<compile_context>
chip_gen: v7x
topology: tpu7x:2x2x1
jax: 0.10.0
libtpu: 0.0.40
codegen_flags: <defaults>
</compile_context>

<pallas_src>
import jax
import jax.numpy as jnp
from jax.experimental import pallas as pl
from jax.experimental.pallas import tpu as pltpu

# ---- model hyperparameters (match TinyTransformer defaults, small test sizes) ----
D_MODEL = 64
NUM_HEADS = 4
HEAD_DIM = D_MODEL // NUM_HEADS
D_FF = 256
NUM_LAYERS = 3
VOCAB = 32
VOCAB_PAD = 128            # lane-dense logits slab; sliced back to VOCAB outside
MAX_SEQ = 16
LN_EPS = 1e-5              # nn.LayerNorm default
LANE = 128
QKV_W = 3 * NUM_HEADS * LANE   # 1536: each head's q/k/v block starts on a 128-lane boundary
EMB_ROWS = 128                 # tok(32) + pos(16) embedding rows, zero-padded to one lane tile


def _layer_norm(h, w, b):
    mu = jnp.mean(h, axis=-1, keepdims=True)
    var = jnp.mean(jnp.square(h - mu), axis=-1, keepdims=True)
    return (h - mu) * jax.lax.rsqrt(var + LN_EPS) * w + b


def fused_transformer_kernel(tok_idx_ref, pos_idx_ref, emb_ref,
                             ln1w_ref, ln1b_ref, qkvw_ref, qkvb_ref,
                             ow_ref, ob_ref, ln2w_ref, ln2b_ref,
                             w1_ref, b1_ref, w2_ref, b2_ref,
                             lnw_ref, lnb_ref, hw_ref, hb_ref,
                             out_ref):
    B, T, _ = out_ref.shape
    BT = B * T
    H, hd, C = NUM_HEADS, HEAD_DIM, D_MODEL
    n_layers = ln1w_ref.shape[0]
    scale = 1.0 / (hd ** 0.5)
    bf16 = jnp.bfloat16

    # ---------- fused token + position embedding (one-hot MXU gather, f32) ----------
    tok = tok_idx_ref[...]                                           # (BT, 1) int32
    posc = pos_idx_ref[...]                                          # (BT, 1) int32 (already VOCAB-offset)
    col = jax.lax.broadcasted_iota(jnp.int32, (BT, EMB_ROWS), 1)
    onehot = ((col == tok) | (col == posc)).astype(jnp.float32)      # (BT, 128)
    h = jnp.dot(onehot, emb_ref[...],
                preferred_element_type=jnp.float32)                  # (BT, C) f32 residual stream

    for l in range(n_layers):                                        # unrolled (3 layers)
        # ------------------- self-attention -------------------
        xn = _layer_norm(h, ln1w_ref[l], ln1b_ref[l]).astype(bf16)
        qkv = jnp.dot(xn, qkvw_ref[l],
                      preferred_element_type=jnp.float32) + qkvb_ref[l]   # (BT, 12*128)

        def head_block(kind, hh):
            c0 = (kind * H + hh) * LANE        # slice start is 128-lane tile-aligned
            return qkv[:, c0:c0 + hd]          # (BT, hd)

        qh = jnp.stack([head_block(0, hh) for hh in range(H)], 0).reshape(H * B, T, hd)
        kh = jnp.stack([head_block(1, hh) for hh in range(H)], 0).reshape(H * B, T, hd)
        vh = jnp.stack([head_block(2, hh) for hh in range(H)], 0).reshape(H * B, T, hd)

        s = jnp.einsum('bqd,bkd->bqk', qh.astype(bf16), kh.astype(bf16),
                       preferred_element_type=jnp.float32) * scale        # (HB, T, T) f32
        s = s - jnp.max(s, axis=-1, keepdims=True)
        p = jnp.exp(s)
        p = p * pl.reciprocal(jnp.sum(p, axis=-1, keepdims=True), approx=True)
        o = jnp.einsum('bqk,bkd->bqd', p.astype(bf16), vh.astype(bf16),
                       preferred_element_type=jnp.float32)                # (HB, T, hd)

        # per-head out-projection accumulation (no lane concatenate)
        o = o.reshape(H, BT, hd)
        attn = ob_ref[l]                                                  # (1, C) f32, broadcasts
        for hh in range(H):
            attn = attn + jnp.dot(o[hh].astype(bf16), ow_ref[l * H + hh],
                                  preferred_element_type=jnp.float32)
        # TODO(synk): nn.Dropout(p=0.1) implemented as identity (inference semantics).
        h = h + attn

        # ------------------- feed-forward ----------------------
        xn = _layer_norm(h, ln2w_ref[l], ln2b_ref[l]).astype(bf16)
        hid = jnp.dot(xn, w1_ref[l], preferred_element_type=jnp.float32) + b1_ref[l]
        hid = jnp.maximum(hid, 0.0).astype(bf16)
        h = h + jnp.dot(hid, w2_ref[l], preferred_element_type=jnp.float32) + b2_ref[l]

    # ------------- final LayerNorm + lane-dense head -------------
    xn = _layer_norm(h, lnw_ref[...], lnb_ref[...]).astype(bf16)
    logits = jnp.dot(xn, hw_ref[...],
                     preferred_element_type=jnp.float32) + hb_ref[...]    # (BT, 128)
    out_ref[...] = logits.reshape(B, T, VOCAB_PAD)


def pack_params(params):
    """Stack per-layer weights, head-align the fused QKV, split the out-proj per
    head, fuse tok/pos embedding tables, pad the head, and cast MXU weights to bf16."""
    blocks = params['blocks']
    bf16 = jnp.bfloat16
    H, hd = NUM_HEADS, HEAD_DIM
    stk = lambda key: jnp.stack([b[key] for b in blocks], axis=0)

    def pack_qkv_mat(b):
        w = jnp.zeros((D_MODEL, QKV_W), jnp.float32)
        for kind, key in enumerate(('qw', 'kw', 'vw')):
            for hh in range(H):
                c0 = (kind * H + hh) * LANE
                w = w.at[:, c0:c0 + hd].set(b[key][:, hh * hd:(hh + 1) * hd])
        return w

    def pack_qkv_bias(b):
        v = jnp.zeros((1, QKV_W), jnp.float32)
        for kind, key in enumerate(('qb', 'kb', 'vb')):
            for hh in range(H):
                c0 = (kind * H + hh) * LANE
                v = v.at[:, c0:c0 + hd].set(b[key][:, hh * hd:(hh + 1) * hd])
        return v

    qkvw = jnp.stack([pack_qkv_mat(b) for b in blocks], 0).astype(bf16)   # (L, C, 1536) bf16
    qkvb = jnp.stack([pack_qkv_bias(b) for b in blocks], 0)               # (L, 1, 1536) f32

    # out-projection split per head: rows h*hd:(h+1)*hd of ow belong to head h
    ow = jnp.concatenate([b['ow'].reshape(H, hd, D_MODEL) for b in blocks],
                         axis=0).astype(bf16)                             # (L*H, hd, C) bf16

    emb_cat = jnp.zeros((EMB_ROWS, D_MODEL), jnp.float32)
    emb_cat = emb_cat.at[:VOCAB].set(params['tok_emb'])
    emb_cat = emb_cat.at[VOCAB:VOCAB + MAX_SEQ].set(params['pos_emb'])

    hw_pad = jnp.pad(params['hw'], ((0, 0), (0, VOCAB_PAD - VOCAB))).astype(bf16)
    hb_pad = jnp.pad(params['hb'], ((0, 0), (0, VOCAB_PAD - VOCAB)))

    return dict(
        emb=emb_cat,
        ln1w=stk('ln1w'), ln1b=stk('ln1b'), qkvw=qkvw, qkvb=qkvb,
        ow=ow, ob=stk('ob'), ln2w=stk('ln2w'), ln2b=stk('ln2b'),
        w1=stk('w1').astype(bf16), b1=stk('b1'),
        w2=stk('w2').astype(bf16), b2=stk('b2'),
        lnw=params['lnw'], lnb=params['lnb'], hw=hw_pad, hb=hb_pad)


@jax.jit
def tiny_transformer_forward(token_ids, packed):
    B, T = token_ids.shape
    tok_idx = token_ids.reshape(B * T, 1).astype(jnp.int32)
    pos_idx = (VOCAB + jnp.tile(jnp.arange(T, dtype=jnp.int32), B)).reshape(B * T, 1)

    args = (tok_idx, pos_idx, packed['emb'],
            packed['ln1w'], packed['ln1b'], packed['qkvw'], packed['qkvb'],
            packed['ow'], packed['ob'], packed['ln2w'], packed['ln2b'],
            packed['w1'], packed['b1'], packed['w2'], packed['b2'],
            packed['lnw'], packed['lnb'], packed['hw'], packed['hb'])

    # NOTE: grid=() — whole problem (~1 MiB resident) fits VMEM on v5e/v6e
    # (128 MiB) and v7x (64 MiB).  If D_MODEL / T / B are scaled up, add a
    # leading ("parallel",) row grid (also shards across v7x's 2 TensorCores),
    # remember BlockSpec double-buffering doubles per-input VMEM, and
    # re-derive tile sizes against the v7x 64 MiB budget.
    logits_pad = pl.pallas_call(
        fused_transformer_kernel,
        out_shape=jax.ShapeDtypeStruct((B, T, VOCAB_PAD), jnp.float32),
        in_specs=[pl.BlockSpec(memory_space=pltpu.MemorySpace.VMEM) for _ in args],
        out_specs=pl.BlockSpec(memory_space=pltpu.MemorySpace.VMEM),
        compiler_params=pltpu.CompilerParams(vmem_limit_bytes=16 * 1024 * 1024),
        cost_estimate=pl.CostEstimate(flops=14_000_000, transcendentals=2_000,
                                      bytes_accessed=1_200_000),
    )(*args)
    return logits_pad[:, :, :VOCAB]


# -------------------- pure-JAX reference (for correctness check) --------------------
def reference_forward(token_ids, params):
    T = token_ids.shape[1]
    h = params['tok_emb'][token_ids] + params['pos_emb'][jnp.arange(T)][None, :, :]
    for p in params['blocks']:
        xn = _layer_norm(h, p['ln1w'], p['ln1b'])
        q = xn @ p['qw'] + p['qb']
        k = xn @ p['kw'] + p['kb']
        v = xn @ p['vw'] + p['vb']
        B, T_, C = q.shape
        qh = q.reshape(B, T_, NUM_HEADS, HEAD_DIM).transpose(0, 2, 1, 3)
        kh = k.reshape(B, T_, NUM_HEADS, HEAD_DIM).transpose(0, 2, 1, 3)
        vh = v.reshape(B, T_, NUM_HEADS, HEAD_DIM).transpose(0, 2, 1, 3)
        s = jnp.einsum('bhtd,bhsd->bhts', qh, kh) / (HEAD_DIM ** 0.5)
        a = jax.nn.softmax(s, axis=-1)
        o = jnp.einsum('bhts,bhsd->bhtd', a, vh).transpose(0, 2, 1, 3).reshape(B, T_, C)
        h = h + (o @ p['ow'] + p['ob'])
        xn = _layer_norm(h, p['ln2w'], p['ln2b'])
        h = h + (jnp.maximum(xn @ p['w1'] + p['b1'], 0.0) @ p['w2'] + p['b2'])
    h = _layer_norm(h, params['lnw'], params['lnb'])
    return h @ params['hw'] + params['hb']


# -------------------- deterministic parameter init --------------------
def init_params(key):
    def normal(k, shape, scale=0.02):
        return (scale * jax.random.normal(k, shape)).astype(jnp.float32)

    keys = jax.random.split(key, 4 + NUM_LAYERS)
    params = {
        'tok_emb': normal(keys[0], (VOCAB, D_MODEL), 1.0),
        'pos_emb': normal(keys[1], (MAX_SEQ, D_MODEL), 1.0),
        'lnw': jnp.ones((1, D_MODEL), jnp.float32),
        'lnb': jnp.zeros((1, D_MODEL), jnp.float32),
        'hw': normal(keys[2], (D_MODEL, VOCAB)),
        'hb': jnp.zeros((1, VOCAB), jnp.float32),
        'blocks': [],
    }
    for l in range(NUM_LAYERS):
        ks = jax.random.split(keys[4 + l], 8)
        params['blocks'].append({
            'ln1w': jnp.ones((1, D_MODEL), jnp.float32),
            'ln1b': jnp.zeros((1, D_MODEL), jnp.float32),
            'qw': normal(ks[0], (D_MODEL, D_MODEL)),
            'qb': normal(ks[1], (1, D_MODEL)),
            'kw': normal(ks[2], (D_MODEL, D_MODEL)),
            'kb': normal(ks[3], (1, D_MODEL)),
            'vw': normal(ks[4], (D_MODEL, D_MODEL)),
            'vb': normal(ks[5], (1, D_MODEL)),
            'ow': normal(ks[6], (D_MODEL, D_MODEL)),
            'ob': jnp.zeros((1, D_MODEL), jnp.float32),
            'ln2w': jnp.ones((1, D_MODEL), jnp.float32),
            'ln2b': jnp.zeros((1, D_MODEL), jnp.float32),
            'w1': normal(ks[7], (D_MODEL, D_FF)),
            'b1': jnp.zeros((1, D_FF), jnp.float32),
            'w2': normal(jax.random.fold_in(ks[7], 1), (D_FF, D_MODEL)),
            'b2': jnp.zeros((1, D_MODEL), jnp.float32),
        })
    return params


if __name__ == "__main__":
    key = jax.random.PRNGKey(0)
    pkey, xkey = jax.random.split(key)
    params = init_params(pkey)
    packed = pack_params(params)

    B, T = 2, 8
    token_ids = jax.random.randint(xkey, (B, T), 0, VOCAB, dtype=jnp.int32)

    logits = jax.block_until_ready(tiny_transformer_forward(token_ids, packed))
    ref = jax.block_until_ready(reference_forward(token_ids, params))

    assert logits.shape == (B, T, VOCAB)
    assert jnp.allclose(logits, ref, atol=1e-2, rtol=1e-2), "mismatch vs reference"

    print("KERNEL_OK")
</pallas_src>

<mosaic_0001>
module attributes {stable_mosaic.version = 11 : i64} {
  func.func @fused_transformer_kernel(%arg0: memref<16x1xi32, #tpu.memory_space<vmem>>, %arg1: memref<16x1xi32, #tpu.memory_space<vmem>>, %arg2: memref<128x64xf32, #tpu.memory_space<vmem>>, %arg3: memref<3x1x64xf32, #tpu.memory_space<vmem>>, %arg4: memref<3x1x64xf32, #tpu.memory_space<vmem>>, %arg5: memref<3x64x1536xbf16, #tpu.memory_space<vmem>>, %arg6: memref<3x1x1536xf32, #tpu.memory_space<vmem>>, %arg7: memref<12x16x64xbf16, #tpu.memory_space<vmem>>, %arg8: memref<3x1x64xf32, #tpu.memory_space<vmem>>, %arg9: memref<3x1x64xf32, #tpu.memory_space<vmem>>, %arg10: memref<3x1x64xf32, #tpu.memory_space<vmem>>, %arg11: memref<3x64x256xbf16, #tpu.memory_space<vmem>>, %arg12: memref<3x1x256xf32, #tpu.memory_space<vmem>>, %arg13: memref<3x256x64xbf16, #tpu.memory_space<vmem>>, %arg14: memref<3x1x64xf32, #tpu.memory_space<vmem>>, %arg15: memref<1x64xf32, #tpu.memory_space<vmem>>, %arg16: memref<1x64xf32, #tpu.memory_space<vmem>>, %arg17: memref<64x128xbf16, #tpu.memory_space<vmem>>, %arg18: memref<1x128xf32, #tpu.memory_space<vmem>>, %arg19: memref<2x8x128xf32, #tpu.memory_space<vmem>>) attributes {dimension_semantics = [], scalar_prefetch = 0 : i64, scratch_operands = 0 : i64, tpu.core_type = #tpu.core_type<tc>} {
    %c0 = arith.constant 0 : index
    %c0_0 = arith.constant 0 : index
    %0 = vector.load %arg0[%c0, %c0_0] : memref<16x1xi32, #tpu.memory_space<vmem>>, vector<16x1xi32>
    %c0_1 = arith.constant 0 : index
    %c0_2 = arith.constant 0 : index
    %1 = vector.load %arg1[%c0_1, %c0_2] : memref<16x1xi32, #tpu.memory_space<vmem>>, vector<16x1xi32>
    %2 = tpu.iota {dimensions = array<i32: 1>} : vector<16x128xi32>
    %3 = vector.broadcast %0 : vector<16x1xi32> to vector<16x128xi32>
    %4 = arith.cmpi eq, %2, %3 : vector<16x128xi32>
    %5 = vector.broadcast %1 : vector<16x1xi32> to vector<16x128xi32>
    %6 = arith.cmpi eq, %2, %5 : vector<16x128xi32>
    %7 = arith.ori %4, %6 : vector<16x128xi1>
    %8 = arith.extui %7 : vector<16x128xi1> to vector<16x128xi32>
    %9 = arith.sitofp %8 : vector<16x128xi32> to vector<16x128xf32>
    %c0_3 = arith.constant 0 : index
    %c0_4 = arith.constant 0 : index
    %10 = vector.load %arg2[%c0_3, %c0_4] : memref<128x64xf32, #tpu.memory_space<vmem>>, vector<128x64xf32>
    %cst = arith.constant dense<0.000000e+00> : vector<16x64xf32>
    %11 = tpu.matmul %9, %10, %cst {dimension_numbers = #tpu.dot_dimension_numbers<[1], [0], [0], [1], [0, 0, 1, 1], [], []>} : vector<16x128xf32>, vector<128x64xf32>, vector<16x64xf32> -> vector<16x64xf32>
    %c0_5 = arith.constant 0 : index
    %c0_6 = arith.constant 0 : index
    %c0_7 = arith.constant 0 : index
    %12 = vector.load %arg3[%c0_5, %c0_6, %c0_7] : memref<3x1x64xf32, #tpu.memory_space<vmem>>, vector<1x1x64xf32>
    %13 = vector.shape_cast %12 : vector<1x1x64xf32> to vector<1x64xf32>
    %c0_8 = arith.constant 0 : index
    %c0_9 = arith.constant 0 : index
    %c0_10 = arith.constant 0 : index
    %14 = vector.load %arg4[%c0_8, %c0_9, %c0_10] : memref<3x1x64xf32, #tpu.memory_space<vmem>>, vector<1x1x64xf32>
    %15 = vector.shape_cast %14 : vector<1x1x64xf32> to vector<1x64xf32>
    %cst_11 = arith.constant dense<0.000000e+00> : vector<16xf32>
    %16 = vector.multi_reduction <add>, %11, %cst_11 [1] : vector<16x64xf32> to vector<16xf32>
    %17 = vector.shape_cast %16 : vector<16xf32> to vector<16x1xf32>
    %cst_12 = arith.constant 6.400000e+01 : f32
    %18 = vector.broadcast %cst_12 : f32 to vector<16x1xf32>
    %19 = arith.divf %17, %18 : vector<16x1xf32>
    %20 = vector.broadcast %19 : vector<16x1xf32> to vector<16x64xf32>
    %21 = arith.subf %11, %20 : vector<16x64xf32>
    %22 = arith.mulf %21, %21 : vector<16x64xf32>
    %cst_13 = arith.constant dense<0.000000e+00> : vector<16xf32>
    %23 = vector.multi_reduction <add>, %22, %cst_13 [1] : vector<16x64xf32> to vector<16xf32>
    %24 = vector.shape_cast %23 : vector<16xf32> to vector<16x1xf32>
    %cst_14 = arith.constant 6.400000e+01 : f32
    %25 = vector.broadcast %cst_14 : f32 to vector<16x1xf32>
    %26 = arith.divf %24, %25 : vector<16x1xf32>
    %27 = vector.broadcast %19 : vector<16x1xf32> to vector<16x64xf32>
    %28 = arith.subf %11, %27 : vector<16x64xf32>
    %cst_15 = arith.constant 9.99999974E-6 : f32
    %29 = vector.broadcast %cst_15 : f32 to vector<16x1xf32>
    %30 = arith.addf %26, %29 : vector<16x1xf32>
    %31 = math.rsqrt %30 : vector<16x1xf32>
    %32 = vector.broadcast %31 : vector<16x1xf32> to vector<16x64xf32>
    %33 = arith.mulf %28, %32 : vector<16x64xf32>
    %34 = vector.broadcast %13 : vector<1x64xf32> to vector<16x64xf32>
    %35 = arith.mulf %33, %34 : vector<16x64xf32>
    %36 = vector.broadcast %15 : vector<1x64xf32> to vector<16x64xf32>
    %37 = arith.addf %35, %36 : vector<16x64xf32>
    %38 = arith.truncf %37 : vector<16x64xf32> to vector<16x64xbf16>
    %c0_16 = arith.constant 0 : index
    %c0_17 = arith.constant 0 : index
    %c0_18 = arith.constant 0 : index
    %39 = vector.load %arg5[%c0_16, %c0_17, %c0_18] : memref<3x64x1536xbf16, #tpu.memory_space<vmem>>, vector<1x64x1536xbf16>
    %40 = vector.shape_cast %39 : vector<1x64x1536xbf16> to vector<64x1536xbf16>
    %cst_19 = arith.constant dense<0.000000e+00> : vector<16x1536xf32>
    %41 = tpu.matmul %38, %40, %cst_19 {dimension_numbers = #tpu.dot_dimension_numbers<[1], [0], [0], [1], [0, 0, 1, 1], [], []>} : vector<16x64xbf16>, vector<64x1536xbf16>, vector<16x1536xf32> -> vector<16x1536xf32>
    %c0_20 = arith.constant 0 : index
    %c0_21 = arith.constant 0 : index
    %c0_22 = arith.constant 0 : index
    %42 = vector.load %arg6[%c0_20, %c0_21, %c0_22] : memref<3x1x1536xf32, #tpu.memory_space<vmem>>, vector<1x1x1536xf32>
    %43 = vector.shape_cast %42 : vector<1x1x1536xf32> to vector<1x1536xf32>
    %44 = vector.broadcast %43 : vector<1x1536xf32> to vector<16x1536xf32>
    %45 = arith.addf %41, %44 : vector<16x1536xf32>
    %46 = vector.extract_strided_slice %45 {offsets = [0, 0], sizes = [16, 16], strides = [1, 1]} : vector<16x1536xf32> to vector<16x16xf32>
    %47 = vector.extract_strided_slice %45 {offsets = [0, 128], sizes = [16, 16], strides = [1, 1]} : vector<16x1536xf32> to vector<16x16xf32>
    %48 = vector.extract_strided_slice %45 {offsets = [0, 256], sizes = [16, 16], strides = [1, 1]} : vector<16x1536xf32> to vector<16x16xf32>
    %49 = vector.extract_strided_slice %45 {offsets = [0, 384], sizes = [16, 16], strides = [1, 1]} : vector<16x1536xf32> to vector<16x16xf32>
    %50 = vector.shape_cast %46 : vector<16x16xf32> to vector<1x16x16xf32>
    %51 = vector.shape_cast %47 : vector<16x16xf32> to vector<1x16x16xf32>
    %52 = vector.shape_cast %48 : vector<16x16xf32> to vector<1x16x16xf32>
    %53 = vector.shape_cast %49 : vector<16x16xf32> to vector<1x16x16xf32>
    %54 = tpu.concatenate %50, %51, %52, %53 in 0 : vector<1x16x16xf32>, vector<1x16x16xf32>, vector<1x16x16xf32>, vector<1x16x16xf32> -> vector<4x16x16xf32>
    %55 = vector.shape_cast %54 : vector<4x16x16xf32> to vector<8x8x16xf32>
    %56 = vector.extract_strided_slice %45 {offsets = [0, 512], sizes = [16, 16], strides = [1, 1]} : vector<16x1536xf32> to vector<16x16xf32>
    %57 = vector.extract_strided_slice %45 {offsets = [0, 640], sizes = [16, 16], strides = [1, 1]} : vector<16x1536xf32> to vector<16x16xf32>
    %58 = vector.extract_strided_slice %45 {offsets = [0, 768], sizes = [16, 16], strides = [1, 1]} : vector<16x1536xf32> to vector<16x16xf32>
    %59 = vector.extract_strided_slice %45 {offsets = [0, 896], sizes = [16, 16], strides = [1, 1]} : vector<16x1536xf32> to vector<16x16xf32>
    %60 = vector.shape_cast %56 : vector<16x16xf32> to vector<1x16x16xf32>
    %61 = vector.shape_cast %57 : vector<16x16xf32> to vector<1x16x16xf32>
    %62 = vector.shape_cast %58 : vector<16x16xf32> to vector<1x16x16xf32>
    %63 = vector.shape_cast %59 : vector<16x16xf32> to vector<1x16x16xf32>
    %64 = tpu.concatenate %60, %61, %62, %63 in 0 : vector<1x16x16xf32>, vector<1x16x16xf32>, vector<1x16x16xf32>, vector<1x16x16xf32> -> vector<4x16x16xf32>
    %65 = vector.shape_cast %64 : vector<4x16x16xf32> to vector<8x8x16xf32>
    %66 = vector.extract_strided_slice %45 {offsets = [0, 1024], sizes = [16, 16], strides = [1, 1]} : vector<16x1536xf32> to vector<16x16xf32>
    %67 = vector.extract_strided_slice %45 {offsets = [0, 1152], sizes = [16, 16], strides = [1, 1]} : vector<16x1536xf32> to vector<16x16xf32>
    %68 = vector.extract_strided_slice %45 {offsets = [0, 1280], sizes = [16, 16], strides = [1, 1]} : vector<16x1536xf32> to vector<16x16xf32>
    %69 = vector.extract_strided_slice %45 {offsets = [0, 1408], sizes = [16, 16], strides = [1, 1]} : vector<16x1536xf32> to vector<16x16xf32>
    %70 = vector.shape_cast %66 : vector<16x16xf32> to vector<1x16x16xf32>
    %71 = vector.shape_cast %67 : vector<16x16xf32> to vector<1x16x16xf32>
    %72 = vector.shape_cast %68 : vector<16x16xf32> to vector<1x16x16xf32>
    %73 = vector.shape_cast %69 : vector<16x16xf32> to vector<1x16x16xf32>
    %74 = tpu.concatenate %70, %71, %72, %73 in 0 : vector<1x16x16xf32>, vector<1x16x16xf32>, vector<1x16x16xf32>, vector<1x16x16xf32> -> vector<4x16x16xf32>
    %75 = vector.shape_cast %74 : vector<4x16x16xf32> to vector<8x8x16xf32>
    %76 = arith.truncf %55 : vector<8x8x16xf32> to vector<8x8x16xbf16>
    %77 = arith.truncf %65 : vector<8x8x16xf32> to vector<8x8x16xbf16>
    "tpu.trace_start"() <{level = 10 : i32, message = "bqd,bkd->bqk"}> : () -> ()
    %cst_23 = arith.constant dense<0.000000e+00> : vector<8x8x8xf32>
    %78 = tpu.matmul %76, %77, %cst_23 {dimension_numbers = #tpu.dot_dimension_numbers<[2], [2], [1], [1], [0, 0, 0, 1, 1, 1], [0], [0]>} : vector<8x8x16xbf16>, vector<8x8x16xbf16>, vector<8x8x8xf32> -> vector<8x8x8xf32>
    "tpu.trace_stop"() : () -> ()
    %cst_24 = arith.constant 2.500000e-01 : f32
    %79 = vector.broadcast %cst_24 : f32 to vector<8x8x8xf32>
    %80 = arith.mulf %78, %79 : vector<8x8x8xf32>
    %cst_25 = arith.constant dense<0xFF800000> : vector<8x8xf32>
    %81 = vector.multi_reduction <maximumf>, %80, %cst_25 [2] : vector<8x8x8xf32> to vector<8x8xf32>
    %82 = vector.shape_cast %81 : vector<8x8xf32> to vector<8x8x1xf32>
    %83 = vector.broadcast %82 : vector<8x8x1xf32> to vector<8x8x8xf32>
    %84 = arith.subf %80, %83 : vector<8x8x8xf32>
    %85 = math.exp %84 : vector<8x8x8xf32>
    %cst_26 = arith.constant dense<0.000000e+00> : vector<8x8xf32>
    %86 = vector.multi_reduction <add>, %85, %cst_26 [2] : vector<8x8x8xf32> to vector<8x8xf32>
    %87 = vector.shape_cast %86 : vector<8x8xf32> to vector<8x8x1xf32>
    %88 = tpu.reciprocal %87 {approx = true} : vector<8x8x1xf32> -> vector<8x8x1xf32>
    %89 = vector.broadcast %88 : vector<8x8x1xf32> to vector<8x8x8xf32>
    %90 = arith.mulf %85, %89 : vector<8x8x8xf32>
    %91 = arith.truncf %90 : vector<8x8x8xf32> to vector<8x8x8xbf16>
    %92 = arith.truncf %75 : vector<8x8x16xf32> to vector<8x8x16xbf16>
    "tpu.trace_start"() <{level = 10 : i32, message = "bqk,bkd->bqd"}> : () -> ()
    %cst_27 = arith.constant dense<0.000000e+00> : vector<8x8x16xf32>
    %93 = tpu.matmul %91, %92, %cst_27 {dimension_numbers = #tpu.dot_dimension_numbers<[2], [1], [1], [2], [0, 0, 0, 1, 1, 2], [0], [0]>} : vector<8x8x8xbf16>, vector<8x8x16xbf16>, vector<8x8x16xf32> -> vector<8x8x16xf32>
    "tpu.trace_stop"() : () -> ()
    %94 = vector.shape_cast %93 : vector<8x8x16xf32> to vector<4x16x16xf32>
    %c0_28 = arith.constant 0 : index
    %c0_29 = arith.constant 0 : index
    %c0_30 = arith.constant 0 : index
    %95 = vector.load %arg8[%c0_28, %c0_29, %c0_30] : memref<3x1x64xf32, #tpu.memory_space<vmem>>, vector<1x1x64xf32>
    %96 = vector.shape_cast %95 : vector<1x1x64xf32> to vector<1x64xf32>
    %97 = vector.extract_strided_slice %94 {offsets = [0, 0, 0], sizes = [1, 16, 16], strides = [1, 1, 1]} : vector<4x16x16xf32> to vector<1x16x16xf32>
    %98 = vector.shape_cast %97 : vector<1x16x16xf32> to vector<16x16xf32>
    %99 = arith.truncf %98 : vector<16x16xf32> to vector<16x16xbf16>
    %c0_31 = arith.constant 0 : index
    %c0_32 = arith.constant 0 : index
    %c0_33 = arith.constant 0 : index
    %100 = vector.load %arg7[%c0_31, %c0_32, %c0_33] : memref<12x16x64xbf16, #tpu.memory_space<vmem>>, vector<1x16x64xbf16>
    %101 = vector.shape_cast %100 : vector<1x16x64xbf16> to vector<16x64xbf16>
    %cst_34 = arith.constant dense<0.000000e+00> : vector<16x64xf32>
    %102 = tpu.matmul %99, %101, %cst_34 {dimension_numbers = #tpu.dot_dimension_numbers<[1], [0], [0], [1], [0, 0, 1, 1], [], []>} : vector<16x16xbf16>, vector<16x64xbf16>, vector<16x64xf32> -> vector<16x64xf32>
    %103 = vector.broadcast %96 : vector<1x64xf32> to vector<16x64xf32>
    %104 = arith.addf %103, %102 : vector<16x64xf32>
    %105 = vector.extract_strided_slice %94 {offsets = [1, 0, 0], sizes = [1, 16, 16], strides = [1, 1, 1]} : vector<4x16x16xf32> to vector<1x16x16xf32>
    %106 = vector.shape_cast %105 : vector<1x16x16xf32> to vector<16x16xf32>
    %107 = arith.truncf %106 : vector<16x16xf32> to vector<16x16xbf16>
    %c1 = arith.constant 1 : index
    %c0_35 = arith.constant 0 : index
    %c0_36 = arith.constant 0 : index
    %108 = vector.load %arg7[%c1, %c0_35, %c0_36] : memref<12x16x64xbf16, #tpu.memory_space<vmem>>, vector<1x16x64xbf16>
    %109 = vector.shape_cast %108 : vector<1x16x64xbf16> to vector<16x64xbf16>
    %cst_37 = arith.constant dense<0.000000e+00> : vector<16x64xf32>
    %110 = tpu.matmul %107, %109, %cst_37 {dimension_numbers = #tpu.dot_dimension_numbers<[1], [0], [0], [1], [0, 0, 1, 1], [], []>} : vector<16x16xbf16>, vector<16x64xbf16>, vector<16x64xf32> -> vector<16x64xf32>
    %111 = arith.addf %104, %110 : vector<16x64xf32>
    %112 = vector.extract_strided_slice %94 {offsets = [2, 0, 0], sizes = [1, 16, 16], strides = [1, 1, 1]} : vector<4x16x16xf32> to vector<1x16x16xf32>
    %113 = vector.shape_cast %112 : vector<1x16x16xf32> to vector<16x16xf32>
    %114 = arith.truncf %113 : vector<16x16xf32> to vector<16x16xbf16>
    %c2 = arith.constant 2 : index
    %c0_38 = arith.constant 0 : index
    %c0_39 = arith.constant 0 : index
    %115 = vector.load %arg7[%c2, %c0_38, %c0_39] : memref<12x16x64xbf16, #tpu.memory_space<vmem>>, vector<1x16x64xbf16>
    %116 = vector.shape_cast %115 : vector<1x16x64xbf16> to vector<16x64xbf16>
    %cst_40 = arith.constant dense<0.000000e+00> : vector<16x64xf32>
    %117 = tpu.matmul %114, %116, %cst_40 {dimension_numbers = #tpu.dot_dimension_numbers<[1], [0], [0], [1], [0, 0, 1, 1], [], []>} : vector<16x16xbf16>, vector<16x64xbf16>, vector<16x64xf32> -> vector<16x64xf32>
    %118 = arith.addf %111, %117 : vector<16x64xf32>
    %119 = vector.extract_strided_slice %94 {offsets = [3, 0, 0], sizes = [1, 16, 16], strides = [1, 1, 1]} : vector<4x16x16xf32> to vector<1x16x16xf32>
    %120 = vector.shape_cast %119 : vector<1x16x16xf32> to vector<16x16xf32>
    %121 = arith.truncf %120 : vector<16x16xf32> to vector<16x16xbf16>
    %c3 = arith.constant 3 : index
    %c0_41 = arith.constant 0 : index
    %c0_42 = arith.constant 0 : index
    %122 = vector.load %arg7[%c3, %c0_41, %c0_42] : memref<12x16x64xbf16, #tpu.memory_space<vmem>>, vector<1x16x64xbf16>
    %123 = vector.shape_cast %122 : vector<1x16x64xbf16> to vector<16x64xbf16>
    %cst_43 = arith.constant dense<0.000000e+00> : vector<16x64xf32>
    %124 = tpu.matmul %121, %123, %cst_43 {dimension_numbers = #tpu.dot_dimension_numbers<[1], [0], [0], [1], [0, 0, 1, 1], [], []>} : vector<16x16xbf16>, vector<16x64xbf16>, vector<16x64xf32> -> vector<16x64xf32>
    %125 = arith.addf %118, %124 : vector<16x64xf32>
    %126 = arith.addf %11, %125 : vector<16x64xf32>
    %c0_44 = arith.constant 0 : index
    %c0_45 = arith.constant 0 : index
    %c0_46 = arith.constant 0 : index
    %127 = vector.load %arg9[%c0_44, %c0_45, %c0_46] : memref<3x1x64xf32, #tpu.memory_space<vmem>>, vector<1x1x64xf32>
    %128 = vector.shape_cast %127 : vector<1x1x64xf32> to vector<1x64xf32>
    %c0_47 = arith.constant 0 : index
    %c0_48 = arith.constant 0 : index
    %c0_49 = arith.constant 0 : index
    %129 = vector.load %arg10[%c0_47, %c0_48, %c0_49] : memref<3x1x64xf32, #tpu.memory_space<vmem>>, vector<1x1x64xf32>
    %130 = vector.shape_cast %129 : vector<1x1x64xf32> to vector<1x64xf32>
    %cst_50 = arith.constant dense<0.000000e+00> : vector<16xf32>
    %131 = vector.multi_reduction <add>, %126, %cst_50 [1] : vector<16x64xf32> to vector<16xf32>
    %132 = vector.shape_cast %131 : vector<16xf32> to vector<16x1xf32>
    %cst_51 = arith.constant 6.400000e+01 : f32
    %133 = vector.broadcast %cst_51 : f32 to vector<16x1xf32>
    %134 = arith.divf %132, %133 : vector<16x1xf32>
    %135 = vector.broadcast %134 : vector<16x1xf32> to vector<16x64xf32>
    %136 = arith.subf %126, %135 : vector<16x64xf32>
    %137 = arith.mulf %136, %136 : vector<16x64xf32>
    %cst_52 = arith.constant dense<0.000000e+00> : vector<16xf32>
    %138 = vector.multi_reduction <add>, %137, %cst_52 [1] : vector<16x64xf32> to vector<16xf32>
    %139 = vector.shape_cast %138 : vector<16xf32> to vector<16x1xf32>
    %cst_53 = arith.constant 6.400000e+01 : f32
    %140 = vector.broadcast %cst_53 : f32 to vector<16x1xf32>
    %141 = arith.divf %139, %140 : vector<16x1xf32>
    %142 = vector.broadcast %134 : vector<16x1xf32> to vector<16x64xf32>
    %143 = arith.subf %126, %142 : vector<16x64xf32>
    %cst_54 = arith.constant 9.99999974E-6 : f32
    %144 = vector.broadcast %cst_54 : f32 to vector<16x1xf32>
    %145 = arith.addf %141, %144 : vector<16x1xf32>
    %146 = math.rsqrt %145 : vector<16x1xf32>
    %147 = vector.broadcast %146 : vector<16x1xf32> to vector<16x64xf32>
    %148 = arith.mulf %143, %147 : vector<16x64xf32>
    %149 = vector.broadcast %128 : vector<1x64xf32> to vector<16x64xf32>
    %150 = arith.mulf %148, %149 : vector<16x64xf32>
    %151 = vector.broadcast %130 : vector<1x64xf32> to vector<16x64xf32>
    %152 = arith.addf %150, %151 : vector<16x64xf32>
    %153 = arith.truncf %152 : vector<16x64xf32> to vector<16x64xbf16>
    %c0_55 = arith.constant 0 : index
    %c0_56 = arith.constant 0 : index
    %c0_57 = arith.constant 0 : index
    %154 = vector.load %arg11[%c0_55, %c0_56, %c0_57] : memref<3x64x256xbf16, #tpu.memory_space<vmem>>, vector<1x64x256xbf16>
    %155 = vector.shape_cast %154 : vector<1x64x256xbf16> to vector<64x256xbf16>
    %cst_58 = arith.constant dense<0.000000e+00> : vector<16x256xf32>
    %156 = tpu.matmul %153, %155, %cst_58 {dimension_numbers = #tpu.dot_dimension_numbers<[1], [0], [0], [1], [0, 0, 1, 1], [], []>} : vector<16x64xbf16>, vector<64x256xbf16>, vector<16x256xf32> -> vector<16x256xf32>
    %c0_59 = arith.constant 0 : index
    %c0_60 = arith.constant 0 : index
    %c0_61 = arith.constant 0 : index
    %157 = vector.load %arg12[%c0_59, %c0_60, %c0_61] : memref<3x1x256xf32, #tpu.memory_space<vmem>>, vector<1x1x256xf32>
    %158 = vector.shape_cast %157 : vector<1x1x256xf32> to vector<1x256xf32>
    %159 = vector.broadcast %158 : vector<1x256xf32> to vector<16x256xf32>
    %160 = arith.addf %156, %159 : vector<16x256xf32>
    %cst_62 = arith.constant 0.000000e+00 : f32
    %161 = vector.broadcast %cst_62 : f32 to vector<16x256xf32>
    %162 = arith.maximumf %160, %161 : vector<16x256xf32>
    %163 = arith.truncf %162 : vector<16x256xf32> to vector<16x256xbf16>
    %c0_63 = arith.constant 0 : index
    %c0_64 = arith.constant 0 : index
    %c0_65 = arith.constant 0 : index
    %164 = vector.load %arg13[%c0_63, %c0_64, %c0_65] : memref<3x256x64xbf16, #tpu.memory_space<vmem>>, vector<1x256x64xbf16>
    %165 = vector.shape_cast %164 : vector<1x256x64xbf16> to vector<256x64xbf16>
    %cst_66 = arith.constant dense<0.000000e+00> : vector<16x64xf32>
    %166 = tpu.matmul %163, %165, %cst_66 {dimension_numbers = #tpu.dot_dimension_numbers<[1], [0], [0], [1], [0, 0, 1, 1], [], []>} : vector<16x256xbf16>, vector<256x64xbf16>, vector<16x64xf32> -> vector<16x64xf32>
    %167 = arith.addf %126, %166 : vector<16x64xf32>
    %c0_67 = arith.constant 0 : index
    %c0_68 = arith.constant 0 : index
    %c0_69 = arith.constant 0 : index
    %168 = vector.load %arg14[%c0_67, %c0_68, %c0_69] : memref<3x1x64xf32, #tpu.memory_space<vmem>>, vector<1x1x64xf32>
    %169 = vector.shape_cast %168 : vector<1x1x64xf32> to vector<1x64xf32>
    %170 = vector.broadcast %169 : vector<1x64xf32> to vector<16x64xf32>
    %171 = arith.addf %167, %170 : vector<16x64xf32>
    %c1_70 = arith.constant 1 : index
    %c0_71 = arith.constant 0 : index
    %c0_72 = arith.constant 0 : index
    %172 = vector.load %arg3[%c1_70, %c0_71, %c0_72] : memref<3x1x64xf32, #tpu.memory_space<vmem>>, vector<1x1x64xf32>
    %173 = vector.shape_cast %172 : vector<1x1x64xf32> to vector<1x64xf32>
    %c1_73 = arith.constant 1 : index
    %c0_74 = arith.constant 0 : index
    %c0_75 = arith.constant 0 : index
    %174 = vector.load %arg4[%c1_73, %c0_74, %c0_75] : memref<3x1x64xf32, #tpu.memory_space<vmem>>, vector<1x1x64xf32>
    %175 = vector.shape_cast %174 : vector<1x1x64xf32> to vector<1x64xf32>
    %cst_76 = arith.constant dense<0.000000e+00> : vector<16xf32>
    %176 = vector.multi_reduction <add>, %171, %cst_76 [1] : vector<16x64xf32> to vector<16xf32>
    %177 = vector.shape_cast %176 : vector<16xf32> to vector<16x1xf32>
    %cst_77 = arith.constant 6.400000e+01 : f32
    %178 = vector.broadcast %cst_77 : f32 to vector<16x1xf32>
    %179 = arith.divf %177, %178 : vector<16x1xf32>
    %180 = vector.broadcast %179 : vector<16x1xf32> to vector<16x64xf32>
    %181 = arith.subf %171, %180 : vector<16x64xf32>
    %182 = arith.mulf %181, %181 : vector<16x64xf32>
    %cst_78 = arith.constant dense<0.000000e+00> : vector<16xf32>
    %183 = vector.multi_reduction <add>, %182, %cst_78 [1] : vector<16x64xf32> to vector<16xf32>
    %184 = vector.shape_cast %183 : vector<16xf32> to vector<16x1xf32>
    %cst_79 = arith.constant 6.400000e+01 : f32
    %185 = vector.broadcast %cst_79 : f32 to vector<16x1xf32>
    %186 = arith.divf %184, %185 : vector<16x1xf32>
    %187 = vector.broadcast %179 : vector<16x1xf32> to vector<16x64xf32>
    %188 = arith.subf %171, %187 : vector<16x64xf32>
    %cst_80 = arith.constant 9.99999974E-6 : f32
    %189 = vector.broadcast %cst_80 : f32 to vector<16x1xf32>
    %190 = arith.addf %186, %189 : vector<16x1xf32>
    %191 = math.rsqrt %190 : vector<16x1xf32>
    %192 = vector.broadcast %191 : vector<16x1xf32> to vector<16x64xf32>
    %193 = arith.mulf %188, %192 : vector<16x64xf32>
    %194 = vector.broadcast %173 : vector<1x64xf32> to vector<16x64xf32>
    %195 = arith.mulf %193, %194 : vector<16x64xf32>
    %196 = vector.broadcast %175 : vector<1x64xf32> to vector<16x64xf32>
    %197 = arith.addf %195, %196 : vector<16x64xf32>
    %198 = arith.truncf %197 : vector<16x64xf32> to vector<16x64xbf16>
    %c1_81 = arith.constant 1 : index
    %c0_82 = arith.constant 0 : index
    %c0_83 = arith.constant 0 : index
    %199 = vector.load %arg5[%c1_81, %c0_82, %c0_83] : memref<3x64x1536xbf16, #tpu.memory_space<vmem>>, vector<1x64x1536xbf16>
    %200 = vector.shape_cast %199 : vector<1x64x1536xbf16> to vector<64x1536xbf16>
    %cst_84 = arith.constant dense<0.000000e+00> : vector<16x1536xf32>
    %201 = tpu.matmul %198, %200, %cst_84 {dimension_numbers = #tpu.dot_dimension_numbers<[1], [0], [0], [1], [0, 0, 1, 1], [], []>} : vector<16x64xbf16>, vector<64x1536xbf16>, vector<16x1536xf32> -> vector<16x1536xf32>
    %c1_85 = arith.constant 1 : index
    %c0_86 = arith.constant 0 : index
    %c0_87 = arith.constant 0 : index
    %202 = vector.load %arg6[%c1_85, %c0_86, %c0_87] : memref<3x1x1536xf32, #tpu.memory_space<vmem>>, vector<1x1x1536xf32>
    %203 = vector.shape_cast %202 : vector<1x1x1536xf32> to vector<1x1536xf32>
    %204 = vector.broadcast %203 : vector<1x1536xf32> to vector<16x1536xf32>
    %205 = arith.addf %201, %204 : vector<16x1536xf32>
    %206 = vector.extract_strided_slice %205 {offsets = [0, 0], sizes = [16, 16], strides = [1, 1]} : vector<16x1536xf32> to vector<16x16xf32>
    %207 = vector.extract_strided_slice %205 {offsets = [0, 128], sizes = [16, 16], strides = [1, 1]} : vector<16x1536xf32> to vector<16x16xf32>
    %208 = vector.extract_strided_slice %205 {offsets = [0, 256], sizes = [16, 16], strides = [1, 1]} : vector<16x1536xf32> to vector<16x16xf32>
    %209 = vector.extract_strided_slice %205 {offsets = [0, 384], sizes = [16, 16], strides = [1, 1]} : vector<16x1536xf32> to vector<16x16xf32>
    %210 = vector.shape_cast %206 : vector<16x16xf32> to vector<1x16x16xf32>
    %211 = vector.shape_cast %207 : vector<16x16xf32> to vector<1x16x16xf32>
    %212 = vector.shape_cast %208 : vector<16x16xf32> to vector<1x16x16xf32>
    %213 = vector.shape_cast %209 : vector<16x16xf32> to vector<1x16x16xf32>
    %214 = tpu.concatenate %210, %211, %212, %213 in 0 : vector<1x16x16xf32>, vector<1x16x16xf32>, vector<1x16x16xf32>, vector<1x16x16xf32> -> vector<4x16x16xf32>
    %215 = vector.shape_cast %214 : vector<4x16x16xf32> to vector<8x8x16xf32>
    %216 = vector.extract_strided_slice %205 {offsets = [0, 512], sizes = [16, 16], strides = [1, 1]} : vector<16x1536xf32> to vector<16x16xf32>
    %217 = vector.extract_strided_slice %205 {offsets = [0, 640], sizes = [16, 16], strides = [1, 1]} : vector<16x1536xf32> to vector<16x16xf32>
    %218 = vector.extract_strided_slice %205 {offsets = [0, 768], sizes = [16, 16], strides = [1, 1]} : vector<16x1536xf32> to vector<16x16xf32>
    %219 = vector.extract_strided_slice %205 {offsets = [0, 896], sizes = [16, 16], strides = [1, 1]} : vector<16x1536xf32> to vector<16x16xf32>
    %220 = vector.shape_cast %216 : vector<16x16xf32> to vector<1x16x16xf32>
    %221 = vector.shape_cast %217 : vector<16x16xf32> to vector<1x16x16xf32>
    %222 = vector.shape_cast %218 : vector<16x16xf32> to vector<1x16x16xf32>
    %223 = vector.shape_cast %219 : vector<16x16xf32> to vector<1x16x16xf32>
    %224 = tpu.concatenate %220, %221, %222, %223 in 0 : vector<1x16x16xf32>, vector<1x16x16xf32>, vector<1x16x16xf32>, vector<1x16x16xf32> -> vector<4x16x16xf32>
    %225 = vector.shape_cast %224 : vector<4x16x16xf32> to vector<8x8x16xf32>
    %226 = vector.extract_strided_slice %205 {offsets = [0, 1024], sizes = [16, 16], strides = [1, 1]} : vector<16x1536xf32> to vector<16x16xf32>
    %227 = vector.extract_strided_slice %205 {offsets = [0, 1152], sizes = [16, 16], strides = [1, 1]} : vector<16x1536xf32> to vector<16x16xf32>
    %228 = vector.extract_strided_slice %205 {offsets = [0, 1280], sizes = [16, 16], strides = [1, 1]} : vector<16x1536xf32> to vector<16x16xf32>
    %229 = vector.extract_strided_slice %205 {offsets = [0, 1408], sizes = [16, 16], strides = [1, 1]} : vector<16x1536xf32> to vector<16x16xf32>
    %230 = vector.shape_cast %226 : vector<16x16xf32> to vector<1x16x16xf32>
    %231 = vector.shape_cast %227 : vector<16x16xf32> to vector<1x16x16xf32>
    %232 = vector.shape_cast %228 : vector<16x16xf32> to vector<1x16x16xf32>
    %233 = vector.shape_cast %229 : vector<16x16xf32> to vector<1x16x16xf32>
    %234 = tpu.concatenate %230, %231, %232, %233 in 0 : vector<1x16x16xf32>, vector<1x16x16xf32>, vector<1x16x16xf32>, vector<1x16x16xf32> -> vector<4x16x16xf32>
    %235 = vector.shape_cast %234 : vector<4x16x16xf32> to vector<8x8x16xf32>
    %236 = arith.truncf %215 : vector<8x8x16xf32> to vector<8x8x16xbf16>
    %237 = arith.truncf %225 : vector<8x8x16xf32> to vector<8x8x16xbf16>
    "tpu.trace_start"() <{level = 10 : i32, message = "bqd,bkd->bqk"}> : () -> ()
    %cst_88 = arith.constant dense<0.000000e+00> : vector<8x8x8xf32>
    %238 = tpu.matmul %236, %237, %cst_88 {dimension_numbers = #tpu.dot_dimension_numbers<[2], [2], [1], [1], [0, 0, 0, 1, 1, 1], [0], [0]>} : vector<8x8x16xbf16>, vector<8x8x16xbf16>, vector<8x8x8xf32> -> vector<8x8x8xf32>
    "tpu.trace_stop"() : () -> ()
    %cst_89 = arith.constant 2.500000e-01 : f32
    %239 = vector.broadcast %cst_89 : f32 to vector<8x8x8xf32>
    %240 = arith.mulf %238, %239 : vector<8x8x8xf32>
    %cst_90 = arith.constant dense<0xFF800000> : vector<8x8xf32>
    %241 = vector.multi_reduction <maximumf>, %240, %cst_90 [2] : vector<8x8x8xf32> to vector<8x8xf32>
    %242 = vector.shape_cast %241 : vector<8x8xf32> to vector<8x8x1xf32>
    %243 = vector.broadcast %242 : vector<8x8x1xf32> to vector<8x8x8xf32>
    %244 = arith.subf %240, %243 : vector<8x8x8xf32>
    %245 = math.exp %244 : vector<8x8x8xf32>
    %cst_91 = arith.constant dense<0.000000e+00> : vector<8x8xf32>
    %246 = vector.multi_reduction <add>, %245, %cst_91 [2] : vector<8x8x8xf32> to vector<8x8xf32>
    %247 = vector.shape_cast %246 : vector<8x8xf32> to vector<8x8x1xf32>
    %248 = tpu.reciprocal %247 {approx = true} : vector<8x8x1xf32> -> vector<8x8x1xf32>
    %249 = vector.broadcast %248 : vector<8x8x1xf32> to vector<8x8x8xf32>
    %250 = arith.mulf %245, %249 : vector<8x8x8xf32>
    %251 = arith.truncf %250 : vector<8x8x8xf32> to vector<8x8x8xbf16>
    %252 = arith.truncf %235 : vector<8x8x16xf32> to vector<8x8x16xbf16>
    "tpu.trace_start"() <{level = 10 : i32, message = "bqk,bkd->bqd"}> : () -> ()
    %cst_92 = arith.constant dense<0.000000e+00> : vector<8x8x16xf32>
    %253 = tpu.matmul %251, %252, %cst_92 {dimension_numbers = #tpu.dot_dimension_numbers<[2], [1], [1], [2], [0, 0, 0, 1, 1, 2], [0], [0]>} : vector<8x8x8xbf16>, vector<8x8x16xbf16>, vector<8x8x16xf32> -> vector<8x8x16xf32>
    "tpu.trace_stop"() : () -> ()
    %254 = vector.shape_cast %253 : vector<8x8x16xf32> to vector<4x16x16xf32>
    %c1_93 = arith.constant 1 : index
    %c0_94 = arith.constant 0 : index
    %c0_95 = arith.constant 0 : index
    %255 = vector.load %arg8[%c1_93, %c0_94, %c0_95] : memref<3x1x64xf32, #tpu.memory_space<vmem>>, vector<1x1x64xf32>
    %256 = vector.shape_cast %255 : vector<1x1x64xf32> to vector<1x64xf32>
    %257 = vector.extract_strided_slice %254 {offsets = [0, 0, 0], sizes = [1, 16, 16], strides = [1, 1, 1]} : vector<4x16x16xf32> to vector<1x16x16xf32>
    %258 = vector.shape_cast %257 : vector<1x16x16xf32> to vector<16x16xf32>
    %259 = arith.truncf %258 : vector<16x16xf32> to vector<16x16xbf16>
    %c4 = arith.constant 4 : index
    %c0_96 = arith.constant 0 : index
    %c0_97 = arith.constant 0 : index
    %260 = vector.load %arg7[%c4, %c0_96, %c0_97] : memref<12x16x64xbf16, #tpu.memory_space<vmem>>, vector<1x16x64xbf16>
    %261 = vector.shape_cast %260 : vector<1x16x64xbf16> to vector<16x64xbf16>
    %cst_98 = arith.constant dense<0.000000e+00> : vector<16x64xf32>
    %262 = tpu.matmul %259, %261, %cst_98 {dimension_numbers = #tpu.dot_dimension_numbers<[1], [0], [0], [1], [0, 0, 1, 1], [], []>} : vector<16x16xbf16>, vector<16x64xbf16>, vector<16x64xf32> -> vector<16x64xf32>
    %263 = vector.broadcast %256 : vector<1x64xf32> to vector<16x64xf32>
    %264 = arith.addf %263, %262 : vector<16x64xf32>
    %265 = vector.extract_strided_slice %254 {offsets = [1, 0, 0], sizes = [1, 16, 16], strides = [1, 1, 1]} : vector<4x16x16xf32> to vector<1x16x16xf32>
    %266 = vector.shape_cast %265 : vector<1x16x16xf32> to vector<16x16xf32>
    %267 = arith.truncf %266 : vector<16x16xf32> to vector<16x16xbf16>
    %c5 = arith.constant 5 : index
    %c0_99 = arith.constant 0 : index
    %c0_100 = arith.constant 0 : index
    %268 = vector.load %arg7[%c5, %c0_99, %c0_100] : memref<12x16x64xbf16, #tpu.memory_space<vmem>>, vector<1x16x64xbf16>
    %269 = vector.shape_cast %268 : vector<1x16x64xbf16> to vector<16x64xbf16>
    %cst_101 = arith.constant dense<0.000000e+00> : vector<16x64xf32>
    %270 = tpu.matmul %267, %269, %cst_101 {dimension_numbers = #tpu.dot_dimension_numbers<[1], [0], [0], [1], [0, 0, 1, 1], [], []>} : vector<16x16xbf16>, vector<16x64xbf16>, vector<16x64xf32> -> vector<16x64xf32>
    %271 = arith.addf %264, %270 : vector<16x64xf32>
    %272 = vector.extract_strided_slice %254 {offsets = [2, 0, 0], sizes = [1, 16, 16], strides = [1, 1, 1]} : vector<4x16x16xf32> to vector<1x16x16xf32>
    %273 = vector.shape_cast %272 : vector<1x16x16xf32> to vector<16x16xf32>
    %274 = arith.truncf %273 : vector<16x16xf32> to vector<16x16xbf16>
    %c6 = arith.constant 6 : index
    %c0_102 = arith.constant 0 : index
    %c0_103 = arith.constant 0 : index
    %275 = vector.load %arg7[%c6, %c0_102, %c0_103] : memref<12x16x64xbf16, #tpu.memory_space<vmem>>, vector<1x16x64xbf16>
    %276 = vector.shape_cast %275 : vector<1x16x64xbf16> to vector<16x64xbf16>
    %cst_104 = arith.constant dense<0.000000e+00> : vector<16x64xf32>
    %277 = tpu.matmul %274, %276, %cst_104 {dimension_numbers = #tpu.dot_dimension_numbers<[1], [0], [0], [1], [0, 0, 1, 1], [], []>} : vector<16x16xbf16>, vector<16x64xbf16>, vector<16x64xf32> -> vector<16x64xf32>
    %278 = arith.addf %271, %277 : vector<16x64xf32>
    %279 = vector.extract_strided_slice %254 {offsets = [3, 0, 0], sizes = [1, 16, 16], strides = [1, 1, 1]} : vector<4x16x16xf32> to vector<1x16x16xf32>
    %280 = vector.shape_cast %279 : vector<1x16x16xf32> to vector<16x16xf32>
    %281 = arith.truncf %280 : vector<16x16xf32> to vector<16x16xbf16>
    %c7 = arith.constant 7 : index
    %c0_105 = arith.constant 0 : index
    %c0_106 = arith.constant 0 : index
    %282 = vector.load %arg7[%c7, %c0_105, %c0_106] : memref<12x16x64xbf16, #tpu.memory_space<vmem>>, vector<1x16x64xbf16>
    %283 = vector.shape_cast %282 : vector<1x16x64xbf16> to vector<16x64xbf16>
    %cst_107 = arith.constant dense<0.000000e+00> : vector<16x64xf32>
    %284 = tpu.matmul %281, %283, %cst_107 {dimension_numbers = #tpu.dot_dimension_numbers<[1], [0], [0], [1], [0, 0, 1, 1], [], []>} : vector<16x16xbf16>, vector<16x64xbf16>, vector<16x64xf32> -> vector<16x64xf32>
    %285 = arith.addf %278, %284 : vector<16x64xf32>
    %286 = arith.addf %171, %285 : vector<16x64xf32>
    %c1_108 = arith.constant 1 : index
    %c0_109 = arith.constant 0 : index
    %c0_110 = arith.constant 0 : index
    %287 = vector.load %arg9[%c1_108, %c0_109, %c0_110] : memref<3x1x64xf32, #tpu.memory_space<vmem>>, vector<1x1x64xf32>
    %288 = vector.shape_cast %287 : vector<1x1x64xf32> to vector<1x64xf32>
    %c1_111 = arith.constant 1 : index
    %c0_112 = arith.constant 0 : index
    %c0_113 = arith.constant 0 : index
    %289 = vector.load %arg10[%c1_111, %c0_112, %c0_113] : memref<3x1x64xf32, #tpu.memory_space<vmem>>, vector<1x1x64xf32>
    %290 = vector.shape_cast %289 : vector<1x1x64xf32> to vector<1x64xf32>
    %cst_114 = arith.constant dense<0.000000e+00> : vector<16xf32>
    %291 = vector.multi_reduction <add>, %286, %cst_114 [1] : vector<16x64xf32> to vector<16xf32>
    %292 = vector.shape_cast %291 : vector<16xf32> to vector<16x1xf32>
    %cst_115 = arith.constant 6.400000e+01 : f32
    %293 = vector.broadcast %cst_115 : f32 to vector<16x1xf32>
    %294 = arith.divf %292, %293 : vector<16x1xf32>
    %295 = vector.broadcast %294 : vector<16x1xf32> to vector<16x64xf32>
    %296 = arith.subf %286, %295 : vector<16x64xf32>
    %297 = arith.mulf %296, %296 : vector<16x64xf32>
    %cst_116 = arith.constant dense<0.000000e+00> : vector<16xf32>
    %298 = vector.multi_reduction <add>, %297, %cst_116 [1] : vector<16x64xf32> to vector<16xf32>
    %299 = vector.shape_cast %298 : vector<16xf32> to vector<16x1xf32>
    %cst_117 = arith.constant 6.400000e+01 : f32
    %300 = vector.broadcast %cst_117 : f32 to vector<16x1xf32>
    %301 = arith.divf %299, %300 : vector<16x1xf32>
    %302 = vector.broadcast %294 : vector<16x1xf32> to vector<16x64xf32>
    %303 = arith.subf %286, %302 : vector<16x64xf32>
    %cst_118 = arith.constant 9.99999974E-6 : f32
    %304 = vector.broadcast %cst_118 : f32 to vector<16x1xf32>
    %305 = arith.addf %301, %304 : vector<16x1xf32>
    %306 = math.rsqrt %305 : vector<16x1xf32>
    %307 = vector.broadcast %306 : vector<16x1xf32> to vector<16x64xf32>
    %308 = arith.mulf %303, %307 : vector<16x64xf32>
    %309 = vector.broadcast %288 : vector<1x64xf32> to vector<16x64xf32>
    %310 = arith.mulf %308, %309 : vector<16x64xf32>
    %311 = vector.broadcast %290 : vector<1x64xf32> to vector<16x64xf32>
    %312 = arith.addf %310, %311 : vector<16x64xf32>
    %313 = arith.truncf %312 : vector<16x64xf32> to vector<16x64xbf16>
    %c1_119 = arith.constant 1 : index
    %c0_120 = arith.constant 0 : index
    %c0_121 = arith.constant 0 : index
    %314 = vector.load %arg11[%c1_119, %c0_120, %c0_121] : memref<3x64x256xbf16, #tpu.memory_space<vmem>>, vector<1x64x256xbf16>
    %315 = vector.shape_cast %314 : vector<1x64x256xbf16> to vector<64x256xbf16>
    %cst_122 = arith.constant dense<0.000000e+00> : vector<16x256xf32>
    %316 = tpu.matmul %313, %315, %cst_122 {dimension_numbers = #tpu.dot_dimension_numbers<[1], [0], [0], [1], [0, 0, 1, 1], [], []>} : vector<16x64xbf16>, vector<64x256xbf16>, vector<16x256xf32> -> vector<16x256xf32>
    %c1_123 = arith.constant 1 : index
    %c0_124 = arith.constant 0 : index
    %c0_125 = arith.constant 0 : index
    %317 = vector.load %arg12[%c1_123, %c0_124, %c0_125] : memref<3x1x256xf32, #tpu.memory_space<vmem>>, vector<1x1x256xf32>
    %318 = vector.shape_cast %317 : vector<1x1x256xf32> to vector<1x256xf32>
    %319 = vector.broadcast %318 : vector<1x256xf32> to vector<16x256xf32>
    %320 = arith.addf %316, %319 : vector<16x256xf32>
    %cst_126 = arith.constant 0.000000e+00 : f32
    %321 = vector.broadcast %cst_126 : f32 to vector<16x256xf32>
    %322 = arith.maximumf %320, %321 : vector<16x256xf32>
    %323 = arith.truncf %322 : vector<16x256xf32> to vector<16x256xbf16>
    %c1_127 = arith.constant 1 : index
    %c0_128 = arith.constant 0 : index
    %c0_129 = arith.constant 0 : index
    %324 = vector.load %arg13[%c1_127, %c0_128, %c0_129] : memref<3x256x64xbf16, #tpu.memory_space<vmem>>, vector<1x256x64xbf16>
    %325 = vector.shape_cast %324 : vector<1x256x64xbf16> to vector<256x64xbf16>
    %cst_130 = arith.constant dense<0.000000e+00> : vector<16x64xf32>
    %326 = tpu.matmul %323, %325, %cst_130 {dimension_numbers = #tpu.dot_dimension_numbers<[1], [0], [0], [1], [0, 0, 1, 1], [], []>} : vector<16x256xbf16>, vector<256x64xbf16>, vector<16x64xf32> -> vector<16x64xf32>
    %327 = arith.addf %286, %326 : vector<16x64xf32>
    %c1_131 = arith.constant 1 : index
    %c0_132 = arith.constant 0 : index
    %c0_133 = arith.constant 0 : index
    %328 = vector.load %arg14[%c1_131, %c0_132, %c0_133] : memref<3x1x64xf32, #tpu.memory_space<vmem>>, vector<1x1x64xf32>
    %329 = vector.shape_cast %328 : vector<1x1x64xf32> to vector<1x64xf32>
    %330 = vector.broadcast %329 : vector<1x64xf32> to vector<16x64xf32>
    %331 = arith.addf %327, %330 : vector<16x64xf32>
    %c2_134 = arith.constant 2 : index
    %c0_135 = arith.constant 0 : index
    %c0_136 = arith.constant 0 : index
    %332 = vector.load %arg3[%c2_134, %c0_135, %c0_136] : memref<3x1x64xf32, #tpu.memory_space<vmem>>, vector<1x1x64xf32>
    %333 = vector.shape_cast %332 : vector<1x1x64xf32> to vector<1x64xf32>
    %c2_137 = arith.constant 2 : index
    %c0_138 = arith.constant 0 : index
    %c0_139 = arith.constant 0 : index
    %334 = vector.load %arg4[%c2_137, %c0_138, %c0_139] : memref<3x1x64xf32, #tpu.memory_space<vmem>>, vector<1x1x64xf32>
    %335 = vector.shape_cast %334 : vector<1x1x64xf32> to vector<1x64xf32>
    %cst_140 = arith.constant dense<0.000000e+00> : vector<16xf32>
    %336 = vector.multi_reduction <add>, %331, %cst_140 [1] : vector<16x64xf32> to vector<16xf32>
    %337 = vector.shape_cast %336 : vector<16xf32> to vector<16x1xf32>
    %cst_141 = arith.constant 6.400000e+01 : f32
    %338 = vector.broadcast %cst_141 : f32 to vector<16x1xf32>
    %339 = arith.divf %337, %338 : vector<16x1xf32>
    %340 = vector.broadcast %339 : vector<16x1xf32> to vector<16x64xf32>
    %341 = arith.subf %331, %340 : vector<16x64xf32>
    %342 = arith.mulf %341, %341 : vector<16x64xf32>
    %cst_142 = arith.constant dense<0.000000e+00> : vector<16xf32>
    %343 = vector.multi_reduction <add>, %342, %cst_142 [1] : vector<16x64xf32> to vector<16xf32>
    %344 = vector.shape_cast %343 : vector<16xf32> to vector<16x1xf32>
    %cst_143 = arith.constant 6.400000e+01 : f32
    %345 = vector.broadcast %cst_143 : f32 to vector<16x1xf32>
    %346 = arith.divf %344, %345 : vector<16x1xf32>
    %347 = vector.broadcast %339 : vector<16x1xf32> to vector<16x64xf32>
    %348 = arith.subf %331, %347 : vector<16x64xf32>
    %cst_144 = arith.constant 9.99999974E-6 : f32
    %349 = vector.broadcast %cst_144 : f32 to vector<16x1xf32>
    %350 = arith.addf %346, %349 : vector<16x1xf32>
    %351 = math.rsqrt %350 : vector<16x1xf32>
    %352 = vector.broadcast %351 : vector<16x1xf32> to vector<16x64xf32>
    %353 = arith.mulf %348, %352 : vector<16x64xf32>
    %354 = vector.broadcast %333 : vector<1x64xf32> to vector<16x64xf32>
    %355 = arith.mulf %353, %354 : vector<16x64xf32>
    %356 = vector.broadcast %335 : vector<1x64xf32> to vector<16x64xf32>
    %357 = arith.addf %355, %356 : vector<16x64xf32>
    %358 = arith.truncf %357 : vector<16x64xf32> to vector<16x64xbf16>
    %c2_145 = arith.constant 2 : index
    %c0_146 = arith.constant 0 : index
    %c0_147 = arith.constant 0 : index
    %359 = vector.load %arg5[%c2_145, %c0_146, %c0_147] : memref<3x64x1536xbf16, #tpu.memory_space<vmem>>, vector<1x64x1536xbf16>
    %360 = vector.shape_cast %359 : vector<1x64x1536xbf16> to vector<64x1536xbf16>
    %cst_148 = arith.constant dense<0.000000e+00> : vector<16x1536xf32>
    %361 = tpu.matmul %358, %360, %cst_148 {dimension_numbers = #tpu.dot_dimension_numbers<[1], [0], [0], [1], [0, 0, 1, 1], [], []>} : vector<16x64xbf16>, vector<64x1536xbf16>, vector<16x1536xf32> -> vector<16x1536xf32>
    %c2_149 = arith.constant 2 : index
    %c0_150 = arith.constant 0 : index
    %c0_151 = arith.constant 0 : index
    %362 = vector.load %arg6[%c2_149, %c0_150, %c0_151] : memref<3x1x1536xf32, #tpu.memory_space<vmem>>, vector<1x1x1536xf32>
    %363 = vector.shape_cast %362 : vector<1x1x1536xf32> to vector<1x1536xf32>
    %364 = vector.broadcast %363 : vector<1x1536xf32> to vector<16x1536xf32>
    %365 = arith.addf %361, %364 : vector<16x1536xf32>
    %366 = vector.extract_strided_slice %365 {offsets = [0, 0], sizes = [16, 16], strides = [1, 1]} : vector<16x1536xf32> to vector<16x16xf32>
    %367 = vector.extract_strided_slice %365 {offsets = [0, 128], sizes = [16, 16], strides = [1, 1]} : vector<16x1536xf32> to vector<16x16xf32>
    %368 = vector.extract_strided_slice %365 {offsets = [0, 256], sizes = [16, 16], strides = [1, 1]} : vector<16x1536xf32> to vector<16x16xf32>
    %369 = vector.extract_strided_slice %365 {offsets = [0, 384], sizes = [16, 16], strides = [1, 1]} : vector<16x1536xf32> to vector<16x16xf32>
    %370 = vector.shape_cast %366 : vector<16x16xf32> to vector<1x16x16xf32>
    %371 = vector.shape_cast %367 : vector<16x16xf32> to vector<1x16x16xf32>
    %372 = vector.shape_cast %368 : vector<16x16xf32> to vector<1x16x16xf32>
    %373 = vector.shape_cast %369 : vector<16x16xf32> to vector<1x16x16xf32>
    %374 = tpu.concatenate %370, %371, %372, %373 in 0 : vector<1x16x16xf32>, vector<1x16x16xf32>, vector<1x16x16xf32>, vector<1x16x16xf32> -> vector<4x16x16xf32>
    %375 = vector.shape_cast %374 : vector<4x16x16xf32> to vector<8x8x16xf32>
    %376 = vector.extract_strided_slice %365 {offsets = [0, 512], sizes = [16, 16], strides = [1, 1]} : vector<16x1536xf32> to vector<16x16xf32>
    %377 = vector.extract_strided_slice %365 {offsets = [0, 640], sizes = [16, 16], strides = [1, 1]} : vector<16x1536xf32> to vector<16x16xf32>
    %378 = vector.extract_strided_slice %365 {offsets = [0, 768], sizes = [16, 16], strides = [1, 1]} : vector<16x1536xf32> to vector<16x16xf32>
    %379 = vector.extract_strided_slice %365 {offsets = [0, 896], sizes = [16, 16], strides = [1, 1]} : vector<16x1536xf32> to vector<16x16xf32>
    %380 = vector.shape_cast %376 : vector<16x16xf32> to vector<1x16x16xf32>
    %381 = vector.shape_cast %377 : vector<16x16xf32> to vector<1x16x16xf32>
    %382 = vector.shape_cast %378 : vector<16x16xf32> to vector<1x16x16xf32>
    %383 = vector.shape_cast %379 : vector<16x16xf32> to vector<1x16x16xf32>
    %384 = tpu.concatenate %380, %381, %382, %383 in 0 : vector<1x16x16xf32>, vector<1x16x16xf32>, vector<1x16x16xf32>, vector<1x16x16xf32> -> vector<4x16x16xf32>
    %385 = vector.shape_cast %384 : vector<4x16x16xf32> to vector<8x8x16xf32>
    %386 = vector.extract_strided_slice %365 {offsets = [0, 1024], sizes = [16, 16], strides = [1, 1]} : vector<16x1536xf32> to vector<16x16xf32>
    %387 = vector.extract_strided_slice %365 {offsets = [0, 1152], sizes = [16, 16], strides = [1, 1]} : vector<16x1536xf32> to vector<16x16xf32>
    %388 = vector.extract_strided_slice %365 {offsets = [0, 1280], sizes = [16, 16], strides = [1, 1]} : vector<16x1536xf32> to vector<16x16xf32>
    %389 = vector.extract_strided_slice %365 {offsets = [0, 1408], sizes = [16, 16], strides = [1, 1]} : vector<16x1536xf32> to vector<16x16xf32>
    %390 = vector.shape_cast %386 : vector<16x16xf32> to vector<1x16x16xf32>
    %391 = vector.shape_cast %387 : vector<16x16xf32> to vector<1x16x16xf32>
    %392 = vector.shape_cast %388 : vector<16x16xf32> to vector<1x16x16xf32>
    %393 = vector.shape_cast %389 : vector<16x16xf32> to vector<1x16x16xf32>
    %394 = tpu.concatenate %390, %391, %392, %393 in 0 : vector<1x16x16xf32>, vector<1x16x16xf32>, vector<1x16x16xf32>, vector<1x16x16xf32> -> vector<4x16x16xf32>
    %395 = vector.shape_cast %394 : vector<4x16x16xf32> to vector<8x8x16xf32>
    %396 = arith.truncf %375 : vector<8x8x16xf32> to vector<8x8x16xbf16>
    %397 = arith.truncf %385 : vector<8x8x16xf32> to vector<8x8x16xbf16>
    "tpu.trace_start"() <{level = 10 : i32, message = "bqd,bkd->bqk"}> : () -> ()
    %cst_152 = arith.constant dense<0.000000e+00> : vector<8x8x8xf32>
    %398 = tpu.matmul %396, %397, %cst_152 {dimension_numbers = #tpu.dot_dimension_numbers<[2], [2], [1], [1], [0, 0, 0, 1, 1, 1], [0], [0]>} : vector<8x8x16xbf16>, vector<8x8x16xbf16>, vector<8x8x8xf32> -> vector<8x8x8xf32>
    "tpu.trace_stop"() : () -> ()
    %cst_153 = arith.constant 2.500000e-01 : f32
    %399 = vector.broadcast %cst_153 : f32 to vector<8x8x8xf32>
    %400 = arith.mulf %398, %399 : vector<8x8x8xf32>
    %cst_154 = arith.constant dense<0xFF800000> : vector<8x8xf32>
    %401 = vector.multi_reduction <maximumf>, %400, %cst_154 [2] : vector<8x8x8xf32> to vector<8x8xf32>
    %402 = vector.shape_cast %401 : vector<8x8xf32> to vector<8x8x1xf32>
    %403 = vector.broadcast %402 : vector<8x8x1xf32> to vector<8x8x8xf32>
    %404 = arith.subf %400, %403 : vector<8x8x8xf32>
    %405 = math.exp %404 : vector<8x8x8xf32>
    %cst_155 = arith.constant dense<0.000000e+00> : vector<8x8xf32>
    %406 = vector.multi_reduction <add>, %405, %cst_155 [2] : vector<8x8x8xf32> to vector<8x8xf32>
    %407 = vector.shape_cast %406 : vector<8x8xf32> to vector<8x8x1xf32>
    %408 = tpu.reciprocal %407 {approx = true} : vector<8x8x1xf32> -> vector<8x8x1xf32>
    %409 = vector.broadcast %408 : vector<8x8x1xf32> to vector<8x8x8xf32>
    %410 = arith.mulf %405, %409 : vector<8x8x8xf32>
    %411 = arith.truncf %410 : vector<8x8x8xf32> to vector<8x8x8xbf16>
    %412 = arith.truncf %395 : vector<8x8x16xf32> to vector<8x8x16xbf16>
    "tpu.trace_start"() <{level = 10 : i32, message = "bqk,bkd->bqd"}> : () -> ()
    %cst_156 = arith.constant dense<0.000000e+00> : vector<8x8x16xf32>
    %413 = tpu.matmul %411, %412, %cst_156 {dimension_numbers = #tpu.dot_dimension_numbers<[2], [1], [1], [2], [0, 0, 0, 1, 1, 2], [0], [0]>} : vector<8x8x8xbf16>, vector<8x8x16xbf16>, vector<8x8x16xf32> -> vector<8x8x16xf32>
    "tpu.trace_stop"() : () -> ()
    %414 = vector.shape_cast %413 : vector<8x8x16xf32> to vector<4x16x16xf32>
    %c2_157 = arith.constant 2 : index
    %c0_158 = arith.constant 0 : index
    %c0_159 = arith.constant 0 : index
    %415 = vector.load %arg8[%c2_157, %c0_158, %c0_159] : memref<3x1x64xf32, #tpu.memory_space<vmem>>, vector<1x1x64xf32>
    %416 = vector.shape_cast %415 : vector<1x1x64xf32> to vector<1x64xf32>
    %417 = vector.extract_strided_slice %414 {offsets = [0, 0, 0], sizes = [1, 16, 16], strides = [1, 1, 1]} : vector<4x16x16xf32> to vector<1x16x16xf32>
    %418 = vector.shape_cast %417 : vector<1x16x16xf32> to vector<16x16xf32>
    %419 = arith.truncf %418 : vector<16x16xf32> to vector<16x16xbf16>
    %c8 = arith.constant 8 : index
    %c0_160 = arith.constant 0 : index
    %c0_161 = arith.constant 0 : index
    %420 = vector.load %arg7[%c8, %c0_160, %c0_161] : memref<12x16x64xbf16, #tpu.memory_space<vmem>>, vector<1x16x64xbf16>
    %421 = vector.shape_cast %420 : vector<1x16x64xbf16> to vector<16x64xbf16>
    %cst_162 = arith.constant dense<0.000000e+00> : vector<16x64xf32>
    %422 = tpu.matmul %419, %421, %cst_162 {dimension_numbers = #tpu.dot_dimension_numbers<[1], [0], [0], [1], [0, 0, 1, 1], [], []>} : vector<16x16xbf16>, vector<16x64xbf16>, vector<16x64xf32> -> vector<16x64xf32>
    %423 = vector.broadcast %416 : vector<1x64xf32> to vector<16x64xf32>
    %424 = arith.addf %423, %422 : vector<16x64xf32>
    %425 = vector.extract_strided_slice %414 {offsets = [1, 0, 0], sizes = [1, 16, 16], strides = [1, 1, 1]} : vector<4x16x16xf32> to vector<1x16x16xf32>
    %426 = vector.shape_cast %425 : vector<1x16x16xf32> to vector<16x16xf32>
    %427 = arith.truncf %426 : vector<16x16xf32> to vector<16x16xbf16>
    %c9 = arith.constant 9 : index
    %c0_163 = arith.constant 0 : index
    %c0_164 = arith.constant 0 : index
    %428 = vector.load %arg7[%c9, %c0_163, %c0_164] : memref<12x16x64xbf16, #tpu.memory_space<vmem>>, vector<1x16x64xbf16>
    %429 = vector.shape_cast %428 : vector<1x16x64xbf16> to vector<16x64xbf16>
    %cst_165 = arith.constant dense<0.000000e+00> : vector<16x64xf32>
    %430 = tpu.matmul %427, %429, %cst_165 {dimension_numbers = #tpu.dot_dimension_numbers<[1], [0], [0], [1], [0, 0, 1, 1], [], []>} : vector<16x16xbf16>, vector<16x64xbf16>, vector<16x64xf32> -> vector<16x64xf32>
    %431 = arith.addf %424, %430 : vector<16x64xf32>
    %432 = vector.extract_strided_slice %414 {offsets = [2, 0, 0], sizes = [1, 16, 16], strides = [1, 1, 1]} : vector<4x16x16xf32> to vector<1x16x16xf32>
    %433 = vector.shape_cast %432 : vector<1x16x16xf32> to vector<16x16xf32>
    %434 = arith.truncf %433 : vector<16x16xf32> to vector<16x16xbf16>
    %c10 = arith.constant 10 : index
    %c0_166 = arith.constant 0 : index
    %c0_167 = arith.constant 0 : index
    %435 = vector.load %arg7[%c10, %c0_166, %c0_167] : memref<12x16x64xbf16, #tpu.memory_space<vmem>>, vector<1x16x64xbf16>
    %436 = vector.shape_cast %435 : vector<1x16x64xbf16> to vector<16x64xbf16>
    %cst_168 = arith.constant dense<0.000000e+00> : vector<16x64xf32>
    %437 = tpu.matmul %434, %436, %cst_168 {dimension_numbers = #tpu.dot_dimension_numbers<[1], [0], [0], [1], [0, 0, 1, 1], [], []>} : vector<16x16xbf16>, vector<16x64xbf16>, vector<16x64xf32> -> vector<16x64xf32>
    %438 = arith.addf %431, %437 : vector<16x64xf32>
    %439 = vector.extract_strided_slice %414 {offsets = [3, 0, 0], sizes = [1, 16, 16], strides = [1, 1, 1]} : vector<4x16x16xf32> to vector<1x16x16xf32>
    %440 = vector.shape_cast %439 : vector<1x16x16xf32> to vector<16x16xf32>
    %441 = arith.truncf %440 : vector<16x16xf32> to vector<16x16xbf16>
    %c11 = arith.constant 11 : index
    %c0_169 = arith.constant 0 : index
    %c0_170 = arith.constant 0 : index
    %442 = vector.load %arg7[%c11, %c0_169, %c0_170] : memref<12x16x64xbf16, #tpu.memory_space<vmem>>, vector<1x16x64xbf16>
    %443 = vector.shape_cast %442 : vector<1x16x64xbf16> to vector<16x64xbf16>
    %cst_171 = arith.constant dense<0.000000e+00> : vector<16x64xf32>
    %444 = tpu.matmul %441, %443, %cst_171 {dimension_numbers = #tpu.dot_dimension_numbers<[1], [0], [0], [1], [0, 0, 1, 1], [], []>} : vector<16x16xbf16>, vector<16x64xbf16>, vector<16x64xf32> -> vector<16x64xf32>
    %445 = arith.addf %438, %444 : vector<16x64xf32>
    %446 = arith.addf %331, %445 : vector<16x64xf32>
    %c2_172 = arith.constant 2 : index
    %c0_173 = arith.constant 0 : index
    %c0_174 = arith.constant 0 : index
    %447 = vector.load %arg9[%c2_172, %c0_173, %c0_174] : memref<3x1x64xf32, #tpu.memory_space<vmem>>, vector<1x1x64xf32>
    %448 = vector.shape_cast %447 : vector<1x1x64xf32> to vector<1x64xf32>
    %c2_175 = arith.constant 2 : index
    %c0_176 = arith.constant 0 : index
    %c0_177 = arith.constant 0 : index
    %449 = vector.load %arg10[%c2_175, %c0_176, %c0_177] : memref<3x1x64xf32, #tpu.memory_space<vmem>>, vector<1x1x64xf32>
    %450 = vector.shape_cast %449 : vector<1x1x64xf32> to vector<1x64xf32>
    %cst_178 = arith.constant dense<0.000000e+00> : vector<16xf32>
    %451 = vector.multi_reduction <add>, %446, %cst_178 [1] : vector<16x64xf32> to vector<16xf32>
    %452 = vector.shape_cast %451 : vector<16xf32> to vector<16x1xf32>
    %cst_179 = arith.constant 6.400000e+01 : f32
    %453 = vector.broadcast %cst_179 : f32 to vector<16x1xf32>
    %454 = arith.divf %452, %453 : vector<16x1xf32>
    %455 = vector.broadcast %454 : vector<16x1xf32> to vector<16x64xf32>
    %456 = arith.subf %446, %455 : vector<16x64xf32>
    %457 = arith.mulf %456, %456 : vector<16x64xf32>
    %cst_180 = arith.constant dense<0.000000e+00> : vector<16xf32>
    %458 = vector.multi_reduction <add>, %457, %cst_180 [1] : vector<16x64xf32> to vector<16xf32>
    %459 = vector.shape_cast %458 : vector<16xf32> to vector<16x1xf32>
    %cst_181 = arith.constant 6.400000e+01 : f32
    %460 = vector.broadcast %cst_181 : f32 to vector<16x1xf32>
    %461 = arith.divf %459, %460 : vector<16x1xf32>
    %462 = vector.broadcast %454 : vector<16x1xf32> to vector<16x64xf32>
    %463 = arith.subf %446, %462 : vector<16x64xf32>
    %cst_182 = arith.constant 9.99999974E-6 : f32
    %464 = vector.broadcast %cst_182 : f32 to vector<16x1xf32>
    %465 = arith.addf %461, %464 : vector<16x1xf32>
    %466 = math.rsqrt %465 : vector<16x1xf32>
    %467 = vector.broadcast %466 : vector<16x1xf32> to vector<16x64xf32>
    %468 = arith.mulf %463, %467 : vector<16x64xf32>
    %469 = vector.broadcast %448 : vector<1x64xf32> to vector<16x64xf32>
    %470 = arith.mulf %468, %469 : vector<16x64xf32>
    %471 = vector.broadcast %450 : vector<1x64xf32> to vector<16x64xf32>
    %472 = arith.addf %470, %471 : vector<16x64xf32>
    %473 = arith.truncf %472 : vector<16x64xf32> to vector<16x64xbf16>
    %c2_183 = arith.constant 2 : index
    %c0_184 = arith.constant 0 : index
    %c0_185 = arith.constant 0 : index
    %474 = vector.load %arg11[%c2_183, %c0_184, %c0_185] : memref<3x64x256xbf16, #tpu.memory_space<vmem>>, vector<1x64x256xbf16>
    %475 = vector.shape_cast %474 : vector<1x64x256xbf16> to vector<64x256xbf16>
    %cst_186 = arith.constant dense<0.000000e+00> : vector<16x256xf32>
    %476 = tpu.matmul %473, %475, %cst_186 {dimension_numbers = #tpu.dot_dimension_numbers<[1], [0], [0], [1], [0, 0, 1, 1], [], []>} : vector<16x64xbf16>, vector<64x256xbf16>, vector<16x256xf32> -> vector<16x256xf32>
    %c2_187 = arith.constant 2 : index
    %c0_188 = arith.constant 0 : index
    %c0_189 = arith.constant 0 : index
    %477 = vector.load %arg12[%c2_187, %c0_188, %c0_189] : memref<3x1x256xf32, #tpu.memory_space<vmem>>, vector<1x1x256xf32>
    %478 = vector.shape_cast %477 : vector<1x1x256xf32> to vector<1x256xf32>
    %479 = vector.broadcast %478 : vector<1x256xf32> to vector<16x256xf32>
    %480 = arith.addf %476, %479 : vector<16x256xf32>
    %cst_190 = arith.constant 0.000000e+00 : f32
    %481 = vector.broadcast %cst_190 : f32 to vector<16x256xf32>
    %482 = arith.maximumf %480, %481 : vector<16x256xf32>
    %483 = arith.truncf %482 : vector<16x256xf32> to vector<16x256xbf16>
    %c2_191 = arith.constant 2 : index
    %c0_192 = arith.constant 0 : index
    %c0_193 = arith.constant 0 : index
    %484 = vector.load %arg13[%c2_191, %c0_192, %c0_193] : memref<3x256x64xbf16, #tpu.memory_space<vmem>>, vector<1x256x64xbf16>
    %485 = vector.shape_cast %484 : vector<1x256x64xbf16> to vector<256x64xbf16>
    %cst_194 = arith.constant dense<0.000000e+00> : vector<16x64xf32>
    %486 = tpu.matmul %483, %485, %cst_194 {dimension_numbers = #tpu.dot_dimension_numbers<[1], [0], [0], [1], [0, 0, 1, 1], [], []>} : vector<16x256xbf16>, vector<256x64xbf16>, vector<16x64xf32> -> vector<16x64xf32>
    %487 = arith.addf %446, %486 : vector<16x64xf32>
    %c2_195 = arith.constant 2 : index
    %c0_196 = arith.constant 0 : index
    %c0_197 = arith.constant 0 : index
    %488 = vector.load %arg14[%c2_195, %c0_196, %c0_197] : memref<3x1x64xf32, #tpu.memory_space<vmem>>, vector<1x1x64xf32>
    %489 = vector.shape_cast %488 : vector<1x1x64xf32> to vector<1x64xf32>
    %490 = vector.broadcast %489 : vector<1x64xf32> to vector<16x64xf32>
    %491 = arith.addf %487, %490 : vector<16x64xf32>
    %c0_198 = arith.constant 0 : index
    %c0_199 = arith.constant 0 : index
    %492 = vector.load %arg15[%c0_198, %c0_199] : memref<1x64xf32, #tpu.memory_space<vmem>>, vector<1x64xf32>
    %c0_200 = arith.constant 0 : index
    %c0_201 = arith.constant 0 : index
    %493 = vector.load %arg16[%c0_200, %c0_201] : memref<1x64xf32, #tpu.memory_space<vmem>>, vector<1x64xf32>
    %cst_202 = arith.constant dense<0.000000e+00> : vector<16xf32>
    %494 = vector.multi_reduction <add>, %491, %cst_202 [1] : vector<16x64xf32> to vector<16xf32>
    %495 = vector.shape_cast %494 : vector<16xf32> to vector<16x1xf32>
    %cst_203 = arith.constant 6.400000e+01 : f32
    %496 = vector.broadcast %cst_203 : f32 to vector<16x1xf32>
    %497 = arith.divf %495, %496 : vector<16x1xf32>
    %498 = vector.broadcast %497 : vector<16x1xf32> to vector<16x64xf32>
    %499 = arith.subf %491, %498 : vector<16x64xf32>
    %500 = arith.mulf %499, %499 : vector<16x64xf32>
    %cst_204 = arith.constant dense<0.000000e+00> : vector<16xf32>
    %501 = vector.multi_reduction <add>, %500, %cst_204 [1] : vector<16x64xf32> to vector<16xf32>
    %502 = vector.shape_cast %501 : vector<16xf32> to vector<16x1xf32>
    %cst_205 = arith.constant 6.400000e+01 : f32
    %503 = vector.broadcast %cst_205 : f32 to vector<16x1xf32>
    %504 = arith.divf %502, %503 : vector<16x1xf32>
    %505 = vector.broadcast %497 : vector<16x1xf32> to vector<16x64xf32>
    %506 = arith.subf %491, %505 : vector<16x64xf32>
    %cst_206 = arith.constant 9.99999974E-6 : f32
    %507 = vector.broadcast %cst_206 : f32 to vector<16x1xf32>
    %508 = arith.addf %504, %507 : vector<16x1xf32>
    %509 = math.rsqrt %508 : vector<16x1xf32>
    %510 = vector.broadcast %509 : vector<16x1xf32> to vector<16x64xf32>
    %511 = arith.mulf %506, %510 : vector<16x64xf32>
    %512 = vector.broadcast %492 : vector<1x64xf32> to vector<16x64xf32>
    %513 = arith.mulf %511, %512 : vector<16x64xf32>
    %514 = vector.broadcast %493 : vector<1x64xf32> to vector<16x64xf32>
    %515 = arith.addf %513, %514 : vector<16x64xf32>
    %516 = arith.truncf %515 : vector<16x64xf32> to vector<16x64xbf16>
    %c0_207 = arith.constant 0 : index
    %c0_208 = arith.constant 0 : index
    %517 = vector.load %arg17[%c0_207, %c0_208] : memref<64x128xbf16, #tpu.memory_space<vmem>>, vector<64x128xbf16>
    %cst_209 = arith.constant dense<0.000000e+00> : vector<16x128xf32>
    %518 = tpu.matmul %516, %517, %cst_209 {dimension_numbers = #tpu.dot_dimension_numbers<[1], [0], [0], [1], [0, 0, 1, 1], [], []>} : vector<16x64xbf16>, vector<64x128xbf16>, vector<16x128xf32> -> vector<16x128xf32>
    %c0_210 = arith.constant 0 : index
    %c0_211 = arith.constant 0 : index
    %519 = vector.load %arg18[%c0_210, %c0_211] : memref<1x128xf32, #tpu.memory_space<vmem>>, vector<1x128xf32>
    %520 = vector.broadcast %519 : vector<1x128xf32> to vector<16x128xf32>
    %521 = arith.addf %518, %520 : vector<16x128xf32>
    %522 = vector.shape_cast %521 : vector<16x128xf32> to vector<2x8x128xf32>
    %c0_212 = arith.constant 0 : index
    %c0_213 = arith.constant 0 : index
    %c0_214 = arith.constant 0 : index
    %523 = vector.load %arg19[%c0_212, %c0_213, %c0_214] : memref<2x8x128xf32, #tpu.memory_space<vmem>>, vector<2x8x128xf32>
    tpu.vector_store %arg19[%c0_212, %c0_213, %c0_214], %522 {strides = array<i32>} : memref<2x8x128xf32, #tpu.memory_space<vmem>>, vector<2x8x128xf32>,
    return
  }
}

</mosaic_0001>

<llo_original>
// kernel: tiny_transformer_forward.1
$region0: #{tiny_transformer_forward.1}
  #allocation0 [shape = 'u32[]', space=smem, size = 0x4, offset = 0x4, fixed_abs, tag = 'smem constant byte address 0x4 - core index']
  #allocation1 [shape = 'u32[144,128]{1,0:T(1,128)}', space=vmem, size = 0x12000, scoped, tag = 'internal scratch']
  %s0 = inlined_call_operand.vmem [shape: s32[16,1], index: 0, kind: input, shape index: {}]
  %s1 = inlined_call_operand.vmem [shape: s32[16,1], index: 1, kind: input, shape index: {}]
  %s2 = inlined_call_operand.vmem [shape: f32[128,64], index: 2, kind: input, shape index: {}]
  %s3 = inlined_call_operand.vmem [shape: f32[3,1,64], index: 3, kind: input, shape index: {}]
  %s4 = inlined_call_operand.vmem [shape: f32[3,1,64], index: 4, kind: input, shape index: {}]
  %s5 = inlined_call_operand.hbm [shape: bf16[3,64,1536], index: 5, kind: input, shape index: {}]
  %s6 = inlined_call_operand.vmem [shape: f32[3,1,1536], index: 6, kind: input, shape index: {}]
  %s7 = inlined_call_operand.vmem [shape: bf16[12,16,64], index: 7, kind: input, shape index: {}]
  %s8 = inlined_call_operand.vmem [shape: f32[3,1,64], index: 8, kind: input, shape index: {}]
  %s9 = inlined_call_operand.vmem [shape: f32[3,1,64], index: 9, kind: input, shape index: {}]
  %s10 = inlined_call_operand.vmem [shape: f32[3,1,64], index: 10, kind: input, shape index: {}]
  %s11 = inlined_call_operand.vmem [shape: bf16[3,64,256], index: 11, kind: input, shape index: {}]
  %s12 = inlined_call_operand.vmem [shape: f32[3,1,256], index: 12, kind: input, shape index: {}]
  %s13 = inlined_call_operand.vmem [shape: bf16[3,256,64], index: 13, kind: input, shape index: {}]
  %s14 = inlined_call_operand.vmem [shape: f32[3,1,64], index: 14, kind: input, shape index: {}]
  %s15 = inlined_call_operand.vmem [shape: f32[1,64], index: 15, kind: input, shape index: {}]
  %s16 = inlined_call_operand.vmem [shape: f32[1,64], index: 16, kind: input, shape index: {}]
  %s17 = inlined_call_operand.vmem [shape: bf16[64,128], index: 17, kind: input, shape index: {}]
  %s18 = inlined_call_operand.vmem [shape: f32[1,128], index: 18, kind: input, shape index: {}]
  %s19 = inlined_call_operand.hbm [shape: f32[2,8,128], index: 19, kind: output, shape index: {}]
  %s20 = sld [smem:[#allocation0]]
  $region90: #{tiny_transformer_forward.1} parent=0
    _
  %s22 = ssub.s32 1, %s20
  %s23 = scalar_select 0, %s22, %s20
  $region1: #{tiny_transformer_forward.1} parent=0
    #allocation2 [shape = 'u8[589824]{0}', space=vmem, size = 0x90000, scoped, tag = 'input window, operand 5, single buffered']
    #allocation3 [shape = 's32[1]{0}', space=sflag, size = 0x4, scoped, tag = 'scoped memory for tiny_transformer_forward.1']
    #allocation4 [shape = 's32[1]{0}', space=sflag, size = 0x4, scoped, tag = 'scoped memory for tiny_transformer_forward.1']
    #allocation5 [shape = 'u8[8192]{0}', space=vmem, size = 0x2000, scoped, tag = 'output window, operand 0, single buffered']
    %24 = vsyncpa [#allocation3], 0
    %25 = vsyncpa [#allocation4], 0
    // Predicated region
    $region2: #{tiny_transformer_forward.1} parent=1 // pred_check
      _
    $region3: #{tiny_transformer_forward.1} parent=1 // pred_check_branch
      %27 = sbr.rel (0) target = $region5
    $region4: #{tiny_transformer_forward.1} parent=1 // pred_region
      _
    $region5: #{tiny_transformer_forward.1} parent=1 // pred_fallthru
      _
    // Predicated region
    $region6: #{tiny_transformer_forward.1} parent=1 // pred_check
      _
    $region7: #{tiny_transformer_forward.1} parent=1 // pred_check_branch
      %29 = sbr.rel (0) target = $region9
    $region8: #{tiny_transformer_forward.1} parent=1 // pred_region
      _
    $region9: #{tiny_transformer_forward.1} parent=1 // pred_fallthru
      _
    // Predicated region
    $region10: #{tiny_transformer_forward.1} parent=1 // pred_check
      _
    $region11: #{tiny_transformer_forward.1} parent=1 // pred_check_branch
      %31 = sbr.rel (0) target = $region13
    $region12: #{tiny_transformer_forward.1} parent=1 // pred_region
      _
    $region13: #{tiny_transformer_forward.1} parent=1 // pred_fallthru
      _
    // Predicated region
    $region14: #{tiny_transformer_forward.1} parent=1 // pred_check
      _
    $region15: #{tiny_transformer_forward.1} parent=1 // pred_check_branch
      %33 = sbr.rel (0) target = $region17
    $region16: #{tiny_transformer_forward.1} parent=1 // pred_region
      _
    $region17: #{tiny_transformer_forward.1} parent=1 // pred_fallthru
      _
    // Predicated region
    $region18: #{tiny_transformer_forward.1} parent=1 // pred_check
      _
    $region19: #{tiny_transformer_forward.1} parent=1 // pred_check_branch
      %35 = sbr.rel (0) target = $region21
    $region20: #{tiny_transformer_forward.1} parent=1 // pred_region
      _
    $region21: #{tiny_transformer_forward.1} parent=1 // pred_fallthru
      _
    // Predicated region
    $region22: #{tiny_transformer_forward.1} parent=1 // pred_check
      _
    $region23: #{tiny_transformer_forward.1} parent=1 // pred_check_branch
      %37 = sbr.rel (0) target = $region25
    $region24: #{tiny_transformer_forward.1} parent=1 // pred_region
      %s39 = ssub.s32 18432, 18432
      %40 = vsyncadd [#allocation3], %s39
      %s41 = sshll.u32 [#allocation2], 4
      %s42 = int_to_ptr.vmem [resolvable:$true] %s41
      %47 = dma.hbm_to_vmem [thread:$0]  %s5, 18432, %s42, [#allocation3], 768, 768, 48
    $region25: #{tiny_transformer_forward.1} parent=1 // pred_fallthru
      _
    // Predicated region
    $region26: #{tiny_transformer_forward.1} parent=1 // pred_check
      _
    $region27: #{tiny_transformer_forward.1} parent=1 // pred_check_branch
      %49 = sbr.rel (0) target = $region29
    $region28: #{tiny_transformer_forward.1} parent=1 // pred_region
      _
    $region29: #{tiny_transformer_forward.1} parent=1 // pred_fallthru
      _
    // Predicated region
    $region30: #{tiny_transformer_forward.1} parent=1 // pred_check
      _
    $region31: #{tiny_transformer_forward.1} parent=1 // pred_check_branch
      %51 = sbr.rel (0) target = $region33
    $region32: #{tiny_transformer_forward.1} parent=1 // pred_region
      _
    $region33: #{tiny_transformer_forward.1} parent=1 // pred_fallthru
      _
    // Predicated region
    $region34: #{tiny_transformer_forward.1} parent=1 // pred_check
      _
    $region35: #{tiny_transformer_forward.1} parent=1 // pred_check_branch
      %53 = sbr.rel (0) target = $region37
    $region36: #{tiny_transformer_forward.1} parent=1 // pred_region
      _
    $region37: #{tiny_transformer_forward.1} parent=1 // pred_fallthru
      _
    // Predicated region
    $region38: #{tiny_transformer_forward.1} parent=1 // pred_check
      _
    $region39: #{tiny_transformer_forward.1} parent=1 // pred_check_branch
      %55 = sbr.rel (0) target = $region41
    $region40: #{tiny_transformer_forward.1} parent=1 // pred_region
      _
    $region41: #{tiny_transformer_forward.1} parent=1 // pred_fallthru
      _
    // Predicated region
    $region42: #{tiny_transformer_forward.1} parent=1 // pred_check
      _
    $region43: #{tiny_transformer_forward.1} parent=1 // pred_check_branch
      %57 = sbr.rel (0) target = $region45
    $region44: #{tiny_transformer_forward.1} parent=1 // pred_region
      _
    $region45: #{tiny_transformer_forward.1} parent=1 // pred_fallthru
      _
    // Predicated region
    $region46: #{tiny_transformer_forward.1} parent=1 // pred_check
      _
    $region47: #{tiny_transformer_forward.1} parent=1 // pred_check_branch
      %59 = sbr.rel (0) target = $region49
    $region48: #{tiny_transformer_forward.1} parent=1 // pred_region
      _
    $region49: #{tiny_transformer_forward.1} parent=1 // pred_fallthru
      _
    // Predicated region
    $region50: #{tiny_transformer_forward.1} parent=1 // pred_check
      _
    $region51: #{tiny_transformer_forward.1} parent=1 // pred_check_branch
      %61 = sbr.rel (0) target = $region53
    $region52: #{tiny_transformer_forward.1} parent=1 // pred_region
      _
    $region53: #{tiny_transformer_forward.1} parent=1 // pred_fallthru
      _
    // Predicated region
    $region54: #{tiny_transformer_forward.1} parent=1 // pred_check
      _
    $region55: #{tiny_transformer_forward.1} parent=1 // pred_check_branch
      %63 = sbr.rel (0) target = $region57
    $region56: #{tiny_transformer_forward.1} parent=1 // pred_region
      _
    $region57: #{tiny_transformer_forward.1} parent=1 // pred_fallthru
      _
    // Predicated region
    $region58: #{tiny_transformer_forward.1} parent=1 // pred_check
      _
    $region59: #{tiny_transformer_forward.1} parent=1 // pred_check_branch
      %65 = sbr.rel (0) target = $region61
    $region60: #{tiny_transformer_forward.1} parent=1 // pred_region
      _
    $region61: #{tiny_transformer_forward.1} parent=1 // pred_fallthru
      _
    // Predicated region
    $region62: #{tiny_transformer_forward.1} parent=1 // pred_check
      _
    $region63: #{tiny_transformer_forward.1} parent=1 // pred_check_branch
      %67 = sbr.rel (0) target = $region65
    $region64: #{tiny_transformer_forward.1} parent=1 // pred_region
      _
    $region65: #{tiny_transformer_forward.1} parent=1 // pred_fallthru
      _
    // Predicated region
    $region66: #{tiny_transformer_forward.1} parent=1 // pred_check
      _
    $region67: #{tiny_transformer_forward.1} parent=1 // pred_check_branch
      %69 = sbr.rel (0) target = $region69
    $region68: #{tiny_transformer_forward.1} parent=1 // pred_region
      _
    $region69: #{tiny_transformer_forward.1} parent=1 // pred_fallthru
      _
    // Predicated region
    $region70: #{tiny_transformer_forward.1} parent=1 // pred_check
      _
    $region71: #{tiny_transformer_forward.1} parent=1 // pred_check_branch
      %71 = sbr.rel (0) target = $region73
    $region72: #{tiny_transformer_forward.1} parent=1 // pred_region
      _
    $region73: #{tiny_transformer_forward.1} parent=1 // pred_fallthru
      _
    // Predicated region
    $region74: #{tiny_transformer_forward.1} parent=1 // pred_check
      _
    $region75: #{tiny_transformer_forward.1} parent=1 // pred_check_branch
      %73 = sbr.rel (0) target = $region77
    $region76: #{tiny_transformer_forward.1} parent=1 // pred_region
      _
    $region77: #{tiny_transformer_forward.1} parent=1 // pred_fallthru
      _
    // Predicated region
    $region78: #{tiny_transformer_forward.1} parent=1 // pred_check
      _
    $region79: #{tiny_transformer_forward.1} parent=1 // pred_check_branch
      %75 = sbr.rel (0) target = $region81
    $region80: #{tiny_transformer_forward.1} parent=1 // pred_region
      %76 = dma.done [#allocation3], 18432
    $region81: #{tiny_transformer_forward.1} parent=1 // pred_fallthru
      _
    %v78 = vld [vmem:[%s0] sm:$0xff]
    %v79 = vld [vmem:[%s0 + $0x8] sm:$0xff]
    %v80 = vld [vmem:[%s1] sm:$0xff]
    %v81 = vld [vmem:[%s1 + $0x8] sm:$0xff]
    %v82 = vlaneseq
    %v83 = vand.u32 %v82, 127
    %84 = vset.pattern.permute.xlu0 0
    %85 = vperm.xlu0 %84, %v78
    %v86 = vpop.permute.xlu0 %85
    %87 = vset.pattern.permute.xlu0 0
    %88 = vperm.xlu0 %87, %v79
    %v89 = vpop.permute.xlu0 %88
    %vm90 = vcmp.eq.s32.totalorder %v83, %v86
    %vm91 = vcmp.eq.s32.totalorder %v83, %v89
    %92 = vset.pattern.permute.xlu0 0
    %93 = vperm.xlu0 %92, %v80
    %v94 = vpop.permute.xlu0 %93
    %95 = vset.pattern.permute.xlu0 0
    %96 = vperm.xlu0 %95, %v81
    %v97 = vpop.permute.xlu0 %96
    %vm98 = vcmp.eq.s32.totalorder %v83, %v94
    %vm99 = vcmp.eq.s32.totalorder %v83, %v97
    %vm100 = vmor %vm90, %vm98
    %vm101 = vmor %vm91, %vm99
    %v102 = vsel %vm100, 1, 0
    %v103 = vsel %vm101, 1, 0
    %v104 = vcvt.s32.f32 %v102
    %v105 = vcvt.s32.f32 %v103
    %v106 = vld [vmem:[%s2] sm:$0xff]
    %v107 = vld [vmem:[%s2 + $0x8] sm:$0xff]
    %v108 = vld [vmem:[%s2 + $0x10] sm:$0xff]
    %v109 = vld [vmem:[%s2 + $0x18] sm:$0xff]
    %v110 = vld [vmem:[%s2 + $0x20] sm:$0xff]
    %v111 = vld [vmem:[%s2 + $0x28] sm:$0xff]
    %v112 = vld [vmem:[%s2 + $0x30] sm:$0xff]
    %v113 = vld [vmem:[%s2 + $0x38] sm:$0xff]
    %v114 = vld [vmem:[%s2 + $0x40] sm:$0xff]
    %v115 = vld [vmem:[%s2 + $0x48] sm:$0xff]
    %v116 = vld [vmem:[%s2 + $0x50] sm:$0xff]
    %v117 = vld [vmem:[%s2 + $0x58] sm:$0xff]
    %v118 = vld [vmem:[%s2 + $0x60] sm:$0xff]
    %v119 = vld [vmem:[%s2 + $0x68] sm:$0xff]
    %v120 = vld [vmem:[%s2 + $0x70] sm:$0xff]
    %v121 = vld [vmem:[%s2 + $0x78] sm:$0xff]
    %122 = vmatprep.subr.mxu0 0.0
    %123 = vmatpush1.msra.mxu0 %v106
    %124 = vmatprep.subr.mxu0 0.0
    %125 = vmatpush1.msra.mxu0 %v107
    %126 = vmatprep.subr.mxu0 0.0
    %127 = vmatpush1.msra.mxu0 %v108
    %128 = vmatprep.subr.mxu0 0.0
    %129 = vmatpush1.msra.mxu0 %v109
    %130 = vmatprep.subr.mxu0 0.0
    %131 = vmatpush1.msra.mxu0 %v110
    %132 = vmatprep.subr.mxu0 0.0
    %133 = vmatpush1.msra.mxu0 %v111
    %134 = vmatprep.subr.mxu0 0.0
    %135 = vmatpush1.msra.mxu0 %v112
    %136 = vmatprep.subr.mxu0 0.0
    %137 = vmatpush1.msra.mxu0 %v113
    %138 = vmatprep.subr.mxu0 0.0
    %139 = vmatpush1.msra.mxu0 %v114
    %140 = vmatprep.subr.mxu0 0.0
    %141 = vmatpush1.msra.mxu0 %v115
    %142 = vmatprep.subr.mxu0 0.0
    %143 = vmatpush1.msra.mxu0 %v116
    %144 = vmatprep.subr.mxu0 0.0
    %145 = vmatpush1.msra.mxu0 %v117
    %146 = vmatprep.subr.mxu0 0.0
    %147 = vmatpush1.msra.mxu0 %v118
    %148 = vmatprep.subr.mxu0 0.0
    %149 = vmatpush1.msra.mxu0 %v119
    %150 = vmatprep.subr.mxu0 0.0
    %151 = vmatpush1.msra.mxu0 %v120
    %152 = vmatprep.subr.mxu0 0.0
    %153 = vmatpush1.msra.mxu0 %v121
    %154 = vmatprep.subr.mxu0 0.0
    %155 = vmatpush1.msra.mxu0 0.0
    %156 = vmatprep.subr.mxu0 0.0
    %157 = vmatpush1.msra.mxu0 0.0
    %158 = vmatprep.subr.mxu0 0.0
    %159 = vmatpush1.msra.mxu0 0.0
    %160 = vmatprep.subr.mxu0 0.0
    %161 = vmatpush1.msra.mxu0 0.0
    %162 = vmatprep.subr.mxu0 0.0
    %163 = vmatpush1.msra.mxu0 0.0
    %164 = vmatprep.subr.mxu0 0.0
    %165 = vmatpush1.msra.mxu0 0.0
    %166 = vmatprep.subr.mxu0 0.0
    %167 = vmatpush1.msra.mxu0 0.0
    %168 = vmatprep.subr.mxu0 0.0
    %169 = vmatpush1.msra.mxu0 0.0
    %170 = vmatprep.subr.mxu0 0.0
    %171 = vmatpush1.msra.mxu0 0.0
    %172 = vmatprep.subr.mxu0 0.0
    %173 = vmatpush1.msra.mxu0 0.0
    %174 = vmatprep.subr.mxu0 0.0
    %175 = vmatpush1.msra.mxu0 0.0
    %176 = vmatprep.subr.mxu0 0.0
    %177 = vmatpush1.msra.mxu0 0.0
    %178 = vmatprep.subr.mxu0 0.0
    %179 = vmatpush1.msra.mxu0 0.0
    %180 = vmatprep.subr.mxu0 0.0
    %181 = vmatpush1.msra.mxu0 0.0
    %182 = vmatprep.subr.mxu0 0.0
    %183 = vmatpush1.msra.mxu0 0.0
    %184 = vmatprep.subr.mxu0 0.0
    %185 = vmatpush1.msra.mxu0 0.0
    %186 = vmatprep.mubr.f32.mxu0 0.0
    %187 = vmatmul.mubr.f32.gmra.mrb[0].mxu0 %v104
    %v188 = vpop.f32.mrb[0].mxu0
    %v189 = vadd.f32 0.0, %v188
    %v190 = vpop.f32.mrb[0].mxu0
    %191 = vmatprep.mubr.f32.mxu0 0.0
    %192 = vmatmul.mubr.f32.gmra.mrb[0].mxu0 %v105
    %v193 = vpop.f32.mrb[0].mxu0
    %v194 = vadd.f32 0.0, %v193
    %v195 = vpop.f32.mrb[0].mxu0
    %196 = vdwg.mxu0
    %v197 = vld [vmem:[%s3] sm:$0x1]
    %v198 = vld [vmem:[%s4] sm:$0x1]
    %vm199 = vcmask 523264
    %v200 = vsel %vm199, %v189, 0.0
    %201 = vadd.xlane.f32.xlu0 %v200
    %v202 = vpop.xlane.xlu0 %201
    %v203 = vsel %vm199, %v194, 0.0
    %204 = vadd.xlane.f32.xlu0 %v203
    %v205 = vpop.xlane.xlu0 %204
    %v206 = vrcp.pop 64.0
    %v207 = vmul.f32 %v202, %v206
    %v208 = vmul.f32 %v205, %v206
    %v209 = vsub.f32 %v189, %v207
    %v210 = vsub.f32 %v194, %v208
    %v211 = vmul.f32 %v209, %v209
    %v212 = vmul.f32 %v210, %v210
    %v213 = vsel %vm199, %v211, 0.0
    %214 = vadd.xlane.f32.xlu0 %v213
    %v215 = vpop.xlane.xlu0 %214
    %v216 = vsel %vm199, %v212, 0.0
    %217 = vadd.xlane.f32.xlu0 %v216
    %v218 = vpop.xlane.xlu0 %217
    %v219 = vmul.f32 %v215, %v206
    %v220 = vmul.f32 %v218, %v206
    %v221 = vadd.f32 %v219, 1e-05
    %v222 = vadd.f32 %v220, 1e-05
    %v223 = vrsqrt.pop %v221
    %v224 = vrsqrt.pop %v222
    %v225 = vmul.f32 %v209, %v223
    %v226 = vmul.f32 %v210, %v224
    %v228 = vlaneseq
    %v229 = vshrl.u32 %v228, 7
    %v230 = vsub.s32 0, %v229
    %v231 = vrot.slane %v197, %v230
    %v233 = vmul.f32 %v225, %v231
    %v234 = vmul.f32 %v226, %v231
    %v236 = vlaneseq
    %v237 = vshrl.u32 %v236, 7
    %v238 = vsub.s32 0, %v237
    %v239 = vrot.slane %v198, %v238
    %v241 = vadd.f32 %v233, %v239
    %v242 = vadd.f32 %v234, %v239
    %v243 = vpack.c.bf16 %v242, %v241
    %v244 = vld [vmem:[#allocation2] sm:$0xff]
    %v245 = vld [vmem:[#allocation2 + $0x8] sm:$0xff]
    %v246 = vld [vmem:[#allocation2 + $0x10] sm:$0xff]
    %v247 = vld [vmem:[#allocation2 + $0x18] sm:$0xff]
    %v248 = vld [vmem:[#allocation2 + $0x20] sm:$0xff]
    %v249 = vld [vmem:[#allocation2 + $0x28] sm:$0xff]
    %v250 = vld [vmem:[#allocation2 + $0x30] sm:$0xff]
    %v251 = vld [vmem:[#allocation2 + $0x38] sm:$0xff]
    %v252 = vld [vmem:[#allocation2 + $0x40] sm:$0xff]
    %v253 = vld [vmem:[#allocation2 + $0x48] sm:$0xff]
    %v254 = vld [vmem:[#allocation2 + $0x50] sm:$0xff]
    %v255 = vld [vmem:[#allocation2 + $0x58] sm:$0xff]
    %v256 = vld [vmem:[#allocation2 + $0x60] sm:$0xff]
    %v257 = vld [vmem:[#allocation2 + $0x68] sm:$0xff]
    %v258 = vld [vmem:[#allocation2 + $0x70] sm:$0xff]
    %v259 = vld [vmem:[#allocation2 + $0x78] sm:$0xff]
    %v260 = vld [vmem:[#allocation2 + $0x80] sm:$0xff]
    %v261 = vld [vmem:[#allocation2 + $0x88] sm:$0xff]
    %v262 = vld [vmem:[#allocation2 + $0x90] sm:$0xff]
    %v263 = vld [vmem:[#allocation2 + $0x98] sm:$0xff]
    %v264 = vld [vmem:[#allocation2 + $0xa0] sm:$0xff]
    %v265 = vld [vmem:[#allocation2 + $0xa8] sm:$0xff]
    %v266 = vld [vmem:[#allocation2 + $0xb0] sm:$0xff]
    %v267 = vld [vmem:[#allocation2 + $0xb8] sm:$0xff]
    %v268 = vld [vmem:[#allocation2 + $0xc0] sm:$0xff]
    %v269 = vld [vmem:[#allocation2 + $0xc8] sm:$0xff]
    %v270 = vld [vmem:[#allocation2 + $0xd0] sm:$0xff]
    %v271 = vld [vmem:[#allocation2 + $0xd8] sm:$0xff]
    %v272 = vld [vmem:[#allocation2 + $0xe0] sm:$0xff]
    %v273 = vld [vmem:[#allocation2 + $0xe8] sm:$0xff]
    %v274 = vld [vmem:[#allocation2 + $0xf0] sm:$0xff]
    %v275 = vld [vmem:[#allocation2 + $0xf8] sm:$0xff]
    %v276 = vld [vmem:[#allocation2 + $0x100] sm:$0xff]
    %v277 = vld [vmem:[#allocation2 + $0x108] sm:$0xff]
    %v278 = vld [vmem:[#allocation2 + $0x110] sm:$0xff]
    %v279 = vld [vmem:[#allocation2 + $0x118] sm:$0xff]
    %v280 = vld [vmem:[#allocation2 + $0x120] sm:$0xff]
    %v281 = vld [vmem:[#allocation2 + $0x128] sm:$0xff]
    %v282 = vld [vmem:[#allocation2 + $0x130] sm:$0xff]
    %v283 = vld [vmem:[#allocation2 + $0x138] sm:$0xff]
    %v284 = vld [vmem:[#allocation2 + $0x140] sm:$0xff]
    %v285 = vld [vmem:[#allocation2 + $0x148] sm:$0xff]
    %v286 = vld [vmem:[#allocation2 + $0x150] sm:$0xff]
    %v287 = vld [vmem:[#allocation2 + $0x158] sm:$0xff]
    %v288 = vld [vmem:[#allocation2 + $0x160] sm:$0xff]
    %v289 = vld [vmem:[#allocation2 + $0x168] sm:$0xff]
    %v290 = vld [vmem:[#allocation2 + $0x170] sm:$0xff]
    %v291 = vld [vmem:[#allocation2 + $0x178] sm:$0xff]
    %v292 = vld [vmem:[%s6] sm:$0xff]
    %v293 = vld [vmem:[%s6 + $0x8] sm:$0xf]
    %v296 = vlaneseq
    %v297 = vshrl.u32 %v296, 7
    %v298 = vsub.s32 0, %v297
    %v299 = vrot.slane %v292, %v298
    %v300 = vlaneseq
    %v301 = vshrl.u32 %v300, 7
    %v302 = vsub.s32 1, %v301
    %v303 = vrot.slane %v292, %v302
    %v304 = vlaneseq
    %v305 = vshrl.u32 %v304, 7
    %v306 = vsub.s32 2, %v305
    %v307 = vrot.slane %v292, %v306
    %v308 = vlaneseq
    %v309 = vshrl.u32 %v308, 7
    %v310 = vsub.s32 3, %v309
    %v311 = vrot.slane %v292, %v310
    %v312 = vlaneseq
    %v313 = vshrl.u32 %v312, 7
    %v314 = vsub.s32 4, %v313
    %v315 = vrot.slane %v292, %v314
    %v316 = vlaneseq
    %v317 = vshrl.u32 %v316, 7
    %v318 = vsub.s32 5, %v317
    %v319 = vrot.slane %v292, %v318
    %v320 = vlaneseq
    %v321 = vshrl.u32 %v320, 7
    %v322 = vsub.s32 6, %v321
    %v323 = vrot.slane %v292, %v322
    %v324 = vlaneseq
    %v325 = vshrl.u32 %v324, 7
    %v326 = vsub.s32 7, %v325
    %v327 = vrot.slane %v292, %v326
    %v328 = vlaneseq
    %v329 = vshrl.u32 %v328, 7
    %v330 = vsub.s32 0, %v329
    %v331 = vrot.slane %v293, %v330
    %v332 = vlaneseq
    %v333 = vshrl.u32 %v332, 7
    %v334 = vsub.s32 1, %v333
    %v335 = vrot.slane %v293, %v334
    %v336 = vlaneseq
    %v337 = vshrl.u32 %v336, 7
    %v338 = vsub.s32 2, %v337
    %v339 = vrot.slane %v293, %v338
    %v340 = vlaneseq
    %v341 = vshrl.u32 %v340, 7
    %v342 = vsub.s32 3, %v341
    %v343 = vrot.slane %v293, %v342
    %v404 = vunpack.c.l.b16 %v244
    %v405 = vunpack.c.h.b16 %v244
    %v406 = vunpack.c.l.b16 %v245
    %v407 = vunpack.c.h.b16 %v245
    %v408 = vunpack.c.l.b16 %v246
    %v409 = vunpack.c.h.b16 %v246
    %v410 = vunpack.c.l.b16 %v247
    %v411 = vunpack.c.h.b16 %v247
    %v412 = vunpack.c.l.b16 %v248
    %v413 = vunpack.c.h.b16 %v248
    %v414 = vunpack.c.l.b16 %v249
    %v415 = vunpack.c.h.b16 %v249
    %v416 = vunpack.c.l.b16 %v250
    %v417 = vunpack.c.h.b16 %v250
    %v418 = vunpack.c.l.b16 %v251
    %v419 = vunpack.c.h.b16 %v251
    %v420 = vunpack.c.l.b16 %v252
    %v421 = vunpack.c.h.b16 %v252
    %v422 = vunpack.c.l.b16 %v253
    %v423 = vunpack.c.h.b16 %v253
    %v424 = vunpack.c.l.b16 %v254
    %v425 = vunpack.c.h.b16 %v254
    %v426 = vunpack.c.l.b16 %v255
    %v427 = vunpack.c.h.b16 %v255
    %v428 = vunpack.c.l.b16 %v256
    %v429 = vunpack.c.h.b16 %v256
    %v430 = vunpack.c.l.b16 %v257
    %v431 = vunpack.c.h.b16 %v257
    %v432 = vunpack.c.l.b16 %v258
    %v433 = vunpack.c.h.b16 %v258
    %v434 = vunpack.c.l.b16 %v259
    %v435 = vunpack.c.h.b16 %v259
    %v436 = vunpack.c.l.b16 %v260
    %v437 = vunpack.c.h.b16 %v260
    %v438 = vunpack.c.l.b16 %v261
    %v439 = vunpack.c.h.b16 %v261
    %v440 = vunpack.c.l.b16 %v262
    %v441 = vunpack.c.h.b16 %v262
    %v442 = vunpack.c.l.b16 %v263
    %v443 = vunpack.c.h.b16 %v263
    %v444 = vunpack.c.l.b16 %v264
    %v445 = vunpack.c.h.b16 %v264
    %v446 = vunpack.c.l.b16 %v265
    %v447 = vunpack.c.h.b16 %v265
    %v448 = vunpack.c.l.b16 %v266
    %v449 = vunpack.c.h.b16 %v266
    %v450 = vunpack.c.l.b16 %v267
    %v451 = vunpack.c.h.b16 %v267
    %v452 = vunpack.c.l.b16 %v268
    %v453 = vunpack.c.h.b16 %v268
    %v454 = vunpack.c.l.b16 %v269
    %v455 = vunpack.c.h.b16 %v269
    %v456 = vunpack.c.l.b16 %v270
    %v457 = vunpack.c.h.b16 %v270
    %v458 = vunpack.c.l.b16 %v271
    %v459 = vunpack.c.h.b16 %v271
    %v460 = vunpack.c.l.b16 %v272
    %v461 = vunpack.c.h.b16 %v272
    %v462 = vunpack.c.l.b16 %v273
    %v463 = vunpack.c.h.b16 %v273
    %v464 = vunpack.c.l.b16 %v274
    %v465 = vunpack.c.h.b16 %v274
    %v466 = vunpack.c.l.b16 %v275
    %v467 = vunpack.c.h.b16 %v275
    %v468 = vunpack.c.l.b16 %v276
    %v469 = vunpack.c.h.b16 %v276
    %v470 = vunpack.c.l.b16 %v277
    %v471 = vunpack.c.h.b16 %v277
    %v472 = vunpack.c.l.b16 %v278
    %v473 = vunpack.c.h.b16 %v278
    %v474 = vunpack.c.l.b16 %v279
    %v475 = vunpack.c.h.b16 %v279
    %v476 = vunpack.c.l.b16 %v280
    %v477 = vunpack.c.h.b16 %v280
    %v478 = vunpack.c.l.b16 %v281
    %v479 = vunpack.c.h.b16 %v281
    %v480 = vunpack.c.l.b16 %v282
    %v481 = vunpack.c.h.b16 %v282
    %v482 = vunpack.c.l.b16 %v283
    %v483 = vunpack.c.h.b16 %v283
    %v484 = vunpack.c.l.b16 %v284
    %v485 = vunpack.c.h.b16 %v284
    %v486 = vunpack.c.l.b16 %v285
    %v487 = vunpack.c.h.b16 %v285
    %v488 = vunpack.c.l.b16 %v286
    %v489 = vunpack.c.h.b16 %v286
    %v490 = vunpack.c.l.b16 %v287
    %v491 = vunpack.c.h.b16 %v287
    %v492 = vunpack.c.l.b16 %v288
    %v493 = vunpack.c.h.b16 %v288
    %v494 = vunpack.c.l.b16 %v289
    %v495 = vunpack.c.h.b16 %v289
    %v496 = vunpack.c.l.b16 %v290
    %v497 = vunpack.c.h.b16 %v290
    %v498 = vunpack.c.l.b16 %v291
    %v499 = vunpack.c.h.b16 %v291
    %v500 = vpack.c.b16 %v416, %v404
    %v501 = vpack.c.b16 %v417, %v405
    %v502 = vpack.c.b16 %v418, %v406
    %v503 = vpack.c.b16 %v419, %v407
    %v504 = vpack.c.b16 %v420, %v408
    %v505 = vpack.c.b16 %v421, %v409
    %v506 = vpack.c.b16 %v422, %v410
    %v507 = vpack.c.b16 %v423, %v411
    %v508 = vpack.c.b16 %v424, %v412
    %v509 = vpack.c.b16 %v425, %v413
    %v510 = vpack.c.b16 %v426, %v414
    %v511 = vpack.c.b16 %v427, %v415
    %v512 = vpack.c.b16 %v440, %v428
    %v513 = vpack.c.b16 %v441, %v429
    %v514 = vpack.c.b16 %v442, %v430
    %v515 = vpack.c.b16 %v443, %v431
    %v516 = vpack.c.b16 %v444, %v432
    %v517 = vpack.c.b16 %v445, %v433
    %v518 = vpack.c.b16 %v446, %v434
    %v519 = vpack.c.b16 %v447, %v435
    %v520 = vpack.c.b16 %v448, %v436
    %v521 = vpack.c.b16 %v449, %v437
    %v522 = vpack.c.b16 %v450, %v438
    %v523 = vpack.c.b16 %v451, %v439
    %v524 = vpack.c.b16 %v464, %v452
    %v525 = vpack.c.b16 %v465, %v453
    %v526 = vpack.c.b16 %v466, %v454
    %v527 = vpack.c.b16 %v467, %v455
    %v528 = vpack.c.b16 %v468, %v456
    %v529 = vpack.c.b16 %v469, %v457
    %v530 = vpack.c.b16 %v470, %v458
    %v531 = vpack.c.b16 %v471, %v459
    %v532 = vpack.c.b16 %v472, %v460
    %v533 = vpack.c.b16 %v473, %v461
    %v534 = vpack.c.b16 %v474, %v462
    %v535 = vpack.c.b16 %v475, %v463
    %v536 = vpack.c.b16 %v488, %v476
    %v537 = vpack.c.b16 %v489, %v477
    %v538 = vpack.c.b16 %v490, %v478
    %v539 = vpack.c.b16 %v491, %v479
    %v540 = vpack.c.b16 %v492, %v480
    %v541 = vpack.c.b16 %v493, %v481
    %v542 = vpack.c.b16 %v494, %v482
    %v543 = vpack.c.b16 %v495, %v483
    %v544 = vpack.c.b16 %v496, %v484
    %v545 = vpack.c.b16 %v497, %v485
    %v546 = vpack.c.b16 %v498, %v486
    %v547 = vpack.c.b16 %v499, %v487
    %v597 = vsel %vm199, %v243, 0
    %599 = vmatprep.subr.bf16.mxu0 %v501
    %600 = vmatpush1.bf16.msra.mxu0 %v500
    %601 = vmatprep.subr.bf16.mxu0 %v513
    %602 = vmatpush1.bf16.msra.mxu0 %v512
    %603 = vmatprep.subr.bf16.mxu0 %v525
    %604 = vmatpush1.bf16.msra.mxu0 %v524
    %605 = vmatprep.subr.bf16.mxu0 %v537
    %606 = vmatpush1.bf16.msra.mxu0 %v536
    %607 = vmatprep.subr.bf16.mxu0 0
    %608 = vmatpush1.bf16.msra.mxu0 0
    %609 = vmatprep.subr.bf16.mxu0 0
    %610 = vmatpush1.bf16.msra.mxu0 0
    %611 = vmatprep.subr.bf16.mxu0 0
    %612 = vmatpush1.bf16.msra.mxu0 0
    %613 = vmatprep.subr.bf16.mxu0 0
    %614 = vmatpush1.bf16.msra.mxu0 0
    %615 = vmatprep.subr.bf16.mxu0 0
    %616 = vmatpush1.bf16.msra.mxu0 0
    %617 = vmatprep.subr.bf16.mxu0 0
    %618 = vmatpush1.bf16.msra.mxu0 0
    %619 = vmatprep.subr.bf16.mxu0 0
    %620 = vmatpush1.bf16.msra.mxu0 0
    %621 = vmatprep.subr.bf16.mxu0 0
    %622 = vmatpush1.bf16.msra.mxu0 0
    %623 = vmatprep.subr.bf16.mxu0 0
    %624 = vmatpush1.bf16.msra.mxu0 0
    %625 = vmatprep.subr.bf16.mxu0 0
    %626 = vmatpush1.bf16.msra.mxu0 0
    %627 = vmatprep.subr.bf16.mxu0 0
    %628 = vmatpush1.bf16.msra.mxu0 0
    %629 = vmatprep.subr.bf16.mxu0 0
    %630 = vmatpush1.bf16.msra.mxu0 0
    %631 = vmatprep.mubr.bf16.mxu0 0
    %632 = vmatmul.mubr.bf16.gmra.mrb[0].mxu0 %v597
    %v633 = vpop.f32.mrb[0].mxu0
    %v634 = vadd.f32 %v299, %v633
    %v635 = vpop.f32.mrb[0].mxu0
    %v636 = vadd.f32 %v303, %v635
    %v637 = vpop.f32.mrb[0].mxu0
    %v638 = vadd.f32 %v299, %v637
    %v639 = vpop.f32.mrb[0].mxu0
    %v640 = vadd.f32 %v303, %v639
    %641 = vdwg.mxu0
    %642 = vmatprep.subr.bf16.mxu0 %v503
    %643 = vmatpush1.bf16.msra.mxu0 %v502
    %644 = vmatprep.subr.bf16.mxu0 %v515
    %645 = vmatpush1.bf16.msra.mxu0 %v514
    %646 = vmatprep.subr.bf16.mxu0 %v527
    %647 = vmatpush1.bf16.msra.mxu0 %v526
    %648 = vmatprep.subr.bf16.mxu0 %v539
    %649 = vmatpush1.bf16.msra.mxu0 %v538
    %650 = vmatprep.subr.bf16.mxu0 0
    %651 = vmatpush1.bf16.msra.mxu0 0
    %652 = vmatprep.subr.bf16.mxu0 0
    %653 = vmatpush1.bf16.msra.mxu0 0
    %654 = vmatprep.subr.bf16.mxu0 0
    %655 = vmatpush1.bf16.msra.mxu0 0
    %656 = vmatprep.subr.bf16.mxu0 0
    %657 = vmatpush1.bf16.msra.mxu0 0
    %658 = vmatprep.subr.bf16.mxu0 0
    %659 = vmatpush1.bf16.msra.mxu0 0
    %660 = vmatprep.subr.bf16.mxu0 0
    %661 = vmatpush1.bf16.msra.mxu0 0
    %662 = vmatprep.subr.bf16.mxu0 0
    %663 = vmatpush1.bf16.msra.mxu0 0
    %664 = vmatprep.subr.bf16.mxu0 0
    %665 = vmatpush1.bf16.msra.mxu0 0
    %666 = vmatprep.subr.bf16.mxu0 0
    %667 = vmatpush1.bf16.msra.mxu0 0
    %668 = vmatprep.subr.bf16.mxu0 0
    %669 = vmatpush1.bf16.msra.mxu0 0
    %670 = vmatprep.subr.bf16.mxu0 0
    %671 = vmatpush1.bf16.msra.mxu0 0
    %672 = vmatprep.subr.bf16.mxu0 0
    %673 = vmatpush1.bf16.msra.mxu0 0
    %674 = vmatprep.mubr.bf16.mxu0 0
    %675 = vmatmul.mubr.bf16.gmra.mrb[0].mxu0 %v597
    %v676 = vpop.f32.mrb[0].mxu0
    %v677 = vadd.f32 %v307, %v676
    %v678 = vpop.f32.mrb[0].mxu0
    %v679 = vadd.f32 %v311, %v678
    %v680 = vpop.f32.mrb[0].mxu0
    %v681 = vadd.f32 %v307, %v680
    %v682 = vpop.f32.mrb[0].mxu0
    %v683 = vadd.f32 %v311, %v682
    %684 = vdwg.mxu0
    %685 = vmatprep.subr.bf16.mxu0 %v505
    %686 = vmatpush1.bf16.msra.mxu0 %v504
    %687 = vmatprep.subr.bf16.mxu0 %v517
    %688 = vmatpush1.bf16.msra.mxu0 %v516
    %689 = vmatprep.subr.bf16.mxu0 %v529
    %690 = vmatpush1.bf16.msra.mxu0 %v528
    %691 = vmatprep.subr.bf16.mxu0 %v541
    %692 = vmatpush1.bf16.msra.mxu0 %v540
    %693 = vmatprep.subr.bf16.mxu0 0
    %694 = vmatpush1.bf16.msra.mxu0 0
    %695 = vmatprep.subr.bf16.mxu0 0
    %696 = vmatpush1.bf16.msra.mxu0 0
    %697 = vmatprep.subr.bf16.mxu0 0
    %698 = vmatpush1.bf16.msra.mxu0 0
    %699 = vmatprep.subr.bf16.mxu0 0
    %700 = vmatpush1.bf16.msra.mxu0 0
    %701 = vmatprep.subr.bf16.mxu0 0
    %702 = vmatpush1.bf16.msra.mxu0 0
    %703 = vmatprep.subr.bf16.mxu0 0
    %704 = vmatpush1.bf16.msra.mxu0 0
    %705 = vmatprep.subr.bf16.mxu0 0
    %706 = vmatpush1.bf16.msra.mxu0 0
    %707 = vmatprep.subr.bf16.mxu0 0
    %708 = vmatpush1.bf16.msra.mxu0 0
    %709 = vmatprep.subr.bf16.mxu0 0
    %710 = vmatpush1.bf16.msra.mxu0 0
    %711 = vmatprep.subr.bf16.mxu0 0
    %712 = vmatpush1.bf16.msra.mxu0 0
    %713 = vmatprep.subr.bf16.mxu0 0
    %714 = vmatpush1.bf16.msra.mxu0 0
    %715 = vmatprep.subr.bf16.mxu0 0
    %716 = vmatpush1.bf16.msra.mxu0 0
    %717 = vmatprep.mubr.bf16.mxu0 0
    %718 = vmatmul.mubr.bf16.gmra.mrb[0].mxu0 %v597
    %v719 = vpop.f32.mrb[0].mxu0
    %v720 = vadd.f32 %v315, %v719
    %v721 = vpop.f32.mrb[0].mxu0
    %v722 = vadd.f32 %v319, %v721
    %v723 = vpop.f32.mrb[0].mxu0
    %v724 = vadd.f32 %v315, %v723
    %v725 = vpop.f32.mrb[0].mxu0
    %v726 = vadd.f32 %v319, %v725
    %727 = vdwg.mxu0
    %728 = vmatprep.subr.bf16.mxu0 %v507
    %729 = vmatpush1.bf16.msra.mxu0 %v506
    %730 = vmatprep.subr.bf16.mxu0 %v519
    %731 = vmatpush1.bf16.msra.mxu0 %v518
    %732 = vmatprep.subr.bf16.mxu0 %v531
    %733 = vmatpush1.bf16.msra.mxu0 %v530
    %734 = vmatprep.subr.bf16.mxu0 %v543
    %735 = vmatpush1.bf16.msra.mxu0 %v542
    %736 = vmatprep.subr.bf16.mxu0 0
    %737 = vmatpush1.bf16.msra.mxu0 0
    %738 = vmatprep.subr.bf16.mxu0 0
    %739 = vmatpush1.bf16.msra.mxu0 0
    %740 = vmatprep.subr.bf16.mxu0 0
    %741 = vmatpush1.bf16.msra.mxu0 0
    %742 = vmatprep.subr.bf16.mxu0 0
    %743 = vmatpush1.bf16.msra.mxu0 0
    %744 = vmatprep.subr.bf16.mxu0 0
    %745 = vmatpush1.bf16.msra.mxu0 0
    %746 = vmatprep.subr.bf16.mxu0 0
    %747 = vmatpush1.bf16.msra.mxu0 0
    %748 = vmatprep.subr.bf16.mxu0 0
    %749 = vmatpush1.bf16.msra.mxu0 0
    %750 = vmatprep.subr.bf16.mxu0 0
    %751 = vmatpush1.bf16.msra.mxu0 0
    %752 = vmatprep.subr.bf16.mxu0 0
    %753 = vmatpush1.bf16.msra.mxu0 0
    %754 = vmatprep.subr.bf16.mxu0 0
    %755 = vmatpush1.bf16.msra.mxu0 0
    %756 = vmatprep.subr.bf16.mxu0 0
    %757 = vmatpush1.bf16.msra.mxu0 0
    %758 = vmatprep.subr.bf16.mxu0 0
    %759 = vmatpush1.bf16.msra.mxu0 0
    %760 = vmatprep.mubr.bf16.mxu0 0
    %761 = vmatmul.mubr.bf16.gmra.mrb[0].mxu0 %v597
    %v762 = vpop.f32.mrb[0].mxu0
    %v763 = vadd.f32 %v323, %v762
    %v764 = vpop.f32.mrb[0].mxu0
    %v765 = vadd.f32 %v327, %v764
    %v766 = vpop.f32.mrb[0].mxu0
    %v767 = vadd.f32 %v323, %v766
    %v768 = vpop.f32.mrb[0].mxu0
    %v769 = vadd.f32 %v327, %v768
    %770 = vdwg.mxu0
    %771 = vmatprep.subr.bf16.mxu0 %v509
    %772 = vmatpush1.bf16.msra.mxu0 %v508
    %773 = vmatprep.subr.bf16.mxu0 %v521
    %774 = vmatpush1.bf16.msra.mxu0 %v520
    %775 = vmatprep.subr.bf16.mxu0 %v533
    %776 = vmatpush1.bf16.msra.mxu0 %v532
    %777 = vmatprep.subr.bf16.mxu0 %v545
    %778 = vmatpush1.bf16.msra.mxu0 %v544
    %779 = vmatprep.subr.bf16.mxu0 0
    %780 = vmatpush1.bf16.msra.mxu0 0
    %781 = vmatprep.subr.bf16.mxu0 0
    %782 = vmatpush1.bf16.msra.mxu0 0
    %783 = vmatprep.subr.bf16.mxu0 0
    %784 = vmatpush1.bf16.msra.mxu0 0
    %785 = vmatprep.subr.bf16.mxu0 0
    %786 = vmatpush1.bf16.msra.mxu0 0
    %787 = vmatprep.subr.bf16.mxu0 0
    %788 = vmatpush1.bf16.msra.mxu0 0
    %789 = vmatprep.subr.bf16.mxu0 0
    %790 = vmatpush1.bf16.msra.mxu0 0
    %791 = vmatprep.subr.bf16.mxu0 0
    %792 = vmatpush1.bf16.msra.mxu0 0
    %793 = vmatprep.subr.bf16.mxu0 0
    %794 = vmatpush1.bf16.msra.mxu0 0
    %795 = vmatprep.subr.bf16.mxu0 0
    %796 = vmatpush1.bf16.msra.mxu0 0
    %797 = vmatprep.subr.bf16.mxu0 0
    %798 = vmatpush1.bf16.msra.mxu0 0
    %799 = vmatprep.subr.bf16.mxu0 0
    %800 = vmatpush1.bf16.msra.mxu0 0
    %801 = vmatprep.subr.bf16.mxu0 0
    %802 = vmatpush1.bf16.msra.mxu0 0
    %803 = vmatprep.mubr.bf16.mxu0 0
    %804 = vmatmul.mubr.bf16.gmra.mrb[0].mxu0 %v597
    %v805 = vpop.f32.mrb[0].mxu0
    %v806 = vadd.f32 %v331, %v805
    %v807 = vpop.f32.mrb[0].mxu0
    %v808 = vadd.f32 %v335, %v807
    %v809 = vpop.f32.mrb[0].mxu0
    %v810 = vadd.f32 %v331, %v809
    %v811 = vpop.f32.mrb[0].mxu0
    %v812 = vadd.f32 %v335, %v811
    %813 = vdwg.mxu0
    %814 = vmatprep.subr.bf16.mxu0 %v511
    %815 = vmatpush1.bf16.msra.mxu0 %v510
    %816 = vmatprep.subr.bf16.mxu0 %v523
    %817 = vmatpush1.bf16.msra.mxu0 %v522
    %818 = vmatprep.subr.bf16.mxu0 %v535
    %819 = vmatpush1.bf16.msra.mxu0 %v534
    %820 = vmatprep.subr.bf16.mxu0 %v547
    %821 = vmatpush1.bf16.msra.mxu0 %v546
    %822 = vmatprep.subr.bf16.mxu0 0
    %823 = vmatpush1.bf16.msra.mxu0 0
    %824 = vmatprep.subr.bf16.mxu0 0
    %825 = vmatpush1.bf16.msra.mxu0 0
    %826 = vmatprep.subr.bf16.mxu0 0
    %827 = vmatpush1.bf16.msra.mxu0 0
    %828 = vmatprep.subr.bf16.mxu0 0
    %829 = vmatpush1.bf16.msra.mxu0 0
    %830 = vmatprep.subr.bf16.mxu0 0
    %831 = vmatpush1.bf16.msra.mxu0 0
    %832 = vmatprep.subr.bf16.mxu0 0
    %833 = vmatpush1.bf16.msra.mxu0 0
    %834 = vmatprep.subr.bf16.mxu0 0
    %835 = vmatpush1.bf16.msra.mxu0 0
    %836 = vmatprep.subr.bf16.mxu0 0
    %837 = vmatpush1.bf16.msra.mxu0 0
    %838 = vmatprep.subr.bf16.mxu0 0
    %839 = vmatpush1.bf16.msra.mxu0 0
    %840 = vmatprep.subr.bf16.mxu0 0
    %841 = vmatpush1.bf16.msra.mxu0 0
    %842 = vmatprep.subr.bf16.mxu0 0
    %843 = vmatpush1.bf16.msra.mxu0 0
    %844 = vmatprep.subr.bf16.mxu0 0
    %845 = vmatpush1.bf16.msra.mxu0 0
    %846 = vmatprep.mubr.bf16.mxu0 0
    %847 = vmatmul.mubr.bf16.gmra.mrb[0].mxu0 %v597
    %v848 = vpop.f32.mrb[0].mxu0
    %v849 = vadd.f32 %v339, %v848
    %v850 = vpop.f32.mrb[0].mxu0
    %v851 = vadd.f32 %v343, %v850
    %v852 = vpop.f32.mrb[0].mxu0
    %v853 = vadd.f32 %v339, %v852
    %v854 = vpop.f32.mrb[0].mxu0
    %v855 = vadd.f32 %v343, %v854
    %856 = vdwg.mxu0
    %v857 = vpack.c.bf16 %v634, %v634
    %v858 = vpack.c.bf16 %v638, %v638
    %v859 = vpack.c.bf16 %v636, %v636
    %v860 = vpack.c.bf16 %v640, %v640
    %v861 = vpack.c.bf16 %v677, %v677
    %v862 = vpack.c.bf16 %v681, %v681
    %v863 = vpack.c.bf16 %v679, %v679
    %v864 = vpack.c.bf16 %v683, %v683
    %v865 = vpack.c.bf16 %v720, %v720
    %v866 = vpack.c.bf16 %v724, %v724
    %v867 = vpack.c.bf16 %v722, %v722
    %v868 = vpack.c.bf16 %v726, %v726
    %v869 = vpack.c.bf16 %v763, %v763
    %v870 = vpack.c.bf16 %v767, %v767
    %v871 = vpack.c.bf16 %v765, %v765
    %v872 = vpack.c.bf16 %v769, %v769
    %vm873 = vcmask 130048
    %v875 = vsel %vm873, %v857, 0
    %v878 = vsel %vm873, %v865, 0
    %880 = vmatprep.subr.bf16.mxu0 0
    %881 = vmatpush1.bf16.xpose.msra.mxu0 %v878
    %882 = vmatprep.subr.bf16.mxu0 0
    %883 = vmatpush1.bf16.xpose.msra.mxu0 0
    %884 = vmatprep.subr.bf16.mxu0 0
    %885 = vmatpush1.bf16.xpose.msra.mxu0 0
    %886 = vmatprep.subr.bf16.mxu0 0
    %887 = vmatpush1.bf16.xpose.msra.mxu0 0
    %888 = vmatprep.subr.bf16.mxu0 0
    %889 = vmatpush1.bf16.xpose.msra.mxu0 0
    %890 = vmatprep.subr.bf16.mxu0 0
    %891 = vmatpush1.bf16.xpose.msra.mxu0 0
    %892 = vmatprep.subr.bf16.mxu0 0
    %893 = vmatpush1.bf16.xpose.msra.mxu0 0
    %894 = vmatprep.subr.bf16.mxu0 0
    %895 = vmatpush1.bf16.xpose.msra.mxu0 0
    %896 = vmatprep.subr.bf16.mxu0 0
    %897 = vmatpush1.bf16.xpose.msra.mxu0 0
    %898 = vmatprep.subr.bf16.mxu0 0
    %899 = vmatpush1.bf16.xpose.msra.mxu0 0
    %900 = vmatprep.subr.bf16.mxu0 0
    %901 = vmatpush1.bf16.xpose.msra.mxu0 0
    %902 = vmatprep.subr.bf16.mxu0 0
    %903 = vmatpush1.bf16.xpose.msra.mxu0 0
    %904 = vmatprep.subr.bf16.mxu0 0
    %905 = vmatpush1.bf16.xpose.msra.mxu0 0
    %906 = vmatprep.subr.bf16.mxu0 0
    %907 = vmatpush1.bf16.xpose.msra.mxu0 0
    %908 = vmatprep.subr.bf16.mxu0 0
    %909 = vmatpush1.bf16.xpose.msra.mxu0 0
    %910 = vmatprep.subr.bf16.mxu0 0
    %911 = vmatpush1.bf16.xpose.msra.mxu0 0
    %912 = vmatprep.mubr.bf16.mxu0 0
    %913 = vmatmul.mubr.bf16.gmra.mrb[0].mxu0 %v875
    %v914 = vpop.f32.mrb[0].mxu0
    %v915 = vadd.f32 0.0, %v914
    %v916 = vpop.f32.mrb[0].mxu0
    %v917 = vpop.f32.mrb[0].mxu0
    %v918 = vpop.f32.mrb[0].mxu0
    %919 = vdwg.mxu0
    %v921 = vsel %vm873, %v858, 0
    %v924 = vsel %vm873, %v866, 0
    %926 = vmatprep.subr.bf16.mxu0 0
    %927 = vmatpush1.bf16.xpose.msra.mxu0 %v924
    %928 = vmatprep.subr.bf16.mxu0 0
    %929 = vmatpush1.bf16.xpose.msra.mxu0 0
    %930 = vmatprep.subr.bf16.mxu0 0
    %931 = vmatpush1.bf16.xpose.msra.mxu0 0
    %932 = vmatprep.subr.bf16.mxu0 0
    %933 = vmatpush1.bf16.xpose.msra.mxu0 0
    %934 = vmatprep.subr.bf16.mxu0 0
    %935 = vmatpush1.bf16.xpose.msra.mxu0 0
    %936 = vmatprep.subr.bf16.mxu0 0
    %937 = vmatpush1.bf16.xpose.msra.mxu0 0
    %938 = vmatprep.subr.bf16.mxu0 0
    %939 = vmatpush1.bf16.xpose.msra.mxu0 0
    %940 = vmatprep.subr.bf16.mxu0 0
    %941 = vmatpush1.bf16.xpose.msra.mxu0 0
    %942 = vmatprep.subr.bf16.mxu0 0
    %943 = vmatpush1.bf16.xpose.msra.mxu0 0
    %944 = vmatprep.subr.bf16.mxu0 0
    %945 = vmatpush1.bf16.xpose.msra.mxu0 0
    %946 = vmatprep.subr.bf16.mxu0 0
    %947 = vmatpush1.bf16.xpose.msra.mxu0 0
    %948 = vmatprep.subr.bf16.mxu0 0
    %949 = vmatpush1.bf16.xpose.msra.mxu0 0
    %950 = vmatprep.subr.bf16.mxu0 0
    %951 = vmatpush1.bf16.xpose.msra.mxu0 0
    %952 = vmatprep.subr.bf16.mxu0 0
    %953 = vmatpush1.bf16.xpose.msra.mxu0 0
    %954 = vmatprep.subr.bf16.mxu0 0
    %955 = vmatpush1.bf16.xpose.msra.mxu0 0
    %956 = vmatprep.subr.bf16.mxu0 0
    %957 = vmatpush1.bf16.xpose.msra.mxu0 0
    %958 = vmatprep.mubr.bf16.mxu0 0
    %959 = vmatmul.mubr.bf16.gmra.mrb[0].mxu0 %v921
    %v960 = vpop.f32.mrb[0].mxu0
    %v961 = vadd.f32 0.0, %v960
    %v962 = vpop.f32.mrb[0].mxu0
    %v963 = vpop.f32.mrb[0].mxu0
    %v964 = vpop.f32.mrb[0].mxu0
    %965 = vdwg.mxu0
    %v967 = vsel %vm873, %v859, 0
    %v970 = vsel %vm873, %v867, 0
    %972 = vmatprep.subr.bf16.mxu0 0
    %973 = vmatpush1.bf16.xpose.msra.mxu0 %v970
    %974 = vmatprep.subr.bf16.mxu0 0
    %975 = vmatpush1.bf16.xpose.msra.mxu0 0
    %976 = vmatprep.subr.bf16.mxu0 0
    %977 = vmatpush1.bf16.xpose.msra.mxu0 0
    %978 = vmatprep.subr.bf16.mxu0 0
    %979 = vmatpush1.bf16.xpose.msra.mxu0 0
    %980 = vmatprep.subr.bf16.mxu0 0
    %981 = vmatpush1.bf16.xpose.msra.mxu0 0
    %982 = vmatprep.subr.bf16.mxu0 0
    %983 = vmatpush1.bf16.xpose.msra.mxu0 0
    %984 = vmatprep.subr.bf16.mxu0 0
    %985 = vmatpush1.bf16.xpose.msra.mxu0 0
    %986 = vmatprep.subr.bf16.mxu0 0
    %987 = vmatpush1.bf16.xpose.msra.mxu0 0
    %988 = vmatprep.subr.bf16.mxu0 0
    %989 = vmatpush1.bf16.xpose.msra.mxu0 0
    %990 = vmatprep.subr.bf16.mxu0 0
    %991 = vmatpush1.bf16.xpose.msra.mxu0 0
    %992 = vmatprep.subr.bf16.mxu0 0
    %993 = vmatpush1.bf16.xpose.msra.mxu0 0
    %994 = vmatprep.subr.bf16.mxu0 0
    %995 = vmatpush1.bf16.xpose.msra.mxu0 0
    %996 = vmatprep.subr.bf16.mxu0 0
    %997 = vmatpush1.bf16.xpose.msra.mxu0 0
    %998 = vmatprep.subr.bf16.mxu0 0
    %999 = vmatpush1.bf16.xpose.msra.mxu0 0
    %1000 = vmatprep.subr.bf16.mxu0 0
    %1001 = vmatpush1.bf16.xpose.msra.mxu0 0
    %1002 = vmatprep.subr.bf16.mxu0 0
    %1003 = vmatpush1.bf16.xpose.msra.mxu0 0
    %1004 = vmatprep.mubr.bf16.mxu0 0
    %1005 = vmatmul.mubr.bf16.gmra.mrb[0].mxu0 %v967
    %v1006 = vpop.f32.mrb[0].mxu0
    %v1007 = vadd.f32 0.0, %v1006
    %v1008 = vpop.f32.mrb[0].mxu0
    %v1009 = vpop.f32.mrb[0].mxu0
    %v1010 = vpop.f32.mrb[0].mxu0
    %1011 = vdwg.mxu0
    %v1013 = vsel %vm873, %v860, 0
    %v1016 = vsel %vm873, %v868, 0
    %1018 = vmatprep.subr.bf16.mxu0 0
    %1019 = vmatpush1.bf16.xpose.msra.mxu0 %v1016
    %1020 = vmatprep.subr.bf16.mxu0 0
    %1021 = vmatpush1.bf16.xpose.msra.mxu0 0
    %1022 = vmatprep.subr.bf16.mxu0 0
    %1023 = vmatpush1.bf16.xpose.msra.mxu0 0
    %1024 = vmatprep.subr.bf16.mxu0 0
    %1025 = vmatpush1.bf16.xpose.msra.mxu0 0
    %1026 = vmatprep.subr.bf16.mxu0 0
    %1027 = vmatpush1.bf16.xpose.msra.mxu0 0
    %1028 = vmatprep.subr.bf16.mxu0 0
    %1029 = vmatpush1.bf16.xpose.msra.mxu0 0
    %1030 = vmatprep.subr.bf16.mxu0 0
    %1031 = vmatpush1.bf16.xpose.msra.mxu0 0
    %1032 = vmatprep.subr.bf16.mxu0 0
    %1033 = vmatpush1.bf16.xpose.msra.mxu0 0
    %1034 = vmatprep.subr.bf16.mxu0 0
    %1035 = vmatpush1.bf16.xpose.msra.mxu0 0
    %1036 = vmatprep.subr.bf16.mxu0 0
    %1037 = vmatpush1.bf16.xpose.msra.mxu0 0
    %1038 = vmatprep.subr.bf16.mxu0 0
    %1039 = vmatpush1.bf16.xpose.msra.mxu0 0
    %1040 = vmatprep.subr.bf16.mxu0 0
    %1041 = vmatpush1.bf16.xpose.msra.mxu0 0
    %1042 = vmatprep.subr.bf16.mxu0 0
    %1043 = vmatpush1.bf16.xpose.msra.mxu0 0
    %1044 = vmatprep.subr.bf16.mxu0 0
    %1045 = vmatpush1.bf16.xpose.msra.mxu0 0
    %1046 = vmatprep.subr.bf16.mxu0 0
    %1047 = vmatpush1.bf16.xpose.msra.mxu0 0
    %1048 = vmatprep.subr.bf16.mxu0 0
    %1049 = vmatpush1.bf16.xpose.msra.mxu0 0
    %1050 = vmatprep.mubr.bf16.mxu0 0
    %1051 = vmatmul.mubr.bf16.gmra.mrb[0].mxu0 %v1013
    %v1052 = vpop.f32.mrb[0].mxu0
    %v1053 = vadd.f32 0.0, %v1052
    %v1054 = vpop.f32.mrb[0].mxu0
    %v1055 = vpop.f32.mrb[0].mxu0
    %v1056 = vpop.f32.mrb[0].mxu0
    %1057 = vdwg.mxu0
    %v1059 = vsel %vm873, %v861, 0
    %v1062 = vsel %vm873, %v869, 0
    %1064 = vmatprep.subr.bf16.mxu0 0
    %1065 = vmatpush1.bf16.xpose.msra.mxu0 %v1062
    %1066 = vmatprep.subr.bf16.mxu0 0
    %1067 = vmatpush1.bf16.xpose.msra.mxu0 0
    %1068 = vmatprep.subr.bf16.mxu0 0
    %1069 = vmatpush1.bf16.xpose.msra.mxu0 0
    %1070 = vmatprep.subr.bf16.mxu0 0
    %1071 = vmatpush1.bf16.xpose.msra.mxu0 0
    %1072 = vmatprep.subr.bf16.mxu0 0
    %1073 = vmatpush1.bf16.xpose.msra.mxu0 0
    %1074 = vmatprep.subr.bf16.mxu0 0
    %1075 = vmatpush1.bf16.xpose.msra.mxu0 0
    %1076 = vmatprep.subr.bf16.mxu0 0
    %1077 = vmatpush1.bf16.xpose.msra.mxu0 0
    %1078 = vmatprep.subr.bf16.mxu0 0
    %1079 = vmatpush1.bf16.xpose.msra.mxu0 0
    %1080 = vmatprep.subr.bf16.mxu0 0
    %1081 = vmatpush1.bf16.xpose.msra.mxu0 0
    %1082 = vmatprep.subr.bf16.mxu0 0
    %1083 = vmatpush1.bf16.xpose.msra.mxu0 0
    %1084 = vmatprep.subr.bf16.mxu0 0
    %1085 = vmatpush1.bf16.xpose.msra.mxu0 0
    %1086 = vmatprep.subr.bf16.mxu0 0
    %1087 = vmatpush1.bf16.xpose.msra.mxu0 0
    %1088 = vmatprep.subr.bf16.mxu0 0
    %1089 = vmatpush1.bf16.xpose.msra.mxu0 0
    %1090 = vmatprep.subr.bf16.mxu0 0
    %1091 = vmatpush1.bf16.xpose.msra.mxu0 0
    %1092 = vmatprep.subr.bf16.mxu0 0
    %1093 = vmatpush1.bf16.xpose.msra.mxu0 0
    %1094 = vmatprep.subr.bf16.mxu0 0
    %1095 = vmatpush1.bf16.xpose.msra.mxu0 0
    %1096 = vmatprep.mubr.bf16.mxu0 0
    %1097 = vmatmul.mubr.bf16.gmra.mrb[0].mxu0 %v1059
    %v1098 = vpop.f32.mrb[0].mxu0
    %v1099 = vadd.f32 0.0, %v1098
    %v1100 = vpop.f32.mrb[0].mxu0
    %v1101 = vpop.f32.mrb[0].mxu0
    %v1102 = vpop.f32.mrb[0].mxu0
    %1103 = vdwg.mxu0
    %v1105 = vsel %vm873, %v862, 0
    %v1108 = vsel %vm873, %v870, 0
    %1110 = vmatprep.subr.bf16.mxu0 0
    %1111 = vmatpush1.bf16.xpose.msra.mxu0 %v1108
    %1112 = vmatprep.subr.bf16.mxu0 0
    %1113 = vmatpush1.bf16.xpose.msra.mxu0 0
    %1114 = vmatprep.subr.bf16.mxu0 0
    %1115 = vmatpush1.bf16.xpose.msra.mxu0 0
    %1116 = vmatprep.subr.bf16.mxu0 0
    %1117 = vmatpush1.bf16.xpose.msra.mxu0 0
    %1118 = vmatprep.subr.bf16.mxu0 0
    %1119 = vmatpush1.bf16.xpose.msra.mxu0 0
    %1120 = vmatprep.subr.bf16.mxu0 0
    %1121 = vmatpush1.bf16.xpose.msra.mxu0 0
    %1122 = vmatprep.subr.bf16.mxu0 0
    %1123 = vmatpush1.bf16.xpose.msra.mxu0 0
    %1124 = vmatprep.subr.bf16.mxu0 0
    %1125 = vmatpush1.bf16.xpose.msra.mxu0 0
    %1126 = vmatprep.subr.bf16.mxu0 0
    %1127 = vmatpush1.bf16.xpose.msra.mxu0 0
    %1128 = vmatprep.subr.bf16.mxu0 0
    %1129 = vmatpush1.bf16.xpose.msra.mxu0 0
    %1130 = vmatprep.subr.bf16.mxu0 0
    %1131 = vmatpush1.bf16.xpose.msra.mxu0 0
    %1132 = vmatprep.subr.bf16.mxu0 0
    %1133 = vmatpush1.bf16.xpose.msra.mxu0 0
    %1134 = vmatprep.subr.bf16.mxu0 0
    %1135 = vmatpush1.bf16.xpose.msra.mxu0 0
    %1136 = vmatprep.subr.bf16.mxu0 0
    %1137 = vmatpush1.bf16.xpose.msra.mxu0 0
    %1138 = vmatprep.subr.bf16.mxu0 0
    %1139 = vmatpush1.bf16.xpose.msra.mxu0 0
    %1140 = vmatprep.subr.bf16.mxu0 0
    %1141 = vmatpush1.bf16.xpose.msra.mxu0 0
    %1142 = vmatprep.mubr.bf16.mxu0 0
    %1143 = vmatmul.mubr.bf16.gmra.mrb[0].mxu0 %v1105
    %v1144 = vpop.f32.mrb[0].mxu0
    %v1145 = vadd.f32 0.0, %v1144
    %v1146 = vpop.f32.mrb[0].mxu0
    %v1147 = vpop.f32.mrb[0].mxu0
    %v1148 = vpop.f32.mrb[0].mxu0
    %1149 = vdwg.mxu0
    %v1151 = vsel %vm873, %v863, 0
    %v1154 = vsel %vm873, %v871, 0
    %1156 = vmatprep.subr.bf16.mxu0 0
    %1157 = vmatpush1.bf16.xpose.msra.mxu0 %v1154
    %1158 = vmatprep.subr.bf16.mxu0 0
    %1159 = vmatpush1.bf16.xpose.msra.mxu0 0
    %1160 = vmatprep.subr.bf16.mxu0 0
    %1161 = vmatpush1.bf16.xpose.msra.mxu0 0
    %1162 = vmatprep.subr.bf16.mxu0 0
    %1163 = vmatpush1.bf16.xpose.msra.mxu0 0
    %1164 = vmatprep.subr.bf16.mxu0 0
    %1165 = vmatpush1.bf16.xpose.msra.mxu0 0
    %1166 = vmatprep.subr.bf16.mxu0 0
    %1167 = vmatpush1.bf16.xpose.msra.mxu0 0
    %1168 = vmatprep.subr.bf16.mxu0 0
    %1169 = vmatpush1.bf16.xpose.msra.mxu0 0
    %1170 = vmatprep.subr.bf16.mxu0 0
    %1171 = vmatpush1.bf16.xpose.msra.mxu0 0
    %1172 = vmatprep.subr.bf16.mxu0 0
    %1173 = vmatpush1.bf16.xpose.msra.mxu0 0
    %1174 = vmatprep.subr.bf16.mxu0 0
    %1175 = vmatpush1.bf16.xpose.msra.mxu0 0
    %1176 = vmatprep.subr.bf16.mxu0 0
    %1177 = vmatpush1.bf16.xpose.msra.mxu0 0
    %1178 = vmatprep.subr.bf16.mxu0 0
    %1179 = vmatpush1.bf16.xpose.msra.mxu0 0
    %1180 = vmatprep.subr.bf16.mxu0 0
    %1181 = vmatpush1.bf16.xpose.msra.mxu0 0
    %1182 = vmatprep.subr.bf16.mxu0 0
    %1183 = vmatpush1.bf16.xpose.msra.mxu0 0
    %1184 = vmatprep.subr.bf16.mxu0 0
    %1185 = vmatpush1.bf16.xpose.msra.mxu0 0
    %1186 = vmatprep.subr.bf16.mxu0 0
    %1187 = vmatpush1.bf16.xpose.msra.mxu0 0
    %1188 = vmatprep.mubr.bf16.mxu0 0
    %1189 = vmatmul.mubr.bf16.gmra.mrb[0].mxu0 %v1151
    %v1190 = vpop.f32.mrb[0].mxu0
    %v1191 = vadd.f32 0.0, %v1190
    %v1192 = vpop.f32.mrb[0].mxu0
    %v1193 = vpop.f32.mrb[0].mxu0
    %v1194 = vpop.f32.mrb[0].mxu0
    %1195 = vdwg.mxu0
    %v1197 = vsel %vm873, %v864, 0
    %v1200 = vsel %vm873, %v872, 0
    %1202 = vmatprep.subr.bf16.mxu0 0
    %1203 = vmatpush1.bf16.xpose.msra.mxu0 %v1200
    %1204 = vmatprep.subr.bf16.mxu0 0
    %1205 = vmatpush1.bf16.xpose.msra.mxu0 0
    %1206 = vmatprep.subr.bf16.mxu0 0
    %1207 = vmatpush1.bf16.xpose.msra.mxu0 0
    %1208 = vmatprep.subr.bf16.mxu0 0
    %1209 = vmatpush1.bf16.xpose.msra.mxu0 0
    %1210 = vmatprep.subr.bf16.mxu0 0
    %1211 = vmatpush1.bf16.xpose.msra.mxu0 0
    %1212 = vmatprep.subr.bf16.mxu0 0
    %1213 = vmatpush1.bf16.xpose.msra.mxu0 0
    %1214 = vmatprep.subr.bf16.mxu0 0
    %1215 = vmatpush1.bf16.xpose.msra.mxu0 0
    %1216 = vmatprep.subr.bf16.mxu0 0
    %1217 = vmatpush1.bf16.xpose.msra.mxu0 0
    %1218 = vmatprep.subr.bf16.mxu0 0
    %1219 = vmatpush1.bf16.xpose.msra.mxu0 0
    %1220 = vmatprep.subr.bf16.mxu0 0
    %1221 = vmatpush1.bf16.xpose.msra.mxu0 0
    %1222 = vmatprep.subr.bf16.mxu0 0
    %1223 = vmatpush1.bf16.xpose.msra.mxu0 0
    %1224 = vmatprep.subr.bf16.mxu0 0
    %1225 = vmatpush1.bf16.xpose.msra.mxu0 0
    %1226 = vmatprep.subr.bf16.mxu0 0
    %1227 = vmatpush1.bf16.xpose.msra.mxu0 0
    %1228 = vmatprep.subr.bf16.mxu0 0
    %1229 = vmatpush1.bf16.xpose.msra.mxu0 0
    %1230 = vmatprep.subr.bf16.mxu0 0
    %1231 = vmatpush1.bf16.xpose.msra.mxu0 0
    %1232 = vmatprep.subr.bf16.mxu0 0
    %1233 = vmatpush1.bf16.xpose.msra.mxu0 0
    %1234 = vmatprep.mubr.bf16.mxu0 0
    %1235 = vmatmul.mubr.bf16.gmra.mrb[0].mxu0 %v1197
    %v1236 = vpop.f32.mrb[0].mxu0
    %v1237 = vadd.f32 0.0, %v1236
    %v1238 = vpop.f32.mrb[0].mxu0
    %v1239 = vpop.f32.mrb[0].mxu0
    %v1240 = vpop.f32.mrb[0].mxu0
    %1241 = vdwg.mxu0
    %v1242 = vmul.f32 %v915, 0.25
    %v1243 = vmul.f32 %v961, 0.25
    %v1244 = vmul.f32 %v1007, 0.25
    %v1245 = vmul.f32 %v1053, 0.25
    %v1246 = vmul.f32 %v1099, 0.25
    %v1247 = vmul.f32 %v1145, 0.25
    %v1248 = vmul.f32 %v1191, 0.25
    %v1249 = vmul.f32 %v1237, 0.25
    %vm1250 = vcmask 64512
    %v1251 = vsel %vm1250, %v1242, -inf
    %1252 = vmax.xlane.f32.xlu0 %v1251
    %v1253 = vpop.xlane.xlu0 %1252
    %v1254 = vsel %vm1250, %v1243, -inf
    %1255 = vmax.xlane.f32.xlu0 %v1254
    %v1256 = vpop.xlane.xlu0 %1255
    %v1257 = vsel %vm1250, %v1244, -inf
    %1258 = vmax.xlane.f32.xlu0 %v1257
    %v1259 = vpop.xlane.xlu0 %1258
    %v1260 = vsel %vm1250, %v1245, -inf
    %1261 = vmax.xlane.f32.xlu0 %v1260
    %v1262 = vpop.xlane.xlu0 %1261
    %v1263 = vsel %vm1250, %v1246, -inf
    %1264 = vmax.xlane.f32.xlu0 %v1263
    %v1265 = vpop.xlane.xlu0 %1264
    %v1266 = vsel %vm1250, %v1247, -inf
    %1267 = vmax.xlane.f32.xlu0 %v1266
    %v1268 = vpop.xlane.xlu0 %1267
    %v1269 = vsel %vm1250, %v1248, -inf
    %1270 = vmax.xlane.f32.xlu0 %v1269
    %v1271 = vpop.xlane.xlu0 %1270
    %v1272 = vsel %vm1250, %v1249, -inf
    %1273 = vmax.xlane.f32.xlu0 %v1272
    %v1274 = vpop.xlane.xlu0 %1273
    %v1275 = vsub.f32 %v1242, %v1253
    %v1276 = vsub.f32 %v1243, %v1256
    %v1277 = vsub.f32 %v1244, %v1259
    %v1278 = vsub.f32 %v1245, %v1262
    %v1279 = vsub.f32 %v1246, %v1265
    %v1280 = vsub.f32 %v1247, %v1268
    %v1281 = vsub.f32 %v1248, %v1271
    %v1282 = vsub.f32 %v1249, %v1274
    %v1283 = vmul.f32 %v1275, 1.442695
    %v1284 = vpow.pop %v1283
    %v1285 = vmul.f32 %v1276, 1.442695
    %v1286 = vpow.pop %v1285
    %v1287 = vmul.f32 %v1277, 1.442695
    %v1288 = vpow.pop %v1287
    %v1289 = vmul.f32 %v1278, 1.442695
    %v1290 = vpow.pop %v1289
    %v1291 = vmul.f32 %v1279, 1.442695
    %v1292 = vpow.pop %v1291
    %v1293 = vmul.f32 %v1280, 1.442695
    %v1294 = vpow.pop %v1293
    %v1295 = vmul.f32 %v1281, 1.442695
    %v1296 = vpow.pop %v1295
    %v1297 = vmul.f32 %v1282, 1.442695
    %v1298 = vpow.pop %v1297
    %v1299 = vsel %vm1250, %v1284, 0.0
    %1300 = vadd.xlane.f32.xlu0 %v1299
    %v1301 = vpop.xlane.xlu0 %1300
    %v1302 = vsel %vm1250, %v1286, 0.0
    %1303 = vadd.xlane.f32.xlu0 %v1302
    %v1304 = vpop.xlane.xlu0 %1303
    %v1305 = vsel %vm1250, %v1288, 0.0
    %1306 = vadd.xlane.f32.xlu0 %v1305
    %v1307 = vpop.xlane.xlu0 %1306
    %v1308 = vsel %vm1250, %v1290, 0.0
    %1309 = vadd.xlane.f32.xlu0 %v1308
    %v1310 = vpop.xlane.xlu0 %1309
    %v1311 = vsel %vm1250, %v1292, 0.0
    %1312 = vadd.xlane.f32.xlu0 %v1311
    %v1313 = vpop.xlane.xlu0 %1312
    %v1314 = vsel %vm1250, %v1294, 0.0
    %1315 = vadd.xlane.f32.xlu0 %v1314
    %v1316 = vpop.xlane.xlu0 %1315
    %v1317 = vsel %vm1250, %v1296, 0.0
    %1318 = vadd.xlane.f32.xlu0 %v1317
    %v1319 = vpop.xlane.xlu0 %1318
    %v1320 = vsel %vm1250, %v1298, 0.0
    %1321 = vadd.xlane.f32.xlu0 %v1320
    %v1322 = vpop.xlane.xlu0 %1321
    %v1323 = vrcp.pop %v1301
    %v1324 = vrcp.pop %v1304
    %v1325 = vrcp.pop %v1307
    %v1326 = vrcp.pop %v1310
    %v1327 = vrcp.pop %v1313
    %v1328 = vrcp.pop %v1316
    %v1329 = vrcp.pop %v1319
    %v1330 = vrcp.pop %v1322
    %v1331 = vmul.f32 %v1284, %v1323
    %v1332 = vmul.f32 %v1286, %v1324
    %v1333 = vmul.f32 %v1288, %v1325
    %v1334 = vmul.f32 %v1290, %v1326
    %v1335 = vmul.f32 %v1292, %v1327
    %v1336 = vmul.f32 %v1294, %v1328
    %v1337 = vmul.f32 %v1296, %v1329
    %v1338 = vmul.f32 %v1298, %v1330
    %v1339 = vpack.c.bf16 %v1331, %v1331
    %v1340 = vpack.c.bf16 %v1332, %v1332
    %v1341 = vpack.c.bf16 %v1333, %v1333
    %v1342 = vpack.c.bf16 %v1334, %v1334
    %v1343 = vpack.c.bf16 %v1335, %v1335
    %v1344 = vpack.c.bf16 %v1336, %v1336
    %v1345 = vpack.c.bf16 %v1337, %v1337
    %v1346 = vpack.c.bf16 %v1338, %v1338
    %v1347 = vpack.c.bf16 %v806, %v806
    %v1348 = vpack.c.bf16 %v810, %v810
    %v1349 = vpack.c.bf16 %v808, %v808
    %v1350 = vpack.c.bf16 %v812, %v812
    %v1351 = vpack.c.bf16 %v849, %v849
    %v1352 = vpack.c.bf16 %v853, %v853
    %v1353 = vpack.c.bf16 %v851, %v851
    %v1354 = vpack.c.bf16 %v855, %v855
    %v1356 = vsel %vm1250, %v1339, 0
    %vm1358 = vcmask 1043456
    %v1360 = vsel %vm1358, %v1347, 0
    %1362 = vmatprep.subr.bf16.mxu0 0
    %1363 = vmatpush1.bf16.msra.mxu0 %v1360
    %1364 = vmatprep.subr.bf16.mxu0 0
    %1365 = vmatpush1.bf16.msra.mxu0 0
    %1366 = vmatprep.subr.bf16.mxu0 0
    %1367 = vmatpush1.bf16.msra.mxu0 0
    %1368 = vmatprep.subr.bf16.mxu0 0
    %1369 = vmatpush1.bf16.msra.mxu0 0
    %1370 = vmatprep.subr.bf16.mxu0 0
    %1371 = vmatpush1.bf16.msra.mxu0 0
    %1372 = vmatprep.subr.bf16.mxu0 0
    %1373 = vmatpush1.bf16.msra.mxu0 0
    %1374 = vmatprep.subr.bf16.mxu0 0
    %1375 = vmatpush1.bf16.msra.mxu0 0
    %1376 = vmatprep.subr.bf16.mxu0 0
    %1377 = vmatpush1.bf16.msra.mxu0 0
    %1378 = vmatprep.subr.bf16.mxu0 0
    %1379 = vmatpush1.bf16.msra.mxu0 0
    %1380 = vmatprep.subr.bf16.mxu0 0
    %1381 = vmatpush1.bf16.msra.mxu0 0
    %1382 = vmatprep.subr.bf16.mxu0 0
    %1383 = vmatpush1.bf16.msra.mxu0 0
    %1384 = vmatprep.subr.bf16.mxu0 0
    %1385 = vmatpush1.bf16.msra.mxu0 0
    %1386 = vmatprep.subr.bf16.mxu0 0
    %1387 = vmatpush1.bf16.msra.mxu0 0
    %1388 = vmatprep.subr.bf16.mxu0 0
    %1389 = vmatpush1.bf16.msra.mxu0 0
    %1390 = vmatprep.subr.bf16.mxu0 0
    %1391 = vmatpush1.bf16.msra.mxu0 0
    %1392 = vmatprep.subr.bf16.mxu0 0
    %1393 = vmatpush1.bf16.msra.mxu0 0
    %1394 = vmatprep.mubr.bf16.mxu0 0
    %1395 = vmatmul.mubr.bf16.gmra.mrb[0].mxu0 %v1356
    %v1396 = vpop.f32.mrb[0].mxu0
    %v1397 = vadd.f32 0.0, %v1396
    %v1398 = vpop.f32.mrb[0].mxu0
    %v1399 = vpop.f32.mrb[0].mxu0
    %v1400 = vpop.f32.mrb[0].mxu0
    %1401 = vdwg.mxu0
    %v1403 = vsel %vm1250, %v1340, 0
    %v1406 = vsel %vm1358, %v1348, 0
    %1408 = vmatprep.subr.bf16.mxu0 0
    %1409 = vmatpush1.bf16.msra.mxu0 %v1406
    %1410 = vmatprep.subr.bf16.mxu0 0
    %1411 = vmatpush1.bf16.msra.mxu0 0
    %1412 = vmatprep.subr.bf16.mxu0 0
    %1413 = vmatpush1.bf16.msra.mxu0 0
    %1414 = vmatprep.subr.bf16.mxu0 0
    %1415 = vmatpush1.bf16.msra.mxu0 0
    %1416 = vmatprep.subr.bf16.mxu0 0
    %1417 = vmatpush1.bf16.msra.mxu0 0
    %1418 = vmatprep.subr.bf16.mxu0 0
    %1419 = vmatpush1.bf16.msra.mxu0 0
    %1420 = vmatprep.subr.bf16.mxu0 0
    %1421 = vmatpush1.bf16.msra.mxu0 0
    %1422 = vmatprep.subr.bf16.mxu0 0
    %1423 = vmatpush1.bf16.msra.mxu0 0
    %1424 = vmatprep.subr.bf16.mxu0 0
    %1425 = vmatpush1.bf16.msra.mxu0 0
    %1426 = vmatprep.subr.bf16.mxu0 0
    %1427 = vmatpush1.bf16.msra.mxu0 0
    %1428 = vmatprep.subr.bf16.mxu0 0
    %1429 = vmatpush1.bf16.msra.mxu0 0
    %1430 = vmatprep.subr.bf16.mxu0 0
    %1431 = vmatpush1.bf16.msra.mxu0 0
    %1432 = vmatprep.subr.bf16.mxu0 0
    %1433 = vmatpush1.bf16.msra.mxu0 0
    %1434 = vmatprep.subr.bf16.mxu0 0
    %1435 = vmatpush1.bf16.msra.mxu0 0
    %1436 = vmatprep.subr.bf16.mxu0 0
    %1437 = vmatpush1.bf16.msra.mxu0 0
    %1438 = vmatprep.subr.bf16.mxu0 0
    %1439 = vmatpush1.bf16.msra.mxu0 0
    %1440 = vmatprep.mubr.bf16.mxu0 0
    %1441 = vmatmul.mubr.bf16.gmra.mrb[0].mxu0 %v1403
    %v1442 = vpop.f32.mrb[0].mxu0
    %v1443 = vadd.f32 0.0, %v1442
    %v1444 = vpop.f32.mrb[0].mxu0
    %v1445 = vpop.f32.mrb[0].mxu0
    %v1446 = vpop.f32.mrb[0].mxu0
    %1447 = vdwg.mxu0
    %v1449 = vsel %vm1250, %v1341, 0
    %v1452 = vsel %vm1358, %v1349, 0
    %1454 = vmatprep.subr.bf16.mxu0 0
    %1455 = vmatpush1.bf16.msra.mxu0 %v1452
    %1456 = vmatprep.subr.bf16.mxu0 0
    %1457 = vmatpush1.bf16.msra.mxu0 0
    %1458 = vmatprep.subr.bf16.mxu0 0
    %1459 = vmatpush1.bf16.msra.mxu0 0
    %1460 = vmatprep.subr.bf16.mxu0 0
    %1461 = vmatpush1.bf16.msra.mxu0 0
    %1462 = vmatprep.subr.bf16.mxu0 0
    %1463 = vmatpush1.bf16.msra.mxu0 0
    %1464 = vmatprep.subr.bf16.mxu0 0
    %1465 = vmatpush1.bf16.msra.mxu0 0
    %1466 = vmatprep.subr.bf16.mxu0 0
    %1467 = vmatpush1.bf16.msra.mxu0 0
    %1468 = vmatprep.subr.bf16.mxu0 0
    %1469 = vmatpush1.bf16.msra.mxu0 0
    %1470 = vmatprep.subr.bf16.mxu0 0
    %1471 = vmatpush1.bf16.msra.mxu0 0
    %1472 = vmatprep.subr.bf16.mxu0 0
    %1473 = vmatpush1.bf16.msra.mxu0 0
    %1474 = vmatprep.subr.bf16.mxu0 0
    %1475 = vmatpush1.bf16.msra.mxu0 0
    %1476 = vmatprep.subr.bf16.mxu0 0
    %1477 = vmatpush1.bf16.msra.mxu0 0
    %1478 = vmatprep.subr.bf16.mxu0 0
    %1479 = vmatpush1.bf16.msra.mxu0 0
    %1480 = vmatprep.subr.bf16.mxu0 0
    %1481 = vmatpush1.bf16.msra.mxu0 0
    %1482 = vmatprep.subr.bf16.mxu0 0
    %1483 = vmatpush1.bf16.msra.mxu0 0
    %1484 = vmatprep.subr.bf16.mxu0 0
    %1485 = vmatpush1.bf16.msra.mxu0 0
    %1486 = vmatprep.mubr.bf16.mxu0 0
    %1487 = vmatmul.mubr.bf16.gmra.mrb[0].mxu0 %v1449
    %v1488 = vpop.f32.mrb[0].mxu0
    %v1489 = vadd.f32 0.0, %v1488
    %v1490 = vpop.f32.mrb[0].mxu0
    %v1491 = vpop.f32.mrb[0].mxu0
    %v1492 = vpop.f32.mrb[0].mxu0
    %1493 = vdwg.mxu0
    %v1495 = vsel %vm1250, %v1342, 0
    %v1498 = vsel %vm1358, %v1350, 0
    %1500 = vmatprep.subr.bf16.mxu0 0
    %1501 = vmatpush1.bf16.msra.mxu0 %v1498
    %1502 = vmatprep.subr.bf16.mxu0 0
    %1503 = vmatpush1.bf16.msra.mxu0 0
    %1504 = vmatprep.subr.bf16.mxu0 0
    %1505 = vmatpush1.bf16.msra.mxu0 0
    %1506 = vmatprep.subr.bf16.mxu0 0
    %1507 = vmatpush1.bf16.msra.mxu0 0
    %1508 = vmatprep.subr.bf16.mxu0 0
    %1509 = vmatpush1.bf16.msra.mxu0 0
    %1510 = vmatprep.subr.bf16.mxu0 0
    %1511 = vmatpush1.bf16.msra.mxu0 0
    %1512 = vmatprep.subr.bf16.mxu0 0
    %1513 = vmatpush1.bf16.msra.mxu0 0
    %1514 = vmatprep.subr.bf16.mxu0 0
    %1515 = vmatpush1.bf16.msra.mxu0 0
    %1516 = vmatprep.subr.bf16.mxu0 0
    %1517 = vmatpush1.bf16.msra.mxu0 0
    %1518 = vmatprep.subr.bf16.mxu0 0
    %1519 = vmatpush1.bf16.msra.mxu0 0
    %1520 = vmatprep.subr.bf16.mxu0 0
    %1521 = vmatpush1.bf16.msra.mxu0 0
    %1522 = vmatprep.subr.bf16.mxu0 0
    %1523 = vmatpush1.bf16.msra.mxu0 0
    %1524 = vmatprep.subr.bf16.mxu0 0
    %1525 = vmatpush1.bf16.msra.mxu0 0
    %1526 = vmatprep.subr.bf16.mxu0 0
    %1527 = vmatpush1.bf16.msra.mxu0 0
    %1528 = vmatprep.subr.bf16.mxu0 0
    %1529 = vmatpush1.bf16.msra.mxu0 0
    %1530 = vmatprep.subr.bf16.mxu0 0
    %1531 = vmatpush1.bf16.msra.mxu0 0
    %1532 = vmatprep.mubr.bf16.mxu0 0
    %1533 = vmatmul.mubr.bf16.gmra.mrb[0].mxu0 %v1495
    %v1534 = vpop.f32.mrb[0].mxu0
    %v1535 = vadd.f32 0.0, %v1534
    %v1536 = vpop.f32.mrb[0].mxu0
    %v1537 = vpop.f32.mrb[0].mxu0
    %v1538 = vpop.f32.mrb[0].mxu0
    %1539 = vdwg.mxu0
    %v1541 = vsel %vm1250, %v1343, 0
    %v1544 = vsel %vm1358, %v1351, 0
    %1546 = vmatprep.subr.bf16.mxu0 0
    %1547 = vmatpush1.bf16.msra.mxu0 %v1544
    %1548 = vmatprep.subr.bf16.mxu0 0
    %1549 = vmatpush1.bf16.msra.mxu0 0
    %1550 = vmatprep.subr.bf16.mxu0 0
    %1551 = vmatpush1.bf16.msra.mxu0 0
    %1552 = vmatprep.subr.bf16.mxu0 0
    %1553 = vmatpush1.bf16.msra.mxu0 0
    %1554 = vmatprep.subr.bf16.mxu0 0
    %1555 = vmatpush1.bf16.msra.mxu0 0
    %1556 = vmatprep.subr.bf16.mxu0 0
    %1557 = vmatpush1.bf16.msra.mxu0 0
    %1558 = vmatprep.subr.bf16.mxu0 0
    %1559 = vmatpush1.bf16.msra.mxu0 0
    %1560 = vmatprep.subr.bf16.mxu0 0
    %1561 = vmatpush1.bf16.msra.mxu0 0
    %1562 = vmatprep.subr.bf16.mxu0 0
    %1563 = vmatpush1.bf16.msra.mxu0 0
    %1564 = vmatprep.subr.bf16.mxu0 0
    %1565 = vmatpush1.bf16.msra.mxu0 0
    %1566 = vmatprep.subr.bf16.mxu0 0
    %1567 = vmatpush1.bf16.msra.mxu0 0
    %1568 = vmatprep.subr.bf16.mxu0 0
    %1569 = vmatpush1.bf16.msra.mxu0 0
    %1570 = vmatprep.subr.bf16.mxu0 0
    %1571 = vmatpush1.bf16.msra.mxu0 0
    %1572 = vmatprep.subr.bf16.mxu0 0
    %1573 = vmatpush1.bf16.msra.mxu0 0
    %1574 = vmatprep.subr.bf16.mxu0 0
    %1575 = vmatpush1.bf16.msra.mxu0 0
    %1576 = vmatprep.subr.bf16.mxu0 0
    %1577 = vmatpush1.bf16.msra.mxu0 0
    %1578 = vmatprep.mubr.bf16.mxu0 0
    %1579 = vmatmul.mubr.bf16.gmra.mrb[0].mxu0 %v1541
    %v1580 = vpop.f32.mrb[0].mxu0
    %v1581 = vadd.f32 0.0, %v1580
    %v1582 = vpop.f32.mrb[0].mxu0
    %v1583 = vpop.f32.mrb[0].mxu0
    %v1584 = vpop.f32.mrb[0].mxu0
    %1585 = vdwg.mxu0
    %v1587 = vsel %vm1250, %v1344, 0
    %v1590 = vsel %vm1358, %v1352, 0
    %1592 = vmatprep.subr.bf16.mxu0 0
    %1593 = vmatpush1.bf16.msra.mxu0 %v1590
    %1594 = vmatprep.subr.bf16.mxu0 0
    %1595 = vmatpush1.bf16.msra.mxu0 0
    %1596 = vmatprep.subr.bf16.mxu0 0
    %1597 = vmatpush1.bf16.msra.mxu0 0
    %1598 = vmatprep.subr.bf16.mxu0 0
    %1599 = vmatpush1.bf16.msra.mxu0 0
    %1600 = vmatprep.subr.bf16.mxu0 0
    %1601 = vmatpush1.bf16.msra.mxu0 0
    %1602 = vmatprep.subr.bf16.mxu0 0
    %1603 = vmatpush1.bf16.msra.mxu0 0
    %1604 = vmatprep.subr.bf16.mxu0 0
    %1605 = vmatpush1.bf16.msra.mxu0 0
    %1606 = vmatprep.subr.bf16.mxu0 0
    %1607 = vmatpush1.bf16.msra.mxu0 0
    %1608 = vmatprep.subr.bf16.mxu0 0
    %1609 = vmatpush1.bf16.msra.mxu0 0
    %1610 = vmatprep.subr.bf16.mxu0 0
    %1611 = vmatpush1.bf16.msra.mxu0 0
    %1612 = vmatprep.subr.bf16.mxu0 0
    %1613 = vmatpush1.bf16.msra.mxu0 0
    %1614 = vmatprep.subr.bf16.mxu0 0
    %1615 = vmatpush1.bf16.msra.mxu0 0
    %1616 = vmatprep.subr.bf16.mxu0 0
    %1617 = vmatpush1.bf16.msra.mxu0 0
    %1618 = vmatprep.subr.bf16.mxu0 0
    %1619 = vmatpush1.bf16.msra.mxu0 0
    %1620 = vmatprep.subr.bf16.mxu0 0
    %1621 = vmatpush1.bf16.msra.mxu0 0
    %1622 = vmatprep.subr.bf16.mxu0 0
    %1623 = vmatpush1.bf16.msra.mxu0 0
    %1624 = vmatprep.mubr.bf16.mxu0 0
    %1625 = vmatmul.mubr.bf16.gmra.mrb[0].mxu0 %v1587
    %v1626 = vpop.f32.mrb[0].mxu0
    %v1627 = vadd.f32 0.0, %v1626
    %v1628 = vpop.f32.mrb[0].mxu0
    %v1629 = vpop.f32.mrb[0].mxu0
    %v1630 = vpop.f32.mrb[0].mxu0
    %1631 = vdwg.mxu0
    %v1633 = vsel %vm1250, %v1345, 0
    %v1636 = vsel %vm1358, %v1353, 0
    %1638 = vmatprep.subr.bf16.mxu0 0
    %1639 = vmatpush1.bf16.msra.mxu0 %v1636
    %1640 = vmatprep.subr.bf16.mxu0 0
    %1641 = vmatpush1.bf16.msra.mxu0 0
    %1642 = vmatprep.subr.bf16.mxu0 0
    %1643 = vmatpush1.bf16.msra.mxu0 0
    %1644 = vmatprep.subr.bf16.mxu0 0
    %1645 = vmatpush1.bf16.msra.mxu0 0
    %1646 = vmatprep.subr.bf16.mxu0 0
    %1647 = vmatpush1.bf16.msra.mxu0 0
    %1648 = vmatprep.subr.bf16.mxu0 0
    %1649 = vmatpush1.bf16.msra.mxu0 0
    %1650 = vmatprep.subr.bf16.mxu0 0
    %1651 = vmatpush1.bf16.msra.mxu0 0
    %1652 = vmatprep.subr.bf16.mxu0 0
    %1653 = vmatpush1.bf16.msra.mxu0 0
    %1654 = vmatprep.subr.bf16.mxu0 0
    %1655 = vmatpush1.bf16.msra.mxu0 0
    %1656 = vmatprep.subr.bf16.mxu0 0
    %1657 = vmatpush1.bf16.msra.mxu0 0
    %1658 = vmatprep.subr.bf16.mxu0 0
    %1659 = vmatpush1.bf16.msra.mxu0 0
    %1660 = vmatprep.subr.bf16.mxu0 0
    %1661 = vmatpush1.bf16.msra.mxu0 0
    %1662 = vmatprep.subr.bf16.mxu0 0
    %1663 = vmatpush1.bf16.msra.mxu0 0
    %1664 = vmatprep.subr.bf16.mxu0 0
    %1665 = vmatpush1.bf16.msra.mxu0 0
    %1666 = vmatprep.subr.bf16.mxu0 0
    %1667 = vmatpush1.bf16.msra.mxu0 0
    %1668 = vmatprep.subr.bf16.mxu0 0
    %1669 = vmatpush1.bf16.msra.mxu0 0
    %1670 = vmatprep.mubr.bf16.mxu0 0
    %1671 = vmatmul.mubr.bf16.gmra.mrb[0].mxu0 %v1633
    %v1672 = vpop.f32.mrb[0].mxu0
    %v1673 = vadd.f32 0.0, %v1672
    %v1674 = vpop.f32.mrb[0].mxu0
    %v1675 = vpop.f32.mrb[0].mxu0
    %v1676 = vpop.f32.mrb[0].mxu0
    %1677 = vdwg.mxu0
    %v1679 = vsel %vm1250, %v1346, 0
    %v1682 = vsel %vm1358, %v1354, 0
    %1684 = vmatprep.subr.bf16.mxu0 0
    %1685 = vmatpush1.bf16.msra.mxu0 %v1682
    %1686 = vmatprep.subr.bf16.mxu0 0
    %1687 = vmatpush1.bf16.msra.mxu0 0
    %1688 = vmatprep.subr.bf16.mxu0 0
    %1689 = vmatpush1.bf16.msra.mxu0 0
    %1690 = vmatprep.subr.bf16.mxu0 0
    %1691 = vmatpush1.bf16.msra.mxu0 0
    %1692 = vmatprep.subr.bf16.mxu0 0
    %1693 = vmatpush1.bf16.msra.mxu0 0
    %1694 = vmatprep.subr.bf16.mxu0 0
    %1695 = vmatpush1.bf16.msra.mxu0 0
    %1696 = vmatprep.subr.bf16.mxu0 0
    %1697 = vmatpush1.bf16.msra.mxu0 0
    %1698 = vmatprep.subr.bf16.mxu0 0
    %1699 = vmatpush1.bf16.msra.mxu0 0
    %1700 = vmatprep.subr.bf16.mxu0 0
    %1701 = vmatpush1.bf16.msra.mxu0 0
    %1702 = vmatprep.subr.bf16.mxu0 0
    %1703 = vmatpush1.bf16.msra.mxu0 0
    %1704 = vmatprep.subr.bf16.mxu0 0
    %1705 = vmatpush1.bf16.msra.mxu0 0
    %1706 = vmatprep.subr.bf16.mxu0 0
    %1707 = vmatpush1.bf16.msra.mxu0 0
    %1708 = vmatprep.subr.bf16.mxu0 0
    %1709 = vmatpush1.bf16.msra.mxu0 0
    %1710 = vmatprep.subr.bf16.mxu0 0
    %1711 = vmatpush1.bf16.msra.mxu0 0
    %1712 = vmatprep.subr.bf16.mxu0 0
    %1713 = vmatpush1.bf16.msra.mxu0 0
    %1714 = vmatprep.subr.bf16.mxu0 0
    %1715 = vmatpush1.bf16.msra.mxu0 0
    %1716 = vmatprep.mubr.bf16.mxu0 0
    %1717 = vmatmul.mubr.bf16.gmra.mrb[0].mxu0 %v1679
    %v1718 = vpop.f32.mrb[0].mxu0
    %v1719 = vadd.f32 0.0, %v1718
    %v1720 = vpop.f32.mrb[0].mxu0
    %v1721 = vpop.f32.mrb[0].mxu0
    %v1722 = vpop.f32.mrb[0].mxu0
    %1723 = vdwg.mxu0
    %v1724 = vld [vmem:[%s8] sm:$0x1]
    %v1725 = vpack.c.bf16 %v1443, %v1397
    %v1726 = vld [vmem:[%s7] sm:$0xf]
    %v1727 = vld [vmem:[%s7 + $0x4] sm:$0xf]
    %v1730 = vunpack.c.l.b16 %v1726
    %v1731 = vunpack.c.l.b16 %v1727
    %v1732 = vpack.c.b16 %v1731, %v1730
    %v1735 = vsel %vm873, %v1725, 0
    %1737 = vmatprep.subr.bf16.mxu0 0
    %1738 = vmatpush1.bf16.msra.mxu0 %v1732
    %1739 = vmatprep.subr.bf16.mxu0 0
    %1740 = vmatpush1.bf16.msra.mxu0 0
    %1741 = vmatprep.subr.bf16.mxu0 0
    %1742 = vmatpush1.bf16.msra.mxu0 0
    %1743 = vmatprep.subr.bf16.mxu0 0
    %1744 = vmatpush1.bf16.msra.mxu0 0
    %1745 = vmatprep.subr.bf16.mxu0 0
    %1746 = vmatpush1.bf16.msra.mxu0 0
    %1747 = vmatprep.subr.bf16.mxu0 0
    %1748 = vmatpush1.bf16.msra.mxu0 0
    %1749 = vmatprep.subr.bf16.mxu0 0
    %1750 = vmatpush1.bf16.msra.mxu0 0
    %1751 = vmatprep.subr.bf16.mxu0 0
    %1752 = vmatpush1.bf16.msra.mxu0 0
    %1753 = vmatprep.subr.bf16.mxu0 0
    %1754 = vmatpush1.bf16.msra.mxu0 0
    %1755 = vmatprep.subr.bf16.mxu0 0
    %1756 = vmatpush1.bf16.msra.mxu0 0
    %1757 = vmatprep.subr.bf16.mxu0 0
    %1758 = vmatpush1.bf16.msra.mxu0 0
    %1759 = vmatprep.subr.bf16.mxu0 0
    %1760 = vmatpush1.bf16.msra.mxu0 0
    %1761 = vmatprep.subr.bf16.mxu0 0
    %1762 = vmatpush1.bf16.msra.mxu0 0
    %1763 = vmatprep.subr.bf16.mxu0 0
    %1764 = vmatpush1.bf16.msra.mxu0 0
    %1765 = vmatprep.subr.bf16.mxu0 0
    %1766 = vmatpush1.bf16.msra.mxu0 0
    %1767 = vmatprep.subr.bf16.mxu0 0
    %1768 = vmatpush1.bf16.msra.mxu0 0
    %1769 = vmatprep.mubr.bf16.mxu0 0
    %1770 = vmatmul.mubr.bf16.gmra.mrb[0].mxu0 %v1735
    %v1771 = vpop.f32.mrb[0].mxu0
    %v1772 = vadd.f32 0.0, %v1771
    %v1773 = vpop.f32.mrb[0].mxu0
    %v1774 = vpop.f32.mrb[0].mxu0
    %v1775 = vadd.f32 0.0, %v1774
    %v1776 = vpop.f32.mrb[0].mxu0
    %1777 = vdwg.mxu0
    %v1779 = vlaneseq
    %v1780 = vshrl.u32 %v1779, 7
    %v1781 = vsub.s32 0, %v1780
    %v1782 = vrot.slane %v1724, %v1781
    %v1784 = vadd.f32 %v1782, %v1772
    %v1785 = vadd.f32 %v1782, %v1775
    %v1786 = vpack.c.bf16 %v1535, %v1489
    %s1787 = scalar_lea.vmem %s7, 8
    %v1788 = vld [vmem:[%s1787] sm:$0xf]
    %v1789 = vld [vmem:[%s1787 + $0x4] sm:$0xf]
    %v1792 = vunpack.c.l.b16 %v1788
    %v1793 = vunpack.c.l.b16 %v1789
    %v1794 = vpack.c.b16 %v1793, %v1792
    %v1797 = vsel %vm873, %v1786, 0
    %1799 = vmatprep.subr.bf16.mxu0 0
    %1800 = vmatpush1.bf16.msra.mxu0 %v1794
    %1801 = vmatprep.subr.bf16.mxu0 0
    %1802 = vmatpush1.bf16.msra.mxu0 0
    %1803 = vmatprep.subr.bf16.mxu0 0
    %1804 = vmatpush1.bf16.msra.mxu0 0
    %1805 = vmatprep.subr.bf16.mxu0 0
    %1806 = vmatpush1.bf16.msra.mxu0 0
    %1807 = vmatprep.subr.bf16.mxu0 0
    %1808 = vmatpush1.bf16.msra.mxu0 0
    %1809 = vmatprep.subr.bf16.mxu0 0
    %1810 = vmatpush1.bf16.msra.mxu0 0
    %1811 = vmatprep.subr.bf16.mxu0 0
    %1812 = vmatpush1.bf16.msra.mxu0 0
    %1813 = vmatprep.subr.bf16.mxu0 0
    %1814 = vmatpush1.bf16.msra.mxu0 0
    %1815 = vmatprep.subr.bf16.mxu0 0
    %1816 = vmatpush1.bf16.msra.mxu0 0
    %1817 = vmatprep.subr.bf16.mxu0 0
    %1818 = vmatpush1.bf16.msra.mxu0 0
    %1819 = vmatprep.subr.bf16.mxu0 0
    %1820 = vmatpush1.bf16.msra.mxu0 0
    %1821 = vmatprep.subr.bf16.mxu0 0
    %1822 = vmatpush1.bf16.msra.mxu0 0
    %1823 = vmatprep.subr.bf16.mxu0 0
    %1824 = vmatpush1.bf16.msra.mxu0 0
    %1825 = vmatprep.subr.bf16.mxu0 0
    %1826 = vmatpush1.bf16.msra.mxu0 0
    %1827 = vmatprep.subr.bf16.mxu0 0
    %1828 = vmatpush1.bf16.msra.mxu0 0
    %1829 = vmatprep.subr.bf16.mxu0 0
    %1830 = vmatpush1.bf16.msra.mxu0 0
    %1831 = vmatprep.mubr.bf16.mxu0 0
    %1832 = vmatmul.mubr.bf16.gmra.mrb[0].mxu0 %v1797
    %v1833 = vpop.f32.mrb[0].mxu0
    %v1834 = vadd.f32 0.0, %v1833
    %v1835 = vpop.f32.mrb[0].mxu0
    %v1836 = vpop.f32.mrb[0].mxu0
    %v1837 = vadd.f32 0.0, %v1836
    %v1838 = vpop.f32.mrb[0].mxu0
    %1839 = vdwg.mxu0
    %v1840 = vadd.f32 %v1784, %v1834
    %v1841 = vadd.f32 %v1785, %v1837
    %v1842 = vpack.c.bf16 %v1627, %v1581
    %s1843 = scalar_lea.vmem %s7, 16
    %v1844 = vld [vmem:[%s1843] sm:$0xf]
    %v1845 = vld [vmem:[%s1843 + $0x4] sm:$0xf]
    %v1848 = vunpack.c.l.b16 %v1844
    %v1849 = vunpack.c.l.b16 %v1845
    %v1850 = vpack.c.b16 %v1849, %v1848
    %v1853 = vsel %vm873, %v1842, 0
    %1855 = vmatprep.subr.bf16.mxu0 0
    %1856 = vmatpush1.bf16.msra.mxu0 %v1850
    %1857 = vmatprep.subr.bf16.mxu0 0
    %1858 = vmatpush1.bf16.msra.mxu0 0
    %1859 = vmatprep.subr.bf16.mxu0 0
    %1860 = vmatpush1.bf16.msra.mxu0 0
    %1861 = vmatprep.subr.bf16.mxu0 0
    %1862 = vmatpush1.bf16.msra.mxu0 0
    %1863 = vmatprep.subr.bf16.mxu0 0
    %1864 = vmatpush1.bf16.msra.mxu0 0
    %1865 = vmatprep.subr.bf16.mxu0 0
    %1866 = vmatpush1.bf16.msra.mxu0 0
    %1867 = vmatprep.subr.bf16.mxu0 0
    %1868 = vmatpush1.bf16.msra.mxu0 0
    %1869 = vmatprep.subr.bf16.mxu0 0
    %1870 = vmatpush1.bf16.msra.mxu0 0
    %1871 = vmatprep.subr.bf16.mxu0 0
    %1872 = vmatpush1.bf16.msra.mxu0 0
    %1873 = vmatprep.subr.bf16.mxu0 0
    %1874 = vmatpush1.bf16.msra.mxu0 0
    %1875 = vmatprep.subr.bf16.mxu0 0
    %1876 = vmatpush1.bf16.msra.mxu0 0
    %1877 = vmatprep.subr.bf16.mxu0 0
    %1878 = vmatpush1.bf16.msra.mxu0 0
    %1879 = vmatprep.subr.bf16.mxu0 0
    %1880 = vmatpush1.bf16.msra.mxu0 0
    %1881 = vmatprep.subr.bf16.mxu0 0
    %1882 = vmatpush1.bf16.msra.mxu0 0
    %1883 = vmatprep.subr.bf16.mxu0 0
    %1884 = vmatpush1.bf16.msra.mxu0 0
    %1885 = vmatprep.subr.bf16.mxu0 0
    %1886 = vmatpush1.bf16.msra.mxu0 0
    %1887 = vmatprep.mubr.bf16.mxu0 0
    %1888 = vmatmul.mubr.bf16.gmra.mrb[0].mxu0 %v1853
    %v1889 = vpop.f32.mrb[0].mxu0
    %v1890 = vadd.f32 0.0, %v1889
    %v1891 = vpop.f32.mrb[0].mxu0
    %v1892 = vpop.f32.mrb[0].mxu0
    %v1893 = vadd.f32 0.0, %v1892
    %v1894 = vpop.f32.mrb[0].mxu0
    %1895 = vdwg.mxu0
    %v1896 = vadd.f32 %v1840, %v1890
    %v1897 = vadd.f32 %v1841, %v1893
    %v1898 = vpack.c.bf16 %v1719, %v1673
    %s1899 = scalar_lea.vmem %s7, 24
    %v1900 = vld [vmem:[%s1899] sm:$0xf]
    %v1901 = vld [vmem:[%s1899 + $0x4] sm:$0xf]
    %v1904 = vunpack.c.l.b16 %v1900
    %v1905 = vunpack.c.l.b16 %v1901
    %v1906 = vpack.c.b16 %v1905, %v1904
    %v1909 = vsel %vm873, %v1898, 0
    %1911 = vmatprep.subr.bf16.mxu0 0
    %1912 = vmatpush1.bf16.msra.mxu0 %v1906
    %1913 = vmatprep.subr.bf16.mxu0 0
    %1914 = vmatpush1.bf16.msra.mxu0 0
    %1915 = vmatprep.subr.bf16.mxu0 0
    %1916 = vmatpush1.bf16.msra.mxu0 0
    %1917 = vmatprep.subr.bf16.mxu0 0
    %1918 = vmatpush1.bf16.msra.mxu0 0
    %1919 = vmatprep.subr.bf16.mxu0 0
    %1920 = vmatpush1.bf16.msra.mxu0 0
    %1921 = vmatprep.subr.bf16.mxu0 0
    %1922 = vmatpush1.bf16.msra.mxu0 0
    %1923 = vmatprep.subr.bf16.mxu0 0
    %1924 = vmatpush1.bf16.msra.mxu0 0
    %1925 = vmatprep.subr.bf16.mxu0 0
    %1926 = vmatpush1.bf16.msra.mxu0 0
    %1927 = vmatprep.subr.bf16.mxu0 0
    %1928 = vmatpush1.bf16.msra.mxu0 0
    %1929 = vmatprep.subr.bf16.mxu0 0
    %1930 = vmatpush1.bf16.msra.mxu0 0
    %1931 = vmatprep.subr.bf16.mxu0 0
    %1932 = vmatpush1.bf16.msra.mxu0 0
    %1933 = vmatprep.subr.bf16.mxu0 0
    %1934 = vmatpush1.bf16.msra.mxu0 0
    %1935 = vmatprep.subr.bf16.mxu0 0
    %1936 = vmatpush1.bf16.msra.mxu0 0
    %1937 = vmatprep.subr.bf16.mxu0 0
    %1938 = vmatpush1.bf16.msra.mxu0 0
    %1939 = vmatprep.subr.bf16.mxu0 0
    %1940 = vmatpush1.bf16.msra.mxu0 0
    %1941 = vmatprep.subr.bf16.mxu0 0
    %1942 = vmatpush1.bf16.msra.mxu0 0
    %1943 = vmatprep.mubr.bf16.mxu0 0
    %1944 = vmatmul.mubr.bf16.gmra.mrb[0].mxu0 %v1909
    %v1945 = vpop.f32.mrb[0].mxu0
    %v1946 = vadd.f32 0.0, %v1945
    %v1947 = vpop.f32.mrb[0].mxu0
    %v1948 = vpop.f32.mrb[0].mxu0
    %v1949 = vadd.f32 0.0, %v1948
    %v1950 = vpop.f32.mrb[0].mxu0
    %1951 = vdwg.mxu0
    %v1952 = vadd.f32 %v1896, %v1946
    %v1953 = vadd.f32 %v1897, %v1949
    %v1954 = vadd.f32 %v189, %v1952
    %v1955 = vadd.f32 %v194, %v1953
    %v1956 = vld [vmem:[%s9] sm:$0x1]
    %v1957 = vld [vmem:[%s10] sm:$0x1]
    %v1958 = vsel %vm199, %v1954, 0.0
    %1959 = vadd.xlane.f32.xlu0 %v1958
    %v1960 = vpop.xlane.xlu0 %1959
    %v1961 = vsel %vm199, %v1955, 0.0
    %1962 = vadd.xlane.f32.xlu0 %v1961
    %v1963 = vpop.xlane.xlu0 %1962
    %v1964 = vmul.f32 %v1960, %v206
    %v1965 = vmul.f32 %v1963, %v206
    %v1966 = vsub.f32 %v1954, %v1964
    %v1967 = vsub.f32 %v1955, %v1965
    %v1968 = vmul.f32 %v1966, %v1966
    %v1969 = vmul.f32 %v1967, %v1967
    %v1970 = vsel %vm199, %v1968, 0.0
    %1971 = vadd.xlane.f32.xlu0 %v1970
    %v1972 = vpop.xlane.xlu0 %1971
    %v1973 = vsel %vm199, %v1969, 0.0
    %1974 = vadd.xlane.f32.xlu0 %v1973
    %v1975 = vpop.xlane.xlu0 %1974
    %v1976 = vmul.f32 %v1972, %v206
    %v1977 = vmul.f32 %v1975, %v206
    %v1978 = vadd.f32 %v1976, 1e-05
    %v1979 = vadd.f32 %v1977, 1e-05
    %v1980 = vrsqrt.pop %v1978
    %v1981 = vrsqrt.pop %v1979
    %v1982 = vmul.f32 %v1966, %v1980
    %v1983 = vmul.f32 %v1967, %v1981
    %v1985 = vlaneseq
    %v1986 = vshrl.u32 %v1985, 7
    %v1987 = vsub.s32 0, %v1986
    %v1988 = vrot.slane %v1956, %v1987
    %v1990 = vmul.f32 %v1982, %v1988
    %v1991 = vmul.f32 %v1983, %v1988
    %v1993 = vlaneseq
    %v1994 = vshrl.u32 %v1993, 7
    %v1995 = vsub.s32 0, %v1994
    %v1996 = vrot.slane %v1957, %v1995
    %v1998 = vadd.f32 %v1990, %v1996
    %v1999 = vadd.f32 %v1991, %v1996
    %v2000 = vpack.c.bf16 %v1999, %v1998
    %v2001 = vld [vmem:[%s11] sm:$0xff]
    %v2002 = vld [vmem:[%s11 + $0x8] sm:$0xff]
    %v2003 = vld [vmem:[%s11 + $0x10] sm:$0xff]
    %v2004 = vld [vmem:[%s11 + $0x18] sm:$0xff]
    %v2005 = vld [vmem:[%s11 + $0x20] sm:$0xff]
    %v2006 = vld [vmem:[%s11 + $0x28] sm:$0xff]
    %v2007 = vld [vmem:[%s11 + $0x30] sm:$0xff]
    %v2008 = vld [vmem:[%s11 + $0x38] sm:$0xff]
    %v2009 = vld [vmem:[%s12] sm:$0x3]
    %v2011 = vlaneseq
    %v2012 = vshrl.u32 %v2011, 7
    %v2013 = vsub.s32 0, %v2012
    %v2014 = vrot.slane %v2009, %v2013
    %v2015 = vlaneseq
    %v2016 = vshrl.u32 %v2015, 7
    %v2017 = vsub.s32 1, %v2016
    %v2018 = vrot.slane %v2009, %v2017
    %v2029 = vunpack.c.l.b16 %v2001
    %v2030 = vunpack.c.h.b16 %v2001
    %v2031 = vunpack.c.l.b16 %v2002
    %v2032 = vunpack.c.h.b16 %v2002
    %v2033 = vunpack.c.l.b16 %v2003
    %v2034 = vunpack.c.h.b16 %v2003
    %v2035 = vunpack.c.l.b16 %v2004
    %v2036 = vunpack.c.h.b16 %v2004
    %v2037 = vunpack.c.l.b16 %v2005
    %v2038 = vunpack.c.h.b16 %v2005
    %v2039 = vunpack.c.l.b16 %v2006
    %v2040 = vunpack.c.h.b16 %v2006
    %v2041 = vunpack.c.l.b16 %v2007
    %v2042 = vunpack.c.h.b16 %v2007
    %v2043 = vunpack.c.l.b16 %v2008
    %v2044 = vunpack.c.h.b16 %v2008
    %v2045 = vpack.c.b16 %v2031, %v2029
    %v2046 = vpack.c.b16 %v2032, %v2030
    %v2047 = vpack.c.b16 %v2035, %v2033
    %v2048 = vpack.c.b16 %v2036, %v2034
    %v2049 = vpack.c.b16 %v2039, %v2037
    %v2050 = vpack.c.b16 %v2040, %v2038
    %v2051 = vpack.c.b16 %v2043, %v2041
    %v2052 = vpack.c.b16 %v2044, %v2042
    %v2062 = vsel %vm199, %v2000, 0
    %2064 = vmatprep.subr.bf16.mxu0 %v2046
    %2065 = vmatpush1.bf16.msra.mxu0 %v2045
    %2066 = vmatprep.subr.bf16.mxu0 %v2048
    %2067 = vmatpush1.bf16.msra.mxu0 %v2047
    %2068 = vmatprep.subr.bf16.mxu0 %v2050
    %2069 = vmatpush1.bf16.msra.mxu0 %v2049
    %2070 = vmatprep.subr.bf16.mxu0 %v2052
    %2071 = vmatpush1.bf16.msra.mxu0 %v2051
    %2072 = vmatprep.subr.bf16.mxu0 0
    %2073 = vmatpush1.bf16.msra.mxu0 0
    %2074 = vmatprep.subr.bf16.mxu0 0
    %2075 = vmatpush1.bf16.msra.mxu0 0
    %2076 = vmatprep.subr.bf16.mxu0 0
    %2077 = vmatpush1.bf16.msra.mxu0 0
    %2078 = vmatprep.subr.bf16.mxu0 0
    %2079 = vmatpush1.bf16.msra.mxu0 0
    %2080 = vmatprep.subr.bf16.mxu0 0
    %2081 = vmatpush1.bf16.msra.mxu0 0
    %2082 = vmatprep.subr.bf16.mxu0 0
    %2083 = vmatpush1.bf16.msra.mxu0 0
    %2084 = vmatprep.subr.bf16.mxu0 0
    %2085 = vmatpush1.bf16.msra.mxu0 0
    %2086 = vmatprep.subr.bf16.mxu0 0
    %2087 = vmatpush1.bf16.msra.mxu0 0
    %2088 = vmatprep.subr.bf16.mxu0 0
    %2089 = vmatpush1.bf16.msra.mxu0 0
    %2090 = vmatprep.subr.bf16.mxu0 0
    %2091 = vmatpush1.bf16.msra.mxu0 0
    %2092 = vmatprep.subr.bf16.mxu0 0
    %2093 = vmatpush1.bf16.msra.mxu0 0
    %2094 = vmatprep.subr.bf16.mxu0 0
    %2095 = vmatpush1.bf16.msra.mxu0 0
    %2096 = vmatprep.mubr.bf16.mxu0 0
    %2097 = vmatmul.mubr.bf16.gmra.mrb[0].mxu0 %v2062
    %v2098 = vpop.f32.mrb[0].mxu0
    %v2099 = vadd.f32 %v2014, %v2098
    %v2100 = vpop.f32.mrb[0].mxu0
    %v2101 = vadd.f32 %v2018, %v2100
    %v2102 = vpop.f32.mrb[0].mxu0
    %v2103 = vadd.f32 %v2014, %v2102
    %v2104 = vpop.f32.mrb[0].mxu0
    %v2105 = vadd.f32 %v2018, %v2104
    %2106 = vdwg.mxu0
    %v2107 = vmax.f32 %v2099, 0.0
    %v2108 = vmax.f32 %v2101, 0.0
    %v2109 = vmax.f32 %v2103, 0.0
    %v2110 = vmax.f32 %v2105, 0.0
    %v2111 = vpack.c.bf16 %v2109, %v2107
    %v2112 = vpack.c.bf16 %v2110, %v2108
    %v2113 = vld [vmem:[%s13] sm:$0xf]
    %v2114 = vld [vmem:[%s13 + $0x4] sm:$0xf]
    %v2115 = vld [vmem:[%s13 + $0x8] sm:$0xf]
    %v2116 = vld [vmem:[%s13 + $0xc] sm:$0xf]
    %v2117 = vld [vmem:[%s13 + $0x10] sm:$0xf]
    %v2118 = vld [vmem:[%s13 + $0x14] sm:$0xf]
    %v2119 = vld [vmem:[%s13 + $0x18] sm:$0xf]
    %v2120 = vld [vmem:[%s13 + $0x1c] sm:$0xf]
    %v2121 = vld [vmem:[%s13 + $0x20] sm:$0xf]
    %v2122 = vld [vmem:[%s13 + $0x24] sm:$0xf]
    %v2123 = vld [vmem:[%s13 + $0x28] sm:$0xf]
    %v2124 = vld [vmem:[%s13 + $0x2c] sm:$0xf]
    %v2125 = vld [vmem:[%s13 + $0x30] sm:$0xf]
    %v2126 = vld [vmem:[%s13 + $0x34] sm:$0xf]
    %v2127 = vld [vmem:[%s13 + $0x38] sm:$0xf]
    %v2128 = vld [vmem:[%s13 + $0x3c] sm:$0xf]
    %v2129 = vld [vmem:[%s13 + $0x40] sm:$0xf]
    %v2130 = vld [vmem:[%s13 + $0x44] sm:$0xf]
    %v2131 = vld [vmem:[%s13 + $0x48] sm:$0xf]
    %v2132 = vld [vmem:[%s13 + $0x4c] sm:$0xf]
    %v2133 = vld [vmem:[%s13 + $0x50] sm:$0xf]
    %v2134 = vld [vmem:[%s13 + $0x54] sm:$0xf]
    %v2135 = vld [vmem:[%s13 + $0x58] sm:$0xf]
    %v2136 = vld [vmem:[%s13 + $0x5c] sm:$0xf]
    %v2137 = vld [vmem:[%s13 + $0x60] sm:$0xf]
    %v2138 = vld [vmem:[%s13 + $0x64] sm:$0xf]
    %v2139 = vld [vmem:[%s13 + $0x68] sm:$0xf]
    %v2140 = vld [vmem:[%s13 + $0x6c] sm:$0xf]
    %v2141 = vld [vmem:[%s13 + $0x70] sm:$0xf]
    %v2142 = vld [vmem:[%s13 + $0x74] sm:$0xf]
    %v2143 = vld [vmem:[%s13 + $0x78] sm:$0xf]
    %v2144 = vld [vmem:[%s13 + $0x7c] sm:$0xf]
    %v2177 = vunpack.c.l.b16 %v2113
    %v2178 = vunpack.c.l.b16 %v2114
    %v2179 = vunpack.c.l.b16 %v2115
    %v2180 = vunpack.c.l.b16 %v2116
    %v2181 = vunpack.c.l.b16 %v2117
    %v2182 = vunpack.c.l.b16 %v2118
    %v2183 = vunpack.c.l.b16 %v2119
    %v2184 = vunpack.c.l.b16 %v2120
    %v2185 = vunpack.c.l.b16 %v2121
    %v2186 = vunpack.c.l.b16 %v2122
    %v2187 = vunpack.c.l.b16 %v2123
    %v2188 = vunpack.c.l.b16 %v2124
    %v2189 = vunpack.c.l.b16 %v2125
    %v2190 = vunpack.c.l.b16 %v2126
    %v2191 = vunpack.c.l.b16 %v2127
    %v2192 = vunpack.c.l.b16 %v2128
    %v2193 = vunpack.c.l.b16 %v2129
    %v2194 = vunpack.c.l.b16 %v2130
    %v2195 = vunpack.c.l.b16 %v2131
    %v2196 = vunpack.c.l.b16 %v2132
    %v2197 = vunpack.c.l.b16 %v2133
    %v2198 = vunpack.c.l.b16 %v2134
    %v2199 = vunpack.c.l.b16 %v2135
    %v2200 = vunpack.c.l.b16 %v2136
    %v2201 = vunpack.c.l.b16 %v2137
    %v2202 = vunpack.c.l.b16 %v2138
    %v2203 = vunpack.c.l.b16 %v2139
    %v2204 = vunpack.c.l.b16 %v2140
    %v2205 = vunpack.c.l.b16 %v2141
    %v2206 = vunpack.c.l.b16 %v2142
    %v2207 = vunpack.c.l.b16 %v2143
    %v2208 = vunpack.c.l.b16 %v2144
    %v2209 = vpack.c.b16 %v2178, %v2177
    %v2210 = vpack.c.b16 %v2180, %v2179
    %v2211 = vpack.c.b16 %v2182, %v2181
    %v2212 = vpack.c.b16 %v2184, %v2183
    %v2213 = vpack.c.b16 %v2186, %v2185
    %v2214 = vpack.c.b16 %v2188, %v2187
    %v2215 = vpack.c.b16 %v2190, %v2189
    %v2216 = vpack.c.b16 %v2192, %v2191
    %v2217 = vpack.c.b16 %v2194, %v2193
    %v2218 = vpack.c.b16 %v2196, %v2195
    %v2219 = vpack.c.b16 %v2198, %v2197
    %v2220 = vpack.c.b16 %v2200, %v2199
    %v2221 = vpack.c.b16 %v2202, %v2201
    %v2222 = vpack.c.b16 %v2204, %v2203
    %v2223 = vpack.c.b16 %v2206, %v2205
    %v2224 = vpack.c.b16 %v2208, %v2207
    %2241 = vmatprep.subr.bf16.mxu0 0
    %2242 = vmatpush1.bf16.msra.mxu0 %v2209
    %2243 = vmatprep.subr.bf16.mxu0 0
    %2244 = vmatpush1.bf16.msra.mxu0 %v2210
    %2245 = vmatprep.subr.bf16.mxu0 0
    %2246 = vmatpush1.bf16.msra.mxu0 %v2211
    %2247 = vmatprep.subr.bf16.mxu0 0
    %2248 = vmatpush1.bf16.msra.mxu0 %v2212
    %2249 = vmatprep.subr.bf16.mxu0 0
    %2250 = vmatpush1.bf16.msra.mxu0 %v2213
    %2251 = vmatprep.subr.bf16.mxu0 0
    %2252 = vmatpush1.bf16.msra.mxu0 %v2214
    %2253 = vmatprep.subr.bf16.mxu0 0
    %2254 = vmatpush1.bf16.msra.mxu0 %v2215
    %2255 = vmatprep.subr.bf16.mxu0 0
    %2256 = vmatpush1.bf16.msra.mxu0 %v2216
    %2257 = vmatprep.subr.bf16.mxu0 0
    %2258 = vmatpush1.bf16.msra.mxu0 %v2217
    %2259 = vmatprep.subr.bf16.mxu0 0
    %2260 = vmatpush1.bf16.msra.mxu0 %v2218
    %2261 = vmatprep.subr.bf16.mxu0 0
    %2262 = vmatpush1.bf16.msra.mxu0 %v2219
    %2263 = vmatprep.subr.bf16.mxu0 0
    %2264 = vmatpush1.bf16.msra.mxu0 %v2220
    %2265 = vmatprep.subr.bf16.mxu0 0
    %2266 = vmatpush1.bf16.msra.mxu0 %v2221
    %2267 = vmatprep.subr.bf16.mxu0 0
    %2268 = vmatpush1.bf16.msra.mxu0 %v2222
    %2269 = vmatprep.subr.bf16.mxu0 0
    %2270 = vmatpush1.bf16.msra.mxu0 %v2223
    %2271 = vmatprep.subr.bf16.mxu0 0
    %2272 = vmatpush1.bf16.msra.mxu0 %v2224
    %2273 = vmatprep.mubr.bf16.mxu0 %v2112
    %2274 = vmatmul.mubr.bf16.gmra.mrb[0].mxu0 %v2111
    %v2275 = vpop.f32.mrb[0].mxu0
    %v2276 = vadd.f32 0.0, %v2275
    %v2277 = vpop.f32.mrb[0].mxu0
    %v2278 = vpop.f32.mrb[0].mxu0
    %v2279 = vadd.f32 0.0, %v2278
    %v2280 = vpop.f32.mrb[0].mxu0
    %2281 = vdwg.mxu0
    %v2282 = vadd.f32 %v1954, %v2276
    %v2283 = vadd.f32 %v1955, %v2279
    %v2284 = vld [vmem:[%s14] sm:$0x1]
    %v2286 = vlaneseq
    %v2287 = vshrl.u32 %v2286, 7
    %v2288 = vsub.s32 0, %v2287
    %v2289 = vrot.slane %v2284, %v2288
    %v2291 = vadd.f32 %v2282, %v2289
    %v2292 = vadd.f32 %v2283, %v2289
    %s2293 = scalar_lea.vmem %s3, 1
    %v2294 = vld [vmem:[%s2293] sm:$0x1]
    %s2295 = scalar_lea.vmem %s4, 1
    %v2296 = vld [vmem:[%s2295] sm:$0x1]
    %v2297 = vsel %vm199, %v2291, 0.0
    %2298 = vadd.xlane.f32.xlu0 %v2297
    %v2299 = vpop.xlane.xlu0 %2298
    %v2300 = vsel %vm199, %v2292, 0.0
    %2301 = vadd.xlane.f32.xlu0 %v2300
    %v2302 = vpop.xlane.xlu0 %2301
    %v2303 = vmul.f32 %v2299, %v206
    %v2304 = vmul.f32 %v2302, %v206
    %v2305 = vsub.f32 %v2291, %v2303
    %v2306 = vsub.f32 %v2292, %v2304
    %v2307 = vmul.f32 %v2305, %v2305
    %v2308 = vmul.f32 %v2306, %v2306
    %v2309 = vsel %vm199, %v2307, 0.0
    %2310 = vadd.xlane.f32.xlu0 %v2309
    %v2311 = vpop.xlane.xlu0 %2310
    %v2312 = vsel %vm199, %v2308, 0.0
    %2313 = vadd.xlane.f32.xlu0 %v2312
    %v2314 = vpop.xlane.xlu0 %2313
    %v2315 = vmul.f32 %v2311, %v206
    %v2316 = vmul.f32 %v2314, %v206
    %v2317 = vadd.f32 %v2315, 1e-05
    %v2318 = vadd.f32 %v2316, 1e-05
    %v2319 = vrsqrt.pop %v2317
    %v2320 = vrsqrt.pop %v2318
    %v2321 = vmul.f32 %v2305, %v2319
    %v2322 = vmul.f32 %v2306, %v2320
    %v2324 = vlaneseq
    %v2325 = vshrl.u32 %v2324, 7
    %v2326 = vsub.s32 0, %v2325
    %v2327 = vrot.slane %v2294, %v2326
    %v2329 = vmul.f32 %v2321, %v2327
    %v2330 = vmul.f32 %v2322, %v2327
    %v2332 = vlaneseq
    %v2333 = vshrl.u32 %v2332, 7
    %v2334 = vsub.s32 0, %v2333
    %v2335 = vrot.slane %v2296, %v2334
    %v2337 = vadd.f32 %v2329, %v2335
    %v2338 = vadd.f32 %v2330, %v2335
    %v2339 = vpack.c.bf16 %v2338, %v2337
    %s2340 = scalar_lea.vmem [#allocation2], 384
    %v2341 = vld [vmem:[%s2340] sm:$0xff]
    %v2342 = vld [vmem:[%s2340 + $0x8] sm:$0xff]
    %v2343 = vld [vmem:[%s2340 + $0x10] sm:$0xff]
    %v2344 = vld [vmem:[%s2340 + $0x18] sm:$0xff]
    %v2345 = vld [vmem:[%s2340 + $0x20] sm:$0xff]
    %v2346 = vld [vmem:[%s2340 + $0x28] sm:$0xff]
    %v2347 = vld [vmem:[%s2340 + $0x30] sm:$0xff]
    %v2348 = vld [vmem:[%s2340 + $0x38] sm:$0xff]
    %v2349 = vld [vmem:[%s2340 + $0x40] sm:$0xff]
    %v2350 = vld [vmem:[%s2340 + $0x48] sm:$0xff]
    %v2351 = vld [vmem:[%s2340 + $0x50] sm:$0xff]
    %v2352 = vld [vmem:[%s2340 + $0x58] sm:$0xff]
    %v2353 = vld [vmem:[%s2340 + $0x60] sm:$0xff]
    %v2354 = vld [vmem:[%s2340 + $0x68] sm:$0xff]
    %v2355 = vld [vmem:[%s2340 + $0x70] sm:$0xff]
    %v2356 = vld [vmem:[%s2340 + $0x78] sm:$0xff]
    %v2357 = vld [vmem:[%s2340 + $0x80] sm:$0xff]
    %v2358 = vld [vmem:[%s2340 + $0x88] sm:$0xff]
    %v2359 = vld [vmem:[%s2340 + $0x90] sm:$0xff]
    %v2360 = vld [vmem:[%s2340 + $0x98] sm:$0xff]
    %v2361 = vld [vmem:[%s2340 + $0xa0] sm:$0xff]
    %v2362 = vld [vmem:[%s2340 + $0xa8] sm:$0xff]
    %v2363 = vld [vmem:[%s2340 + $0xb0] sm:$0xff]
    %v2364 = vld [vmem:[%s2340 + $0xb8] sm:$0xff]
    %v2365 = vld [vmem:[%s2340 + $0xc0] sm:$0xff]
    %v2366 = vld [vmem:[%s2340 + $0xc8] sm:$0xff]
    %v2367 = vld [vmem:[%s2340 + $0xd0] sm:$0xff]
    %v2368 = vld [vmem:[%s2340 + $0xd8] sm:$0xff]
    %v2369 = vld [vmem:[%s2340 + $0xe0] sm:$0xff]
    %v2370 = vld [vmem:[%s2340 + $0xe8] sm:$0xff]
    %v2371 = vld [vmem:[%s2340 + $0xf0] sm:$0xff]
    %v2372 = vld [vmem:[%s2340 + $0xf8] sm:$0xff]
    %v2373 = vld [vmem:[%s2340 + $0x100] sm:$0xff]
    %v2374 = vld [vmem:[%s2340 + $0x108] sm:$0xff]
    %v2375 = vld [vmem:[%s2340 + $0x110] sm:$0xff]
    %v2376 = vld [vmem:[%s2340 + $0x118] sm:$0xff]
    %v2377 = vld [vmem:[%s2340 + $0x120] sm:$0xff]
    %v2378 = vld [vmem:[%s2340 + $0x128] sm:$0xff]
    %v2379 = vld [vmem:[%s2340 + $0x130] sm:$0xff]
    %v2380 = vld [vmem:[%s2340 + $0x138] sm:$0xff]
    %v2381 = vld [vmem:[%s2340 + $0x140] sm:$0xff]
    %v2382 = vld [vmem:[%s2340 + $0x148] sm:$0xff]
    %v2383 = vld [vmem:[%s2340 + $0x150] sm:$0xff]
    %v2384 = vld [vmem:[%s2340 + $0x158] sm:$0xff]
    %v2385 = vld [vmem:[%s2340 + $0x160] sm:$0xff]
    %v2386 = vld [vmem:[%s2340 + $0x168] sm:$0xff]
    %v2387 = vld [vmem:[%s2340 + $0x170] sm:$0xff]
    %v2388 = vld [vmem:[%s2340 + $0x178] sm:$0xff]
    %s2389 = scalar_lea.vmem %s6, 12
    %v2390 = vld [vmem:[%s2389] sm:$0xff]
    %v2391 = vld [vmem:[%s2389 + $0x8] sm:$0xf]
    %v2394 = vlaneseq
    %v2395 = vshrl.u32 %v2394, 7
    %v2396 = vsub.s32 0, %v2395
    %v2397 = vrot.slane %v2390, %v2396
    %v2398 = vlaneseq
    %v2399 = vshrl.u32 %v2398, 7
    %v2400 = vsub.s32 1, %v2399
    %v2401 = vrot.slane %v2390, %v2400
    %v2402 = vlaneseq
    %v2403 = vshrl.u32 %v2402, 7
    %v2404 = vsub.s32 2, %v2403
    %v2405 = vrot.slane %v2390, %v2404
    %v2406 = vlaneseq
    %v2407 = vshrl.u32 %v2406, 7
    %v2408 = vsub.s32 3, %v2407
    %v2409 = vrot.slane %v2390, %v2408
    %v2410 = vlaneseq
    %v2411 = vshrl.u32 %v2410, 7
    %v2412 = vsub.s32 4, %v2411
    %v2413 = vrot.slane %v2390, %v2412
    %v2414 = vlaneseq
    %v2415 = vshrl.u32 %v2414, 7
    %v2416 = vsub.s32 5, %v2415
    %v2417 = vrot.slane %v2390, %v2416
    %v2418 = vlaneseq
    %v2419 = vshrl.u32 %v2418, 7
    %v2420 = vsub.s32 6, %v2419
    %v2421 = vrot.slane %v2390, %v2420
    %v2422 = vlaneseq
    %v2423 = vshrl.u32 %v2422, 7
    %v2424 = vsub.s32 7, %v2423
    %v2425 = vrot.slane %v2390, %v2424
    %v2426 = vlaneseq
    %v2427 = vshrl.u32 %v2426, 7
    %v2428 = vsub.s32 0, %v2427
    %v2429 = vrot.slane %v2391, %v2428
    %v2430 = vlaneseq
    %v2431 = vshrl.u32 %v2430, 7
    %v2432 = vsub.s32 1, %v2431
    %v2433 = vrot.slane %v2391, %v2432
    %v2434 = vlaneseq
    %v2435 = vshrl.u32 %v2434, 7
    %v2436 = vsub.s32 2, %v2435
    %v2437 = vrot.slane %v2391, %v2436
    %v2438 = vlaneseq
    %v2439 = vshrl.u32 %v2438, 7
    %v2440 = vsub.s32 3, %v2439
    %v2441 = vrot.slane %v2391, %v2440
    %v2502 = vunpack.c.l.b16 %v2341
    %v2503 = vunpack.c.h.b16 %v2341
    %v2504 = vunpack.c.l.b16 %v2342
    %v2505 = vunpack.c.h.b16 %v2342
    %v2506 = vunpack.c.l.b16 %v2343
    %v2507 = vunpack.c.h.b16 %v2343
    %v2508 = vunpack.c.l.b16 %v2344
    %v2509 = vunpack.c.h.b16 %v2344
    %v2510 = vunpack.c.l.b16 %v2345
    %v2511 = vunpack.c.h.b16 %v2345
    %v2512 = vunpack.c.l.b16 %v2346
    %v2513 = vunpack.c.h.b16 %v2346
    %v2514 = vunpack.c.l.b16 %v2347
    %v2515 = vunpack.c.h.b16 %v2347
    %v2516 = vunpack.c.l.b16 %v2348
    %v2517 = vunpack.c.h.b16 %v2348
    %v2518 = vunpack.c.l.b16 %v2349
    %v2519 = vunpack.c.h.b16 %v2349
    %v2520 = vunpack.c.l.b16 %v2350
    %v2521 = vunpack.c.h.b16 %v2350
    %v2522 = vunpack.c.l.b16 %v2351
    %v2523 = vunpack.c.h.b16 %v2351
    %v2524 = vunpack.c.l.b16 %v2352
    %v2525 = vunpack.c.h.b16 %v2352
    %v2526 = vunpack.c.l.b16 %v2353
    %v2527 = vunpack.c.h.b16 %v2353
    %v2528 = vunpack.c.l.b16 %v2354
    %v2529 = vunpack.c.h.b16 %v2354
    %v2530 = vunpack.c.l.b16 %v2355
    %v2531 = vunpack.c.h.b16 %v2355
    %v2532 = vunpack.c.l.b16 %v2356
    %v2533 = vunpack.c.h.b16 %v2356
    %v2534 = vunpack.c.l.b16 %v2357
    %v2535 = vunpack.c.h.b16 %v2357
    %v2536 = vunpack.c.l.b16 %v2358
    %v2537 = vunpack.c.h.b16 %v2358
    %v2538 = vunpack.c.l.b16 %v2359
    %v2539 = vunpack.c.h.b16 %v2359
    %v2540 = vunpack.c.l.b16 %v2360
    %v2541 = vunpack.c.h.b16 %v2360
    %v2542 = vunpack.c.l.b16 %v2361
    %v2543 = vunpack.c.h.b16 %v2361
    %v2544 = vunpack.c.l.b16 %v2362
    %v2545 = vunpack.c.h.b16 %v2362
    %v2546 = vunpack.c.l.b16 %v2363
    %v2547 = vunpack.c.h.b16 %v2363
    %v2548 = vunpack.c.l.b16 %v2364
    %v2549 = vunpack.c.h.b16 %v2364
    %v2550 = vunpack.c.l.b16 %v2365
    %v2551 = vunpack.c.h.b16 %v2365
    %v2552 = vunpack.c.l.b16 %v2366
    %v2553 = vunpack.c.h.b16 %v2366
    %v2554 = vunpack.c.l.b16 %v2367
    %v2555 = vunpack.c.h.b16 %v2367
    %v2556 = vunpack.c.l.b16 %v2368
    %v2557 = vunpack.c.h.b16 %v2368
    %v2558 = vunpack.c.l.b16 %v2369
    %v2559 = vunpack.c.h.b16 %v2369
    %v2560 = vunpack.c.l.b16 %v2370
    %v2561 = vunpack.c.h.b16 %v2370
    %v2562 = vunpack.c.l.b16 %v2371
    %v2563 = vunpack.c.h.b16 %v2371
    %v2564 = vunpack.c.l.b16 %v2372
    %v2565 = vunpack.c.h.b16 %v2372
    %v2566 = vunpack.c.l.b16 %v2373
    %v2567 = vunpack.c.h.b16 %v2373
    %v2568 = vunpack.c.l.b16 %v2374
    %v2569 = vunpack.c.h.b16 %v2374
    %v2570 = vunpack.c.l.b16 %v2375
    %v2571 = vunpack.c.h.b16 %v2375
    %v2572 = vunpack.c.l.b16 %v2376
    %v2573 = vunpack.c.h.b16 %v2376
    %v2574 = vunpack.c.l.b16 %v2377
    %v2575 = vunpack.c.h.b16 %v2377
    %v2576 = vunpack.c.l.b16 %v2378
    %v2577 = vunpack.c.h.b16 %v2378
    %v2578 = vunpack.c.l.b16 %v2379
    %v2579 = vunpack.c.h.b16 %v2379
    %v2580 = vunpack.c.l.b16 %v2380
    %v2581 = vunpack.c.h.b16 %v2380
    %v2582 = vunpack.c.l.b16 %v2381
    %v2583 = vunpack.c.h.b16 %v2381
    %v2584 = vunpack.c.l.b16 %v2382
    %v2585 = vunpack.c.h.b16 %v2382
    %v2586 = vunpack.c.l.b16 %v2383
    %v2587 = vunpack.c.h.b16 %v2383
    %v2588 = vunpack.c.l.b16 %v2384
    %v2589 = vunpack.c.h.b16 %v2384
    %v2590 = vunpack.c.l.b16 %v2385
    %v2591 = vunpack.c.h.b16 %v2385
    %v2592 = vunpack.c.l.b16 %v2386
    %v2593 = vunpack.c.h.b16 %v2386
    %v2594 = vunpack.c.l.b16 %v2387
    %v2595 = vunpack.c.h.b16 %v2387
    %v2596 = vunpack.c.l.b16 %v2388
    %v2597 = vunpack.c.h.b16 %v2388
    %v2598 = vpack.c.b16 %v2514, %v2502
    %v2599 = vpack.c.b16 %v2515, %v2503
    %v2600 = vpack.c.b16 %v2516, %v2504
    %v2601 = vpack.c.b16 %v2517, %v2505
    %v2602 = vpack.c.b16 %v2518, %v2506
    %v2603 = vpack.c.b16 %v2519, %v2507
    %v2604 = vpack.c.b16 %v2520, %v2508
    %v2605 = vpack.c.b16 %v2521, %v2509
    %v2606 = vpack.c.b16 %v2522, %v2510
    %v2607 = vpack.c.b16 %v2523, %v2511
    %v2608 = vpack.c.b16 %v2524, %v2512
    %v2609 = vpack.c.b16 %v2525, %v2513
    %v2610 = vpack.c.b16 %v2538, %v2526
    %v2611 = vpack.c.b16 %v2539, %v2527
    %v2612 = vpack.c.b16 %v2540, %v2528
    %v2613 = vpack.c.b16 %v2541, %v2529
    %v2614 = vpack.c.b16 %v2542, %v2530
    %v2615 = vpack.c.b16 %v2543, %v2531
    %v2616 = vpack.c.b16 %v2544, %v2532
    %v2617 = vpack.c.b16 %v2545, %v2533
    %v2618 = vpack.c.b16 %v2546, %v2534
    %v2619 = vpack.c.b16 %v2547, %v2535
    %v2620 = vpack.c.b16 %v2548, %v2536
    %v2621 = vpack.c.b16 %v2549, %v2537
    %v2622 = vpack.c.b16 %v2562, %v2550
    %v2623 = vpack.c.b16 %v2563, %v2551
    %v2624 = vpack.c.b16 %v2564, %v2552
    %v2625 = vpack.c.b16 %v2565, %v2553
    %v2626 = vpack.c.b16 %v2566, %v2554
    %v2627 = vpack.c.b16 %v2567, %v2555
    %v2628 = vpack.c.b16 %v2568, %v2556
    %v2629 = vpack.c.b16 %v2569, %v2557
    %v2630 = vpack.c.b16 %v2570, %v2558
    %v2631 = vpack.c.b16 %v2571, %v2559
    %v2632 = vpack.c.b16 %v2572, %v2560
    %v2633 = vpack.c.b16 %v2573, %v2561
    %v2634 = vpack.c.b16 %v2586, %v2574
    %v2635 = vpack.c.b16 %v2587, %v2575
    %v2636 = vpack.c.b16 %v2588, %v2576
    %v2637 = vpack.c.b16 %v2589, %v2577
    %v2638 = vpack.c.b16 %v2590, %v2578
    %v2639 = vpack.c.b16 %v2591, %v2579
    %v2640 = vpack.c.b16 %v2592, %v2580
    %v2641 = vpack.c.b16 %v2593, %v2581
    %v2642 = vpack.c.b16 %v2594, %v2582
    %v2643 = vpack.c.b16 %v2595, %v2583
    %v2644 = vpack.c.b16 %v2596, %v2584
    %v2645 = vpack.c.b16 %v2597, %v2585
    %v2695 = vsel %vm199, %v2339, 0
    %2697 = vmatprep.subr.bf16.mxu0 %v2599
    %2698 = vmatpush1.bf16.msra.mxu0 %v2598
    %2699 = vmatprep.subr.bf16.mxu0 %v2611
    %2700 = vmatpush1.bf16.msra.mxu0 %v2610
    %2701 = vmatprep.subr.bf16.mxu0 %v2623
    %2702 = vmatpush1.bf16.msra.mxu0 %v2622
    %2703 = vmatprep.subr.bf16.mxu0 %v2635
    %2704 = vmatpush1.bf16.msra.mxu0 %v2634
    %2705 = vmatprep.subr.bf16.mxu0 0
    %2706 = vmatpush1.bf16.msra.mxu0 0
    %2707 = vmatprep.subr.bf16.mxu0 0
    %2708 = vmatpush1.bf16.msra.mxu0 0
    %2709 = vmatprep.subr.bf16.mxu0 0
    %2710 = vmatpush1.bf16.msra.mxu0 0
    %2711 = vmatprep.subr.bf16.mxu0 0
    %2712 = vmatpush1.bf16.msra.mxu0 0
    %2713 = vmatprep.subr.bf16.mxu0 0
    %2714 = vmatpush1.bf16.msra.mxu0 0
    %2715 = vmatprep.subr.bf16.mxu0 0
    %2716 = vmatpush1.bf16.msra.mxu0 0
    %2717 = vmatprep.subr.bf16.mxu0 0
    %2718 = vmatpush1.bf16.msra.mxu0 0
    %2719 = vmatprep.subr.bf16.mxu0 0
    %2720 = vmatpush1.bf16.msra.mxu0 0
    %2721 = vmatprep.subr.bf16.mxu0 0
    %2722 = vmatpush1.bf16.msra.mxu0 0
    %2723 = vmatprep.subr.bf16.mxu0 0
    %2724 = vmatpush1.bf16.msra.mxu0 0
    %2725 = vmatprep.subr.bf16.mxu0 0
    %2726 = vmatpush1.bf16.msra.mxu0 0
    %2727 = vmatprep.subr.bf16.mxu0 0
    %2728 = vmatpush1.bf16.msra.mxu0 0
    %2729 = vmatprep.mubr.bf16.mxu0 0
    %2730 = vmatmul.mubr.bf16.gmra.mrb[0].mxu0 %v2695
    %v2731 = vpop.f32.mrb[0].mxu0
    %v2732 = vadd.f32 %v2397, %v2731
    %v2733 = vpop.f32.mrb[0].mxu0
    %v2734 = vadd.f32 %v2401, %v2733
    %v2735 = vpop.f32.mrb[0].mxu0
    %v2736 = vadd.f32 %v2397, %v2735
    %v2737 = vpop.f32.mrb[0].mxu0
    %v2738 = vadd.f32 %v2401, %v2737
    %2739 = vdwg.mxu0
    %2740 = vmatprep.subr.bf16.mxu0 %v2601
    %2741 = vmatpush1.bf16.msra.mxu0 %v2600
    %2742 = vmatprep.subr.bf16.mxu0 %v2613
    %2743 = vmatpush1.bf16.msra.mxu0 %v2612
    %2744 = vmatprep.subr.bf16.mxu0 %v2625
    %2745 = vmatpush1.bf16.msra.mxu0 %v2624
    %2746 = vmatprep.subr.bf16.mxu0 %v2637
    %2747 = vmatpush1.bf16.msra.mxu0 %v2636
    %2748 = vmatprep.subr.bf16.mxu0 0
    %2749 = vmatpush1.bf16.msra.mxu0 0
    %2750 = vmatprep.subr.bf16.mxu0 0
    %2751 = vmatpush1.bf16.msra.mxu0 0
    %2752 = vmatprep.subr.bf16.mxu0 0
    %2753 = vmatpush1.bf16.msra.mxu0 0
    %2754 = vmatprep.subr.bf16.mxu0 0
    %2755 = vmatpush1.bf16.msra.mxu0 0
    %2756 = vmatprep.subr.bf16.mxu0 0
    %2757 = vmatpush1.bf16.msra.mxu0 0
    %2758 = vmatprep.subr.bf16.mxu0 0
    %2759 = vmatpush1.bf16.msra.mxu0 0
    %2760 = vmatprep.subr.bf16.mxu0 0
    %2761 = vmatpush1.bf16.msra.mxu0 0
    %2762 = vmatprep.subr.bf16.mxu0 0
    %2763 = vmatpush1.bf16.msra.mxu0 0
    %2764 = vmatprep.subr.bf16.mxu0 0
    %2765 = vmatpush1.bf16.msra.mxu0 0
    %2766 = vmatprep.subr.bf16.mxu0 0
    %2767 = vmatpush1.bf16.msra.mxu0 0
    %2768 = vmatprep.subr.bf16.mxu0 0
    %2769 = vmatpush1.bf16.msra.mxu0 0
    %2770 = vmatprep.subr.bf16.mxu0 0
    %2771 = vmatpush1.bf16.msra.mxu0 0
    %2772 = vmatprep.mubr.bf16.mxu0 0
    %2773 = vmatmul.mubr.bf16.gmra.mrb[0].mxu0 %v2695
    %v2774 = vpop.f32.mrb[0].mxu0
    %v2775 = vadd.f32 %v2405, %v2774
    %v2776 = vpop.f32.mrb[0].mxu0
    %v2777 = vadd.f32 %v2409, %v2776
    %v2778 = vpop.f32.mrb[0].mxu0
    %v2779 = vadd.f32 %v2405, %v2778
    %v2780 = vpop.f32.mrb[0].mxu0
    %v2781 = vadd.f32 %v2409, %v2780
    %2782 = vdwg.mxu0
    %2783 = vmatprep.subr.bf16.mxu0 %v2603
    %2784 = vmatpush1.bf16.msra.mxu0 %v2602
    %2785 = vmatprep.subr.bf16.mxu0 %v2615
    %2786 = vmatpush1.bf16.msra.mxu0 %v2614
    %2787 = vmatprep.subr.bf16.mxu0 %v2627
    %2788 = vmatpush1.bf16.msra.mxu0 %v2626
    %2789 = vmatprep.subr.bf16.mxu0 %v2639
    %2790 = vmatpush1.bf16.msra.mxu0 %v2638
    %2791 = vmatprep.subr.bf16.mxu0 0
    %2792 = vmatpush1.bf16.msra.mxu0 0
    %2793 = vmatprep.subr.bf16.mxu0 0
    %2794 = vmatpush1.bf16.msra.mxu0 0
    %2795 = vmatprep.subr.bf16.mxu0 0
    %2796 = vmatpush1.bf16.msra.mxu0 0
    %2797 = vmatprep.subr.bf16.mxu0 0
    %2798 = vmatpush1.bf16.msra.mxu0 0
    %2799 = vmatprep.subr.bf16.mxu0 0
    %2800 = vmatpush1.bf16.msra.mxu0 0
    %2801 = vmatprep.subr.bf16.mxu0 0
    %2802 = vmatpush1.bf16.msra.mxu0 0
    %2803 = vmatprep.subr.bf16.mxu0 0
    %2804 = vmatpush1.bf16.msra.mxu0 0
    %2805 = vmatprep.subr.bf16.mxu0 0
    %2806 = vmatpush1.bf16.msra.mxu0 0
    %2807 = vmatprep.subr.bf16.mxu0 0
    %2808 = vmatpush1.bf16.msra.mxu0 0
    %2809 = vmatprep.subr.bf16.mxu0 0
    %2810 = vmatpush1.bf16.msra.mxu0 0
    %2811 = vmatprep.subr.bf16.mxu0 0
    %2812 = vmatpush1.bf16.msra.mxu0 0
    %2813 = vmatprep.subr.bf16.mxu0 0
    %2814 = vmatpush1.bf16.msra.mxu0 0
    %2815 = vmatprep.mubr.bf16.mxu0 0
    %2816 = vmatmul.mubr.bf16.gmra.mrb[0].mxu0 %v2695
    %v2817 = vpop.f32.mrb[0].mxu0
    %v2818 = vadd.f32 %v2413, %v2817
    %v2819 = vpop.f32.mrb[0].mxu0
    %v2820 = vadd.f32 %v2417, %v2819
    %v2821 = vpop.f32.mrb[0].mxu0
    %v2822 = vadd.f32 %v2413, %v2821
    %v2823 = vpop.f32.mrb[0].mxu0
    %v2824 = vadd.f32 %v2417, %v2823
    %2825 = vdwg.mxu0
    %2826 = vmatprep.subr.bf16.mxu0 %v2605
    %2827 = vmatpush1.bf16.msra.mxu0 %v2604
    %2828 = vmatprep.subr.bf16.mxu0 %v2617
    %2829 = vmatpush1.bf16.msra.mxu0 %v2616
    %2830 = vmatprep.subr.bf16.mxu0 %v2629
    %2831 = vmatpush1.bf16.msra.mxu0 %v2628
    %2832 = vmatprep.subr.bf16.mxu0 %v2641
    %2833 = vmatpush1.bf16.msra.mxu0 %v2640
    %2834 = vmatprep.subr.bf16.mxu0 0
    %2835 = vmatpush1.bf16.msra.mxu0 0
    %2836 = vmatprep.subr.bf16.mxu0 0
    %2837 = vmatpush1.bf16.msra.mxu0 0
    %2838 = vmatprep.subr.bf16.mxu0 0
    %2839 = vmatpush1.bf16.msra.mxu0 0
    %2840 = vmatprep.subr.bf16.mxu0 0
    %2841 = vmatpush1.bf16.msra.mxu0 0
    %2842 = vmatprep.subr.bf16.mxu0 0
    %2843 = vmatpush1.bf16.msra.mxu0 0
    %2844 = vmatprep.subr.bf16.mxu0 0
    %2845 = vmatpush1.bf16.msra.mxu0 0
    %2846 = vmatprep.subr.bf16.mxu0 0
    %2847 = vmatpush1.bf16.msra.mxu0 0
    %2848 = vmatprep.subr.bf16.mxu0 0
    %2849 = vmatpush1.bf16.msra.mxu0 0
    %2850 = vmatprep.subr.bf16.mxu0 0
    %2851 = vmatpush1.bf16.msra.mxu0 0
    %2852 = vmatprep.subr.bf16.mxu0 0
    %2853 = vmatpush1.bf16.msra.mxu0 0
    %2854 = vmatprep.subr.bf16.mxu0 0
    %2855 = vmatpush1.bf16.msra.mxu0 0
    %2856 = vmatprep.subr.bf16.mxu0 0
    %2857 = vmatpush1.bf16.msra.mxu0 0
    %2858 = vmatprep.mubr.bf16.mxu0 0
    %2859 = vmatmul.mubr.bf16.gmra.mrb[0].mxu0 %v2695
    %v2860 = vpop.f32.mrb[0].mxu0
    %v2861 = vadd.f32 %v2421, %v2860
    %v2862 = vpop.f32.mrb[0].mxu0
    %v2863 = vadd.f32 %v2425, %v2862
    %v2864 = vpop.f32.mrb[0].mxu0
    %v2865 = vadd.f32 %v2421, %v2864
    %v2866 = vpop.f32.mrb[0].mxu0
    %v2867 = vadd.f32 %v2425, %v2866
    %2868 = vdwg.mxu0
    %2869 = vmatprep.subr.bf16.mxu0 %v2607
    %2870 = vmatpush1.bf16.msra.mxu0 %v2606
    %2871 = vmatprep.subr.bf16.mxu0 %v2619
    %2872 = vmatpush1.bf16.msra.mxu0 %v2618
    %2873 = vmatprep.subr.bf16.mxu0 %v2631
    %2874 = vmatpush1.bf16.msra.mxu0 %v2630
    %2875 = vmatprep.subr.bf16.mxu0 %v2643
    %2876 = vmatpush1.bf16.msra.mxu0 %v2642
    %2877 = vmatprep.subr.bf16.mxu0 0
    %2878 = vmatpush1.bf16.msra.mxu0 0
    %2879 = vmatprep.subr.bf16.mxu0 0
    %2880 = vmatpush1.bf16.msra.mxu0 0
    %2881 = vmatprep.subr.bf16.mxu0 0
    %2882 = vmatpush1.bf16.msra.mxu0 0
    %2883 = vmatprep.subr.bf16.mxu0 0
    %2884 = vmatpush1.bf16.msra.mxu0 0
    %2885 = vmatprep.subr.bf16.mxu0 0
    %2886 = vmatpush1.bf16.msra.mxu0 0
    %2887 = vmatprep.subr.bf16.mxu0 0
    %2888 = vmatpush1.bf16.msra.mxu0 0
    %2889 = vmatprep.subr.bf16.mxu0 0
    %2890 = vmatpush1.bf16.msra.mxu0 0
    %2891 = vmatprep.subr.bf16.mxu0 0
    %2892 = vmatpush1.bf16.msra.mxu0 0
    %2893 = vmatprep.subr.bf16.mxu0 0
    %2894 = vmatpush1.bf16.msra.mxu0 0
    %2895 = vmatprep.subr.bf16.mxu0 0
    %2896 = vmatpush1.bf16.msra.mxu0 0
    %2897 = vmatprep.subr.bf16.mxu0 0
    %2898 = vmatpush1.bf16.msra.mxu0 0
    %2899 = vmatprep.subr.bf16.mxu0 0
    %2900 = vmatpush1.bf16.msra.mxu0 0
    %2901 = vmatprep.mubr.bf16.mxu0 0
    %2902 = vmatmul.mubr.bf16.gmra.mrb[0].mxu0 %v2695
    %v2903 = vpop.f32.mrb[0].mxu0
    %v2904 = vadd.f32 %v2429, %v2903
    %v2905 = vpop.f32.mrb[0].mxu0
    %v2906 = vadd.f32 %v2433, %v2905
    %v2907 = vpop.f32.mrb[0].mxu0
    %v2908 = vadd.f32 %v2429, %v2907
    %v2909 = vpop.f32.mrb[0].mxu0
    %v2910 = vadd.f32 %v2433, %v2909
    %2911 = vdwg.mxu0
    %2912 = vmatprep.subr.bf16.mxu0 %v2609
    %2913 = vmatpush1.bf16.msra.mxu0 %v2608
    %2914 = vmatprep.subr.bf16.mxu0 %v2621
    %2915 = vmatpush1.bf16.msra.mxu0 %v2620
    %2916 = vmatprep.subr.bf16.mxu0 %v2633
    %2917 = vmatpush1.bf16.msra.mxu0 %v2632
    %2918 = vmatprep.subr.bf16.mxu0 %v2645
    %2919 = vmatpush1.bf16.msra.mxu0 %v2644
    %2920 = vmatprep.subr.bf16.mxu0 0
    %2921 = vmatpush1.bf16.msra.mxu0 0
    %2922 = vmatprep.subr.bf16.mxu0 0
    %2923 = vmatpush1.bf16.msra.mxu0 0
    %2924 = vmatprep.subr.bf16.mxu0 0
    %2925 = vmatpush1.bf16.msra.mxu0 0
    %2926 = vmatprep.subr.bf16.mxu0 0
    %2927 = vmatpush1.bf16.msra.mxu0 0
    %2928 = vmatprep.subr.bf16.mxu0 0
    %2929 = vmatpush1.bf16.msra.mxu0 0
    %2930 = vmatprep.subr.bf16.mxu0 0
    %2931 = vmatpush1.bf16.msra.mxu0 0
    %2932 = vmatprep.subr.bf16.mxu0 0
    %2933 = vmatpush1.bf16.msra.mxu0 0
    %2934 = vmatprep.subr.bf16.mxu0 0
    %2935 = vmatpush1.bf16.msra.mxu0 0
    %2936 = vmatprep.subr.bf16.mxu0 0
    %2937 = vmatpush1.bf16.msra.mxu0 0
    %2938 = vmatprep.subr.bf16.mxu0 0
    %2939 = vmatpush1.bf16.msra.mxu0 0
    %2940 = vmatprep.subr.bf16.mxu0 0
    %2941 = vmatpush1.bf16.msra.mxu0 0
    %2942 = vmatprep.subr.bf16.mxu0 0
    %2943 = vmatpush1.bf16.msra.mxu0 0
    %2944 = vmatprep.mubr.bf16.mxu0 0
    %2945 = vmatmul.mubr.bf16.gmra.mrb[0].mxu0 %v2695
    %v2946 = vpop.f32.mrb[0].mxu0
    %v2947 = vadd.f32 %v2437, %v2946
    %v2948 = vpop.f32.mrb[0].mxu0
    %v2949 = vadd.f32 %v2441, %v2948
    %v2950 = vpop.f32.mrb[0].mxu0
    %v2951 = vadd.f32 %v2437, %v2950
    %v2952 = vpop.f32.mrb[0].mxu0
    %v2953 = vadd.f32 %v2441, %v2952
    %2954 = vdwg.mxu0
    %v2955 = vpack.c.bf16 %v2732, %v2732
    %v2956 = vpack.c.bf16 %v2736, %v2736
    %v2957 = vpack.c.bf16 %v2734, %v2734
    %v2958 = vpack.c.bf16 %v2738, %v2738
    %v2959 = vpack.c.bf16 %v2775, %v2775
    %v2960 = vpack.c.bf16 %v2779, %v2779
    %v2961 = vpack.c.bf16 %v2777, %v2777
    %v2962 = vpack.c.bf16 %v2781, %v2781
    %v2963 = vpack.c.bf16 %v2818, %v2818
    %v2964 = vpack.c.bf16 %v2822, %v2822
    %v2965 = vpack.c.bf16 %v2820, %v2820
    %v2966 = vpack.c.bf16 %v2824, %v2824
    %v2967 = vpack.c.bf16 %v2861, %v2861
    %v2968 = vpack.c.bf16 %v2865, %v2865
    %v2969 = vpack.c.bf16 %v2863, %v2863
    %v2970 = vpack.c.bf16 %v2867, %v2867
    %v2972 = vsel %vm873, %v2955, 0
    %v2975 = vsel %vm873, %v2963, 0
    %2977 = vmatprep.subr.bf16.mxu0 0
    %2978 = vmatpush1.bf16.xpose.msra.mxu0 %v2975
    %2979 = vmatprep.subr.bf16.mxu0 0
    %2980 = vmatpush1.bf16.xpose.msra.mxu0 0
    %2981 = vmatprep.subr.bf16.mxu0 0
    %2982 = vmatpush1.bf16.xpose.msra.mxu0 0
    %2983 = vmatprep.subr.bf16.mxu0 0
    %2984 = vmatpush1.bf16.xpose.msra.mxu0 0
    %2985 = vmatprep.subr.bf16.mxu0 0
    %2986 = vmatpush1.bf16.xpose.msra.mxu0 0
    %2987 = vmatprep.subr.bf16.mxu0 0
    %2988 = vmatpush1.bf16.xpose.msra.mxu0 0
    %2989 = vmatprep.subr.bf16.mxu0 0
    %2990 = vmatpush1.bf16.xpose.msra.mxu0 0
    %2991 = vmatprep.subr.bf16.mxu0 0
    %2992 = vmatpush1.bf16.xpose.msra.mxu0 0
    %2993 = vmatprep.subr.bf16.mxu0 0
    %2994 = vmatpush1.bf16.xpose.msra.mxu0 0
    %2995 = vmatprep.subr.bf16.mxu0 0
    %2996 = vmatpush1.bf16.xpose.msra.mxu0 0
    %2997 = vmatprep.subr.bf16.mxu0 0
    %2998 = vmatpush1.bf16.xpose.msra.mxu0 0
    %2999 = vmatprep.subr.bf16.mxu0 0
    %3000 = vmatpush1.bf16.xpose.msra.mxu0 0
    %3001 = vmatprep.subr.bf16.mxu0 0
    %3002 = vmatpush1.bf16.xpose.msra.mxu0 0
    %3003 = vmatprep.subr.bf16.mxu0 0
    %3004 = vmatpush1.bf16.xpose.msra.mxu0 0
    %3005 = vmatprep.subr.bf16.mxu0 0
    %3006 = vmatpush1.bf16.xpose.msra.mxu0 0
    %3007 = vmatprep.subr.bf16.mxu0 0
    %3008 = vmatpush1.bf16.xpose.msra.mxu0 0
    %3009 = vmatprep.mubr.bf16.mxu0 0
    %3010 = vmatmul.mubr.bf16.gmra.mrb[0].mxu0 %v2972
    %v3011 = vpop.f32.mrb[0].mxu0
    %v3012 = vadd.f32 0.0, %v3011
    %v3013 = vpop.f32.mrb[0].mxu0
    %v3014 = vpop.f32.mrb[0].mxu0
    %v3015 = vpop.f32.mrb[0].mxu0
    %3016 = vdwg.mxu0
    %v3018 = vsel %vm873, %v2956, 0
    %v3021 = vsel %vm873, %v2964, 0
    %3023 = vmatprep.subr.bf16.mxu0 0
    %3024 = vmatpush1.bf16.xpose.msra.mxu0 %v3021
    %3025 = vmatprep.subr.bf16.mxu0 0
    %3026 = vmatpush1.bf16.xpose.msra.mxu0 0
    %3027 = vmatprep.subr.bf16.mxu0 0
    %3028 = vmatpush1.bf16.xpose.msra.mxu0 0
    %3029 = vmatprep.subr.bf16.mxu0 0
    %3030 = vmatpush1.bf16.xpose.msra.mxu0 0
    %3031 = vmatprep.subr.bf16.mxu0 0
    %3032 = vmatpush1.bf16.xpose.msra.mxu0 0
    %3033 = vmatprep.subr.bf16.mxu0 0
    %3034 = vmatpush1.bf16.xpose.msra.mxu0 0
    %3035 = vmatprep.subr.bf16.mxu0 0
    %3036 = vmatpush1.bf16.xpose.msra.mxu0 0
    %3037 = vmatprep.subr.bf16.mxu0 0
    %3038 = vmatpush1.bf16.xpose.msra.mxu0 0
    %3039 = vmatprep.subr.bf16.mxu0 0
    %3040 = vmatpush1.bf16.xpose.msra.mxu0 0
    %3041 = vmatprep.subr.bf16.mxu0 0
    %3042 = vmatpush1.bf16.xpose.msra.mxu0 0
    %3043 = vmatprep.subr.bf16.mxu0 0
    %3044 = vmatpush1.bf16.xpose.msra.mxu0 0
    %3045 = vmatprep.subr.bf16.mxu0 0
    %3046 = vmatpush1.bf16.xpose.msra.mxu0 0
    %3047 = vmatprep.subr.bf16.mxu0 0
    %3048 = vmatpush1.bf16.xpose.msra.mxu0 0
    %3049 = vmatprep.subr.bf16.mxu0 0
    %3050 = vmatpush1.bf16.xpose.msra.mxu0 0
    %3051 = vmatprep.subr.bf16.mxu0 0
    %3052 = vmatpush1.bf16.xpose.msra.mxu0 0
    %3053 = vmatprep.subr.bf16.mxu0 0
    %3054 = vmatpush1.bf16.xpose.msra.mxu0 0
    %3055 = vmatprep.mubr.bf16.mxu0 0
    %3056 = vmatmul.mubr.bf16.gmra.mrb[0].mxu0 %v3018
    %v3057 = vpop.f32.mrb[0].mxu0
    %v3058 = vadd.f32 0.0, %v3057
    %v3059 = vpop.f32.mrb[0].mxu0
    %v3060 = vpop.f32.mrb[0].mxu0
    %v3061 = vpop.f32.mrb[0].mxu0
    %3062 = vdwg.mxu0
    %v3064 = vsel %vm873, %v2957, 0
    %v3067 = vsel %vm873, %v2965, 0
    %3069 = vmatprep.subr.bf16.mxu0 0
    %3070 = vmatpush1.bf16.xpose.msra.mxu0 %v3067
    %3071 = vmatprep.subr.bf16.mxu0 0
    %3072 = vmatpush1.bf16.xpose.msra.mxu0 0
    %3073 = vmatprep.subr.bf16.mxu0 0
    %3074 = vmatpush1.bf16.xpose.msra.mxu0 0
    %3075 = vmatprep.subr.bf16.mxu0 0
    %3076 = vmatpush1.bf16.xpose.msra.mxu0 0
    %3077 = vmatprep.subr.bf16.mxu0 0
    %3078 = vmatpush1.bf16.xpose.msra.mxu0 0
    %3079 = vmatprep.subr.bf16.mxu0 0
    %3080 = vmatpush1.bf16.xpose.msra.mxu0 0
    %3081 = vmatprep.subr.bf16.mxu0 0
    %3082 = vmatpush1.bf16.xpose.msra.mxu0 0
    %3083 = vmatprep.subr.bf16.mxu0 0
    %3084 = vmatpush1.bf16.xpose.msra.mxu0 0
    %3085 = vmatprep.subr.bf16.mxu0 0
    %3086 = vmatpush1.bf16.xpose.msra.mxu0 0
    %3087 = vmatprep.subr.bf16.mxu0 0
    %3088 = vmatpush1.bf16.xpose.msra.mxu0 0
    %3089 = vmatprep.subr.bf16.mxu0 0
    %3090 = vmatpush1.bf16.xpose.msra.mxu0 0
    %3091 = vmatprep.subr.bf16.mxu0 0
    %3092 = vmatpush1.bf16.xpose.msra.mxu0 0
    %3093 = vmatprep.subr.bf16.mxu0 0
    %3094 = vmatpush1.bf16.xpose.msra.mxu0 0
    %3095 = vmatprep.subr.bf16.mxu0 0
    %3096 = vmatpush1.bf16.xpose.msra.mxu0 0
    %3097 = vmatprep.subr.bf16.mxu0 0
    %3098 = vmatpush1.bf16.xpose.msra.mxu0 0
    %3099 = vmatprep.subr.bf16.mxu0 0
    %3100 = vmatpush1.bf16.xpose.msra.mxu0 0
    %3101 = vmatprep.mubr.bf16.mxu0 0
    %3102 = vmatmul.mubr.bf16.gmra.mrb[0].mxu0 %v3064
    %v3103 = vpop.f32.mrb[0].mxu0
    %v3104 = vadd.f32 0.0, %v3103
    %v3105 = vpop.f32.mrb[0].mxu0
    %v3106 = vpop.f32.mrb[0].mxu0
    %v3107 = vpop.f32.mrb[0].mxu0
    %3108 = vdwg.mxu0
    %v3110 = vsel %vm873, %v2958, 0
    %v3113 = vsel %vm873, %v2966, 0
    %3115 = vmatprep.subr.bf16.mxu0 0
    %3116 = vmatpush1.bf16.xpose.msra.mxu0 %v3113
    %3117 = vmatprep.subr.bf16.mxu0 0
    %3118 = vmatpush1.bf16.xpose.msra.mxu0 0
    %3119 = vmatprep.subr.bf16.mxu0 0
    %3120 = vmatpush1.bf16.xpose.msra.mxu0 0
    %3121 = vmatprep.subr.bf16.mxu0 0
    %3122 = vmatpush1.bf16.xpose.msra.mxu0 0
    %3123 = vmatprep.subr.bf16.mxu0 0
    %3124 = vmatpush1.bf16.xpose.msra.mxu0 0
    %3125 = vmatprep.subr.bf16.mxu0 0
    %3126 = vmatpush1.bf16.xpose.msra.mxu0 0
    %3127 = vmatprep.subr.bf16.mxu0 0
    %3128 = vmatpush1.bf16.xpose.msra.mxu0 0
    %3129 = vmatprep.subr.bf16.mxu0 0
    %3130 = vmatpush1.bf16.xpose.msra.mxu0 0
    %3131 = vmatprep.subr.bf16.mxu0 0
    %3132 = vmatpush1.bf16.xpose.msra.mxu0 0
    %3133 = vmatprep.subr.bf16.mxu0 0
    %3134 = vmatpush1.bf16.xpose.msra.mxu0 0
    %3135 = vmatprep.subr.bf16.mxu0 0
    %3136 = vmatpush1.bf16.xpose.msra.mxu0 0
    %3137 = vmatprep.subr.bf16.mxu0 0
    %3138 = vmatpush1.bf16.xpose.msra.mxu0 0
    %3139 = vmatprep.subr.bf16.mxu0 0
    %3140 = vmatpush1.bf16.xpose.msra.mxu0 0
    %3141 = vmatprep.subr.bf16.mxu0 0
    %3142 = vmatpush1.bf16.xpose.msra.mxu0 0
    %3143 = vmatprep.subr.bf16.mxu0 0
    %3144 = vmatpush1.bf16.xpose.msra.mxu0 0
    %3145 = vmatprep.subr.bf16.mxu0 0
    %3146 = vmatpush1.bf16.xpose.msra.mxu0 0
    %3147 = vmatprep.mubr.bf16.mxu0 0
    %3148 = vmatmul.mubr.bf16.gmra.mrb[0].mxu0 %v3110
    %v3149 = vpop.f32.mrb[0].mxu0
    %v3150 = vadd.f32 0.0, %v3149
    %v3151 = vpop.f32.mrb[0].mxu0
    %v3152 = vpop.f32.mrb[0].mxu0
    %v3153 = vpop.f32.mrb[0].mxu0
    %3154 = vdwg.mxu0
    %v3156 = vsel %vm873, %v2959, 0
    %v3159 = vsel %vm873, %v2967, 0
    %3161 = vmatprep.subr.bf16.mxu0 0
    %3162 = vmatpush1.bf16.xpose.msra.mxu0 %v3159
    %3163 = vmatprep.subr.bf16.mxu0 0
    %3164 = vmatpush1.bf16.xpose.msra.mxu0 0
    %3165 = vmatprep.subr.bf16.mxu0 0
    %3166 = vmatpush1.bf16.xpose.msra.mxu0 0
    %3167 = vmatprep.subr.bf16.mxu0 0
    %3168 = vmatpush1.bf16.xpose.msra.mxu0 0
    %3169 = vmatprep.subr.bf16.mxu0 0
    %3170 = vmatpush1.bf16.xpose.msra.mxu0 0
    %3171 = vmatprep.subr.bf16.mxu0 0
    %3172 = vmatpush1.bf16.xpose.msra.mxu0 0
    %3173 = vmatprep.subr.bf16.mxu0 0
    %3174 = vmatpush1.bf16.xpose.msra.mxu0 0
    %3175 = vmatprep.subr.bf16.mxu0 0
    %3176 = vmatpush1.bf16.xpose.msra.mxu0 0
    %3177 = vmatprep.subr.bf16.mxu0 0
    %3178 = vmatpush1.bf16.xpose.msra.mxu0 0
    %3179 = vmatprep.subr.bf16.mxu0 0
    %3180 = vmatpush1.bf16.xpose.msra.mxu0 0
    %3181 = vmatprep.subr.bf16.mxu0 0
    %3182 = vmatpush1.bf16.xpose.msra.mxu0 0
    %3183 = vmatprep.subr.bf16.mxu0 0
    %3184 = vmatpush1.bf16.xpose.msra.mxu0 0
    %3185 = vmatprep.subr.bf16.mxu0 0
    %3186 = vmatpush1.bf16.xpose.msra.mxu0 0
    %3187 = vmatprep.subr.bf16.mxu0 0
    %3188 = vmatpush1.bf16.xpose.msra.mxu0 0
    %3189 = vmatprep.subr.bf16.mxu0 0
    %3190 = vmatpush1.bf16.xpose.msra.mxu0 0
    %3191 = vmatprep.subr.bf16.mxu0 0
    %3192 = vmatpush1.bf16.xpose.msra.mxu0 0
    %3193 = vmatprep.mubr.bf16.mxu0 0
    %3194 = vmatmul.mubr.bf16.gmra.mrb[0].mxu0 %v3156
    %v3195 = vpop.f32.mrb[0].mxu0
    %v3196 = vadd.f32 0.0, %v3195
    %v3197 = vpop.f32.mrb[0].mxu0
    %v3198 = vpop.f32.mrb[0].mxu0
    %v3199 = vpop.f32.mrb[0].mxu0
    %3200 = vdwg.mxu0
    %v3202 = vsel %vm873, %v2960, 0
    %v3205 = vsel %vm873, %v2968, 0
    %3207 = vmatprep.subr.bf16.mxu0 0
    %3208 = vmatpush1.bf16.xpose.msra.mxu0 %v3205
    %3209 = vmatprep.subr.bf16.mxu0 0
    %3210 = vmatpush1.bf16.xpose.msra.mxu0 0
    %3211 = vmatprep.subr.bf16.mxu0 0
    %3212 = vmatpush1.bf16.xpose.msra.mxu0 0
    %3213 = vmatprep.subr.bf16.mxu0 0
    %3214 = vmatpush1.bf16.xpose.msra.mxu0 0
    %3215 = vmatprep.subr.bf16.mxu0 0
    %3216 = vmatpush1.bf16.xpose.msra.mxu0 0
    %3217 = vmatprep.subr.bf16.mxu0 0
    %3218 = vmatpush1.bf16.xpose.msra.mxu0 0
    %3219 = vmatprep.subr.bf16.mxu0 0
    %3220 = vmatpush1.bf16.xpose.msra.mxu0 0
    %3221 = vmatprep.subr.bf16.mxu0 0
    %3222 = vmatpush1.bf16.xpose.msra.mxu0 0
    %3223 = vmatprep.subr.bf16.mxu0 0
    %3224 = vmatpush1.bf16.xpose.msra.mxu0 0
    %3225 = vmatprep.subr.bf16.mxu0 0
    %3226 = vmatpush1.bf16.xpose.msra.mxu0 0
    %3227 = vmatprep.subr.bf16.mxu0 0
    %3228 = vmatpush1.bf16.xpose.msra.mxu0 0
    %3229 = vmatprep.subr.bf16.mxu0 0
    %3230 = vmatpush1.bf16.xpose.msra.mxu0 0
    %3231 = vmatprep.subr.bf16.mxu0 0
    %3232 = vmatpush1.bf16.xpose.msra.mxu0 0
    %3233 = vmatprep.subr.bf16.mxu0 0
    %3234 = vmatpush1.bf16.xpose.msra.mxu0 0
    %3235 = vmatprep.subr.bf16.mxu0 0
    %3236 = vmatpush1.bf16.xpose.msra.mxu0 0
    %3237 = vmatprep.subr.bf16.mxu0 0
    %3238 = vmatpush1.bf16.xpose.msra.mxu0 0
    %3239 = vmatprep.mubr.bf16.mxu0 0
    %3240 = vmatmul.mubr.bf16.gmra.mrb[0].mxu0 %v3202
    %v3241 = vpop.f32.mrb[0].mxu0
    %v3242 = vadd.f32 0.0, %v3241
    %v3243 = vpop.f32.mrb[0].mxu0
    %v3244 = vpop.f32.mrb[0].mxu0
    %v3245 = vpop.f32.mrb[0].mxu0
    %3246 = vdwg.mxu0
    %v3248 = vsel %vm873, %v2961, 0
    %v3251 = vsel %vm873, %v2969, 0
    %3253 = vmatprep.subr.bf16.mxu0 0
    %3254 = vmatpush1.bf16.xpose.msra.mxu0 %v3251
    %3255 = vmatprep.subr.bf16.mxu0 0
    %3256 = vmatpush1.bf16.xpose.msra.mxu0 0
    %3257 = vmatprep.subr.bf16.mxu0 0
    %3258 = vmatpush1.bf16.xpose.msra.mxu0 0
    %3259 = vmatprep.subr.bf16.mxu0 0
    %3260 = vmatpush1.bf16.xpose.msra.mxu0 0
    %3261 = vmatprep.subr.bf16.mxu0 0
    %3262 = vmatpush1.bf16.xpose.msra.mxu0 0
    %3263 = vmatprep.subr.bf16.mxu0 0
    %3264 = vmatpush1.bf16.xpose.msra.mxu0 0
    %3265 = vmatprep.subr.bf16.mxu0 0
    %3266 = vmatpush1.bf16.xpose.msra.mxu0 0
    %3267 = vmatprep.subr.bf16.mxu0 0
    %3268 = vmatpush1.bf16.xpose.msra.mxu0 0
    %3269 = vmatprep.subr.bf16.mxu0 0
    %3270 = vmatpush1.bf16.xpose.msra.mxu0 0
    %3271 = vmatprep.subr.bf16.mxu0 0
    %3272 = vmatpush1.bf16.xpose.msra.mxu0 0
    %3273 = vmatprep.subr.bf16.mxu0 0
    %3274 = vmatpush1.bf16.xpose.msra.mxu0 0
    %3275 = vmatprep.subr.bf16.mxu0 0
    %3276 = vmatpush1.bf16.xpose.msra.mxu0 0
    %3277 = vmatprep.subr.bf16.mxu0 0
    %3278 = vmatpush1.bf16.xpose.msra.mxu0 0
    %3279 = vmatprep.subr.bf16.mxu0 0
    %3280 = vmatpush1.bf16.xpose.msra.mxu0 0
    %3281 = vmatprep.subr.bf16.mxu0 0
    %3282 = vmatpush1.bf16.xpose.msra.mxu0 0
    %3283 = vmatprep.subr.bf16.mxu0 0
    %3284 = vmatpush1.bf16.xpose.msra.mxu0 0
    %3285 = vmatprep.mubr.bf16.mxu0 0
    %3286 = vmatmul.mubr.bf16.gmra.mrb[0].mxu0 %v3248
    %v3287 = vpop.f32.mrb[0].mxu0
    %v3288 = vadd.f32 0.0, %v3287
    %v3289 = vpop.f32.mrb[0].mxu0
    %v3290 = vpop.f32.mrb[0].mxu0
    %v3291 = vpop.f32.mrb[0].mxu0
    %3292 = vdwg.mxu0
    %v3294 = vsel %vm873, %v2962, 0
    %v3297 = vsel %vm873, %v2970, 0
    %3299 = vmatprep.subr.bf16.mxu0 0
    %3300 = vmatpush1.bf16.xpose.msra.mxu0 %v3297
    %3301 = vmatprep.subr.bf16.mxu0 0
    %3302 = vmatpush1.bf16.xpose.msra.mxu0 0
    %3303 = vmatprep.subr.bf16.mxu0 0
    %3304 = vmatpush1.bf16.xpose.msra.mxu0 0
    %3305 = vmatprep.subr.bf16.mxu0 0
    %3306 = vmatpush1.bf16.xpose.msra.mxu0 0
    %3307 = vmatprep.subr.bf16.mxu0 0
    %3308 = vmatpush1.bf16.xpose.msra.mxu0 0
    %3309 = vmatprep.subr.bf16.mxu0 0
    %3310 = vmatpush1.bf16.xpose.msra.mxu0 0
    %3311 = vmatprep.subr.bf16.mxu0 0
    %3312 = vmatpush1.bf16.xpose.msra.mxu0 0
    %3313 = vmatprep.subr.bf16.mxu0 0
    %3314 = vmatpush1.bf16.xpose.msra.mxu0 0
    %3315 = vmatprep.subr.bf16.mxu0 0
    %3316 = vmatpush1.bf16.xpose.msra.mxu0 0
    %3317 = vmatprep.subr.bf16.mxu0 0
    %3318 = vmatpush1.bf16.xpose.msra.mxu0 0
    %3319 = vmatprep.subr.bf16.mxu0 0
    %3320 = vmatpush1.bf16.xpose.msra.mxu0 0
    %3321 = vmatprep.subr.bf16.mxu0 0
    %3322 = vmatpush1.bf16.xpose.msra.mxu0 0
    %3323 = vmatprep.subr.bf16.mxu0 0
    %3324 = vmatpush1.bf16.xpose.msra.mxu0 0
    %3325 = vmatprep.subr.bf16.mxu0 0
    %3326 = vmatpush1.bf16.xpose.msra.mxu0 0
    %3327 = vmatprep.subr.bf16.mxu0 0
    %3328 = vmatpush1.bf16.xpose.msra.mxu0 0
    %3329 = vmatprep.subr.bf16.mxu0 0
    %3330 = vmatpush1.bf16.xpose.msra.mxu0 0
    %3331 = vmatprep.mubr.bf16.mxu0 0
    %3332 = vmatmul.mubr.bf16.gmra.mrb[0].mxu0 %v3294
    %v3333 = vpop.f32.mrb[0].mxu0
    %v3334 = vadd.f32 0.0, %v3333
    %v3335 = vpop.f32.mrb[0].mxu0
    %v3336 = vpop.f32.mrb[0].mxu0
    %v3337 = vpop.f32.mrb[0].mxu0
    %3338 = vdwg.mxu0
    %v3339 = vmul.f32 %v3012, 0.25
    %v3340 = vmul.f32 %v3058, 0.25
    %v3341 = vmul.f32 %v3104, 0.25
    %v3342 = vmul.f32 %v3150, 0.25
    %v3343 = vmul.f32 %v3196, 0.25
    %v3344 = vmul.f32 %v3242, 0.25
    %v3345 = vmul.f32 %v3288, 0.25
    %v3346 = vmul.f32 %v3334, 0.25
    %v3347 = vsel %vm1250, %v3339, -inf
    %3348 = vmax.xlane.f32.xlu0 %v3347
    %v3349 = vpop.xlane.xlu0 %3348
    %v3350 = vsel %vm1250, %v3340, -inf
    %3351 = vmax.xlane.f32.xlu0 %v3350
    %v3352 = vpop.xlane.xlu0 %3351
    %v3353 = vsel %vm1250, %v3341, -inf
    %3354 = vmax.xlane.f32.xlu0 %v3353
    %v3355 = vpop.xlane.xlu0 %3354
    %v3356 = vsel %vm1250, %v3342, -inf
    %3357 = vmax.xlane.f32.xlu0 %v3356
    %v3358 = vpop.xlane.xlu0 %3357
    %v3359 = vsel %vm1250, %v3343, -inf
    %3360 = vmax.xlane.f32.xlu0 %v3359
    %v3361 = vpop.xlane.xlu0 %3360
    %v3362 = vsel %vm1250, %v3344, -inf
    %3363 = vmax.xlane.f32.xlu0 %v3362
    %v3364 = vpop.xlane.xlu0 %3363
    %v3365 = vsel %vm1250, %v3345, -inf
    %3366 = vmax.xlane.f32.xlu0 %v3365
    %v3367 = vpop.xlane.xlu0 %3366
    %v3368 = vsel %vm1250, %v3346, -inf
    %3369 = vmax.xlane.f32.xlu0 %v3368
    %v3370 = vpop.xlane.xlu0 %3369
    %v3371 = vsub.f32 %v3339, %v3349
    %v3372 = vsub.f32 %v3340, %v3352
    %v3373 = vsub.f32 %v3341, %v3355
    %v3374 = vsub.f32 %v3342, %v3358
    %v3375 = vsub.f32 %v3343, %v3361
    %v3376 = vsub.f32 %v3344, %v3364
    %v3377 = vsub.f32 %v3345, %v3367
    %v3378 = vsub.f32 %v3346, %v3370
    %v3379 = vmul.f32 %v3371, 1.442695
    %v3380 = vpow.pop %v3379
    %v3381 = vmul.f32 %v3372, 1.442695
    %v3382 = vpow.pop %v3381
    %v3383 = vmul.f32 %v3373, 1.442695
    %v3384 = vpow.pop %v3383
    %v3385 = vmul.f32 %v3374, 1.442695
    %v3386 = vpow.pop %v3385
    %v3387 = vmul.f32 %v3375, 1.442695
    %v3388 = vpow.pop %v3387
    %v3389 = vmul.f32 %v3376, 1.442695
    %v3390 = vpow.pop %v3389
    %v3391 = vmul.f32 %v3377, 1.442695
    %v3392 = vpow.pop %v3391
    %v3393 = vmul.f32 %v3378, 1.442695
    %v3394 = vpow.pop %v3393
    %v3395 = vsel %vm1250, %v3380, 0.0
    %3396 = vadd.xlane.f32.xlu0 %v3395
    %v3397 = vpop.xlane.xlu0 %3396
    %v3398 = vsel %vm1250, %v3382, 0.0
    %3399 = vadd.xlane.f32.xlu0 %v3398
    %v3400 = vpop.xlane.xlu0 %3399
    %v3401 = vsel %vm1250, %v3384, 0.0
    %3402 = vadd.xlane.f32.xlu0 %v3401
    %v3403 = vpop.xlane.xlu0 %3402
    %v3404 = vsel %vm1250, %v3386, 0.0
    %3405 = vadd.xlane.f32.xlu0 %v3404
    %v3406 = vpop.xlane.xlu0 %3405
    %v3407 = vsel %vm1250, %v3388, 0.0
    %3408 = vadd.xlane.f32.xlu0 %v3407
    %v3409 = vpop.xlane.xlu0 %3408
    %v3410 = vsel %vm1250, %v3390, 0.0
    %3411 = vadd.xlane.f32.xlu0 %v3410
    %v3412 = vpop.xlane.xlu0 %3411
    %v3413 = vsel %vm1250, %v3392, 0.0
    %3414 = vadd.xlane.f32.xlu0 %v3413
    %v3415 = vpop.xlane.xlu0 %3414
    %v3416 = vsel %vm1250, %v3394, 0.0
    %3417 = vadd.xlane.f32.xlu0 %v3416
    %v3418 = vpop.xlane.xlu0 %3417
    %v3419 = vrcp.pop %v3397
    %v3420 = vrcp.pop %v3400
    %v3421 = vrcp.pop %v3403
    %v3422 = vrcp.pop %v3406
    %v3423 = vrcp.pop %v3409
    %v3424 = vrcp.pop %v3412
    %v3425 = vrcp.pop %v3415
    %v3426 = vrcp.pop %v3418
    %v3427 = vmul.f32 %v3380, %v3419
    %v3428 = vmul.f32 %v3382, %v3420
    %v3429 = vmul.f32 %v3384, %v3421
    %v3430 = vmul.f32 %v3386, %v3422
    %v3431 = vmul.f32 %v3388, %v3423
    %v3432 = vmul.f32 %v3390, %v3424
    %v3433 = vmul.f32 %v3392, %v3425
    %v3434 = vmul.f32 %v3394, %v3426
    %v3435 = vpack.c.bf16 %v3427, %v3427
    %v3436 = vpack.c.bf16 %v3428, %v3428
    %v3437 = vpack.c.bf16 %v3429, %v3429
    %v3438 = vpack.c.bf16 %v3430, %v3430
    %v3439 = vpack.c.bf16 %v3431, %v3431
    %v3440 = vpack.c.bf16 %v3432, %v3432
    %v3441 = vpack.c.bf16 %v3433, %v3433
    %v3442 = vpack.c.bf16 %v3434, %v3434
    %v3443 = vpack.c.bf16 %v2904, %v2904
    %v3444 = vpack.c.bf16 %v2908, %v2908
    %v3445 = vpack.c.bf16 %v2906, %v2906
    %v3446 = vpack.c.bf16 %v2910, %v2910
    %v3447 = vpack.c.bf16 %v2947, %v2947
    %v3448 = vpack.c.bf16 %v2951, %v2951
    %v3449 = vpack.c.bf16 %v2949, %v2949
    %v3450 = vpack.c.bf16 %v2953, %v2953
    %v3452 = vsel %vm1250, %v3435, 0
    %v3455 = vsel %vm1358, %v3443, 0
    %3457 = vmatprep.subr.bf16.mxu0 0
    %3458 = vmatpush1.bf16.msra.mxu0 %v3455
    %3459 = vmatprep.subr.bf16.mxu0 0
    %3460 = vmatpush1.bf16.msra.mxu0 0
    %3461 = vmatprep.subr.bf16.mxu0 0
    %3462 = vmatpush1.bf16.msra.mxu0 0
    %3463 = vmatprep.subr.bf16.mxu0 0
    %3464 = vmatpush1.bf16.msra.mxu0 0
    %3465 = vmatprep.subr.bf16.mxu0 0
    %3466 = vmatpush1.bf16.msra.mxu0 0
    %3467 = vmatprep.subr.bf16.mxu0 0
    %3468 = vmatpush1.bf16.msra.mxu0 0
    %3469 = vmatprep.subr.bf16.mxu0 0
    %3470 = vmatpush1.bf16.msra.mxu0 0
    %3471 = vmatprep.subr.bf16.mxu0 0
    %3472 = vmatpush1.bf16.msra.mxu0 0
    %3473 = vmatprep.subr.bf16.mxu0 0
    %3474 = vmatpush1.bf16.msra.mxu0 0
    %3475 = vmatprep.subr.bf16.mxu0 0
    %3476 = vmatpush1.bf16.msra.mxu0 0
    %3477 = vmatprep.subr.bf16.mxu0 0
    %3478 = vmatpush1.bf16.msra.mxu0 0
    %3479 = vmatprep.subr.bf16.mxu0 0
    %3480 = vmatpush1.bf16.msra.mxu0 0
    %3481 = vmatprep.subr.bf16.mxu0 0
    %3482 = vmatpush1.bf16.msra.mxu0 0
    %3483 = vmatprep.subr.bf16.mxu0 0
    %3484 = vmatpush1.bf16.msra.mxu0 0
    %3485 = vmatprep.subr.bf16.mxu0 0
    %3486 = vmatpush1.bf16.msra.mxu0 0
    %3487 = vmatprep.subr.bf16.mxu0 0
    %3488 = vmatpush1.bf16.msra.mxu0 0
    %3489 = vmatprep.mubr.bf16.mxu0 0
    %3490 = vmatmul.mubr.bf16.gmra.mrb[0].mxu0 %v3452
    %v3491 = vpop.f32.mrb[0].mxu0
    %v3492 = vadd.f32 0.0, %v3491
    %v3493 = vpop.f32.mrb[0].mxu0
    %v3494 = vpop.f32.mrb[0].mxu0
    %v3495 = vpop.f32.mrb[0].mxu0
    %3496 = vdwg.mxu0
    %v3498 = vsel %vm1250, %v3436, 0
    %v3501 = vsel %vm1358, %v3444, 0
    %3503 = vmatprep.subr.bf16.mxu0 0
    %3504 = vmatpush1.bf16.msra.mxu0 %v3501
    %3505 = vmatprep.subr.bf16.mxu0 0
    %3506 = vmatpush1.bf16.msra.mxu0 0
    %3507 = vmatprep.subr.bf16.mxu0 0
    %3508 = vmatpush1.bf16.msra.mxu0 0
    %3509 = vmatprep.subr.bf16.mxu0 0
    %3510 = vmatpush1.bf16.msra.mxu0 0
    %3511 = vmatprep.subr.bf16.mxu0 0
    %3512 = vmatpush1.bf16.msra.mxu0 0
    %3513 = vmatprep.subr.bf16.mxu0 0
    %3514 = vmatpush1.bf16.msra.mxu0 0
    %3515 = vmatprep.subr.bf16.mxu0 0
    %3516 = vmatpush1.bf16.msra.mxu0 0
    %3517 = vmatprep.subr.bf16.mxu0 0
    %3518 = vmatpush1.bf16.msra.mxu0 0
    %3519 = vmatprep.subr.bf16.mxu0 0
    %3520 = vmatpush1.bf16.msra.mxu0 0
    %3521 = vmatprep.subr.bf16.mxu0 0
    %3522 = vmatpush1.bf16.msra.mxu0 0
    %3523 = vmatprep.subr.bf16.mxu0 0
    %3524 = vmatpush1.bf16.msra.mxu0 0
    %3525 = vmatprep.subr.bf16.mxu0 0
    %3526 = vmatpush1.bf16.msra.mxu0 0
    %3527 = vmatprep.subr.bf16.mxu0 0
    %3528 = vmatpush1.bf16.msra.mxu0 0
    %3529 = vmatprep.subr.bf16.mxu0 0
    %3530 = vmatpush1.bf16.msra.mxu0 0
    %3531 = vmatprep.subr.bf16.mxu0 0
    %3532 = vmatpush1.bf16.msra.mxu0 0
    %3533 = vmatprep.subr.bf16.mxu0 0
    %3534 = vmatpush1.bf16.msra.mxu0 0
    %3535 = vmatprep.mubr.bf16.mxu0 0
    %3536 = vmatmul.mubr.bf16.gmra.mrb[0].mxu0 %v3498
    %v3537 = vpop.f32.mrb[0].mxu0
    %v3538 = vadd.f32 0.0, %v3537
    %v3539 = vpop.f32.mrb[0].mxu0
    %v3540 = vpop.f32.mrb[0].mxu0
    %v3541 = vpop.f32.mrb[0].mxu0
    %3542 = vdwg.mxu0
    %v3544 = vsel %vm1250, %v3437, 0
    %v3547 = vsel %vm1358, %v3445, 0
    %3549 = vmatprep.subr.bf16.mxu0 0
    %3550 = vmatpush1.bf16.msra.mxu0 %v3547
    %3551 = vmatprep.subr.bf16.mxu0 0
    %3552 = vmatpush1.bf16.msra.mxu0 0
    %3553 = vmatprep.subr.bf16.mxu0 0
    %3554 = vmatpush1.bf16.msra.mxu0 0
    %3555 = vmatprep.subr.bf16.mxu0 0
    %3556 = vmatpush1.bf16.msra.mxu0 0
    %3557 = vmatprep.subr.bf16.mxu0 0
    %3558 = vmatpush1.bf16.msra.mxu0 0
    %3559 = vmatprep.subr.bf16.mxu0 0
    %3560 = vmatpush1.bf16.msra.mxu0 0
    %3561 = vmatprep.subr.bf16.mxu0 0
    %3562 = vmatpush1.bf16.msra.mxu0 0
    %3563 = vmatprep.subr.bf16.mxu0 0
    %3564 = vmatpush1.bf16.msra.mxu0 0
    %3565 = vmatprep.subr.bf16.mxu0 0
    %3566 = vmatpush1.bf16.msra.mxu0 0
    %3567 = vmatprep.subr.bf16.mxu0 0
    %3568 = vmatpush1.bf16.msra.mxu0 0
    %3569 = vmatprep.subr.bf16.mxu0 0
    %3570 = vmatpush1.bf16.msra.mxu0 0
    %3571 = vmatprep.subr.bf16.mxu0 0
    %3572 = vmatpush1.bf16.msra.mxu0 0
    %3573 = vmatprep.subr.bf16.mxu0 0
    %3574 = vmatpush1.bf16.msra.mxu0 0
    %3575 = vmatprep.subr.bf16.mxu0 0
    %3576 = vmatpush1.bf16.msra.mxu0 0
    %3577 = vmatprep.subr.bf16.mxu0 0
    %3578 = vmatpush1.bf16.msra.mxu0 0
    %3579 = vmatprep.subr.bf16.mxu0 0
    %3580 = vmatpush1.bf16.msra.mxu0 0
    %3581 = vmatprep.mubr.bf16.mxu0 0
    %3582 = vmatmul.mubr.bf16.gmra.mrb[0].mxu0 %v3544
    %v3583 = vpop.f32.mrb[0].mxu0
    %v3584 = vadd.f32 0.0, %v3583
    %v3585 = vpop.f32.mrb[0].mxu0
    %v3586 = vpop.f32.mrb[0].mxu0
    %v3587 = vpop.f32.mrb[0].mxu0
    %3588 = vdwg.mxu0
    %v3590 = vsel %vm1250, %v3438, 0
    %v3593 = vsel %vm1358, %v3446, 0
    %3595 = vmatprep.subr.bf16.mxu0 0
    %3596 = vmatpush1.bf16.msra.mxu0 %v3593
    %3597 = vmatprep.subr.bf16.mxu0 0
    %3598 = vmatpush1.bf16.msra.mxu0 0
    %3599 = vmatprep.subr.bf16.mxu0 0
    %3600 = vmatpush1.bf16.msra.mxu0 0
    %3601 = vmatprep.subr.bf16.mxu0 0
    %3602 = vmatpush1.bf16.msra.mxu0 0
    %3603 = vmatprep.subr.bf16.mxu0 0
    %3604 = vmatpush1.bf16.msra.mxu0 0
    %3605 = vmatprep.subr.bf16.mxu0 0
    %3606 = vmatpush1.bf16.msra.mxu0 0
    %3607 = vmatprep.subr.bf16.mxu0 0
    %3608 = vmatpush1.bf16.msra.mxu0 0
    %3609 = vmatprep.subr.bf16.mxu0 0
    %3610 = vmatpush1.bf16.msra.mxu0 0
    %3611 = vmatprep.subr.bf16.mxu0 0
    %3612 = vmatpush1.bf16.msra.mxu0 0
    %3613 = vmatprep.subr.bf16.mxu0 0
    %3614 = vmatpush1.bf16.msra.mxu0 0
    %3615 = vmatprep.subr.bf16.mxu0 0
    %3616 = vmatpush1.bf16.msra.mxu0 0
    %3617 = vmatprep.subr.bf16.mxu0 0
    %3618 = vmatpush1.bf16.msra.mxu0 0
    %3619 = vmatprep.subr.bf16.mxu0 0
    %3620 = vmatpush1.bf16.msra.mxu0 0
    %3621 = vmatprep.subr.bf16.mxu0 0
    %3622 = vmatpush1.bf16.msra.mxu0 0
    %3623 = vmatprep.subr.bf16.mxu0 0
    %3624 = vmatpush1.bf16.msra.mxu0 0
    %3625 = vmatprep.subr.bf16.mxu0 0
    %3626 = vmatpush1.bf16.msra.mxu0 0
    %3627 = vmatprep.mubr.bf16.mxu0 0
    %3628 = vmatmul.mubr.bf16.gmra.mrb[0].mxu0 %v3590
    %v3629 = vpop.f32.mrb[0].mxu0
    %v3630 = vadd.f32 0.0, %v3629
    %v3631 = vpop.f32.mrb[0].mxu0
    %v3632 = vpop.f32.mrb[0].mxu0
    %v3633 = vpop.f32.mrb[0].mxu0
    %3634 = vdwg.mxu0
    %v3636 = vsel %vm1250, %v3439, 0
    %v3639 = vsel %vm1358, %v3447, 0
    %3641 = vmatprep.subr.bf16.mxu0 0
    %3642 = vmatpush1.bf16.msra.mxu0 %v3639
    %3643 = vmatprep.subr.bf16.mxu0 0
    %3644 = vmatpush1.bf16.msra.mxu0 0
    %3645 = vmatprep.subr.bf16.mxu0 0
    %3646 = vmatpush1.bf16.msra.mxu0 0
    %3647 = vmatprep.subr.bf16.mxu0 0
    %3648 = vmatpush1.bf16.msra.mxu0 0
    %3649 = vmatprep.subr.bf16.mxu0 0
    %3650 = vmatpush1.bf16.msra.mxu0 0
    %3651 = vmatprep.subr.bf16.mxu0 0
    %3652 = vmatpush1.bf16.msra.mxu0 0
    %3653 = vmatprep.subr.bf16.mxu0 0
    %3654 = vmatpush1.bf16.msra.mxu0 0
    %3655 = vmatprep.subr.bf16.mxu0 0
    %3656 = vmatpush1.bf16.msra.mxu0 0
    %3657 = vmatprep.subr.bf16.mxu0 0
    %3658 = vmatpush1.bf16.msra.mxu0 0
    %3659 = vmatprep.subr.bf16.mxu0 0
    %3660 = vmatpush1.bf16.msra.mxu0 0
    %3661 = vmatprep.subr.bf16.mxu0 0
    %3662 = vmatpush1.bf16.msra.mxu0 0
    %3663 = vmatprep.subr.bf16.mxu0 0
    %3664 = vmatpush1.bf16.msra.mxu0 0
    %3665 = vmatprep.subr.bf16.mxu0 0
    %3666 = vmatpush1.bf16.msra.mxu0 0
    %3667 = vmatprep.subr.bf16.mxu0 0
    %3668 = vmatpush1.bf16.msra.mxu0 0
    %3669 = vmatprep.subr.bf16.mxu0 0
    %3670 = vmatpush1.bf16.msra.mxu0 0
    %3671 = vmatprep.subr.bf16.mxu0 0
    %3672 = vmatpush1.bf16.msra.mxu0 0
    %3673 = vmatprep.mubr.bf16.mxu0 0
    %3674 = vmatmul.mubr.bf16.gmra.mrb[0].mxu0 %v3636
    %v3675 = vpop.f32.mrb[0].mxu0
    %v3676 = vadd.f32 0.0, %v3675
    %v3677 = vpop.f32.mrb[0].mxu0
    %v3678 = vpop.f32.mrb[0].mxu0
    %v3679 = vpop.f32.mrb[0].mxu0
    %3680 = vdwg.mxu0
    %v3682 = vsel %vm1250, %v3440, 0
    %v3685 = vsel %vm1358, %v3448, 0
    %3687 = vmatprep.subr.bf16.mxu0 0
    %3688 = vmatpush1.bf16.msra.mxu0 %v3685
    %3689 = vmatprep.subr.bf16.mxu0 0
    %3690 = vmatpush1.bf16.msra.mxu0 0
    %3691 = vmatprep.subr.bf16.mxu0 0
    %3692 = vmatpush1.bf16.msra.mxu0 0
    %3693 = vmatprep.subr.bf16.mxu0 0
    %3694 = vmatpush1.bf16.msra.mxu0 0
    %3695 = vmatprep.subr.bf16.mxu0 0
    %3696 = vmatpush1.bf16.msra.mxu0 0
    %3697 = vmatprep.subr.bf16.mxu0 0
    %3698 = vmatpush1.bf16.msra.mxu0 0
    %3699 = vmatprep.subr.bf16.mxu0 0
    %3700 = vmatpush1.bf16.msra.mxu0 0
    %3701 = vmatprep.subr.bf16.mxu0 0
    %3702 = vmatpush1.bf16.msra.mxu0 0
    %3703 = vmatprep.subr.bf16.mxu0 0
    %3704 = vmatpush1.bf16.msra.mxu0 0
    %3705 = vmatprep.subr.bf16.mxu0 0
    %3706 = vmatpush1.bf16.msra.mxu0 0
    %3707 = vmatprep.subr.bf16.mxu0 0
    %3708 = vmatpush1.bf16.msra.mxu0 0
    %3709 = vmatprep.subr.bf16.mxu0 0
    %3710 = vmatpush1.bf16.msra.mxu0 0
    %3711 = vmatprep.subr.bf16.mxu0 0
    %3712 = vmatpush1.bf16.msra.mxu0 0
    %3713 = vmatprep.subr.bf16.mxu0 0
    %3714 = vmatpush1.bf16.msra.mxu0 0
    %3715 = vmatprep.subr.bf16.mxu0 0
    %3716 = vmatpush1.bf16.msra.mxu0 0
    %3717 = vmatprep.subr.bf16.mxu0 0
    %3718 = vmatpush1.bf16.msra.mxu0 0
    %3719 = vmatprep.mubr.bf16.mxu0 0
    %3720 = vmatmul.mubr.bf16.gmra.mrb[0].mxu0 %v3682
    %v3721 = vpop.f32.mrb[0].mxu0
    %v3722 = vadd.f32 0.0, %v3721
    %v3723 = vpop.f32.mrb[0].mxu0
    %v3724 = vpop.f32.mrb[0].mxu0
    %v3725 = vpop.f32.mrb[0].mxu0
    %3726 = vdwg.mxu0
    %v3728 = vsel %vm1250, %v3441, 0
    %v3731 = vsel %vm1358, %v3449, 0
    %3733 = vmatprep.subr.bf16.mxu0 0
    %3734 = vmatpush1.bf16.msra.mxu0 %v3731
    %3735 = vmatprep.subr.bf16.mxu0 0
    %3736 = vmatpush1.bf16.msra.mxu0 0
    %3737 = vmatprep.subr.bf16.mxu0 0
    %3738 = vmatpush1.bf16.msra.mxu0 0
    %3739 = vmatprep.subr.bf16.mxu0 0
    %3740 = vmatpush1.bf16.msra.mxu0 0
    %3741 = vmatprep.subr.bf16.mxu0 0
    %3742 = vmatpush1.bf16.msra.mxu0 0
    %3743 = vmatprep.subr.bf16.mxu0 0
    %3744 = vmatpush1.bf16.msra.mxu0 0
    %3745 = vmatprep.subr.bf16.mxu0 0
    %3746 = vmatpush1.bf16.msra.mxu0 0
    %3747 = vmatprep.subr.bf16.mxu0 0
    %3748 = vmatpush1.bf16.msra.mxu0 0
    %3749 = vmatprep.subr.bf16.mxu0 0
    %3750 = vmatpush1.bf16.msra.mxu0 0
    %3751 = vmatprep.subr.bf16.mxu0 0
    %3752 = vmatpush1.bf16.msra.mxu0 0
    %3753 = vmatprep.subr.bf16.mxu0 0
    %3754 = vmatpush1.bf16.msra.mxu0 0
    %3755 = vmatprep.subr.bf16.mxu0 0
    %3756 = vmatpush1.bf16.msra.mxu0 0
    %3757 = vmatprep.subr.bf16.mxu0 0
    %3758 = vmatpush1.bf16.msra.mxu0 0
    %3759 = vmatprep.subr.bf16.mxu0 0
    %3760 = vmatpush1.bf16.msra.mxu0 0
    %3761 = vmatprep.subr.bf16.mxu0 0
    %3762 = vmatpush1.bf16.msra.mxu0 0
    %3763 = vmatprep.subr.bf16.mxu0 0
    %3764 = vmatpush1.bf16.msra.mxu0 0
    %3765 = vmatprep.mubr.bf16.mxu0 0
    %3766 = vmatmul.mubr.bf16.gmra.mrb[0].mxu0 %v3728
    %v3767 = vpop.f32.mrb[0].mxu0
    %v3768 = vadd.f32 0.0, %v3767
    %v3769 = vpop.f32.mrb[0].mxu0
    %v3770 = vpop.f32.mrb[0].mxu0
    %v3771 = vpop.f32.mrb[0].mxu0
    %3772 = vdwg.mxu0
    %v3774 = vsel %vm1250, %v3442, 0
    %v3777 = vsel %vm1358, %v3450, 0
    %3779 = vmatprep.subr.bf16.mxu0 0
    %3780 = vmatpush1.bf16.msra.mxu0 %v3777
    %3781 = vmatprep.subr.bf16.mxu0 0
    %3782 = vmatpush1.bf16.msra.mxu0 0
    %3783 = vmatprep.subr.bf16.mxu0 0
    %3784 = vmatpush1.bf16.msra.mxu0 0
    %3785 = vmatprep.subr.bf16.mxu0 0
    %3786 = vmatpush1.bf16.msra.mxu0 0
    %3787 = vmatprep.subr.bf16.mxu0 0
    %3788 = vmatpush1.bf16.msra.mxu0 0
    %3789 = vmatprep.subr.bf16.mxu0 0
    %3790 = vmatpush1.bf16.msra.mxu0 0
    %3791 = vmatprep.subr.bf16.mxu0 0
    %3792 = vmatpush1.bf16.msra.mxu0 0
    %3793 = vmatprep.subr.bf16.mxu0 0
    %3794 = vmatpush1.bf16.msra.mxu0 0
    %3795 = vmatprep.subr.bf16.mxu0 0
    %3796 = vmatpush1.bf16.msra.mxu0 0
    %3797 = vmatprep.subr.bf16.mxu0 0
    %3798 = vmatpush1.bf16.msra.mxu0 0
    %3799 = vmatprep.subr.bf16.mxu0 0
    %3800 = vmatpush1.bf16.msra.mxu0 0
    %3801 = vmatprep.subr.bf16.mxu0 0
    %3802 = vmatpush1.bf16.msra.mxu0 0
    %3803 = vmatprep.subr.bf16.mxu0 0
    %3804 = vmatpush1.bf16.msra.mxu0 0
    %3805 = vmatprep.subr.bf16.mxu0 0
    %3806 = vmatpush1.bf16.msra.mxu0 0
    %3807 = vmatprep.subr.bf16.mxu0 0
    %3808 = vmatpush1.bf16.msra.mxu0 0
    %3809 = vmatprep.subr.bf16.mxu0 0
    %3810 = vmatpush1.bf16.msra.mxu0 0
    %3811 = vmatprep.mubr.bf16.mxu0 0
    %3812 = vmatmul.mubr.bf16.gmra.mrb[0].mxu0 %v3774
    %v3813 = vpop.f32.mrb[0].mxu0
    %v3814 = vadd.f32 0.0, %v3813
    %v3815 = vpop.f32.mrb[0].mxu0
    %v3816 = vpop.f32.mrb[0].mxu0
    %v3817 = vpop.f32.mrb[0].mxu0
    %3818 = vdwg.mxu0
    %s3819 = scalar_lea.vmem %s8, 1
    %v3820 = vld [vmem:[%s3819] sm:$0x1]
    %v3821 = vpack.c.bf16 %v3538, %v3492
    %s3822 = scalar_lea.vmem %s7, 32
    %v3823 = vld [vmem:[%s3822] sm:$0xf]
    %v3824 = vld [vmem:[%s3822 + $0x4] sm:$0xf]
    %v3827 = vunpack.c.l.b16 %v3823
    %v3828 = vunpack.c.l.b16 %v3824
    %v3829 = vpack.c.b16 %v3828, %v3827
    %v3832 = vsel %vm873, %v3821, 0
    %3834 = vmatprep.subr.bf16.mxu0 0
    %3835 = vmatpush1.bf16.msra.mxu0 %v3829
    %3836 = vmatprep.subr.bf16.mxu0 0
    %3837 = vmatpush1.bf16.msra.mxu0 0
    %3838 = vmatprep.subr.bf16.mxu0 0
    %3839 = vmatpush1.bf16.msra.mxu0 0
    %3840 = vmatprep.subr.bf16.mxu0 0
    %3841 = vmatpush1.bf16.msra.mxu0 0
    %3842 = vmatprep.subr.bf16.mxu0 0
    %3843 = vmatpush1.bf16.msra.mxu0 0
    %3844 = vmatprep.subr.bf16.mxu0 0
    %3845 = vmatpush1.bf16.msra.mxu0 0
    %3846 = vmatprep.subr.bf16.mxu0 0
    %3847 = vmatpush1.bf16.msra.mxu0 0
    %3848 = vmatprep.subr.bf16.mxu0 0
    %3849 = vmatpush1.bf16.msra.mxu0 0
    %3850 = vmatprep.subr.bf16.mxu0 0
    %3851 = vmatpush1.bf16.msra.mxu0 0
    %3852 = vmatprep.subr.bf16.mxu0 0
    %3853 = vmatpush1.bf16.msra.mxu0 0
    %3854 = vmatprep.subr.bf16.mxu0 0
    %3855 = vmatpush1.bf16.msra.mxu0 0
    %3856 = vmatprep.subr.bf16.mxu0 0
    %3857 = vmatpush1.bf16.msra.mxu0 0
    %3858 = vmatprep.subr.bf16.mxu0 0
    %3859 = vmatpush1.bf16.msra.mxu0 0
    %3860 = vmatprep.subr.bf16.mxu0 0
    %3861 = vmatpush1.bf16.msra.mxu0 0
    %3862 = vmatprep.subr.bf16.mxu0 0
    %3863 = vmatpush1.bf16.msra.mxu0 0
    %3864 = vmatprep.subr.bf16.mxu0 0
    %3865 = vmatpush1.bf16.msra.mxu0 0
    %3866 = vmatprep.mubr.bf16.mxu0 0
    %3867 = vmatmul.mubr.bf16.gmra.mrb[0].mxu0 %v3832
    %v3868 = vpop.f32.mrb[0].mxu0
    %v3869 = vadd.f32 0.0, %v3868
    %v3870 = vpop.f32.mrb[0].mxu0
    %v3871 = vpop.f32.mrb[0].mxu0
    %v3872 = vadd.f32 0.0, %v3871
    %v3873 = vpop.f32.mrb[0].mxu0
    %3874 = vdwg.mxu0
    %v3876 = vlaneseq
    %v3877 = vshrl.u32 %v3876, 7
    %v3878 = vsub.s32 0, %v3877
    %v3879 = vrot.slane %v3820, %v3878
    %v3881 = vadd.f32 %v3879, %v3869
    %v3882 = vadd.f32 %v3879, %v3872
    %v3883 = vpack.c.bf16 %v3630, %v3584
    %s3884 = scalar_lea.vmem %s7, 40
    %v3885 = vld [vmem:[%s3884] sm:$0xf]
    %v3886 = vld [vmem:[%s3884 + $0x4] sm:$0xf]
    %v3889 = vunpack.c.l.b16 %v3885
    %v3890 = vunpack.c.l.b16 %v3886
    %v3891 = vpack.c.b16 %v3890, %v3889
    %v3894 = vsel %vm873, %v3883, 0
    %3896 = vmatprep.subr.bf16.mxu0 0
    %3897 = vmatpush1.bf16.msra.mxu0 %v3891
    %3898 = vmatprep.subr.bf16.mxu0 0
    %3899 = vmatpush1.bf16.msra.mxu0 0
    %3900 = vmatprep.subr.bf16.mxu0 0
    %3901 = vmatpush1.bf16.msra.mxu0 0
    %3902 = vmatprep.subr.bf16.mxu0 0
    %3903 = vmatpush1.bf16.msra.mxu0 0
    %3904 = vmatprep.subr.bf16.mxu0 0
    %3905 = vmatpush1.bf16.msra.mxu0 0
    %3906 = vmatprep.subr.bf16.mxu0 0
    %3907 = vmatpush1.bf16.msra.mxu0 0
    %3908 = vmatprep.subr.bf16.mxu0 0
    %3909 = vmatpush1.bf16.msra.mxu0 0
    %3910 = vmatprep.subr.bf16.mxu0 0
    %3911 = vmatpush1.bf16.msra.mxu0 0
    %3912 = vmatprep.subr.bf16.mxu0 0
    %3913 = vmatpush1.bf16.msra.mxu0 0
    %3914 = vmatprep.subr.bf16.mxu0 0
    %3915 = vmatpush1.bf16.msra.mxu0 0
    %3916 = vmatprep.subr.bf16.mxu0 0
    %3917 = vmatpush1.bf16.msra.mxu0 0
    %3918 = vmatprep.subr.bf16.mxu0 0
    %3919 = vmatpush1.bf16.msra.mxu0 0
    %3920 = vmatprep.subr.bf16.mxu0 0
    %3921 = vmatpush1.bf16.msra.mxu0 0
    %3922 = vmatprep.subr.bf16.mxu0 0
    %3923 = vmatpush1.bf16.msra.mxu0 0
    %3924 = vmatprep.subr.bf16.mxu0 0
    %3925 = vmatpush1.bf16.msra.mxu0 0
    %3926 = vmatprep.subr.bf16.mxu0 0
    %3927 = vmatpush1.bf16.msra.mxu0 0
    %3928 = vmatprep.mubr.bf16.mxu0 0
    %3929 = vmatmul.mubr.bf16.gmra.mrb[0].mxu0 %v3894
    %v3930 = vpop.f32.mrb[0].mxu0
    %v3931 = vadd.f32 0.0, %v3930
    %v3932 = vpop.f32.mrb[0].mxu0
    %v3933 = vpop.f32.mrb[0].mxu0
    %v3934 = vadd.f32 0.0, %v3933
    %v3935 = vpop.f32.mrb[0].mxu0
    %3936 = vdwg.mxu0
    %v3937 = vadd.f32 %v3881, %v3931
    %v3938 = vadd.f32 %v3882, %v3934
    %v3939 = vpack.c.bf16 %v3722, %v3676
    %s3940 = scalar_lea.vmem %s7, 48
    %v3941 = vld [vmem:[%s3940] sm:$0xf]
    %v3942 = vld [vmem:[%s3940 + $0x4] sm:$0xf]
    %v3945 = vunpack.c.l.b16 %v3941
    %v3946 = vunpack.c.l.b16 %v3942
    %v3947 = vpack.c.b16 %v3946, %v3945
    %v3950 = vsel %vm873, %v3939, 0
    %3952 = vmatprep.subr.bf16.mxu0 0
    %3953 = vmatpush1.bf16.msra.mxu0 %v3947
    %3954 = vmatprep.subr.bf16.mxu0 0
    %3955 = vmatpush1.bf16.msra.mxu0 0
    %3956 = vmatprep.subr.bf16.mxu0 0
    %3957 = vmatpush1.bf16.msra.mxu0 0
    %3958 = vmatprep.subr.bf16.mxu0 0
    %3959 = vmatpush1.bf16.msra.mxu0 0
    %3960 = vmatprep.subr.bf16.mxu0 0
    %3961 = vmatpush1.bf16.msra.mxu0 0
    %3962 = vmatprep.subr.bf16.mxu0 0
    %3963 = vmatpush1.bf16.msra.mxu0 0
    %3964 = vmatprep.subr.bf16.mxu0 0
    %3965 = vmatpush1.bf16.msra.mxu0 0
    %3966 = vmatprep.subr.bf16.mxu0 0
    %3967 = vmatpush1.bf16.msra.mxu0 0
    %3968 = vmatprep.subr.bf16.mxu0 0
    %3969 = vmatpush1.bf16.msra.mxu0 0
    %3970 = vmatprep.subr.bf16.mxu0 0
    %3971 = vmatpush1.bf16.msra.mxu0 0
    %3972 = vmatprep.subr.bf16.mxu0 0
    %3973 = vmatpush1.bf16.msra.mxu0 0
    %3974 = vmatprep.subr.bf16.mxu0 0
    %3975 = vmatpush1.bf16.msra.mxu0 0
    %3976 = vmatprep.subr.bf16.mxu0 0
    %3977 = vmatpush1.bf16.msra.mxu0 0
    %3978 = vmatprep.subr.bf16.mxu0 0
    %3979 = vmatpush1.bf16.msra.mxu0 0
    %3980 = vmatprep.subr.bf16.mxu0 0
    %3981 = vmatpush1.bf16.msra.mxu0 0
    %3982 = vmatprep.subr.bf16.mxu0 0
    %3983 = vmatpush1.bf16.msra.mxu0 0
    %3984 = vmatprep.mubr.bf16.mxu0 0
    %3985 = vmatmul.mubr.bf16.gmra.mrb[0].mxu0 %v3950
    %v3986 = vpop.f32.mrb[0].mxu0
    %v3987 = vadd.f32 0.0, %v3986
    %v3988 = vpop.f32.mrb[0].mxu0
    %v3989 = vpop.f32.mrb[0].mxu0
    %v3990 = vadd.f32 0.0, %v3989
    %v3991 = vpop.f32.mrb[0].mxu0
    %3992 = vdwg.mxu0
    %v3993 = vadd.f32 %v3937, %v3987
    %v3994 = vadd.f32 %v3938, %v3990
    %v3995 = vpack.c.bf16 %v3814, %v3768
    %s3996 = scalar_lea.vmem %s7, 56
    %v3997 = vld [vmem:[%s3996] sm:$0xf]
    %v3998 = vld [vmem:[%s3996 + $0x4] sm:$0xf]
    %v4001 = vunpack.c.l.b16 %v3997
    %v4002 = vunpack.c.l.b16 %v3998
    %v4003 = vpack.c.b16 %v4002, %v4001
    %v4006 = vsel %vm873, %v3995, 0
    %4008 = vmatprep.subr.bf16.mxu0 0
    %4009 = vmatpush1.bf16.msra.mxu0 %v4003
    %4010 = vmatprep.subr.bf16.mxu0 0
    %4011 = vmatpush1.bf16.msra.mxu0 0
    %4012 = vmatprep.subr.bf16.mxu0 0
    %4013 = vmatpush1.bf16.msra.mxu0 0
    %4014 = vmatprep.subr.bf16.mxu0 0
    %4015 = vmatpush1.bf16.msra.mxu0 0
    %4016 = vmatprep.subr.bf16.mxu0 0
    %4017 = vmatpush1.bf16.msra.mxu0 0
    %4018 = vmatprep.subr.bf16.mxu0 0
    %4019 = vmatpush1.bf16.msra.mxu0 0
    %4020 = vmatprep.subr.bf16.mxu0 0
    %4021 = vmatpush1.bf16.msra.mxu0 0
    %4022 = vmatprep.subr.bf16.mxu0 0
    %4023 = vmatpush1.bf16.msra.mxu0 0
    %4024 = vmatprep.subr.bf16.mxu0 0
    %4025 = vmatpush1.bf16.msra.mxu0 0
    %4026 = vmatprep.subr.bf16.mxu0 0
    %4027 = vmatpush1.bf16.msra.mxu0 0
    %4028 = vmatprep.subr.bf16.mxu0 0
    %4029 = vmatpush1.bf16.msra.mxu0 0
    %4030 = vmatprep.subr.bf16.mxu0 0
    %4031 = vmatpush1.bf16.msra.mxu0 0
    %4032 = vmatprep.subr.bf16.mxu0 0
    %4033 = vmatpush1.bf16.msra.mxu0 0
    %4034 = vmatprep.subr.bf16.mxu0 0
    %4035 = vmatpush1.bf16.msra.mxu0 0
    %4036 = vmatprep.subr.bf16.mxu0 0
    %4037 = vmatpush1.bf16.msra.mxu0 0
    %4038 = vmatprep.subr.bf16.mxu0 0
    %4039 = vmatpush1.bf16.msra.mxu0 0
    %4040 = vmatprep.mubr.bf16.mxu0 0
    %4041 = vmatmul.mubr.bf16.gmra.mrb[0].mxu0 %v4006
    %v4042 = vpop.f32.mrb[0].mxu0
    %v4043 = vadd.f32 0.0, %v4042
    %v4044 = vpop.f32.mrb[0].mxu0
    %v4045 = vpop.f32.mrb[0].mxu0
    %v4046 = vadd.f32 0.0, %v4045
    %v4047 = vpop.f32.mrb[0].mxu0
    %4048 = vdwg.mxu0
    %v4049 = vadd.f32 %v3993, %v4043
    %v4050 = vadd.f32 %v3994, %v4046
    %v4051 = vadd.f32 %v2291, %v4049
    %v4052 = vadd.f32 %v2292, %v4050
    %s4053 = scalar_lea.vmem %s9, 1
    %v4054 = vld [vmem:[%s4053] sm:$0x1]
    %s4055 = scalar_lea.vmem %s10, 1
    %v4056 = vld [vmem:[%s4055] sm:$0x1]
    %v4057 = vsel %vm199, %v4051, 0.0
    %4058 = vadd.xlane.f32.xlu0 %v4057
    %v4059 = vpop.xlane.xlu0 %4058
    %v4060 = vsel %vm199, %v4052, 0.0
    %4061 = vadd.xlane.f32.xlu0 %v4060
    %v4062 = vpop.xlane.xlu0 %4061
    %v4063 = vmul.f32 %v4059, %v206
    %v4064 = vmul.f32 %v4062, %v206
    %v4065 = vsub.f32 %v4051, %v4063
    %v4066 = vsub.f32 %v4052, %v4064
    %v4067 = vmul.f32 %v4065, %v4065
    %v4068 = vmul.f32 %v4066, %v4066
    %v4069 = vsel %vm199, %v4067, 0.0
    %4070 = vadd.xlane.f32.xlu0 %v4069
    %v4071 = vpop.xlane.xlu0 %4070
    %v4072 = vsel %vm199, %v4068, 0.0
    %4073 = vadd.xlane.f32.xlu0 %v4072
    %v4074 = vpop.xlane.xlu0 %4073
    %v4075 = vmul.f32 %v4071, %v206
    %v4076 = vmul.f32 %v4074, %v206
    %v4077 = vadd.f32 %v4075, 1e-05
    %v4078 = vadd.f32 %v4076, 1e-05
    %v4079 = vrsqrt.pop %v4077
    %v4080 = vrsqrt.pop %v4078
    %v4081 = vmul.f32 %v4065, %v4079
    %v4082 = vmul.f32 %v4066, %v4080
    %v4084 = vlaneseq
    %v4085 = vshrl.u32 %v4084, 7
    %v4086 = vsub.s32 0, %v4085
    %v4087 = vrot.slane %v4054, %v4086
    %v4089 = vmul.f32 %v4081, %v4087
    %v4090 = vmul.f32 %v4082, %v4087
    %v4092 = vlaneseq
    %v4093 = vshrl.u32 %v4092, 7
    %v4094 = vsub.s32 0, %v4093
    %v4095 = vrot.slane %v4056, %v4094
    %v4097 = vadd.f32 %v4089, %v4095
    %v4098 = vadd.f32 %v4090, %v4095
    %v4099 = vpack.c.bf16 %v4098, %v4097
    %s4100 = scalar_lea.vmem %s11, 64
    %v4101 = vld [vmem:[%s4100] sm:$0xff]
    %v4102 = vld [vmem:[%s4100 + $0x8] sm:$0xff]
    %v4103 = vld [vmem:[%s4100 + $0x10] sm:$0xff]
    %v4104 = vld [vmem:[%s4100 + $0x18] sm:$0xff]
    %v4105 = vld [vmem:[%s4100 + $0x20] sm:$0xff]
    %v4106 = vld [vmem:[%s4100 + $0x28] sm:$0xff]
    %v4107 = vld [vmem:[%s4100 + $0x30] sm:$0xff]
    %v4108 = vld [vmem:[%s4100 + $0x38] sm:$0xff]
    %s4109 = scalar_lea.vmem %s12, 2
    %v4110 = vld [vmem:[%s4109] sm:$0x3]
    %v4112 = vlaneseq
    %v4113 = vshrl.u32 %v4112, 7
    %v4114 = vsub.s32 0, %v4113
    %v4115 = vrot.slane %v4110, %v4114
    %v4116 = vlaneseq
    %v4117 = vshrl.u32 %v4116, 7
    %v4118 = vsub.s32 1, %v4117
    %v4119 = vrot.slane %v4110, %v4118
    %v4130 = vunpack.c.l.b16 %v4101
    %v4131 = vunpack.c.h.b16 %v4101
    %v4132 = vunpack.c.l.b16 %v4102
    %v4133 = vunpack.c.h.b16 %v4102
    %v4134 = vunpack.c.l.b16 %v4103
    %v4135 = vunpack.c.h.b16 %v4103
    %v4136 = vunpack.c.l.b16 %v4104
    %v4137 = vunpack.c.h.b16 %v4104
    %v4138 = vunpack.c.l.b16 %v4105
    %v4139 = vunpack.c.h.b16 %v4105
    %v4140 = vunpack.c.l.b16 %v4106
    %v4141 = vunpack.c.h.b16 %v4106
    %v4142 = vunpack.c.l.b16 %v4107
    %v4143 = vunpack.c.h.b16 %v4107
    %v4144 = vunpack.c.l.b16 %v4108
    %v4145 = vunpack.c.h.b16 %v4108
    %v4146 = vpack.c.b16 %v4132, %v4130
    %v4147 = vpack.c.b16 %v4133, %v4131
    %v4148 = vpack.c.b16 %v4136, %v4134
    %v4149 = vpack.c.b16 %v4137, %v4135
    %v4150 = vpack.c.b16 %v4140, %v4138
    %v4151 = vpack.c.b16 %v4141, %v4139
    %v4152 = vpack.c.b16 %v4144, %v4142
    %v4153 = vpack.c.b16 %v4145, %v4143
    %v4163 = vsel %vm199, %v4099, 0
    %4165 = vmatprep.subr.bf16.mxu0 %v4147
    %4166 = vmatpush1.bf16.msra.mxu0 %v4146
    %4167 = vmatprep.subr.bf16.mxu0 %v4149
    %4168 = vmatpush1.bf16.msra.mxu0 %v4148
    %4169 = vmatprep.subr.bf16.mxu0 %v4151
    %4170 = vmatpush1.bf16.msra.mxu0 %v4150
    %4171 = vmatprep.subr.bf16.mxu0 %v4153
    %4172 = vmatpush1.bf16.msra.mxu0 %v4152
    %4173 = vmatprep.subr.bf16.mxu0 0
    %4174 = vmatpush1.bf16.msra.mxu0 0
    %4175 = vmatprep.subr.bf16.mxu0 0
    %4176 = vmatpush1.bf16.msra.mxu0 0
    %4177 = vmatprep.subr.bf16.mxu0 0
    %4178 = vmatpush1.bf16.msra.mxu0 0
    %4179 = vmatprep.subr.bf16.mxu0 0
    %4180 = vmatpush1.bf16.msra.mxu0 0
    %4181 = vmatprep.subr.bf16.mxu0 0
    %4182 = vmatpush1.bf16.msra.mxu0 0
    %4183 = vmatprep.subr.bf16.mxu0 0
    %4184 = vmatpush1.bf16.msra.mxu0 0
    %4185 = vmatprep.subr.bf16.mxu0 0
    %4186 = vmatpush1.bf16.msra.mxu0 0
    %4187 = vmatprep.subr.bf16.mxu0 0
    %4188 = vmatpush1.bf16.msra.mxu0 0
    %4189 = vmatprep.subr.bf16.mxu0 0
    %4190 = vmatpush1.bf16.msra.mxu0 0
    %4191 = vmatprep.subr.bf16.mxu0 0
    %4192 = vmatpush1.bf16.msra.mxu0 0
    %4193 = vmatprep.subr.bf16.mxu0 0
    %4194 = vmatpush1.bf16.msra.mxu0 0
    %4195 = vmatprep.subr.bf16.mxu0 0
    %4196 = vmatpush1.bf16.msra.mxu0 0
    %4197 = vmatprep.mubr.bf16.mxu0 0
    %4198 = vmatmul.mubr.bf16.gmra.mrb[0].mxu0 %v4163
    %v4199 = vpop.f32.mrb[0].mxu0
    %v4200 = vadd.f32 %v4115, %v4199
    %v4201 = vpop.f32.mrb[0].mxu0
    %v4202 = vadd.f32 %v4119, %v4201
    %v4203 = vpop.f32.mrb[0].mxu0
    %v4204 = vadd.f32 %v4115, %v4203
    %v4205 = vpop.f32.mrb[0].mxu0
    %v4206 = vadd.f32 %v4119, %v4205
    %4207 = vdwg.mxu0
    %v4208 = vmax.f32 %v4200, 0.0
    %v4209 = vmax.f32 %v4202, 0.0
    %v4210 = vmax.f32 %v4204, 0.0
    %v4211 = vmax.f32 %v4206, 0.0
    %v4212 = vpack.c.bf16 %v4210, %v4208
    %v4213 = vpack.c.bf16 %v4211, %v4209
    %s4214 = scalar_lea.vmem %s13, 128
    %v4215 = vld [vmem:[%s4214] sm:$0xf]
    %v4216 = vld [vmem:[%s4214 + $0x4] sm:$0xf]
    %v4217 = vld [vmem:[%s4214 + $0x8] sm:$0xf]
    %v4218 = vld [vmem:[%s4214 + $0xc] sm:$0xf]
    %v4219 = vld [vmem:[%s4214 + $0x10] sm:$0xf]
    %v4220 = vld [vmem:[%s4214 + $0x14] sm:$0xf]
    %v4221 = vld [vmem:[%s4214 + $0x18] sm:$0xf]
    %v4222 = vld [vmem:[%s4214 + $0x1c] sm:$0xf]
    %v4223 = vld [vmem:[%s4214 + $0x20] sm:$0xf]
    %v4224 = vld [vmem:[%s4214 + $0x24] sm:$0xf]
    %v4225 = vld [vmem:[%s4214 + $0x28] sm:$0xf]
    %v4226 = vld [vmem:[%s4214 + $0x2c] sm:$0xf]
    %v4227 = vld [vmem:[%s4214 + $0x30] sm:$0xf]
    %v4228 = vld [vmem:[%s4214 + $0x34] sm:$0xf]
    %v4229 = vld [vmem:[%s4214 + $0x38] sm:$0xf]
    %v4230 = vld [vmem:[%s4214 + $0x3c] sm:$0xf]
    %v4231 = vld [vmem:[%s4214 + $0x40] sm:$0xf]
    %v4232 = vld [vmem:[%s4214 + $0x44] sm:$0xf]
    %v4233 = vld [vmem:[%s4214 + $0x48] sm:$0xf]
    %v4234 = vld [vmem:[%s4214 + $0x4c] sm:$0xf]
    %v4235 = vld [vmem:[%s4214 + $0x50] sm:$0xf]
    %v4236 = vld [vmem:[%s4214 + $0x54] sm:$0xf]
    %v4237 = vld [vmem:[%s4214 + $0x58] sm:$0xf]
    %v4238 = vld [vmem:[%s4214 + $0x5c] sm:$0xf]
    %v4239 = vld [vmem:[%s4214 + $0x60] sm:$0xf]
    %v4240 = vld [vmem:[%s4214 + $0x64] sm:$0xf]
    %v4241 = vld [vmem:[%s4214 + $0x68] sm:$0xf]
    %v4242 = vld [vmem:[%s4214 + $0x6c] sm:$0xf]
    %v4243 = vld [vmem:[%s4214 + $0x70] sm:$0xf]
    %v4244 = vld [vmem:[%s4214 + $0x74] sm:$0xf]
    %v4245 = vld [vmem:[%s4214 + $0x78] sm:$0xf]
    %v4246 = vld [vmem:[%s4214 + $0x7c] sm:$0xf]
    %v4279 = vunpack.c.l.b16 %v4215
    %v4280 = vunpack.c.l.b16 %v4216
    %v4281 = vunpack.c.l.b16 %v4217
    %v4282 = vunpack.c.l.b16 %v4218
    %v4283 = vunpack.c.l.b16 %v4219
    %v4284 = vunpack.c.l.b16 %v4220
    %v4285 = vunpack.c.l.b16 %v4221
    %v4286 = vunpack.c.l.b16 %v4222
    %v4287 = vunpack.c.l.b16 %v4223
    %v4288 = vunpack.c.l.b16 %v4224
    %v4289 = vunpack.c.l.b16 %v4225
    %v4290 = vunpack.c.l.b16 %v4226
    %v4291 = vunpack.c.l.b16 %v4227
    %v4292 = vunpack.c.l.b16 %v4228
    %v4293 = vunpack.c.l.b16 %v4229
    %v4294 = vunpack.c.l.b16 %v4230
    %v4295 = vunpack.c.l.b16 %v4231
    %v4296 = vunpack.c.l.b16 %v4232
    %v4297 = vunpack.c.l.b16 %v4233
    %v4298 = vunpack.c.l.b16 %v4234
    %v4299 = vunpack.c.l.b16 %v4235
    %v4300 = vunpack.c.l.b16 %v4236
    %v4301 = vunpack.c.l.b16 %v4237
    %v4302 = vunpack.c.l.b16 %v4238
    %v4303 = vunpack.c.l.b16 %v4239
    %v4304 = vunpack.c.l.b16 %v4240
    %v4305 = vunpack.c.l.b16 %v4241
    %v4306 = vunpack.c.l.b16 %v4242
    %v4307 = vunpack.c.l.b16 %v4243
    %v4308 = vunpack.c.l.b16 %v4244
    %v4309 = vunpack.c.l.b16 %v4245
    %v4310 = vunpack.c.l.b16 %v4246
    %v4311 = vpack.c.b16 %v4280, %v4279
    %v4312 = vpack.c.b16 %v4282, %v4281
    %v4313 = vpack.c.b16 %v4284, %v4283
    %v4314 = vpack.c.b16 %v4286, %v4285
    %v4315 = vpack.c.b16 %v4288, %v4287
    %v4316 = vpack.c.b16 %v4290, %v4289
    %v4317 = vpack.c.b16 %v4292, %v4291
    %v4318 = vpack.c.b16 %v4294, %v4293
    %v4319 = vpack.c.b16 %v4296, %v4295
    %v4320 = vpack.c.b16 %v4298, %v4297
    %v4321 = vpack.c.b16 %v4300, %v4299
    %v4322 = vpack.c.b16 %v4302, %v4301
    %v4323 = vpack.c.b16 %v4304, %v4303
    %v4324 = vpack.c.b16 %v4306, %v4305
    %v4325 = vpack.c.b16 %v4308, %v4307
    %v4326 = vpack.c.b16 %v4310, %v4309
    %4343 = vmatprep.subr.bf16.mxu0 0
    %4344 = vmatpush1.bf16.msra.mxu0 %v4311
    %4345 = vmatprep.subr.bf16.mxu0 0
    %4346 = vmatpush1.bf16.msra.mxu0 %v4312
    %4347 = vmatprep.subr.bf16.mxu0 0
    %4348 = vmatpush1.bf16.msra.mxu0 %v4313
    %4349 = vmatprep.subr.bf16.mxu0 0
    %4350 = vmatpush1.bf16.msra.mxu0 %v4314
    %4351 = vmatprep.subr.bf16.mxu0 0
    %4352 = vmatpush1.bf16.msra.mxu0 %v4315
    %4353 = vmatprep.subr.bf16.mxu0 0
    %4354 = vmatpush1.bf16.msra.mxu0 %v4316
    %4355 = vmatprep.subr.bf16.mxu0 0
    %4356 = vmatpush1.bf16.msra.mxu0 %v4317
    %4357 = vmatprep.subr.bf16.mxu0 0
    %4358 = vmatpush1.bf16.msra.mxu0 %v4318
    %4359 = vmatprep.subr.bf16.mxu0 0
    %4360 = vmatpush1.bf16.msra.mxu0 %v4319
    %4361 = vmatprep.subr.bf16.mxu0 0
    %4362 = vmatpush1.bf16.msra.mxu0 %v4320
    %4363 = vmatprep.subr.bf16.mxu0 0
    %4364 = vmatpush1.bf16.msra.mxu0 %v4321
    %4365 = vmatprep.subr.bf16.mxu0 0
    %4366 = vmatpush1.bf16.msra.mxu0 %v4322
    %4367 = vmatprep.subr.bf16.mxu0 0
    %4368 = vmatpush1.bf16.msra.mxu0 %v4323
    %4369 = vmatprep.subr.bf16.mxu0 0
    %4370 = vmatpush1.bf16.msra.mxu0 %v4324
    %4371 = vmatprep.subr.bf16.mxu0 0
    %4372 = vmatpush1.bf16.msra.mxu0 %v4325
    %4373 = vmatprep.subr.bf16.mxu0 0
    %4374 = vmatpush1.bf16.msra.mxu0 %v4326
    %4375 = vmatprep.mubr.bf16.mxu0 %v4213
    %4376 = vmatmul.mubr.bf16.gmra.mrb[0].mxu0 %v4212
    %v4377 = vpop.f32.mrb[0].mxu0
    %v4378 = vadd.f32 0.0, %v4377
    %v4379 = vpop.f32.mrb[0].mxu0
    %v4380 = vpop.f32.mrb[0].mxu0
    %v4381 = vadd.f32 0.0, %v4380
    %v4382 = vpop.f32.mrb[0].mxu0
    %4383 = vdwg.mxu0
    %v4384 = vadd.f32 %v4051, %v4378
    %v4385 = vadd.f32 %v4052, %v4381
    %s4386 = scalar_lea.vmem %s14, 1
    %v4387 = vld [vmem:[%s4386] sm:$0x1]
    %v4389 = vlaneseq
    %v4390 = vshrl.u32 %v4389, 7
    %v4391 = vsub.s32 0, %v4390
    %v4392 = vrot.slane %v4387, %v4391
    %v4394 = vadd.f32 %v4384, %v4392
    %v4395 = vadd.f32 %v4385, %v4392
    %s4396 = scalar_lea.vmem %s3, 2
    %v4397 = vld [vmem:[%s4396] sm:$0x1]
    %s4398 = scalar_lea.vmem %s4, 2
    %v4399 = vld [vmem:[%s4398] sm:$0x1]
    %v4400 = vsel %vm199, %v4394, 0.0
    %4401 = vadd.xlane.f32.xlu0 %v4400
    %v4402 = vpop.xlane.xlu0 %4401
    %v4403 = vsel %vm199, %v4395, 0.0
    %4404 = vadd.xlane.f32.xlu0 %v4403
    %v4405 = vpop.xlane.xlu0 %4404
    %v4406 = vmul.f32 %v4402, %v206
    %v4407 = vmul.f32 %v4405, %v206
    %v4408 = vsub.f32 %v4394, %v4406
    %v4409 = vsub.f32 %v4395, %v4407
    %v4410 = vmul.f32 %v4408, %v4408
    %v4411 = vmul.f32 %v4409, %v4409
    %v4412 = vsel %vm199, %v4410, 0.0
    %4413 = vadd.xlane.f32.xlu0 %v4412
    %v4414 = vpop.xlane.xlu0 %4413
    %v4415 = vsel %vm199, %v4411, 0.0
    %4416 = vadd.xlane.f32.xlu0 %v4415
    %v4417 = vpop.xlane.xlu0 %4416
    %v4418 = vmul.f32 %v4414, %v206
    %v4419 = vmul.f32 %v4417, %v206
    %v4420 = vadd.f32 %v4418, 1e-05
    %v4421 = vadd.f32 %v4419, 1e-05
    %v4422 = vrsqrt.pop %v4420
    %v4423 = vrsqrt.pop %v4421
    %v4424 = vmul.f32 %v4408, %v4422
    %v4425 = vmul.f32 %v4409, %v4423
    %v4427 = vlaneseq
    %v4428 = vshrl.u32 %v4427, 7
    %v4429 = vsub.s32 0, %v4428
    %v4430 = vrot.slane %v4397, %v4429
    %v4432 = vmul.f32 %v4424, %v4430
    %v4433 = vmul.f32 %v4425, %v4430
    %v4435 = vlaneseq
    %v4436 = vshrl.u32 %v4435, 7
    %v4437 = vsub.s32 0, %v4436
    %v4438 = vrot.slane %v4399, %v4437
    %v4440 = vadd.f32 %v4432, %v4438
    %v4441 = vadd.f32 %v4433, %v4438
    %v4442 = vpack.c.bf16 %v4441, %v4440
    %s4443 = scalar_lea.vmem [#allocation2], 768
    %v4444 = vld [vmem:[%s4443] sm:$0xff]
    %v4445 = vld [vmem:[%s4443 + $0x8] sm:$0xff]
    %v4446 = vld [vmem:[%s4443 + $0x10] sm:$0xff]
    %v4447 = vld [vmem:[%s4443 + $0x18] sm:$0xff]
    %v4448 = vld [vmem:[%s4443 + $0x20] sm:$0xff]
    %v4449 = vld [vmem:[%s4443 + $0x28] sm:$0xff]
    %v4450 = vld [vmem:[%s4443 + $0x30] sm:$0xff]
    %v4451 = vld [vmem:[%s4443 + $0x38] sm:$0xff]
    %v4452 = vld [vmem:[%s4443 + $0x40] sm:$0xff]
    %v4453 = vld [vmem:[%s4443 + $0x48] sm:$0xff]
    %v4454 = vld [vmem:[%s4443 + $0x50] sm:$0xff]
    %v4455 = vld [vmem:[%s4443 + $0x58] sm:$0xff]
    %v4456 = vld [vmem:[%s4443 + $0x60] sm:$0xff]
    %v4457 = vld [vmem:[%s4443 + $0x68] sm:$0xff]
    %v4458 = vld [vmem:[%s4443 + $0x70] sm:$0xff]
    %v4459 = vld [vmem:[%s4443 + $0x78] sm:$0xff]
    %v4460 = vld [vmem:[%s4443 + $0x80] sm:$0xff]
    %v4461 = vld [vmem:[%s4443 + $0x88] sm:$0xff]
    %v4462 = vld [vmem:[%s4443 + $0x90] sm:$0xff]
    %v4463 = vld [vmem:[%s4443 + $0x98] sm:$0xff]
    %v4464 = vld [vmem:[%s4443 + $0xa0] sm:$0xff]
    %v4465 = vld [vmem:[%s4443 + $0xa8] sm:$0xff]
    %v4466 = vld [vmem:[%s4443 + $0xb0] sm:$0xff]
    %v4467 = vld [vmem:[%s4443 + $0xb8] sm:$0xff]
    %v4468 = vld [vmem:[%s4443 + $0xc0] sm:$0xff]
    %v4469 = vld [vmem:[%s4443 + $0xc8] sm:$0xff]
    %v4470 = vld [vmem:[%s4443 + $0xd0] sm:$0xff]
    %v4471 = vld [vmem:[%s4443 + $0xd8] sm:$0xff]
    %v4472 = vld [vmem:[%s4443 + $0xe0] sm:$0xff]
    %v4473 = vld [vmem:[%s4443 + $0xe8] sm:$0xff]
    %v4474 = vld [vmem:[%s4443 + $0xf0] sm:$0xff]
    %v4475 = vld [vmem:[%s4443 + $0xf8] sm:$0xff]
    %v4476 = vld [vmem:[%s4443 + $0x100] sm:$0xff]
    %v4477 = vld [vmem:[%s4443 + $0x108] sm:$0xff]
    %v4478 = vld [vmem:[%s4443 + $0x110] sm:$0xff]
    %v4479 = vld [vmem:[%s4443 + $0x118] sm:$0xff]
    %v4480 = vld [vmem:[%s4443 + $0x120] sm:$0xff]
    %v4481 = vld [vmem:[%s4443 + $0x128] sm:$0xff]
    %v4482 = vld [vmem:[%s4443 + $0x130] sm:$0xff]
    %v4483 = vld [vmem:[%s4443 + $0x138] sm:$0xff]
    %v4484 = vld [vmem:[%s4443 + $0x140] sm:$0xff]
    %v4485 = vld [vmem:[%s4443 + $0x148] sm:$0xff]
    %v4486 = vld [vmem:[%s4443 + $0x150] sm:$0xff]
    %v4487 = vld [vmem:[%s4443 + $0x158] sm:$0xff]
    %v4488 = vld [vmem:[%s4443 + $0x160] sm:$0xff]
    %v4489 = vld [vmem:[%s4443 + $0x168] sm:$0xff]
    %v4490 = vld [vmem:[%s4443 + $0x170] sm:$0xff]
    %v4491 = vld [vmem:[%s4443 + $0x178] sm:$0xff]
    %s4492 = scalar_lea.vmem %s6, 24
    %v4493 = vld [vmem:[%s4492] sm:$0xff]
    %v4494 = vld [vmem:[%s4492 + $0x8] sm:$0xf]
    %v4497 = vlaneseq
    %v4498 = vshrl.u32 %v4497, 7
    %v4499 = vsub.s32 0, %v4498
    %v4500 = vrot.slane %v4493, %v4499
    %v4501 = vlaneseq
    %v4502 = vshrl.u32 %v4501, 7
    %v4503 = vsub.s32 1, %v4502
    %v4504 = vrot.slane %v4493, %v4503
    %v4505 = vlaneseq
    %v4506 = vshrl.u32 %v4505, 7
    %v4507 = vsub.s32 2, %v4506
    %v4508 = vrot.slane %v4493, %v4507
    %v4509 = vlaneseq
    %v4510 = vshrl.u32 %v4509, 7
    %v4511 = vsub.s32 3, %v4510
    %v4512 = vrot.slane %v4493, %v4511
    %v4513 = vlaneseq
    %v4514 = vshrl.u32 %v4513, 7
    %v4515 = vsub.s32 4, %v4514
    %v4516 = vrot.slane %v4493, %v4515
    %v4517 = vlaneseq
    %v4518 = vshrl.u32 %v4517, 7
    %v4519 = vsub.s32 5, %v4518
    %v4520 = vrot.slane %v4493, %v4519
    %v4521 = vlaneseq
    %v4522 = vshrl.u32 %v4521, 7
    %v4523 = vsub.s32 6, %v4522
    %v4524 = vrot.slane %v4493, %v4523
    %v4525 = vlaneseq
    %v4526 = vshrl.u32 %v4525, 7
    %v4527 = vsub.s32 7, %v4526
    %v4528 = vrot.slane %v4493, %v4527
    %v4529 = vlaneseq
    %v4530 = vshrl.u32 %v4529, 7
    %v4531 = vsub.s32 0, %v4530
    %v4532 = vrot.slane %v4494, %v4531
    %v4533 = vlaneseq
    %v4534 = vshrl.u32 %v4533, 7
    %v4535 = vsub.s32 1, %v4534
    %v4536 = vrot.slane %v4494, %v4535
    %v4537 = vlaneseq
    %v4538 = vshrl.u32 %v4537, 7
    %v4539 = vsub.s32 2, %v4538
    %v4540 = vrot.slane %v4494, %v4539
    %v4541 = vlaneseq
    %v4542 = vshrl.u32 %v4541, 7
    %v4543 = vsub.s32 3, %v4542
    %v4544 = vrot.slane %v4494, %v4543
    %v4605 = vunpack.c.l.b16 %v4444
    %v4606 = vunpack.c.h.b16 %v4444
    %v4607 = vunpack.c.l.b16 %v4445
    %v4608 = vunpack.c.h.b16 %v4445
    %v4609 = vunpack.c.l.b16 %v4446
    %v4610 = vunpack.c.h.b16 %v4446
    %v4611 = vunpack.c.l.b16 %v4447
    %v4612 = vunpack.c.h.b16 %v4447
    %v4613 = vunpack.c.l.b16 %v4448
    %v4614 = vunpack.c.h.b16 %v4448
    %v4615 = vunpack.c.l.b16 %v4449
    %v4616 = vunpack.c.h.b16 %v4449
    %v4617 = vunpack.c.l.b16 %v4450
    %v4618 = vunpack.c.h.b16 %v4450
    %v4619 = vunpack.c.l.b16 %v4451
    %v4620 = vunpack.c.h.b16 %v4451
    %v4621 = vunpack.c.l.b16 %v4452
    %v4622 = vunpack.c.h.b16 %v4452
    %v4623 = vunpack.c.l.b16 %v4453
    %v4624 = vunpack.c.h.b16 %v4453
    %v4625 = vunpack.c.l.b16 %v4454
    %v4626 = vunpack.c.h.b16 %v4454
    %v4627 = vunpack.c.l.b16 %v4455
    %v4628 = vunpack.c.h.b16 %v4455
    %v4629 = vunpack.c.l.b16 %v4456
    %v4630 = vunpack.c.h.b16 %v4456
    %v4631 = vunpack.c.l.b16 %v4457
    %v4632 = vunpack.c.h.b16 %v4457
    %v4633 = vunpack.c.l.b16 %v4458
    %v4634 = vunpack.c.h.b16 %v4458
    %v4635 = vunpack.c.l.b16 %v4459
    %v4636 = vunpack.c.h.b16 %v4459
    %v4637 = vunpack.c.l.b16 %v4460
    %v4638 = vunpack.c.h.b16 %v4460
    %v4639 = vunpack.c.l.b16 %v4461
    %v4640 = vunpack.c.h.b16 %v4461
    %v4641 = vunpack.c.l.b16 %v4462
    %v4642 = vunpack.c.h.b16 %v4462
    %v4643 = vunpack.c.l.b16 %v4463
    %v4644 = vunpack.c.h.b16 %v4463
    %v4645 = vunpack.c.l.b16 %v4464
    %v4646 = vunpack.c.h.b16 %v4464
    %v4647 = vunpack.c.l.b16 %v4465
    %v4648 = vunpack.c.h.b16 %v4465
    %v4649 = vunpack.c.l.b16 %v4466
    %v4650 = vunpack.c.h.b16 %v4466
    %v4651 = vunpack.c.l.b16 %v4467
    %v4652 = vunpack.c.h.b16 %v4467
    %v4653 = vunpack.c.l.b16 %v4468
    %v4654 = vunpack.c.h.b16 %v4468
    %v4655 = vunpack.c.l.b16 %v4469
    %v4656 = vunpack.c.h.b16 %v4469
    %v4657 = vunpack.c.l.b16 %v4470
    %v4658 = vunpack.c.h.b16 %v4470
    %v4659 = vunpack.c.l.b16 %v4471
    %v4660 = vunpack.c.h.b16 %v4471
    %v4661 = vunpack.c.l.b16 %v4472
    %v4662 = vunpack.c.h.b16 %v4472
    %v4663 = vunpack.c.l.b16 %v4473
    %v4664 = vunpack.c.h.b16 %v4473
    %v4665 = vunpack.c.l.b16 %v4474
    %v4666 = vunpack.c.h.b16 %v4474
    %v4667 = vunpack.c.l.b16 %v4475
    %v4668 = vunpack.c.h.b16 %v4475
    %v4669 = vunpack.c.l.b16 %v4476
    %v4670 = vunpack.c.h.b16 %v4476
    %v4671 = vunpack.c.l.b16 %v4477
    %v4672 = vunpack.c.h.b16 %v4477
    %v4673 = vunpack.c.l.b16 %v4478
    %v4674 = vunpack.c.h.b16 %v4478
    %v4675 = vunpack.c.l.b16 %v4479
    %v4676 = vunpack.c.h.b16 %v4479
    %v4677 = vunpack.c.l.b16 %v4480
    %v4678 = vunpack.c.h.b16 %v4480
    %v4679 = vunpack.c.l.b16 %v4481
    %v4680 = vunpack.c.h.b16 %v4481
    %v4681 = vunpack.c.l.b16 %v4482
    %v4682 = vunpack.c.h.b16 %v4482
    %v4683 = vunpack.c.l.b16 %v4483
    %v4684 = vunpack.c.h.b16 %v4483
    %v4685 = vunpack.c.l.b16 %v4484
    %v4686 = vunpack.c.h.b16 %v4484
    %v4687 = vunpack.c.l.b16 %v4485
    %v4688 = vunpack.c.h.b16 %v4485
    %v4689 = vunpack.c.l.b16 %v4486
    %v4690 = vunpack.c.h.b16 %v4486
    %v4691 = vunpack.c.l.b16 %v4487
    %v4692 = vunpack.c.h.b16 %v4487
    %v4693 = vunpack.c.l.b16 %v4488
    %v4694 = vunpack.c.h.b16 %v4488
    %v4695 = vunpack.c.l.b16 %v4489
    %v4696 = vunpack.c.h.b16 %v4489
    %v4697 = vunpack.c.l.b16 %v4490
    %v4698 = vunpack.c.h.b16 %v4490
    %v4699 = vunpack.c.l.b16 %v4491
    %v4700 = vunpack.c.h.b16 %v4491
    %v4701 = vpack.c.b16 %v4617, %v4605
    %v4702 = vpack.c.b16 %v4618, %v4606
    %v4703 = vpack.c.b16 %v4619, %v4607
    %v4704 = vpack.c.b16 %v4620, %v4608
    %v4705 = vpack.c.b16 %v4621, %v4609
    %v4706 = vpack.c.b16 %v4622, %v4610
    %v4707 = vpack.c.b16 %v4623, %v4611
    %v4708 = vpack.c.b16 %v4624, %v4612
    %v4709 = vpack.c.b16 %v4625, %v4613
    %v4710 = vpack.c.b16 %v4626, %v4614
    %v4711 = vpack.c.b16 %v4627, %v4615
    %v4712 = vpack.c.b16 %v4628, %v4616
    %v4713 = vpack.c.b16 %v4641, %v4629
    %v4714 = vpack.c.b16 %v4642, %v4630
    %v4715 = vpack.c.b16 %v4643, %v4631
    %v4716 = vpack.c.b16 %v4644, %v4632
    %v4717 = vpack.c.b16 %v4645, %v4633
    %v4718 = vpack.c.b16 %v4646, %v4634
    %v4719 = vpack.c.b16 %v4647, %v4635
    %v4720 = vpack.c.b16 %v4648, %v4636
    %v4721 = vpack.c.b16 %v4649, %v4637
    %v4722 = vpack.c.b16 %v4650, %v4638
    %v4723 = vpack.c.b16 %v4651, %v4639
    %v4724 = vpack.c.b16 %v4652, %v4640
    %v4725 = vpack.c.b16 %v4665, %v4653
    %v4726 = vpack.c.b16 %v4666, %v4654
    %v4727 = vpack.c.b16 %v4667, %v4655
    %v4728 = vpack.c.b16 %v4668, %v4656
    %v4729 = vpack.c.b16 %v4669, %v4657
    %v4730 = vpack.c.b16 %v4670, %v4658
    %v4731 = vpack.c.b16 %v4671, %v4659
    %v4732 = vpack.c.b16 %v4672, %v4660
    %v4733 = vpack.c.b16 %v4673, %v4661
    %v4734 = vpack.c.b16 %v4674, %v4662
    %v4735 = vpack.c.b16 %v4675, %v4663
    %v4736 = vpack.c.b16 %v4676, %v4664
    %v4737 = vpack.c.b16 %v4689, %v4677
    %v4738 = vpack.c.b16 %v4690, %v4678
    %v4739 = vpack.c.b16 %v4691, %v4679
    %v4740 = vpack.c.b16 %v4692, %v4680
    %v4741 = vpack.c.b16 %v4693, %v4681
    %v4742 = vpack.c.b16 %v4694, %v4682
    %v4743 = vpack.c.b16 %v4695, %v4683
    %v4744 = vpack.c.b16 %v4696, %v4684
    %v4745 = vpack.c.b16 %v4697, %v4685
    %v4746 = vpack.c.b16 %v4698, %v4686
    %v4747 = vpack.c.b16 %v4699, %v4687
    %v4748 = vpack.c.b16 %v4700, %v4688
    %v4798 = vsel %vm199, %v4442, 0
    %4800 = vmatprep.subr.bf16.mxu0 %v4702
    %4801 = vmatpush1.bf16.msra.mxu0 %v4701
    %4802 = vmatprep.subr.bf16.mxu0 %v4714
    %4803 = vmatpush1.bf16.msra.mxu0 %v4713
    %4804 = vmatprep.subr.bf16.mxu0 %v4726
    %4805 = vmatpush1.bf16.msra.mxu0 %v4725
    %4806 = vmatprep.subr.bf16.mxu0 %v4738
    %4807 = vmatpush1.bf16.msra.mxu0 %v4737
    %4808 = vmatprep.subr.bf16.mxu0 0
    %4809 = vmatpush1.bf16.msra.mxu0 0
    %4810 = vmatprep.subr.bf16.mxu0 0
    %4811 = vmatpush1.bf16.msra.mxu0 0
    %4812 = vmatprep.subr.bf16.mxu0 0
    %4813 = vmatpush1.bf16.msra.mxu0 0
    %4814 = vmatprep.subr.bf16.mxu0 0
    %4815 = vmatpush1.bf16.msra.mxu0 0
    %4816 = vmatprep.subr.bf16.mxu0 0
    %4817 = vmatpush1.bf16.msra.mxu0 0
    %4818 = vmatprep.subr.bf16.mxu0 0
    %4819 = vmatpush1.bf16.msra.mxu0 0
    %4820 = vmatprep.subr.bf16.mxu0 0
    %4821 = vmatpush1.bf16.msra.mxu0 0
    %4822 = vmatprep.subr.bf16.mxu0 0
    %4823 = vmatpush1.bf16.msra.mxu0 0
    %4824 = vmatprep.subr.bf16.mxu0 0
    %4825 = vmatpush1.bf16.msra.mxu0 0
    %4826 = vmatprep.subr.bf16.mxu0 0
    %4827 = vmatpush1.bf16.msra.mxu0 0
    %4828 = vmatprep.subr.bf16.mxu0 0
    %4829 = vmatpush1.bf16.msra.mxu0 0
    %4830 = vmatprep.subr.bf16.mxu0 0
    %4831 = vmatpush1.bf16.msra.mxu0 0
    %4832 = vmatprep.mubr.bf16.mxu0 0
    %4833 = vmatmul.mubr.bf16.gmra.mrb[0].mxu0 %v4798
    %v4834 = vpop.f32.mrb[0].mxu0
    %v4835 = vadd.f32 %v4500, %v4834
    %v4836 = vpop.f32.mrb[0].mxu0
    %v4837 = vadd.f32 %v4504, %v4836
    %v4838 = vpop.f32.mrb[0].mxu0
    %v4839 = vadd.f32 %v4500, %v4838
    %v4840 = vpop.f32.mrb[0].mxu0
    %v4841 = vadd.f32 %v4504, %v4840
    %4842 = vdwg.mxu0
    %4843 = vmatprep.subr.bf16.mxu0 %v4704
    %4844 = vmatpush1.bf16.msra.mxu0 %v4703
    %4845 = vmatprep.subr.bf16.mxu0 %v4716
    %4846 = vmatpush1.bf16.msra.mxu0 %v4715
    %4847 = vmatprep.subr.bf16.mxu0 %v4728
    %4848 = vmatpush1.bf16.msra.mxu0 %v4727
    %4849 = vmatprep.subr.bf16.mxu0 %v4740
    %4850 = vmatpush1.bf16.msra.mxu0 %v4739
    %4851 = vmatprep.subr.bf16.mxu0 0
    %4852 = vmatpush1.bf16.msra.mxu0 0
    %4853 = vmatprep.subr.bf16.mxu0 0
    %4854 = vmatpush1.bf16.msra.mxu0 0
    %4855 = vmatprep.subr.bf16.mxu0 0
    %4856 = vmatpush1.bf16.msra.mxu0 0
    %4857 = vmatprep.subr.bf16.mxu0 0
    %4858 = vmatpush1.bf16.msra.mxu0 0
    %4859 = vmatprep.subr.bf16.mxu0 0
    %4860 = vmatpush1.bf16.msra.mxu0 0
    %4861 = vmatprep.subr.bf16.mxu0 0
    %4862 = vmatpush1.bf16.msra.mxu0 0
    %4863 = vmatprep.subr.bf16.mxu0 0
    %4864 = vmatpush1.bf16.msra.mxu0 0
    %4865 = vmatprep.subr.bf16.mxu0 0
    %4866 = vmatpush1.bf16.msra.mxu0 0
    %4867 = vmatprep.subr.bf16.mxu0 0
    %4868 = vmatpush1.bf16.msra.mxu0 0
    %4869 = vmatprep.subr.bf16.mxu0 0
    %4870 = vmatpush1.bf16.msra.mxu0 0
    %4871 = vmatprep.subr.bf16.mxu0 0
    %4872 = vmatpush1.bf16.msra.mxu0 0
    %4873 = vmatprep.subr.bf16.mxu0 0
    %4874 = vmatpush1.bf16.msra.mxu0 0
    %4875 = vmatprep.mubr.bf16.mxu0 0
    %4876 = vmatmul.mubr.bf16.gmra.mrb[0].mxu0 %v4798
    %v4877 = vpop.f32.mrb[0].mxu0
    %v4878 = vadd.f32 %v4508, %v4877
    %v4879 = vpop.f32.mrb[0].mxu0
    %v4880 = vadd.f32 %v4512, %v4879
    %v4881 = vpop.f32.mrb[0].mxu0
    %v4882 = vadd.f32 %v4508, %v4881
    %v4883 = vpop.f32.mrb[0].mxu0
    %v4884 = vadd.f32 %v4512, %v4883
    %4885 = vdwg.mxu0
    %4886 = vmatprep.subr.bf16.mxu0 %v4706
    %4887 = vmatpush1.bf16.msra.mxu0 %v4705
    %4888 = vmatprep.subr.bf16.mxu0 %v4718
    %4889 = vmatpush1.bf16.msra.mxu0 %v4717
    %4890 = vmatprep.subr.bf16.mxu0 %v4730
    %4891 = vmatpush1.bf16.msra.mxu0 %v4729
    %4892 = vmatprep.subr.bf16.mxu0 %v4742
    %4893 = vmatpush1.bf16.msra.mxu0 %v4741
    %4894 = vmatprep.subr.bf16.mxu0 0
    %4895 = vmatpush1.bf16.msra.mxu0 0
    %4896 = vmatprep.subr.bf16.mxu0 0
    %4897 = vmatpush1.bf16.msra.mxu0 0
    %4898 = vmatprep.subr.bf16.mxu0 0
    %4899 = vmatpush1.bf16.msra.mxu0 0
    %4900 = vmatprep.subr.bf16.mxu0 0
    %4901 = vmatpush1.bf16.msra.mxu0 0
    %4902 = vmatprep.subr.bf16.mxu0 0
    %4903 = vmatpush1.bf16.msra.mxu0 0
    %4904 = vmatprep.subr.bf16.mxu0 0
    %4905 = vmatpush1.bf16.msra.mxu0 0
    %4906 = vmatprep.subr.bf16.mxu0 0
    %4907 = vmatpush1.bf16.msra.mxu0 0
    %4908 = vmatprep.subr.bf16.mxu0 0
    %4909 = vmatpush1.bf16.msra.mxu0 0
    %4910 = vmatprep.subr.bf16.mxu0 0
    %4911 = vmatpush1.bf16.msra.mxu0 0
    %4912 = vmatprep.subr.bf16.mxu0 0
    %4913 = vmatpush1.bf16.msra.mxu0 0
    %4914 = vmatprep.subr.bf16.mxu0 0
    %4915 = vmatpush1.bf16.msra.mxu0 0
    %4916 = vmatprep.subr.bf16.mxu0 0
    %4917 = vmatpush1.bf16.msra.mxu0 0
    %4918 = vmatprep.mubr.bf16.mxu0 0
    %4919 = vmatmul.mubr.bf16.gmra.mrb[0].mxu0 %v4798
    %v4920 = vpop.f32.mrb[0].mxu0
    %v4921 = vadd.f32 %v4516, %v4920
    %v4922 = vpop.f32.mrb[0].mxu0
    %v4923 = vadd.f32 %v4520, %v4922
    %v4924 = vpop.f32.mrb[0].mxu0
    %v4925 = vadd.f32 %v4516, %v4924
    %v4926 = vpop.f32.mrb[0].mxu0
    %v4927 = vadd.f32 %v4520, %v4926
    %4928 = vdwg.mxu0
    %4929 = vmatprep.subr.bf16.mxu0 %v4708
    %4930 = vmatpush1.bf16.msra.mxu0 %v4707
    %4931 = vmatprep.subr.bf16.mxu0 %v4720
    %4932 = vmatpush1.bf16.msra.mxu0 %v4719
    %4933 = vmatprep.subr.bf16.mxu0 %v4732
    %4934 = vmatpush1.bf16.msra.mxu0 %v4731
    %4935 = vmatprep.subr.bf16.mxu0 %v4744
    %4936 = vmatpush1.bf16.msra.mxu0 %v4743
    %4937 = vmatprep.subr.bf16.mxu0 0
    %4938 = vmatpush1.bf16.msra.mxu0 0
    %4939 = vmatprep.subr.bf16.mxu0 0
    %4940 = vmatpush1.bf16.msra.mxu0 0
    %4941 = vmatprep.subr.bf16.mxu0 0
    %4942 = vmatpush1.bf16.msra.mxu0 0
    %4943 = vmatprep.subr.bf16.mxu0 0
    %4944 = vmatpush1.bf16.msra.mxu0 0
    %4945 = vmatprep.subr.bf16.mxu0 0
    %4946 = vmatpush1.bf16.msra.mxu0 0
    %4947 = vmatprep.subr.bf16.mxu0 0
    %4948 = vmatpush1.bf16.msra.mxu0 0
    %4949 = vmatprep.subr.bf16.mxu0 0
    %4950 = vmatpush1.bf16.msra.mxu0 0
    %4951 = vmatprep.subr.bf16.mxu0 0
    %4952 = vmatpush1.bf16.msra.mxu0 0
    %4953 = vmatprep.subr.bf16.mxu0 0
    %4954 = vmatpush1.bf16.msra.mxu0 0
    %4955 = vmatprep.subr.bf16.mxu0 0
    %4956 = vmatpush1.bf16.msra.mxu0 0
    %4957 = vmatprep.subr.bf16.mxu0 0
    %4958 = vmatpush1.bf16.msra.mxu0 0
    %4959 = vmatprep.subr.bf16.mxu0 0
    %4960 = vmatpush1.bf16.msra.mxu0 0
    %4961 = vmatprep.mubr.bf16.mxu0 0
    %4962 = vmatmul.mubr.bf16.gmra.mrb[0].mxu0 %v4798
    %v4963 = vpop.f32.mrb[0].mxu0
    %v4964 = vadd.f32 %v4524, %v4963
    %v4965 = vpop.f32.mrb[0].mxu0
    %v4966 = vadd.f32 %v4528, %v4965
    %v4967 = vpop.f32.mrb[0].mxu0
    %v4968 = vadd.f32 %v4524, %v4967
    %v4969 = vpop.f32.mrb[0].mxu0
    %v4970 = vadd.f32 %v4528, %v4969
    %4971 = vdwg.mxu0
    %4972 = vmatprep.subr.bf16.mxu0 %v4710
    %4973 = vmatpush1.bf16.msra.mxu0 %v4709
    %4974 = vmatprep.subr.bf16.mxu0 %v4722
    %4975 = vmatpush1.bf16.msra.mxu0 %v4721
    %4976 = vmatprep.subr.bf16.mxu0 %v4734
    %4977 = vmatpush1.bf16.msra.mxu0 %v4733
    %4978 = vmatprep.subr.bf16.mxu0 %v4746
    %4979 = vmatpush1.bf16.msra.mxu0 %v4745
    %4980 = vmatprep.subr.bf16.mxu0 0
    %4981 = vmatpush1.bf16.msra.mxu0 0
    %4982 = vmatprep.subr.bf16.mxu0 0
    %4983 = vmatpush1.bf16.msra.mxu0 0
    %4984 = vmatprep.subr.bf16.mxu0 0
    %4985 = vmatpush1.bf16.msra.mxu0 0
    %4986 = vmatprep.subr.bf16.mxu0 0
    %4987 = vmatpush1.bf16.msra.mxu0 0
    %4988 = vmatprep.subr.bf16.mxu0 0
    %4989 = vmatpush1.bf16.msra.mxu0 0
    %4990 = vmatprep.subr.bf16.mxu0 0
    %4991 = vmatpush1.bf16.msra.mxu0 0
    %4992 = vmatprep.subr.bf16.mxu0 0
    %4993 = vmatpush1.bf16.msra.mxu0 0
    %4994 = vmatprep.subr.bf16.mxu0 0
    %4995 = vmatpush1.bf16.msra.mxu0 0
    %4996 = vmatprep.subr.bf16.mxu0 0
    %4997 = vmatpush1.bf16.msra.mxu0 0
    %4998 = vmatprep.subr.bf16.mxu0 0
    %4999 = vmatpush1.bf16.msra.mxu0 0
    %5000 = vmatprep.subr.bf16.mxu0 0
    %5001 = vmatpush1.bf16.msra.mxu0 0
    %5002 = vmatprep.subr.bf16.mxu0 0
    %5003 = vmatpush1.bf16.msra.mxu0 0
    %5004 = vmatprep.mubr.bf16.mxu0 0
    %5005 = vmatmul.mubr.bf16.gmra.mrb[0].mxu0 %v4798
    %v5006 = vpop.f32.mrb[0].mxu0
    %v5007 = vadd.f32 %v4532, %v5006
    %v5008 = vpop.f32.mrb[0].mxu0
    %v5009 = vadd.f32 %v4536, %v5008
    %v5010 = vpop.f32.mrb[0].mxu0
    %v5011 = vadd.f32 %v4532, %v5010
    %v5012 = vpop.f32.mrb[0].mxu0
    %v5013 = vadd.f32 %v4536, %v5012
    %5014 = vdwg.mxu0
    %5015 = vmatprep.subr.bf16.mxu0 %v4712
    %5016 = vmatpush1.bf16.msra.mxu0 %v4711
    %5017 = vmatprep.subr.bf16.mxu0 %v4724
    %5018 = vmatpush1.bf16.msra.mxu0 %v4723
    %5019 = vmatprep.subr.bf16.mxu0 %v4736
    %5020 = vmatpush1.bf16.msra.mxu0 %v4735
    %5021 = vmatprep.subr.bf16.mxu0 %v4748
    %5022 = vmatpush1.bf16.msra.mxu0 %v4747
    %5023 = vmatprep.subr.bf16.mxu0 0
    %5024 = vmatpush1.bf16.msra.mxu0 0
    %5025 = vmatprep.subr.bf16.mxu0 0
    %5026 = vmatpush1.bf16.msra.mxu0 0
    %5027 = vmatprep.subr.bf16.mxu0 0
    %5028 = vmatpush1.bf16.msra.mxu0 0
    %5029 = vmatprep.subr.bf16.mxu0 0
    %5030 = vmatpush1.bf16.msra.mxu0 0
    %5031 = vmatprep.subr.bf16.mxu0 0
    %5032 = vmatpush1.bf16.msra.mxu0 0
    %5033 = vmatprep.subr.bf16.mxu0 0
    %5034 = vmatpush1.bf16.msra.mxu0 0
    %5035 = vmatprep.subr.bf16.mxu0 0
    %5036 = vmatpush1.bf16.msra.mxu0 0
    %5037 = vmatprep.subr.bf16.mxu0 0
    %5038 = vmatpush1.bf16.msra.mxu0 0
    %5039 = vmatprep.subr.bf16.mxu0 0
    %5040 = vmatpush1.bf16.msra.mxu0 0
    %5041 = vmatprep.subr.bf16.mxu0 0
    %5042 = vmatpush1.bf16.msra.mxu0 0
    %5043 = vmatprep.subr.bf16.mxu0 0
    %5044 = vmatpush1.bf16.msra.mxu0 0
    %5045 = vmatprep.subr.bf16.mxu0 0
    %5046 = vmatpush1.bf16.msra.mxu0 0
    %5047 = vmatprep.mubr.bf16.mxu0 0
    %5048 = vmatmul.mubr.bf16.gmra.mrb[0].mxu0 %v4798
    %v5049 = vpop.f32.mrb[0].mxu0
    %v5050 = vadd.f32 %v4540, %v5049
    %v5051 = vpop.f32.mrb[0].mxu0
    %v5052 = vadd.f32 %v4544, %v5051
    %v5053 = vpop.f32.mrb[0].mxu0
    %v5054 = vadd.f32 %v4540, %v5053
    %v5055 = vpop.f32.mrb[0].mxu0
    %v5056 = vadd.f32 %v4544, %v5055
    %5057 = vdwg.mxu0
    %v5058 = vpack.c.bf16 %v4835, %v4835
    %v5059 = vpack.c.bf16 %v4839, %v4839
    %v5060 = vpack.c.bf16 %v4837, %v4837
    %v5061 = vpack.c.bf16 %v4841, %v4841
    %v5062 = vpack.c.bf16 %v4878, %v4878
    %v5063 = vpack.c.bf16 %v4882, %v4882
    %v5064 = vpack.c.bf16 %v4880, %v4880
    %v5065 = vpack.c.bf16 %v4884, %v4884
    %v5066 = vpack.c.bf16 %v4921, %v4921
    %v5067 = vpack.c.bf16 %v4925, %v4925
    %v5068 = vpack.c.bf16 %v4923, %v4923
    %v5069 = vpack.c.bf16 %v4927, %v4927
    %v5070 = vpack.c.bf16 %v4964, %v4964
    %v5071 = vpack.c.bf16 %v4968, %v4968
    %v5072 = vpack.c.bf16 %v4966, %v4966
    %v5073 = vpack.c.bf16 %v4970, %v4970
    %v5075 = vsel %vm873, %v5058, 0
    %v5078 = vsel %vm873, %v5066, 0
    %5080 = vmatprep.subr.bf16.mxu0 0
    %5081 = vmatpush1.bf16.xpose.msra.mxu0 %v5078
    %5082 = vmatprep.subr.bf16.mxu0 0
    %5083 = vmatpush1.bf16.xpose.msra.mxu0 0
    %5084 = vmatprep.subr.bf16.mxu0 0
    %5085 = vmatpush1.bf16.xpose.msra.mxu0 0
    %5086 = vmatprep.subr.bf16.mxu0 0
    %5087 = vmatpush1.bf16.xpose.msra.mxu0 0
    %5088 = vmatprep.subr.bf16.mxu0 0
    %5089 = vmatpush1.bf16.xpose.msra.mxu0 0
    %5090 = vmatprep.subr.bf16.mxu0 0
    %5091 = vmatpush1.bf16.xpose.msra.mxu0 0
    %5092 = vmatprep.subr.bf16.mxu0 0
    %5093 = vmatpush1.bf16.xpose.msra.mxu0 0
    %5094 = vmatprep.subr.bf16.mxu0 0
    %5095 = vmatpush1.bf16.xpose.msra.mxu0 0
    %5096 = vmatprep.subr.bf16.mxu0 0
    %5097 = vmatpush1.bf16.xpose.msra.mxu0 0
    %5098 = vmatprep.subr.bf16.mxu0 0
    %5099 = vmatpush1.bf16.xpose.msra.mxu0 0
    %5100 = vmatprep.subr.bf16.mxu0 0
    %5101 = vmatpush1.bf16.xpose.msra.mxu0 0
    %5102 = vmatprep.subr.bf16.mxu0 0
    %5103 = vmatpush1.bf16.xpose.msra.mxu0 0
    %5104 = vmatprep.subr.bf16.mxu0 0
    %5105 = vmatpush1.bf16.xpose.msra.mxu0 0
    %5106 = vmatprep.subr.bf16.mxu0 0
    %5107 = vmatpush1.bf16.xpose.msra.mxu0 0
    %5108 = vmatprep.subr.bf16.mxu0 0
    %5109 = vmatpush1.bf16.xpose.msra.mxu0 0
    %5110 = vmatprep.subr.bf16.mxu0 0
    %5111 = vmatpush1.bf16.xpose.msra.mxu0 0
    %5112 = vmatprep.mubr.bf16.mxu0 0
    %5113 = vmatmul.mubr.bf16.gmra.mrb[0].mxu0 %v5075
    %v5114 = vpop.f32.mrb[0].mxu0
    %v5115 = vadd.f32 0.0, %v5114
    %v5116 = vpop.f32.mrb[0].mxu0
    %v5117 = vpop.f32.mrb[0].mxu0
    %v5118 = vpop.f32.mrb[0].mxu0
    %5119 = vdwg.mxu0
    %v5121 = vsel %vm873, %v5059, 0
    %v5124 = vsel %vm873, %v5067, 0
    %5126 = vmatprep.subr.bf16.mxu0 0
    %5127 = vmatpush1.bf16.xpose.msra.mxu0 %v5124
    %5128 = vmatprep.subr.bf16.mxu0 0
    %5129 = vmatpush1.bf16.xpose.msra.mxu0 0
    %5130 = vmatprep.subr.bf16.mxu0 0
    %5131 = vmatpush1.bf16.xpose.msra.mxu0 0
    %5132 = vmatprep.subr.bf16.mxu0 0
    %5133 = vmatpush1.bf16.xpose.msra.mxu0 0
    %5134 = vmatprep.subr.bf16.mxu0 0
    %5135 = vmatpush1.bf16.xpose.msra.mxu0 0
    %5136 = vmatprep.subr.bf16.mxu0 0
    %5137 = vmatpush1.bf16.xpose.msra.mxu0 0
    %5138 = vmatprep.subr.bf16.mxu0 0
    %5139 = vmatpush1.bf16.xpose.msra.mxu0 0
    %5140 = vmatprep.subr.bf16.mxu0 0
    %5141 = vmatpush1.bf16.xpose.msra.mxu0 0
    %5142 = vmatprep.subr.bf16.mxu0 0
    %5143 = vmatpush1.bf16.xpose.msra.mxu0 0
    %5144 = vmatprep.subr.bf16.mxu0 0
    %5145 = vmatpush1.bf16.xpose.msra.mxu0 0
    %5146 = vmatprep.subr.bf16.mxu0 0
    %5147 = vmatpush1.bf16.xpose.msra.mxu0 0
    %5148 = vmatprep.subr.bf16.mxu0 0
    %5149 = vmatpush1.bf16.xpose.msra.mxu0 0
    %5150 = vmatprep.subr.bf16.mxu0 0
    %5151 = vmatpush1.bf16.xpose.msra.mxu0 0
    %5152 = vmatprep.subr.bf16.mxu0 0
    %5153 = vmatpush1.bf16.xpose.msra.mxu0 0
    %5154 = vmatprep.subr.bf16.mxu0 0
    %5155 = vmatpush1.bf16.xpose.msra.mxu0 0
    %5156 = vmatprep.subr.bf16.mxu0 0
    %5157 = vmatpush1.bf16.xpose.msra.mxu0 0
    %5158 = vmatprep.mubr.bf16.mxu0 0
    %5159 = vmatmul.mubr.bf16.gmra.mrb[0].mxu0 %v5121
    %v5160 = vpop.f32.mrb[0].mxu0
    %v5161 = vadd.f32 0.0, %v5160
    %v5162 = vpop.f32.mrb[0].mxu0
    %v5163 = vpop.f32.mrb[0].mxu0
    %v5164 = vpop.f32.mrb[0].mxu0
    %5165 = vdwg.mxu0
    %v5167 = vsel %vm873, %v5060, 0
    %v5170 = vsel %vm873, %v5068, 0
    %5172 = vmatprep.subr.bf16.mxu0 0
    %5173 = vmatpush1.bf16.xpose.msra.mxu0 %v5170
    %5174 = vmatprep.subr.bf16.mxu0 0
    %5175 = vmatpush1.bf16.xpose.msra.mxu0 0
    %5176 = vmatprep.subr.bf16.mxu0 0
    %5177 = vmatpush1.bf16.xpose.msra.mxu0 0
    %5178 = vmatprep.subr.bf16.mxu0 0
    %5179 = vmatpush1.bf16.xpose.msra.mxu0 0
    %5180 = vmatprep.subr.bf16.mxu0 0
    %5181 = vmatpush1.bf16.xpose.msra.mxu0 0
    %5182 = vmatprep.subr.bf16.mxu0 0
    %5183 = vmatpush1.bf16.xpose.msra.mxu0 0
    %5184 = vmatprep.subr.bf16.mxu0 0
    %5185 = vmatpush1.bf16.xpose.msra.mxu0 0
    %5186 = vmatprep.subr.bf16.mxu0 0
    %5187 = vmatpush1.bf16.xpose.msra.mxu0 0
    %5188 = vmatprep.subr.bf16.mxu0 0
    %5189 = vmatpush1.bf16.xpose.msra.mxu0 0
    %5190 = vmatprep.subr.bf16.mxu0 0
    %5191 = vmatpush1.bf16.xpose.msra.mxu0 0
    %5192 = vmatprep.subr.bf16.mxu0 0
    %5193 = vmatpush1.bf16.xpose.msra.mxu0 0
    %5194 = vmatprep.subr.bf16.mxu0 0
    %5195 = vmatpush1.bf16.xpose.msra.mxu0 0
    %5196 = vmatprep.subr.bf16.mxu0 0
    %5197 = vmatpush1.bf16.xpose.msra.mxu0 0
    %5198 = vmatprep.subr.bf16.mxu0 0
    %5199 = vmatpush1.bf16.xpose.msra.mxu0 0
    %5200 = vmatprep.subr.bf16.mxu0 0
    %5201 = vmatpush1.bf16.xpose.msra.mxu0 0
    %5202 = vmatprep.subr.bf16.mxu0 0
    %5203 = vmatpush1.bf16.xpose.msra.mxu0 0
    %5204 = vmatprep.mubr.bf16.mxu0 0
    %5205 = vmatmul.mubr.bf16.gmra.mrb[0].mxu0 %v5167
    %v5206 = vpop.f32.mrb[0].mxu0
    %v5207 = vadd.f32 0.0, %v5206
    %v5208 = vpop.f32.mrb[0].mxu0
    %v5209 = vpop.f32.mrb[0].mxu0
    %v5210 = vpop.f32.mrb[0].mxu0
    %5211 = vdwg.mxu0
    %v5213 = vsel %vm873, %v5061, 0
    %v5216 = vsel %vm873, %v5069, 0
    %5218 = vmatprep.subr.bf16.mxu0 0
    %5219 = vmatpush1.bf16.xpose.msra.mxu0 %v5216
    %5220 = vmatprep.subr.bf16.mxu0 0
    %5221 = vmatpush1.bf16.xpose.msra.mxu0 0
    %5222 = vmatprep.subr.bf16.mxu0 0
    %5223 = vmatpush1.bf16.xpose.msra.mxu0 0
    %5224 = vmatprep.subr.bf16.mxu0 0
    %5225 = vmatpush1.bf16.xpose.msra.mxu0 0
    %5226 = vmatprep.subr.bf16.mxu0 0
    %5227 = vmatpush1.bf16.xpose.msra.mxu0 0
    %5228 = vmatprep.subr.bf16.mxu0 0
    %5229 = vmatpush1.bf16.xpose.msra.mxu0 0
    %5230 = vmatprep.subr.bf16.mxu0 0
    %5231 = vmatpush1.bf16.xpose.msra.mxu0 0
    %5232 = vmatprep.subr.bf16.mxu0 0
    %5233 = vmatpush1.bf16.xpose.msra.mxu0 0
    %5234 = vmatprep.subr.bf16.mxu0 0
    %5235 = vmatpush1.bf16.xpose.msra.mxu0 0
    %5236 = vmatprep.subr.bf16.mxu0 0
    %5237 = vmatpush1.bf16.xpose.msra.mxu0 0
    %5238 = vmatprep.subr.bf16.mxu0 0
    %5239 = vmatpush1.bf16.xpose.msra.mxu0 0
    %5240 = vmatprep.subr.bf16.mxu0 0
    %5241 = vmatpush1.bf16.xpose.msra.mxu0 0
    %5242 = vmatprep.subr.bf16.mxu0 0
    %5243 = vmatpush1.bf16.xpose.msra.mxu0 0
    %5244 = vmatprep.subr.bf16.mxu0 0
    %5245 = vmatpush1.bf16.xpose.msra.mxu0 0
    %5246 = vmatprep.subr.bf16.mxu0 0
    %5247 = vmatpush1.bf16.xpose.msra.mxu0 0
    %5248 = vmatprep.subr.bf16.mxu0 0
    %5249 = vmatpush1.bf16.xpose.msra.mxu0 0
    %5250 = vmatprep.mubr.bf16.mxu0 0
    %5251 = vmatmul.mubr.bf16.gmra.mrb[0].mxu0 %v5213
    %v5252 = vpop.f32.mrb[0].mxu0
    %v5253 = vadd.f32 0.0, %v5252
    %v5254 = vpop.f32.mrb[0].mxu0
    %v5255 = vpop.f32.mrb[0].mxu0
    %v5256 = vpop.f32.mrb[0].mxu0
    %5257 = vdwg.mxu0
    %v5259 = vsel %vm873, %v5062, 0
    %v5262 = vsel %vm873, %v5070, 0
    %5264 = vmatprep.subr.bf16.mxu0 0
    %5265 = vmatpush1.bf16.xpose.msra.mxu0 %v5262
    %5266 = vmatprep.subr.bf16.mxu0 0
    %5267 = vmatpush1.bf16.xpose.msra.mxu0 0
    %5268 = vmatprep.subr.bf16.mxu0 0
    %5269 = vmatpush1.bf16.xpose.msra.mxu0 0
    %5270 = vmatprep.subr.bf16.mxu0 0
    %5271 = vmatpush1.bf16.xpose.msra.mxu0 0
    %5272 = vmatprep.subr.bf16.mxu0 0
    %5273 = vmatpush1.bf16.xpose.msra.mxu0 0
    %5274 = vmatprep.subr.bf16.mxu0 0
    %5275 = vmatpush1.bf16.xpose.msra.mxu0 0
    %5276 = vmatprep.subr.bf16.mxu0 0
    %5277 = vmatpush1.bf16.xpose.msra.mxu0 0
    %5278 = vmatprep.subr.bf16.mxu0 0
    %5279 = vmatpush1.bf16.xpose.msra.mxu0 0
    %5280 = vmatprep.subr.bf16.mxu0 0
    %5281 = vmatpush1.bf16.xpose.msra.mxu0 0
    %5282 = vmatprep.subr.bf16.mxu0 0
    %5283 = vmatpush1.bf16.xpose.msra.mxu0 0
    %5284 = vmatprep.subr.bf16.mxu0 0
    %5285 = vmatpush1.bf16.xpose.msra.mxu0 0
    %5286 = vmatprep.subr.bf16.mxu0 0
    %5287 = vmatpush1.bf16.xpose.msra.mxu0 0
    %5288 = vmatprep.subr.bf16.mxu0 0
    %5289 = vmatpush1.bf16.xpose.msra.mxu0 0
    %5290 = vmatprep.subr.bf16.mxu0 0
    %5291 = vmatpush1.bf16.xpose.msra.mxu0 0
    %5292 = vmatprep.subr.bf16.mxu0 0
    %5293 = vmatpush1.bf16.xpose.msra.mxu0 0
    %5294 = vmatprep.subr.bf16.mxu0 0
    %5295 = vmatpush1.bf16.xpose.msra.mxu0 0
    %5296 = vmatprep.mubr.bf16.mxu0 0
    %5297 = vmatmul.mubr.bf16.gmra.mrb[0].mxu0 %v5259
    %v5298 = vpop.f32.mrb[0].mxu0
    %v5299 = vadd.f32 0.0, %v5298
    %v5300 = vpop.f32.mrb[0].mxu0
    %v5301 = vpop.f32.mrb[0].mxu0
    %v5302 = vpop.f32.mrb[0].mxu0
    %5303 = vdwg.mxu0
    %v5305 = vsel %vm873, %v5063, 0
    %v5308 = vsel %vm873, %v5071, 0
    %5310 = vmatprep.subr.bf16.mxu0 0
    %5311 = vmatpush1.bf16.xpose.msra.mxu0 %v5308
    %5312 = vmatprep.subr.bf16.mxu0 0
    %5313 = vmatpush1.bf16.xpose.msra.mxu0 0
    %5314 = vmatprep.subr.bf16.mxu0 0
    %5315 = vmatpush1.bf16.xpose.msra.mxu0 0
    %5316 = vmatprep.subr.bf16.mxu0 0
    %5317 = vmatpush1.bf16.xpose.msra.mxu0 0
    %5318 = vmatprep.subr.bf16.mxu0 0
    %5319 = vmatpush1.bf16.xpose.msra.mxu0 0
    %5320 = vmatprep.subr.bf16.mxu0 0
    %5321 = vmatpush1.bf16.xpose.msra.mxu0 0
    %5322 = vmatprep.subr.bf16.mxu0 0
    %5323 = vmatpush1.bf16.xpose.msra.mxu0 0
    %5324 = vmatprep.subr.bf16.mxu0 0
    %5325 = vmatpush1.bf16.xpose.msra.mxu0 0
    %5326 = vmatprep.subr.bf16.mxu0 0
    %5327 = vmatpush1.bf16.xpose.msra.mxu0 0
    %5328 = vmatprep.subr.bf16.mxu0 0
    %5329 = vmatpush1.bf16.xpose.msra.mxu0 0
    %5330 = vmatprep.subr.bf16.mxu0 0
    %5331 = vmatpush1.bf16.xpose.msra.mxu0 0
    %5332 = vmatprep.subr.bf16.mxu0 0
    %5333 = vmatpush1.bf16.xpose.msra.mxu0 0
    %5334 = vmatprep.subr.bf16.mxu0 0
    %5335 = vmatpush1.bf16.xpose.msra.mxu0 0
    %5336 = vmatprep.subr.bf16.mxu0 0
    %5337 = vmatpush1.bf16.xpose.msra.mxu0 0
    %5338 = vmatprep.subr.bf16.mxu0 0
    %5339 = vmatpush1.bf16.xpose.msra.mxu0 0
    %5340 = vmatprep.subr.bf16.mxu0 0
    %5341 = vmatpush1.bf16.xpose.msra.mxu0 0
    %5342 = vmatprep.mubr.bf16.mxu0 0
    %5343 = vmatmul.mubr.bf16.gmra.mrb[0].mxu0 %v5305
    %v5344 = vpop.f32.mrb[0].mxu0
    %v5345 = vadd.f32 0.0, %v5344
    %v5346 = vpop.f32.mrb[0].mxu0
    %v5347 = vpop.f32.mrb[0].mxu0
    %v5348 = vpop.f32.mrb[0].mxu0
    %5349 = vdwg.mxu0
    %v5351 = vsel %vm873, %v5064, 0
    %v5354 = vsel %vm873, %v5072, 0
    %5356 = vmatprep.subr.bf16.mxu0 0
    %5357 = vmatpush1.bf16.xpose.msra.mxu0 %v5354
    %5358 = vmatprep.subr.bf16.mxu0 0
    %5359 = vmatpush1.bf16.xpose.msra.mxu0 0
    %5360 = vmatprep.subr.bf16.mxu0 0
    %5361 = vmatpush1.bf16.xpose.msra.mxu0 0
    %5362 = vmatprep.subr.bf16.mxu0 0
    %5363 = vmatpush1.bf16.xpose.msra.mxu0 0
    %5364 = vmatprep.subr.bf16.mxu0 0
    %5365 = vmatpush1.bf16.xpose.msra.mxu0 0
    %5366 = vmatprep.subr.bf16.mxu0 0
    %5367 = vmatpush1.bf16.xpose.msra.mxu0 0
    %5368 = vmatprep.subr.bf16.mxu0 0
    %5369 = vmatpush1.bf16.xpose.msra.mxu0 0
    %5370 = vmatprep.subr.bf16.mxu0 0
    %5371 = vmatpush1.bf16.xpose.msra.mxu0 0
    %5372 = vmatprep.subr.bf16.mxu0 0
    %5373 = vmatpush1.bf16.xpose.msra.mxu0 0
    %5374 = vmatprep.subr.bf16.mxu0 0
    %5375 = vmatpush1.bf16.xpose.msra.mxu0 0
    %5376 = vmatprep.subr.bf16.mxu0 0
    %5377 = vmatpush1.bf16.xpose.msra.mxu0 0
    %5378 = vmatprep.subr.bf16.mxu0 0
    %5379 = vmatpush1.bf16.xpose.msra.mxu0 0
    %5380 = vmatprep.subr.bf16.mxu0 0
    %5381 = vmatpush1.bf16.xpose.msra.mxu0 0
    %5382 = vmatprep.subr.bf16.mxu0 0
    %5383 = vmatpush1.bf16.xpose.msra.mxu0 0
    %5384 = vmatprep.subr.bf16.mxu0 0
    %5385 = vmatpush1.bf16.xpose.msra.mxu0 0
    %5386 = vmatprep.subr.bf16.mxu0 0
    %5387 = vmatpush1.bf16.xpose.msra.mxu0 0
    %5388 = vmatprep.mubr.bf16.mxu0 0
    %5389 = vmatmul.mubr.bf16.gmra.mrb[0].mxu0 %v5351
    %v5390 = vpop.f32.mrb[0].mxu0
    %v5391 = vadd.f32 0.0, %v5390
    %v5392 = vpop.f32.mrb[0].mxu0
    %v5393 = vpop.f32.mrb[0].mxu0
    %v5394 = vpop.f32.mrb[0].mxu0
    %5395 = vdwg.mxu0
    %v5397 = vsel %vm873, %v5065, 0
    %v5400 = vsel %vm873, %v5073, 0
    %5402 = vmatprep.subr.bf16.mxu0 0
    %5403 = vmatpush1.bf16.xpose.msra.mxu0 %v5400
    %5404 = vmatprep.subr.bf16.mxu0 0
    %5405 = vmatpush1.bf16.xpose.msra.mxu0 0
    %5406 = vmatprep.subr.bf16.mxu0 0
    %5407 = vmatpush1.bf16.xpose.msra.mxu0 0
    %5408 = vmatprep.subr.bf16.mxu0 0
    %5409 = vmatpush1.bf16.xpose.msra.mxu0 0
    %5410 = vmatprep.subr.bf16.mxu0 0
    %5411 = vmatpush1.bf16.xpose.msra.mxu0 0
    %5412 = vmatprep.subr.bf16.mxu0 0
    %5413 = vmatpush1.bf16.xpose.msra.mxu0 0
    %5414 = vmatprep.subr.bf16.mxu0 0
    %5415 = vmatpush1.bf16.xpose.msra.mxu0 0
    %5416 = vmatprep.subr.bf16.mxu0 0
    %5417 = vmatpush1.bf16.xpose.msra.mxu0 0
    %5418 = vmatprep.subr.bf16.mxu0 0
    %5419 = vmatpush1.bf16.xpose.msra.mxu0 0
    %5420 = vmatprep.subr.bf16.mxu0 0
    %5421 = vmatpush1.bf16.xpose.msra.mxu0 0
    %5422 = vmatprep.subr.bf16.mxu0 0
    %5423 = vmatpush1.bf16.xpose.msra.mxu0 0
    %5424 = vmatprep.subr.bf16.mxu0 0
    %5425 = vmatpush1.bf16.xpose.msra.mxu0 0
    %5426 = vmatprep.subr.bf16.mxu0 0
    %5427 = vmatpush1.bf16.xpose.msra.mxu0 0
    %5428 = vmatprep.subr.bf16.mxu0 0
    %5429 = vmatpush1.bf16.xpose.msra.mxu0 0
    %5430 = vmatprep.subr.bf16.mxu0 0
    %5431 = vmatpush1.bf16.xpose.msra.mxu0 0
    %5432 = vmatprep.subr.bf16.mxu0 0
    %5433 = vmatpush1.bf16.xpose.msra.mxu0 0
    %5434 = vmatprep.mubr.bf16.mxu0 0
    %5435 = vmatmul.mubr.bf16.gmra.mrb[0].mxu0 %v5397
    %v5436 = vpop.f32.mrb[0].mxu0
    %v5437 = vadd.f32 0.0, %v5436
    %v5438 = vpop.f32.mrb[0].mxu0
    %v5439 = vpop.f32.mrb[0].mxu0
    %v5440 = vpop.f32.mrb[0].mxu0
    %5441 = vdwg.mxu0
    %v5442 = vmul.f32 %v5115, 0.25
    %v5443 = vmul.f32 %v5161, 0.25
    %v5444 = vmul.f32 %v5207, 0.25
    %v5445 = vmul.f32 %v5253, 0.25
    %v5446 = vmul.f32 %v5299, 0.25
    %v5447 = vmul.f32 %v5345, 0.25
    %v5448 = vmul.f32 %v5391, 0.25
    %v5449 = vmul.f32 %v5437, 0.25
    %v5450 = vsel %vm1250, %v5442, -inf
    %5451 = vmax.xlane.f32.xlu0 %v5450
    %v5452 = vpop.xlane.xlu0 %5451
    %v5453 = vsel %vm1250, %v5443, -inf
    %5454 = vmax.xlane.f32.xlu0 %v5453
    %v5455 = vpop.xlane.xlu0 %5454
    %v5456 = vsel %vm1250, %v5444, -inf
    %5457 = vmax.xlane.f32.xlu0 %v5456
    %v5458 = vpop.xlane.xlu0 %5457
    %v5459 = vsel %vm1250, %v5445, -inf
    %5460 = vmax.xlane.f32.xlu0 %v5459
    %v5461 = vpop.xlane.xlu0 %5460
    %v5462 = vsel %vm1250, %v5446, -inf
    %5463 = vmax.xlane.f32.xlu0 %v5462
    %v5464 = vpop.xlane.xlu0 %5463
    %v5465 = vsel %vm1250, %v5447, -inf
    %5466 = vmax.xlane.f32.xlu0 %v5465
    %v5467 = vpop.xlane.xlu0 %5466
    %v5468 = vsel %vm1250, %v5448, -inf
    %5469 = vmax.xlane.f32.xlu0 %v5468
    %v5470 = vpop.xlane.xlu0 %5469
    %v5471 = vsel %vm1250, %v5449, -inf
    %5472 = vmax.xlane.f32.xlu0 %v5471
    %v5473 = vpop.xlane.xlu0 %5472
    %v5474 = vsub.f32 %v5442, %v5452
    %v5475 = vsub.f32 %v5443, %v5455
    %v5476 = vsub.f32 %v5444, %v5458
    %v5477 = vsub.f32 %v5445, %v5461
    %v5478 = vsub.f32 %v5446, %v5464
    %v5479 = vsub.f32 %v5447, %v5467
    %v5480 = vsub.f32 %v5448, %v5470
    %v5481 = vsub.f32 %v5449, %v5473
    %v5482 = vmul.f32 %v5474, 1.442695
    %v5483 = vpow.pop %v5482
    %v5484 = vmul.f32 %v5475, 1.442695
    %v5485 = vpow.pop %v5484
    %v5486 = vmul.f32 %v5476, 1.442695
    %v5487 = vpow.pop %v5486
    %v5488 = vmul.f32 %v5477, 1.442695
    %v5489 = vpow.pop %v5488
    %v5490 = vmul.f32 %v5478, 1.442695
    %v5491 = vpow.pop %v5490
    %v5492 = vmul.f32 %v5479, 1.442695
    %v5493 = vpow.pop %v5492
    %v5494 = vmul.f32 %v5480, 1.442695
    %v5495 = vpow.pop %v5494
    %v5496 = vmul.f32 %v5481, 1.442695
    %v5497 = vpow.pop %v5496
    %v5498 = vsel %vm1250, %v5483, 0.0
    %5499 = vadd.xlane.f32.xlu0 %v5498
    %v5500 = vpop.xlane.xlu0 %5499
    %v5501 = vsel %vm1250, %v5485, 0.0
    %5502 = vadd.xlane.f32.xlu0 %v5501
    %v5503 = vpop.xlane.xlu0 %5502
    %v5504 = vsel %vm1250, %v5487, 0.0
    %5505 = vadd.xlane.f32.xlu0 %v5504
    %v5506 = vpop.xlane.xlu0 %5505
    %v5507 = vsel %vm1250, %v5489, 0.0
    %5508 = vadd.xlane.f32.xlu0 %v5507
    %v5509 = vpop.xlane.xlu0 %5508
    %v5510 = vsel %vm1250, %v5491, 0.0
    %5511 = vadd.xlane.f32.xlu0 %v5510
    %v5512 = vpop.xlane.xlu0 %5511
    %v5513 = vsel %vm1250, %v5493, 0.0
    %5514 = vadd.xlane.f32.xlu0 %v5513
    %v5515 = vpop.xlane.xlu0 %5514
    %v5516 = vsel %vm1250, %v5495, 0.0
    %5517 = vadd.xlane.f32.xlu0 %v5516
    %v5518 = vpop.xlane.xlu0 %5517
    %v5519 = vsel %vm1250, %v5497, 0.0
    %5520 = vadd.xlane.f32.xlu0 %v5519
    %v5521 = vpop.xlane.xlu0 %5520
    %v5522 = vrcp.pop %v5500
    %v5523 = vrcp.pop %v5503
    %v5524 = vrcp.pop %v5506
    %v5525 = vrcp.pop %v5509
    %v5526 = vrcp.pop %v5512
    %v5527 = vrcp.pop %v5515
    %v5528 = vrcp.pop %v5518
    %v5529 = vrcp.pop %v5521
    %v5530 = vmul.f32 %v5483, %v5522
    %v5531 = vmul.f32 %v5485, %v5523
    %v5532 = vmul.f32 %v5487, %v5524
    %v5533 = vmul.f32 %v5489, %v5525
    %v5534 = vmul.f32 %v5491, %v5526
    %v5535 = vmul.f32 %v5493, %v5527
    %v5536 = vmul.f32 %v5495, %v5528
    %v5537 = vmul.f32 %v5497, %v5529
    %v5538 = vpack.c.bf16 %v5530, %v5530
    %v5539 = vpack.c.bf16 %v5531, %v5531
    %v5540 = vpack.c.bf16 %v5532, %v5532
    %v5541 = vpack.c.bf16 %v5533, %v5533
    %v5542 = vpack.c.bf16 %v5534, %v5534
    %v5543 = vpack.c.bf16 %v5535, %v5535
    %v5544 = vpack.c.bf16 %v5536, %v5536
    %v5545 = vpack.c.bf16 %v5537, %v5537
    %v5546 = vpack.c.bf16 %v5007, %v5007
    %v5547 = vpack.c.bf16 %v5011, %v5011
    %v5548 = vpack.c.bf16 %v5009, %v5009
    %v5549 = vpack.c.bf16 %v5013, %v5013
    %v5550 = vpack.c.bf16 %v5050, %v5050
    %v5551 = vpack.c.bf16 %v5054, %v5054
    %v5552 = vpack.c.bf16 %v5052, %v5052
    %v5553 = vpack.c.bf16 %v5056, %v5056
    %v5555 = vsel %vm1250, %v5538, 0
    %v5558 = vsel %vm1358, %v5546, 0
    %5560 = vmatprep.subr.bf16.mxu0 0
    %5561 = vmatpush1.bf16.msra.mxu0 %v5558
    %5562 = vmatprep.subr.bf16.mxu0 0
    %5563 = vmatpush1.bf16.msra.mxu0 0
    %5564 = vmatprep.subr.bf16.mxu0 0
    %5565 = vmatpush1.bf16.msra.mxu0 0
    %5566 = vmatprep.subr.bf16.mxu0 0
    %5567 = vmatpush1.bf16.msra.mxu0 0
    %5568 = vmatprep.subr.bf16.mxu0 0
    %5569 = vmatpush1.bf16.msra.mxu0 0
    %5570 = vmatprep.subr.bf16.mxu0 0
    %5571 = vmatpush1.bf16.msra.mxu0 0
    %5572 = vmatprep.subr.bf16.mxu0 0
    %5573 = vmatpush1.bf16.msra.mxu0 0
    %5574 = vmatprep.subr.bf16.mxu0 0
    %5575 = vmatpush1.bf16.msra.mxu0 0
    %5576 = vmatprep.subr.bf16.mxu0 0
    %5577 = vmatpush1.bf16.msra.mxu0 0
    %5578 = vmatprep.subr.bf16.mxu0 0
    %5579 = vmatpush1.bf16.msra.mxu0 0
    %5580 = vmatprep.subr.bf16.mxu0 0
    %5581 = vmatpush1.bf16.msra.mxu0 0
    %5582 = vmatprep.subr.bf16.mxu0 0
    %5583 = vmatpush1.bf16.msra.mxu0 0
    %5584 = vmatprep.subr.bf16.mxu0 0
    %5585 = vmatpush1.bf16.msra.mxu0 0
    %5586 = vmatprep.subr.bf16.mxu0 0
    %5587 = vmatpush1.bf16.msra.mxu0 0
    %5588 = vmatprep.subr.bf16.mxu0 0
    %5589 = vmatpush1.bf16.msra.mxu0 0
    %5590 = vmatprep.subr.bf16.mxu0 0
    %5591 = vmatpush1.bf16.msra.mxu0 0
    %5592 = vmatprep.mubr.bf16.mxu0 0
    %5593 = vmatmul.mubr.bf16.gmra.mrb[0].mxu0 %v5555
    %v5594 = vpop.f32.mrb[0].mxu0
    %v5595 = vadd.f32 0.0, %v5594
    %v5596 = vpop.f32.mrb[0].mxu0
    %v5597 = vpop.f32.mrb[0].mxu0
    %v5598 = vpop.f32.mrb[0].mxu0
    %5599 = vdwg.mxu0
    %v5601 = vsel %vm1250, %v5539, 0
    %v5604 = vsel %vm1358, %v5547, 0
    %5606 = vmatprep.subr.bf16.mxu0 0
    %5607 = vmatpush1.bf16.msra.mxu0 %v5604
    %5608 = vmatprep.subr.bf16.mxu0 0
    %5609 = vmatpush1.bf16.msra.mxu0 0
    %5610 = vmatprep.subr.bf16.mxu0 0
    %5611 = vmatpush1.bf16.msra.mxu0 0
    %5612 = vmatprep.subr.bf16.mxu0 0
    %5613 = vmatpush1.bf16.msra.mxu0 0
    %5614 = vmatprep.subr.bf16.mxu0 0
    %5615 = vmatpush1.bf16.msra.mxu0 0
    %5616 = vmatprep.subr.bf16.mxu0 0
    %5617 = vmatpush1.bf16.msra.mxu0 0
    %5618 = vmatprep.subr.bf16.mxu0 0
    %5619 = vmatpush1.bf16.msra.mxu0 0
    %5620 = vmatprep.subr.bf16.mxu0 0
    %5621 = vmatpush1.bf16.msra.mxu0 0
    %5622 = vmatprep.subr.bf16.mxu0 0
    %5623 = vmatpush1.bf16.msra.mxu0 0
    %5624 = vmatprep.subr.bf16.mxu0 0
    %5625 = vmatpush1.bf16.msra.mxu0 0
    %5626 = vmatprep.subr.bf16.mxu0 0
    %5627 = vmatpush1.bf16.msra.mxu0 0
    %5628 = vmatprep.subr.bf16.mxu0 0
    %5629 = vmatpush1.bf16.msra.mxu0 0
    %5630 = vmatprep.subr.bf16.mxu0 0
    %5631 = vmatpush1.bf16.msra.mxu0 0
    %5632 = vmatprep.subr.bf16.mxu0 0
    %5633 = vmatpush1.bf16.msra.mxu0 0
    %5634 = vmatprep.subr.bf16.mxu0 0
    %5635 = vmatpush1.bf16.msra.mxu0 0
    %5636 = vmatprep.subr.bf16.mxu0 0
    %5637 = vmatpush1.bf16.msra.mxu0 0
    %5638 = vmatprep.mubr.bf16.mxu0 0
    %5639 = vmatmul.mubr.bf16.gmra.mrb[0].mxu0 %v5601
    %v5640 = vpop.f32.mrb[0].mxu0
    %v5641 = vadd.f32 0.0, %v5640
    %v5642 = vpop.f32.mrb[0].mxu0
    %v5643 = vpop.f32.mrb[0].mxu0
    %v5644 = vpop.f32.mrb[0].mxu0
    %5645 = vdwg.mxu0
    %v5647 = vsel %vm1250, %v5540, 0
    %v5650 = vsel %vm1358, %v5548, 0
    %5652 = vmatprep.subr.bf16.mxu0 0
    %5653 = vmatpush1.bf16.msra.mxu0 %v5650
    %5654 = vmatprep.subr.bf16.mxu0 0
    %5655 = vmatpush1.bf16.msra.mxu0 0
    %5656 = vmatprep.subr.bf16.mxu0 0
    %5657 = vmatpush1.bf16.msra.mxu0 0
    %5658 = vmatprep.subr.bf16.mxu0 0
    %5659 = vmatpush1.bf16.msra.mxu0 0
    %5660 = vmatprep.subr.bf16.mxu0 0
    %5661 = vmatpush1.bf16.msra.mxu0 0
    %5662 = vmatprep.subr.bf16.mxu0 0
    %5663 = vmatpush1.bf16.msra.mxu0 0
    %5664 = vmatprep.subr.bf16.mxu0 0
    %5665 = vmatpush1.bf16.msra.mxu0 0
    %5666 = vmatprep.subr.bf16.mxu0 0
    %5667 = vmatpush1.bf16.msra.mxu0 0
    %5668 = vmatprep.subr.bf16.mxu0 0
    %5669 = vmatpush1.bf16.msra.mxu0 0
    %5670 = vmatprep.subr.bf16.mxu0 0
    %5671 = vmatpush1.bf16.msra.mxu0 0
    %5672 = vmatprep.subr.bf16.mxu0 0
    %5673 = vmatpush1.bf16.msra.mxu0 0
    %5674 = vmatprep.subr.bf16.mxu0 0
    %5675 = vmatpush1.bf16.msra.mxu0 0
    %5676 = vmatprep.subr.bf16.mxu0 0
    %5677 = vmatpush1.bf16.msra.mxu0 0
    %5678 = vmatprep.subr.bf16.mxu0 0
    %5679 = vmatpush1.bf16.msra.mxu0 0
    %5680 = vmatprep.subr.bf16.mxu0 0
    %5681 = vmatpush1.bf16.msra.mxu0 0
    %5682 = vmatprep.subr.bf16.mxu0 0
    %5683 = vmatpush1.bf16.msra.mxu0 0
    %5684 = vmatprep.mubr.bf16.mxu0 0
    %5685 = vmatmul.mubr.bf16.gmra.mrb[0].mxu0 %v5647
    %v5686 = vpop.f32.mrb[0].mxu0
    %v5687 = vadd.f32 0.0, %v5686
    %v5688 = vpop.f32.mrb[0].mxu0
    %v5689 = vpop.f32.mrb[0].mxu0
    %v5690 = vpop.f32.mrb[0].mxu0
    %5691 = vdwg.mxu0
    %v5693 = vsel %vm1250, %v5541, 0
    %v5696 = vsel %vm1358, %v5549, 0
    %5698 = vmatprep.subr.bf16.mxu0 0
    %5699 = vmatpush1.bf16.msra.mxu0 %v5696
    %5700 = vmatprep.subr.bf16.mxu0 0
    %5701 = vmatpush1.bf16.msra.mxu0 0
    %5702 = vmatprep.subr.bf16.mxu0 0
    %5703 = vmatpush1.bf16.msra.mxu0 0
    %5704 = vmatprep.subr.bf16.mxu0 0
    %5705 = vmatpush1.bf16.msra.mxu0 0
    %5706 = vmatprep.subr.bf16.mxu0 0
    %5707 = vmatpush1.bf16.msra.mxu0 0
    %5708 = vmatprep.subr.bf16.mxu0 0
    %5709 = vmatpush1.bf16.msra.mxu0 0
    %5710 = vmatprep.subr.bf16.mxu0 0
    %5711 = vmatpush1.bf16.msra.mxu0 0
    %5712 = vmatprep.subr.bf16.mxu0 0
    %5713 = vmatpush1.bf16.msra.mxu0 0
    %5714 = vmatprep.subr.bf16.mxu0 0
    %5715 = vmatpush1.bf16.msra.mxu0 0
    %5716 = vmatprep.subr.bf16.mxu0 0
    %5717 = vmatpush1.bf16.msra.mxu0 0
    %5718 = vmatprep.subr.bf16.mxu0 0
    %5719 = vmatpush1.bf16.msra.mxu0 0
    %5720 = vmatprep.subr.bf16.mxu0 0
    %5721 = vmatpush1.bf16.msra.mxu0 0
    %5722 = vmatprep.subr.bf16.mxu0 0
    %5723 = vmatpush1.bf16.msra.mxu0 0
    %5724 = vmatprep.subr.bf16.mxu0 0
    %5725 = vmatpush1.bf16.msra.mxu0 0
    %5726 = vmatprep.subr.bf16.mxu0 0
    %5727 = vmatpush1.bf16.msra.mxu0 0
    %5728 = vmatprep.subr.bf16.mxu0 0
    %5729 = vmatpush1.bf16.msra.mxu0 0
    %5730 = vmatprep.mubr.bf16.mxu0 0
    %5731 = vmatmul.mubr.bf16.gmra.mrb[0].mxu0 %v5693
    %v5732 = vpop.f32.mrb[0].mxu0
    %v5733 = vadd.f32 0.0, %v5732
    %v5734 = vpop.f32.mrb[0].mxu0
    %v5735 = vpop.f32.mrb[0].mxu0
    %v5736 = vpop.f32.mrb[0].mxu0
    %5737 = vdwg.mxu0
    %v5739 = vsel %vm1250, %v5542, 0
    %v5742 = vsel %vm1358, %v5550, 0
    %5744 = vmatprep.subr.bf16.mxu0 0
    %5745 = vmatpush1.bf16.msra.mxu0 %v5742
    %5746 = vmatprep.subr.bf16.mxu0 0
    %5747 = vmatpush1.bf16.msra.mxu0 0
    %5748 = vmatprep.subr.bf16.mxu0 0
    %5749 = vmatpush1.bf16.msra.mxu0 0
    %5750 = vmatprep.subr.bf16.mxu0 0
    %5751 = vmatpush1.bf16.msra.mxu0 0
    %5752 = vmatprep.subr.bf16.mxu0 0
    %5753 = vmatpush1.bf16.msra.mxu0 0
    %5754 = vmatprep.subr.bf16.mxu0 0
    %5755 = vmatpush1.bf16.msra.mxu0 0
    %5756 = vmatprep.subr.bf16.mxu0 0
    %5757 = vmatpush1.bf16.msra.mxu0 0
    %5758 = vmatprep.subr.bf16.mxu0 0
    %5759 = vmatpush1.bf16.msra.mxu0 0
    %5760 = vmatprep.subr.bf16.mxu0 0
    %5761 = vmatpush1.bf16.msra.mxu0 0
    %5762 = vmatprep.subr.bf16.mxu0 0
    %5763 = vmatpush1.bf16.msra.mxu0 0
    %5764 = vmatprep.subr.bf16.mxu0 0
    %5765 = vmatpush1.bf16.msra.mxu0 0
    %5766 = vmatprep.subr.bf16.mxu0 0
    %5767 = vmatpush1.bf16.msra.mxu0 0
    %5768 = vmatprep.subr.bf16.mxu0 0
    %5769 = vmatpush1.bf16.msra.mxu0 0
    %5770 = vmatprep.subr.bf16.mxu0 0
    %5771 = vmatpush1.bf16.msra.mxu0 0
    %5772 = vmatprep.subr.bf16.mxu0 0
    %5773 = vmatpush1.bf16.msra.mxu0 0
    %5774 = vmatprep.subr.bf16.mxu0 0
    %5775 = vmatpush1.bf16.msra.mxu0 0
    %5776 = vmatprep.mubr.bf16.mxu0 0
    %5777 = vmatmul.mubr.bf16.gmra.mrb[0].mxu0 %v5739
    %v5778 = vpop.f32.mrb[0].mxu0
    %v5779 = vadd.f32 0.0, %v5778
    %v5780 = vpop.f32.mrb[0].mxu0
    %v5781 = vpop.f32.mrb[0].mxu0
    %v5782 = vpop.f32.mrb[0].mxu0
    %5783 = vdwg.mxu0
    %v5785 = vsel %vm1250, %v5543, 0
    %v5788 = vsel %vm1358, %v5551, 0
    %5790 = vmatprep.subr.bf16.mxu0 0
    %5791 = vmatpush1.bf16.msra.mxu0 %v5788
    %5792 = vmatprep.subr.bf16.mxu0 0
    %5793 = vmatpush1.bf16.msra.mxu0 0
    %5794 = vmatprep.subr.bf16.mxu0 0
    %5795 = vmatpush1.bf16.msra.mxu0 0
    %5796 = vmatprep.subr.bf16.mxu0 0
    %5797 = vmatpush1.bf16.msra.mxu0 0
    %5798 = vmatprep.subr.bf16.mxu0 0
    %5799 = vmatpush1.bf16.msra.mxu0 0
    %5800 = vmatprep.subr.bf16.mxu0 0
    %5801 = vmatpush1.bf16.msra.mxu0 0
    %5802 = vmatprep.subr.bf16.mxu0 0
    %5803 = vmatpush1.bf16.msra.mxu0 0
    %5804 = vmatprep.subr.bf16.mxu0 0
    %5805 = vmatpush1.bf16.msra.mxu0 0
    %5806 = vmatprep.subr.bf16.mxu0 0
    %5807 = vmatpush1.bf16.msra.mxu0 0
    %5808 = vmatprep.subr.bf16.mxu0 0
    %5809 = vmatpush1.bf16.msra.mxu0 0
    %5810 = vmatprep.subr.bf16.mxu0 0
    %5811 = vmatpush1.bf16.msra.mxu0 0
    %5812 = vmatprep.subr.bf16.mxu0 0
    %5813 = vmatpush1.bf16.msra.mxu0 0
    %5814 = vmatprep.subr.bf16.mxu0 0
    %5815 = vmatpush1.bf16.msra.mxu0 0
    %5816 = vmatprep.subr.bf16.mxu0 0
    %5817 = vmatpush1.bf16.msra.mxu0 0
    %5818 = vmatprep.subr.bf16.mxu0 0
    %5819 = vmatpush1.bf16.msra.mxu0 0
    %5820 = vmatprep.subr.bf16.mxu0 0
    %5821 = vmatpush1.bf16.msra.mxu0 0
    %5822 = vmatprep.mubr.bf16.mxu0 0
    %5823 = vmatmul.mubr.bf16.gmra.mrb[0].mxu0 %v5785
    %v5824 = vpop.f32.mrb[0].mxu0
    %v5825 = vadd.f32 0.0, %v5824
    %v5826 = vpop.f32.mrb[0].mxu0
    %v5827 = vpop.f32.mrb[0].mxu0
    %v5828 = vpop.f32.mrb[0].mxu0
    %5829 = vdwg.mxu0
    %v5831 = vsel %vm1250, %v5544, 0
    %v5834 = vsel %vm1358, %v5552, 0
    %5836 = vmatprep.subr.bf16.mxu0 0
    %5837 = vmatpush1.bf16.msra.mxu0 %v5834
    %5838 = vmatprep.subr.bf16.mxu0 0
    %5839 = vmatpush1.bf16.msra.mxu0 0
    %5840 = vmatprep.subr.bf16.mxu0 0
    %5841 = vmatpush1.bf16.msra.mxu0 0
    %5842 = vmatprep.subr.bf16.mxu0 0
    %5843 = vmatpush1.bf16.msra.mxu0 0
    %5844 = vmatprep.subr.bf16.mxu0 0
    %5845 = vmatpush1.bf16.msra.mxu0 0
    %5846 = vmatprep.subr.bf16.mxu0 0
    %5847 = vmatpush1.bf16.msra.mxu0 0
    %5848 = vmatprep.subr.bf16.mxu0 0
    %5849 = vmatpush1.bf16.msra.mxu0 0
    %5850 = vmatprep.subr.bf16.mxu0 0
    %5851 = vmatpush1.bf16.msra.mxu0 0
    %5852 = vmatprep.subr.bf16.mxu0 0
    %5853 = vmatpush1.bf16.msra.mxu0 0
    %5854 = vmatprep.subr.bf16.mxu0 0
    %5855 = vmatpush1.bf16.msra.mxu0 0
    %5856 = vmatprep.subr.bf16.mxu0 0
    %5857 = vmatpush1.bf16.msra.mxu0 0
    %5858 = vmatprep.subr.bf16.mxu0 0
    %5859 = vmatpush1.bf16.msra.mxu0 0
    %5860 = vmatprep.subr.bf16.mxu0 0
    %5861 = vmatpush1.bf16.msra.mxu0 0
    %5862 = vmatprep.subr.bf16.mxu0 0
    %5863 = vmatpush1.bf16.msra.mxu0 0
    %5864 = vmatprep.subr.bf16.mxu0 0
    %5865 = vmatpush1.bf16.msra.mxu0 0
    %5866 = vmatprep.subr.bf16.mxu0 0
    %5867 = vmatpush1.bf16.msra.mxu0 0
    %5868 = vmatprep.mubr.bf16.mxu0 0
    %5869 = vmatmul.mubr.bf16.gmra.mrb[0].mxu0 %v5831
    %v5870 = vpop.f32.mrb[0].mxu0
    %v5871 = vadd.f32 0.0, %v5870
    %v5872 = vpop.f32.mrb[0].mxu0
    %v5873 = vpop.f32.mrb[0].mxu0
    %v5874 = vpop.f32.mrb[0].mxu0
    %5875 = vdwg.mxu0
    %v5877 = vsel %vm1250, %v5545, 0
    %v5880 = vsel %vm1358, %v5553, 0
    %5882 = vmatprep.subr.bf16.mxu0 0
    %5883 = vmatpush1.bf16.msra.mxu0 %v5880
    %5884 = vmatprep.subr.bf16.mxu0 0
    %5885 = vmatpush1.bf16.msra.mxu0 0
    %5886 = vmatprep.subr.bf16.mxu0 0
    %5887 = vmatpush1.bf16.msra.mxu0 0
    %5888 = vmatprep.subr.bf16.mxu0 0
    %5889 = vmatpush1.bf16.msra.mxu0 0
    %5890 = vmatprep.subr.bf16.mxu0 0
    %5891 = vmatpush1.bf16.msra.mxu0 0
    %5892 = vmatprep.subr.bf16.mxu0 0
    %5893 = vmatpush1.bf16.msra.mxu0 0
    %5894 = vmatprep.subr.bf16.mxu0 0
    %5895 = vmatpush1.bf16.msra.mxu0 0
    %5896 = vmatprep.subr.bf16.mxu0 0
    %5897 = vmatpush1.bf16.msra.mxu0 0
    %5898 = vmatprep.subr.bf16.mxu0 0
    %5899 = vmatpush1.bf16.msra.mxu0 0
    %5900 = vmatprep.subr.bf16.mxu0 0
    %5901 = vmatpush1.bf16.msra.mxu0 0
    %5902 = vmatprep.subr.bf16.mxu0 0
    %5903 = vmatpush1.bf16.msra.mxu0 0
    %5904 = vmatprep.subr.bf16.mxu0 0
    %5905 = vmatpush1.bf16.msra.mxu0 0
    %5906 = vmatprep.subr.bf16.mxu0 0
    %5907 = vmatpush1.bf16.msra.mxu0 0
    %5908 = vmatprep.subr.bf16.mxu0 0
    %5909 = vmatpush1.bf16.msra.mxu0 0
    %5910 = vmatprep.subr.bf16.mxu0 0
    %5911 = vmatpush1.bf16.msra.mxu0 0
    %5912 = vmatprep.subr.bf16.mxu0 0
    %5913 = vmatpush1.bf16.msra.mxu0 0
    %5914 = vmatprep.mubr.bf16.mxu0 0
    %5915 = vmatmul.mubr.bf16.gmra.mrb[0].mxu0 %v5877
    %v5916 = vpop.f32.mrb[0].mxu0
    %v5917 = vadd.f32 0.0, %v5916
    %v5918 = vpop.f32.mrb[0].mxu0
    %v5919 = vpop.f32.mrb[0].mxu0
    %v5920 = vpop.f32.mrb[0].mxu0
    %5921 = vdwg.mxu0
    %s5922 = scalar_lea.vmem %s8, 2
    %v5923 = vld [vmem:[%s5922] sm:$0x1]
    %v5924 = vpack.c.bf16 %v5641, %v5595
    %s5925 = scalar_lea.vmem %s7, 64
    %v5926 = vld [vmem:[%s5925] sm:$0xf]
    %v5927 = vld [vmem:[%s5925 + $0x4] sm:$0xf]
    %v5930 = vunpack.c.l.b16 %v5926
    %v5931 = vunpack.c.l.b16 %v5927
    %v5932 = vpack.c.b16 %v5931, %v5930
    %v5935 = vsel %vm873, %v5924, 0
    %5937 = vmatprep.subr.bf16.mxu0 0
    %5938 = vmatpush1.bf16.msra.mxu0 %v5932
    %5939 = vmatprep.subr.bf16.mxu0 0
    %5940 = vmatpush1.bf16.msra.mxu0 0
    %5941 = vmatprep.subr.bf16.mxu0 0
    %5942 = vmatpush1.bf16.msra.mxu0 0
    %5943 = vmatprep.subr.bf16.mxu0 0
    %5944 = vmatpush1.bf16.msra.mxu0 0
    %5945 = vmatprep.subr.bf16.mxu0 0
    %5946 = vmatpush1.bf16.msra.mxu0 0
    %5947 = vmatprep.subr.bf16.mxu0 0
    %5948 = vmatpush1.bf16.msra.mxu0 0
    %5949 = vmatprep.subr.bf16.mxu0 0
    %5950 = vmatpush1.bf16.msra.mxu0 0
    %5951 = vmatprep.subr.bf16.mxu0 0
    %5952 = vmatpush1.bf16.msra.mxu0 0
    %5953 = vmatprep.subr.bf16.mxu0 0
    %5954 = vmatpush1.bf16.msra.mxu0 0
    %5955 = vmatprep.subr.bf16.mxu0 0
    %5956 = vmatpush1.bf16.msra.mxu0 0
    %5957 = vmatprep.subr.bf16.mxu0 0
    %5958 = vmatpush1.bf16.msra.mxu0 0
    %5959 = vmatprep.subr.bf16.mxu0 0
    %5960 = vmatpush1.bf16.msra.mxu0 0
    %5961 = vmatprep.subr.bf16.mxu0 0
    %5962 = vmatpush1.bf16.msra.mxu0 0
    %5963 = vmatprep.subr.bf16.mxu0 0
    %5964 = vmatpush1.bf16.msra.mxu0 0
    %5965 = vmatprep.subr.bf16.mxu0 0
    %5966 = vmatpush1.bf16.msra.mxu0 0
    %5967 = vmatprep.subr.bf16.mxu0 0
    %5968 = vmatpush1.bf16.msra.mxu0 0
    %5969 = vmatprep.mubr.bf16.mxu0 0
    %5970 = vmatmul.mubr.bf16.gmra.mrb[0].mxu0 %v5935
    %v5971 = vpop.f32.mrb[0].mxu0
    %v5972 = vadd.f32 0.0, %v5971
    %v5973 = vpop.f32.mrb[0].mxu0
    %v5974 = vpop.f32.mrb[0].mxu0
    %v5975 = vadd.f32 0.0, %v5974
    %v5976 = vpop.f32.mrb[0].mxu0
    %5977 = vdwg.mxu0
    %v5979 = vlaneseq
    %v5980 = vshrl.u32 %v5979, 7
    %v5981 = vsub.s32 0, %v5980
    %v5982 = vrot.slane %v5923, %v5981
    %v5984 = vadd.f32 %v5982, %v5972
    %v5985 = vadd.f32 %v5982, %v5975
    %v5986 = vpack.c.bf16 %v5733, %v5687
    %s5987 = scalar_lea.vmem %s7, 72
    %v5988 = vld [vmem:[%s5987] sm:$0xf]
    %v5989 = vld [vmem:[%s5987 + $0x4] sm:$0xf]
    %v5992 = vunpack.c.l.b16 %v5988
    %v5993 = vunpack.c.l.b16 %v5989
    %v5994 = vpack.c.b16 %v5993, %v5992
    %v5997 = vsel %vm873, %v5986, 0
    %5999 = vmatprep.subr.bf16.mxu0 0
    %6000 = vmatpush1.bf16.msra.mxu0 %v5994
    %6001 = vmatprep.subr.bf16.mxu0 0
    %6002 = vmatpush1.bf16.msra.mxu0 0
    %6003 = vmatprep.subr.bf16.mxu0 0
    %6004 = vmatpush1.bf16.msra.mxu0 0
    %6005 = vmatprep.subr.bf16.mxu0 0
    %6006 = vmatpush1.bf16.msra.mxu0 0
    %6007 = vmatprep.subr.bf16.mxu0 0
    %6008 = vmatpush1.bf16.msra.mxu0 0
    %6009 = vmatprep.subr.bf16.mxu0 0
    %6010 = vmatpush1.bf16.msra.mxu0 0
    %6011 = vmatprep.subr.bf16.mxu0 0
    %6012 = vmatpush1.bf16.msra.mxu0 0
    %6013 = vmatprep.subr.bf16.mxu0 0
    %6014 = vmatpush1.bf16.msra.mxu0 0
    %6015 = vmatprep.subr.bf16.mxu0 0
    %6016 = vmatpush1.bf16.msra.mxu0 0
    %6017 = vmatprep.subr.bf16.mxu0 0
    %6018 = vmatpush1.bf16.msra.mxu0 0
    %6019 = vmatprep.subr.bf16.mxu0 0
    %6020 = vmatpush1.bf16.msra.mxu0 0
    %6021 = vmatprep.subr.bf16.mxu0 0
    %6022 = vmatpush1.bf16.msra.mxu0 0
    %6023 = vmatprep.subr.bf16.mxu0 0
    %6024 = vmatpush1.bf16.msra.mxu0 0
    %6025 = vmatprep.subr.bf16.mxu0 0
    %6026 = vmatpush1.bf16.msra.mxu0 0
    %6027 = vmatprep.subr.bf16.mxu0 0
    %6028 = vmatpush1.bf16.msra.mxu0 0
    %6029 = vmatprep.subr.bf16.mxu0 0
    %6030 = vmatpush1.bf16.msra.mxu0 0
    %6031 = vmatprep.mubr.bf16.mxu0 0
    %6032 = vmatmul.mubr.bf16.gmra.mrb[0].mxu0 %v5997
    %v6033 = vpop.f32.mrb[0].mxu0
    %v6034 = vadd.f32 0.0, %v6033
    %v6035 = vpop.f32.mrb[0].mxu0
    %v6036 = vpop.f32.mrb[0].mxu0
    %v6037 = vadd.f32 0.0, %v6036
    %v6038 = vpop.f32.mrb[0].mxu0
    %6039 = vdwg.mxu0
    %v6040 = vadd.f32 %v5984, %v6034
    %v6041 = vadd.f32 %v5985, %v6037
    %v6042 = vpack.c.bf16 %v5825, %v5779
    %s6043 = scalar_lea.vmem %s7, 80
    %v6044 = vld [vmem:[%s6043] sm:$0xf]
    %v6045 = vld [vmem:[%s6043 + $0x4] sm:$0xf]
    %v6048 = vunpack.c.l.b16 %v6044
    %v6049 = vunpack.c.l.b16 %v6045
    %v6050 = vpack.c.b16 %v6049, %v6048
    %v6053 = vsel %vm873, %v6042, 0
    %6055 = vmatprep.subr.bf16.mxu0 0
    %6056 = vmatpush1.bf16.msra.mxu0 %v6050
    %6057 = vmatprep.subr.bf16.mxu0 0
    %6058 = vmatpush1.bf16.msra.mxu0 0
    %6059 = vmatprep.subr.bf16.mxu0 0
    %6060 = vmatpush1.bf16.msra.mxu0 0
    %6061 = vmatprep.subr.bf16.mxu0 0
    %6062 = vmatpush1.bf16.msra.mxu0 0
    %6063 = vmatprep.subr.bf16.mxu0 0
    %6064 = vmatpush1.bf16.msra.mxu0 0
    %6065 = vmatprep.subr.bf16.mxu0 0
    %6066 = vmatpush1.bf16.msra.mxu0 0
    %6067 = vmatprep.subr.bf16.mxu0 0
    %6068 = vmatpush1.bf16.msra.mxu0 0
    %6069 = vmatprep.subr.bf16.mxu0 0
    %6070 = vmatpush1.bf16.msra.mxu0 0
    %6071 = vmatprep.subr.bf16.mxu0 0
    %6072 = vmatpush1.bf16.msra.mxu0 0
    %6073 = vmatprep.subr.bf16.mxu0 0
    %6074 = vmatpush1.bf16.msra.mxu0 0
    %6075 = vmatprep.subr.bf16.mxu0 0
    %6076 = vmatpush1.bf16.msra.mxu0 0
    %6077 = vmatprep.subr.bf16.mxu0 0
    %6078 = vmatpush1.bf16.msra.mxu0 0
    %6079 = vmatprep.subr.bf16.mxu0 0
    %6080 = vmatpush1.bf16.msra.mxu0 0
    %6081 = vmatprep.subr.bf16.mxu0 0
    %6082 = vmatpush1.bf16.msra.mxu0 0
    %6083 = vmatprep.subr.bf16.mxu0 0
    %6084 = vmatpush1.bf16.msra.mxu0 0
    %6085 = vmatprep.subr.bf16.mxu0 0
    %6086 = vmatpush1.bf16.msra.mxu0 0
    %6087 = vmatprep.mubr.bf16.mxu0 0
    %6088 = vmatmul.mubr.bf16.gmra.mrb[0].mxu0 %v6053
    %v6089 = vpop.f32.mrb[0].mxu0
    %v6090 = vadd.f32 0.0, %v6089
    %v6091 = vpop.f32.mrb[0].mxu0
    %v6092 = vpop.f32.mrb[0].mxu0
    %v6093 = vadd.f32 0.0, %v6092
    %v6094 = vpop.f32.mrb[0].mxu0
    %6095 = vdwg.mxu0
    %v6096 = vadd.f32 %v6040, %v6090
    %v6097 = vadd.f32 %v6041, %v6093
    %v6098 = vpack.c.bf16 %v5917, %v5871
    %s6099 = scalar_lea.vmem %s7, 88
    %v6100 = vld [vmem:[%s6099] sm:$0xf]
    %v6101 = vld [vmem:[%s6099 + $0x4] sm:$0xf]
    %v6104 = vunpack.c.l.b16 %v6100
    %v6105 = vunpack.c.l.b16 %v6101
    %v6106 = vpack.c.b16 %v6105, %v6104
    %v6109 = vsel %vm873, %v6098, 0
    %6111 = vmatprep.subr.bf16.mxu0 0
    %6112 = vmatpush1.bf16.msra.mxu0 %v6106
    %6113 = vmatprep.subr.bf16.mxu0 0
    %6114 = vmatpush1.bf16.msra.mxu0 0
    %6115 = vmatprep.subr.bf16.mxu0 0
    %6116 = vmatpush1.bf16.msra.mxu0 0
    %6117 = vmatprep.subr.bf16.mxu0 0
    %6118 = vmatpush1.bf16.msra.mxu0 0
    %6119 = vmatprep.subr.bf16.mxu0 0
    %6120 = vmatpush1.bf16.msra.mxu0 0
    %6121 = vmatprep.subr.bf16.mxu0 0
    %6122 = vmatpush1.bf16.msra.mxu0 0
    %6123 = vmatprep.subr.bf16.mxu0 0
    %6124 = vmatpush1.bf16.msra.mxu0 0
    %6125 = vmatprep.subr.bf16.mxu0 0
    %6126 = vmatpush1.bf16.msra.mxu0 0
    %6127 = vmatprep.subr.bf16.mxu0 0
    %6128 = vmatpush1.bf16.msra.mxu0 0
    %6129 = vmatprep.subr.bf16.mxu0 0
    %6130 = vmatpush1.bf16.msra.mxu0 0
    %6131 = vmatprep.subr.bf16.mxu0 0
    %6132 = vmatpush1.bf16.msra.mxu0 0
    %6133 = vmatprep.subr.bf16.mxu0 0
    %6134 = vmatpush1.bf16.msra.mxu0 0
    %6135 = vmatprep.subr.bf16.mxu0 0
    %6136 = vmatpush1.bf16.msra.mxu0 0
    %6137 = vmatprep.subr.bf16.mxu0 0
    %6138 = vmatpush1.bf16.msra.mxu0 0
    %6139 = vmatprep.subr.bf16.mxu0 0
    %6140 = vmatpush1.bf16.msra.mxu0 0
    %6141 = vmatprep.subr.bf16.mxu0 0
    %6142 = vmatpush1.bf16.msra.mxu0 0
    %6143 = vmatprep.mubr.bf16.mxu0 0
    %6144 = vmatmul.mubr.bf16.gmra.mrb[0].mxu0 %v6109
    %v6145 = vpop.f32.mrb[0].mxu0
    %v6146 = vadd.f32 0.0, %v6145
    %v6147 = vpop.f32.mrb[0].mxu0
    %v6148 = vpop.f32.mrb[0].mxu0
    %v6149 = vadd.f32 0.0, %v6148
    %v6150 = vpop.f32.mrb[0].mxu0
    %6151 = vdwg.mxu0
    %v6152 = vadd.f32 %v6096, %v6146
    %v6153 = vadd.f32 %v6097, %v6149
    %v6154 = vadd.f32 %v4394, %v6152
    %v6155 = vadd.f32 %v4395, %v6153
    %s6156 = scalar_lea.vmem %s9, 2
    %v6157 = vld [vmem:[%s6156] sm:$0x1]
    %s6158 = scalar_lea.vmem %s10, 2
    %v6159 = vld [vmem:[%s6158] sm:$0x1]
    %v6160 = vsel %vm199, %v6154, 0.0
    %6161 = vadd.xlane.f32.xlu0 %v6160
    %v6162 = vpop.xlane.xlu0 %6161
    %v6163 = vsel %vm199, %v6155, 0.0
    %6164 = vadd.xlane.f32.xlu0 %v6163
    %v6165 = vpop.xlane.xlu0 %6164
    %v6166 = vmul.f32 %v6162, %v206
    %v6167 = vmul.f32 %v6165, %v206
    %v6168 = vsub.f32 %v6154, %v6166
    %v6169 = vsub.f32 %v6155, %v6167
    %v6170 = vmul.f32 %v6168, %v6168
    %v6171 = vmul.f32 %v6169, %v6169
    %v6172 = vsel %vm199, %v6170, 0.0
    %6173 = vadd.xlane.f32.xlu0 %v6172
    %v6174 = vpop.xlane.xlu0 %6173
    %v6175 = vsel %vm199, %v6171, 0.0
    %6176 = vadd.xlane.f32.xlu0 %v6175
    %v6177 = vpop.xlane.xlu0 %6176
    %v6178 = vmul.f32 %v6174, %v206
    %v6179 = vmul.f32 %v6177, %v206
    %v6180 = vadd.f32 %v6178, 1e-05
    %v6181 = vadd.f32 %v6179, 1e-05
    %v6182 = vrsqrt.pop %v6180
    %v6183 = vrsqrt.pop %v6181
    %v6184 = vmul.f32 %v6168, %v6182
    %v6185 = vmul.f32 %v6169, %v6183
    %v6187 = vlaneseq
    %v6188 = vshrl.u32 %v6187, 7
    %v6189 = vsub.s32 0, %v6188
    %v6190 = vrot.slane %v6157, %v6189
    %v6192 = vmul.f32 %v6184, %v6190
    %v6193 = vmul.f32 %v6185, %v6190
    %v6195 = vlaneseq
    %v6196 = vshrl.u32 %v6195, 7
    %v6197 = vsub.s32 0, %v6196
    %v6198 = vrot.slane %v6159, %v6197
    %v6200 = vadd.f32 %v6192, %v6198
    %v6201 = vadd.f32 %v6193, %v6198
    %v6202 = vpack.c.bf16 %v6201, %v6200
    %s6203 = scalar_lea.vmem %s11, 128
    %v6204 = vld [vmem:[%s6203] sm:$0xff]
    %v6205 = vld [vmem:[%s6203 + $0x8] sm:$0xff]
    %v6206 = vld [vmem:[%s6203 + $0x10] sm:$0xff]
    %v6207 = vld [vmem:[%s6203 + $0x18] sm:$0xff]
    %v6208 = vld [vmem:[%s6203 + $0x20] sm:$0xff]
    %v6209 = vld [vmem:[%s6203 + $0x28] sm:$0xff]
    %v6210 = vld [vmem:[%s6203 + $0x30] sm:$0xff]
    %v6211 = vld [vmem:[%s6203 + $0x38] sm:$0xff]
    %s6212 = scalar_lea.vmem %s12, 4
    %v6213 = vld [vmem:[%s6212] sm:$0x3]
    %v6215 = vlaneseq
    %v6216 = vshrl.u32 %v6215, 7
    %v6217 = vsub.s32 0, %v6216
    %v6218 = vrot.slane %v6213, %v6217
    %v6219 = vlaneseq
    %v6220 = vshrl.u32 %v6219, 7
    %v6221 = vsub.s32 1, %v6220
    %v6222 = vrot.slane %v6213, %v6221
    %v6233 = vunpack.c.l.b16 %v6204
    %v6234 = vunpack.c.h.b16 %v6204
    %v6235 = vunpack.c.l.b16 %v6205
    %v6236 = vunpack.c.h.b16 %v6205
    %v6237 = vunpack.c.l.b16 %v6206
    %v6238 = vunpack.c.h.b16 %v6206
    %v6239 = vunpack.c.l.b16 %v6207
    %v6240 = vunpack.c.h.b16 %v6207
    %v6241 = vunpack.c.l.b16 %v6208
    %v6242 = vunpack.c.h.b16 %v6208
    %v6243 = vunpack.c.l.b16 %v6209
    %v6244 = vunpack.c.h.b16 %v6209
    %v6245 = vunpack.c.l.b16 %v6210
    %v6246 = vunpack.c.h.b16 %v6210
    %v6247 = vunpack.c.l.b16 %v6211
    %v6248 = vunpack.c.h.b16 %v6211
    %v6249 = vpack.c.b16 %v6235, %v6233
    %v6250 = vpack.c.b16 %v6236, %v6234
    %v6251 = vpack.c.b16 %v6239, %v6237
    %v6252 = vpack.c.b16 %v6240, %v6238
    %v6253 = vpack.c.b16 %v6243, %v6241
    %v6254 = vpack.c.b16 %v6244, %v6242
    %v6255 = vpack.c.b16 %v6247, %v6245
    %v6256 = vpack.c.b16 %v6248, %v6246
    %v6266 = vsel %vm199, %v6202, 0
    %6268 = vmatprep.subr.bf16.mxu0 %v6250
    %6269 = vmatpush1.bf16.msra.mxu0 %v6249
    %6270 = vmatprep.subr.bf16.mxu0 %v6252
    %6271 = vmatpush1.bf16.msra.mxu0 %v6251
    %6272 = vmatprep.subr.bf16.mxu0 %v6254
    %6273 = vmatpush1.bf16.msra.mxu0 %v6253
    %6274 = vmatprep.subr.bf16.mxu0 %v6256
    %6275 = vmatpush1.bf16.msra.mxu0 %v6255
    %6276 = vmatprep.subr.bf16.mxu0 0
    %6277 = vmatpush1.bf16.msra.mxu0 0
    %6278 = vmatprep.subr.bf16.mxu0 0
    %6279 = vmatpush1.bf16.msra.mxu0 0
    %6280 = vmatprep.subr.bf16.mxu0 0
    %6281 = vmatpush1.bf16.msra.mxu0 0
    %6282 = vmatprep.subr.bf16.mxu0 0
    %6283 = vmatpush1.bf16.msra.mxu0 0
    %6284 = vmatprep.subr.bf16.mxu0 0
    %6285 = vmatpush1.bf16.msra.mxu0 0
    %6286 = vmatprep.subr.bf16.mxu0 0
    %6287 = vmatpush1.bf16.msra.mxu0 0
    %6288 = vmatprep.subr.bf16.mxu0 0
    %6289 = vmatpush1.bf16.msra.mxu0 0
    %6290 = vmatprep.subr.bf16.mxu0 0
    %6291 = vmatpush1.bf16.msra.mxu0 0
    %6292 = vmatprep.subr.bf16.mxu0 0
    %6293 = vmatpush1.bf16.msra.mxu0 0
    %6294 = vmatprep.subr.bf16.mxu0 0
    %6295 = vmatpush1.bf16.msra.mxu0 0
    %6296 = vmatprep.subr.bf16.mxu0 0
    %6297 = vmatpush1.bf16.msra.mxu0 0
    %6298 = vmatprep.subr.bf16.mxu0 0
    %6299 = vmatpush1.bf16.msra.mxu0 0
    %6300 = vmatprep.mubr.bf16.mxu0 0
    %6301 = vmatmul.mubr.bf16.gmra.mrb[0].mxu0 %v6266
    %v6302 = vpop.f32.mrb[0].mxu0
    %v6303 = vadd.f32 %v6218, %v6302
    %v6304 = vpop.f32.mrb[0].mxu0
    %v6305 = vadd.f32 %v6222, %v6304
    %v6306 = vpop.f32.mrb[0].mxu0
    %v6307 = vadd.f32 %v6218, %v6306
    %v6308 = vpop.f32.mrb[0].mxu0
    %v6309 = vadd.f32 %v6222, %v6308
    %6310 = vdwg.mxu0
    %v6311 = vmax.f32 %v6303, 0.0
    %v6312 = vmax.f32 %v6305, 0.0
    %v6313 = vmax.f32 %v6307, 0.0
    %v6314 = vmax.f32 %v6309, 0.0
    %v6315 = vpack.c.bf16 %v6313, %v6311
    %v6316 = vpack.c.bf16 %v6314, %v6312
    %s6317 = scalar_lea.vmem %s13, 256
    %v6318 = vld [vmem:[%s6317] sm:$0xf]
    %v6319 = vld [vmem:[%s6317 + $0x4] sm:$0xf]
    %v6320 = vld [vmem:[%s6317 + $0x8] sm:$0xf]
    %v6321 = vld [vmem:[%s6317 + $0xc] sm:$0xf]
    %v6322 = vld [vmem:[%s6317 + $0x10] sm:$0xf]
    %v6323 = vld [vmem:[%s6317 + $0x14] sm:$0xf]
    %v6324 = vld [vmem:[%s6317 + $0x18] sm:$0xf]
    %v6325 = vld [vmem:[%s6317 + $0x1c] sm:$0xf]
    %v6326 = vld [vmem:[%s6317 + $0x20] sm:$0xf]
    %v6327 = vld [vmem:[%s6317 + $0x24] sm:$0xf]
    %v6328 = vld [vmem:[%s6317 + $0x28] sm:$0xf]
    %v6329 = vld [vmem:[%s6317 + $0x2c] sm:$0xf]
    %v6330 = vld [vmem:[%s6317 + $0x30] sm:$0xf]
    %v6331 = vld [vmem:[%s6317 + $0x34] sm:$0xf]
    %v6332 = vld [vmem:[%s6317 + $0x38] sm:$0xf]
    %v6333 = vld [vmem:[%s6317 + $0x3c] sm:$0xf]
    %v6334 = vld [vmem:[%s6317 + $0x40] sm:$0xf]
    %v6335 = vld [vmem:[%s6317 + $0x44] sm:$0xf]
    %v6336 = vld [vmem:[%s6317 + $0x48] sm:$0xf]
    %v6337 = vld [vmem:[%s6317 + $0x4c] sm:$0xf]
    %v6338 = vld [vmem:[%s6317 + $0x50] sm:$0xf]
    %v6339 = vld [vmem:[%s6317 + $0x54] sm:$0xf]
    %v6340 = vld [vmem:[%s6317 + $0x58] sm:$0xf]
    %v6341 = vld [vmem:[%s6317 + $0x5c] sm:$0xf]
    %v6342 = vld [vmem:[%s6317 + $0x60] sm:$0xf]
    %v6343 = vld [vmem:[%s6317 + $0x64] sm:$0xf]
    %v6344 = vld [vmem:[%s6317 + $0x68] sm:$0xf]
    %v6345 = vld [vmem:[%s6317 + $0x6c] sm:$0xf]
    %v6346 = vld [vmem:[%s6317 + $0x70] sm:$0xf]
    %v6347 = vld [vmem:[%s6317 + $0x74] sm:$0xf]
    %v6348 = vld [vmem:[%s6317 + $0x78] sm:$0xf]
    %v6349 = vld [vmem:[%s6317 + $0x7c] sm:$0xf]
    %v6382 = vunpack.c.l.b16 %v6318
    %v6383 = vunpack.c.l.b16 %v6319
    %v6384 = vunpack.c.l.b16 %v6320
    %v6385 = vunpack.c.l.b16 %v6321
    %v6386 = vunpack.c.l.b16 %v6322
    %v6387 = vunpack.c.l.b16 %v6323
    %v6388 = vunpack.c.l.b16 %v6324
    %v6389 = vunpack.c.l.b16 %v6325
    %v6390 = vunpack.c.l.b16 %v6326
    %v6391 = vunpack.c.l.b16 %v6327
    %v6392 = vunpack.c.l.b16 %v6328
    %v6393 = vunpack.c.l.b16 %v6329
    %v6394 = vunpack.c.l.b16 %v6330
    %v6395 = vunpack.c.l.b16 %v6331
    %v6396 = vunpack.c.l.b16 %v6332
    %v6397 = vunpack.c.l.b16 %v6333
    %v6398 = vunpack.c.l.b16 %v6334
    %v6399 = vunpack.c.l.b16 %v6335
    %v6400 = vunpack.c.l.b16 %v6336
    %v6401 = vunpack.c.l.b16 %v6337
    %v6402 = vunpack.c.l.b16 %v6338
    %v6403 = vunpack.c.l.b16 %v6339
    %v6404 = vunpack.c.l.b16 %v6340
    %v6405 = vunpack.c.l.b16 %v6341
    %v6406 = vunpack.c.l.b16 %v6342
    %v6407 = vunpack.c.l.b16 %v6343
    %v6408 = vunpack.c.l.b16 %v6344
    %v6409 = vunpack.c.l.b16 %v6345
    %v6410 = vunpack.c.l.b16 %v6346
    %v6411 = vunpack.c.l.b16 %v6347
    %v6412 = vunpack.c.l.b16 %v6348
    %v6413 = vunpack.c.l.b16 %v6349
    %v6414 = vpack.c.b16 %v6383, %v6382
    %v6415 = vpack.c.b16 %v6385, %v6384
    %v6416 = vpack.c.b16 %v6387, %v6386
    %v6417 = vpack.c.b16 %v6389, %v6388
    %v6418 = vpack.c.b16 %v6391, %v6390
    %v6419 = vpack.c.b16 %v6393, %v6392
    %v6420 = vpack.c.b16 %v6395, %v6394
    %v6421 = vpack.c.b16 %v6397, %v6396
    %v6422 = vpack.c.b16 %v6399, %v6398
    %v6423 = vpack.c.b16 %v6401, %v6400
    %v6424 = vpack.c.b16 %v6403, %v6402
    %v6425 = vpack.c.b16 %v6405, %v6404
    %v6426 = vpack.c.b16 %v6407, %v6406
    %v6427 = vpack.c.b16 %v6409, %v6408
    %v6428 = vpack.c.b16 %v6411, %v6410
    %v6429 = vpack.c.b16 %v6413, %v6412
    %6446 = vmatprep.subr.bf16.mxu0 0
    %6447 = vmatpush1.bf16.msra.mxu0 %v6414
    %6448 = vmatprep.subr.bf16.mxu0 0
    %6449 = vmatpush1.bf16.msra.mxu0 %v6415
    %6450 = vmatprep.subr.bf16.mxu0 0
    %6451 = vmatpush1.bf16.msra.mxu0 %v6416
    %6452 = vmatprep.subr.bf16.mxu0 0
    %6453 = vmatpush1.bf16.msra.mxu0 %v6417
    %6454 = vmatprep.subr.bf16.mxu0 0
    %6455 = vmatpush1.bf16.msra.mxu0 %v6418
    %6456 = vmatprep.subr.bf16.mxu0 0
    %6457 = vmatpush1.bf16.msra.mxu0 %v6419
    %6458 = vmatprep.subr.bf16.mxu0 0
    %6459 = vmatpush1.bf16.msra.mxu0 %v6420
    %6460 = vmatprep.subr.bf16.mxu0 0
    %6461 = vmatpush1.bf16.msra.mxu0 %v6421
    %6462 = vmatprep.subr.bf16.mxu0 0
    %6463 = vmatpush1.bf16.msra.mxu0 %v6422
    %6464 = vmatprep.subr.bf16.mxu0 0
    %6465 = vmatpush1.bf16.msra.mxu0 %v6423
    %6466 = vmatprep.subr.bf16.mxu0 0
    %6467 = vmatpush1.bf16.msra.mxu0 %v6424
    %6468 = vmatprep.subr.bf16.mxu0 0
    %6469 = vmatpush1.bf16.msra.mxu0 %v6425
    %6470 = vmatprep.subr.bf16.mxu0 0
    %6471 = vmatpush1.bf16.msra.mxu0 %v6426
    %6472 = vmatprep.subr.bf16.mxu0 0
    %6473 = vmatpush1.bf16.msra.mxu0 %v6427
    %6474 = vmatprep.subr.bf16.mxu0 0
    %6475 = vmatpush1.bf16.msra.mxu0 %v6428
    %6476 = vmatprep.subr.bf16.mxu0 0
    %6477 = vmatpush1.bf16.msra.mxu0 %v6429
    %6478 = vmatprep.mubr.bf16.mxu0 %v6316
    %6479 = vmatmul.mubr.bf16.gmra.mrb[0].mxu0 %v6315
    %v6480 = vpop.f32.mrb[0].mxu0
    %v6481 = vadd.f32 0.0, %v6480
    %v6482 = vpop.f32.mrb[0].mxu0
    %v6483 = vpop.f32.mrb[0].mxu0
    %v6484 = vadd.f32 0.0, %v6483
    %v6485 = vpop.f32.mrb[0].mxu0
    %6486 = vdwg.mxu0
    %v6487 = vadd.f32 %v6154, %v6481
    %v6488 = vadd.f32 %v6155, %v6484
    %s6489 = scalar_lea.vmem %s14, 2
    %v6490 = vld [vmem:[%s6489] sm:$0x1]
    %v6492 = vlaneseq
    %v6493 = vshrl.u32 %v6492, 7
    %v6494 = vsub.s32 0, %v6493
    %v6495 = vrot.slane %v6490, %v6494
    %v6497 = vadd.f32 %v6487, %v6495
    %v6498 = vadd.f32 %v6488, %v6495
    %v6499 = vld [vmem:[%s15] sm:$0x1]
    %v6500 = vld [vmem:[%s16] sm:$0x1]
    %v6501 = vsel %vm199, %v6497, 0.0
    %6502 = vadd.xlane.f32.xlu0 %v6501
    %v6503 = vpop.xlane.xlu0 %6502
    %v6504 = vsel %vm199, %v6498, 0.0
    %6505 = vadd.xlane.f32.xlu0 %v6504
    %v6506 = vpop.xlane.xlu0 %6505
    %v6507 = vmul.f32 %v6503, %v206
    %v6508 = vmul.f32 %v6506, %v206
    %v6509 = vsub.f32 %v6497, %v6507
    %v6510 = vsub.f32 %v6498, %v6508
    %v6511 = vmul.f32 %v6509, %v6509
    %v6512 = vmul.f32 %v6510, %v6510
    %v6513 = vsel %vm199, %v6511, 0.0
    %6514 = vadd.xlane.f32.xlu0 %v6513
    %v6515 = vpop.xlane.xlu0 %6514
    %v6516 = vsel %vm199, %v6512, 0.0
    %6517 = vadd.xlane.f32.xlu0 %v6516
    %v6518 = vpop.xlane.xlu0 %6517
    %v6519 = vmul.f32 %v6515, %v206
    %v6520 = vmul.f32 %v6518, %v206
    %v6521 = vadd.f32 %v6519, 1e-05
    %v6522 = vadd.f32 %v6520, 1e-05
    %v6523 = vrsqrt.pop %v6521
    %v6524 = vrsqrt.pop %v6522
    %v6525 = vmul.f32 %v6509, %v6523
    %v6526 = vmul.f32 %v6510, %v6524
    %v6528 = vlaneseq
    %v6529 = vshrl.u32 %v6528, 7
    %v6530 = vsub.s32 0, %v6529
    %v6531 = vrot.slane %v6499, %v6530
    %v6533 = vmul.f32 %v6525, %v6531
    %v6534 = vmul.f32 %v6526, %v6531
    %v6536 = vlaneseq
    %v6537 = vshrl.u32 %v6536, 7
    %v6538 = vsub.s32 0, %v6537
    %v6539 = vrot.slane %v6500, %v6538
    %v6541 = vadd.f32 %v6533, %v6539
    %v6542 = vadd.f32 %v6534, %v6539
    %v6543 = vpack.c.bf16 %v6542, %v6541
    %v6544 = vld [vmem:[%s17] sm:$0xf]
    %v6545 = vld [vmem:[%s17 + $0x4] sm:$0xf]
    %v6546 = vld [vmem:[%s17 + $0x8] sm:$0xf]
    %v6547 = vld [vmem:[%s17 + $0xc] sm:$0xf]
    %v6548 = vld [vmem:[%s17 + $0x10] sm:$0xf]
    %v6549 = vld [vmem:[%s17 + $0x14] sm:$0xf]
    %v6550 = vld [vmem:[%s17 + $0x18] sm:$0xf]
    %v6551 = vld [vmem:[%s17 + $0x1c] sm:$0xf]
    %v6552 = vld [vmem:[%s18] sm:$0x1]
    %v6554 = vlaneseq
    %v6555 = vshrl.u32 %v6554, 7
    %v6556 = vsub.s32 0, %v6555
    %v6557 = vrot.slane %v6552, %v6556
    %v6567 = vunpack.c.l.b16 %v6544
    %v6568 = vunpack.c.l.b16 %v6545
    %v6569 = vunpack.c.l.b16 %v6546
    %v6570 = vunpack.c.l.b16 %v6547
    %v6571 = vunpack.c.l.b16 %v6548
    %v6572 = vunpack.c.l.b16 %v6549
    %v6573 = vunpack.c.l.b16 %v6550
    %v6574 = vunpack.c.l.b16 %v6551
    %v6575 = vpack.c.b16 %v6568, %v6567
    %v6576 = vpack.c.b16 %v6570, %v6569
    %v6577 = vpack.c.b16 %v6572, %v6571
    %v6578 = vpack.c.b16 %v6574, %v6573
    %v6584 = vsel %vm199, %v6543, 0
    %6586 = vmatprep.subr.bf16.mxu0 0
    %6587 = vmatpush1.bf16.msra.mxu0 %v6575
    %6588 = vmatprep.subr.bf16.mxu0 0
    %6589 = vmatpush1.bf16.msra.mxu0 %v6576
    %6590 = vmatprep.subr.bf16.mxu0 0
    %6591 = vmatpush1.bf16.msra.mxu0 %v6577
    %6592 = vmatprep.subr.bf16.mxu0 0
    %6593 = vmatpush1.bf16.msra.mxu0 %v6578
    %6594 = vmatprep.subr.bf16.mxu0 0
    %6595 = vmatpush1.bf16.msra.mxu0 0
    %6596 = vmatprep.subr.bf16.mxu0 0
    %6597 = vmatpush1.bf16.msra.mxu0 0
    %6598 = vmatprep.subr.bf16.mxu0 0
    %6599 = vmatpush1.bf16.msra.mxu0 0
    %6600 = vmatprep.subr.bf16.mxu0 0
    %6601 = vmatpush1.bf16.msra.mxu0 0
    %6602 = vmatprep.subr.bf16.mxu0 0
    %6603 = vmatpush1.bf16.msra.mxu0 0
    %6604 = vmatprep.subr.bf16.mxu0 0
    %6605 = vmatpush1.bf16.msra.mxu0 0
    %6606 = vmatprep.subr.bf16.mxu0 0
    %6607 = vmatpush1.bf16.msra.mxu0 0
    %6608 = vmatprep.subr.bf16.mxu0 0
    %6609 = vmatpush1.bf16.msra.mxu0 0
    %6610 = vmatprep.subr.bf16.mxu0 0
    %6611 = vmatpush1.bf16.msra.mxu0 0
    %6612 = vmatprep.subr.bf16.mxu0 0
    %6613 = vmatpush1.bf16.msra.mxu0 0
    %6614 = vmatprep.subr.bf16.mxu0 0
    %6615 = vmatpush1.bf16.msra.mxu0 0
    %6616 = vmatprep.subr.bf16.mxu0 0
    %6617 = vmatpush1.bf16.msra.mxu0 0
    %6618 = vmatprep.mubr.bf16.mxu0 0
    %6619 = vmatmul.mubr.bf16.gmra.mrb[0].mxu0 %v6584
    %v6620 = vpop.f32.mrb[0].mxu0
    %v6621 = vadd.f32 %v6557, %v6620
    %v6622 = vpop.f32.mrb[0].mxu0
    %v6623 = vpop.f32.mrb[0].mxu0
    %v6624 = vadd.f32 %v6557, %v6623
    %v6625 = vpop.f32.mrb[0].mxu0
    %6626 = vdwg.mxu0
    %6627 = vst [vmem:[#allocation5] sm:$0xff] %v6621
    %6628 = vst [vmem:[#allocation5 + $0x8] sm:$0xff] %v6624
    // Predicated region
    $region82: #{tiny_transformer_forward.1} parent=1 // pred_check
      _
    $region83: #{tiny_transformer_forward.1} parent=1 // pred_check_branch
      %6630 = sbr.rel (0) target = $region85
    $region84: #{tiny_transformer_forward.1} parent=1 // pred_region
      %s6632 = ssub.s32 256, 256
      %6633 = vsyncadd [#allocation4], %s6632
      %s6634 = sshll.u32 [#allocation5], 4
      %s6635 = int_to_ptr.vmem [resolvable:$true] %s6634
      %6640 = dma.vmem_to_hbm [thread:$0]  %s6635, 256, %s19, [#allocation4], 128, 128, 8
    $region85: #{tiny_transformer_forward.1} parent=1 // pred_fallthru
      _
    // Predicated region
    $region86: #{tiny_transformer_forward.1} parent=1 // pred_check
      _
    $region87: #{tiny_transformer_forward.1} parent=1 // pred_check_branch
      %6642 = sbr.rel (0) target = $region89
    $region88: #{tiny_transformer_forward.1} parent=1 // pred_region
      %6643 = dma.done [#allocation4], 256
    $region89: #{tiny_transformer_forward.1} parent=1 // pred_fallthru
      _
    %6644 = vsyncpa [#allocation3], 1
    %6645 = vsyncpa [#allocation4], 1

</llo_original>
